<compile_context>
chip_gen: v7x
topology: tpu7x:2x2x1
jax: 0.10.0
libtpu: 0.0.40
codegen_flags: <defaults>
</compile_context>

<pallas_src>
import math

import jax
import jax.numpy as jnp
from jax.experimental import pallas as pl
from jax.experimental.pallas import tpu as pltpu

B = 2
FRAME_SIZE = 64
PROJ = 32
HID = 32
NUM_FRAMES = 8
NUM_WORDS = 6
VOCAB_SIZE = 20
VOCAB_PAD = 128          # lane-dense padded vocab for the logits store
START_ID = 1

F32 = jnp.float32

# ---- packed weight-slab row layout (all offsets multiples of 8 sublanes) ----
SLAB_LANES = 128
ROW_WV     = 0                          # (2*FRAME_SIZE, PROJ)  folded frame_embed path
ROW_WV2    = ROW_WV + 2 * FRAME_SIZE    # (FRAME_SIZE, PROJ)    folded att2(vs) path
ROW_ATT1   = ROW_WV2 + FRAME_SIZE       # (HID, PROJ)           attention linear1 (T)
ROW_WINIT1 = ROW_ATT1 + HID             # (PROJ, 2*HID)         fused h/c init layer 1
ROW_WINIT2 = ROW_WINIT1 + PROJ          # (2*HID, 2*HID)        fused h/c init layer 2
ROW_WGATES = ROW_WINIT2 + 2 * HID       # (PROJ+HID, 4*HID)     fused LSTM gates over [t|h]
ROW_WOUT   = ROW_WGATES + PROJ + HID    # (HID, VOCAB_PAD)      vocab projection (padded)
ROW_BIAS   = ROW_WOUT + HID             # 7 bias rows (see prepare_params)
SLAB_ROWS  = ROW_BIAS + 8               # = 424


def _dot(a, b):
    return jnp.dot(a, b, preferred_element_type=jnp.float32)


def _vmem_specs(n):
    return [pl.BlockSpec(memory_space=pltpu.MemorySpace.VMEM) for _ in range(n)]


def _sigmoid(x):
    # logistic via a single EUP tanh: sigma(x) = 0.5 * tanh(x/2) + 0.5
    return 0.5 * jnp.tanh(0.5 * x) + 0.5


# ---------------------------------------------------------------------------
# Single fused kernel: front-end + state init + full decode loop.
# ---------------------------------------------------------------------------
def decoder_fused_kernel(
    frames_ref,      # (B*NF, 3*FRAME_SIZE)  lanes [0:128]=[xs|xf] batch-major, [128:192]=xs frame-major
    wemb_ref,        # (NUM_WORDS, B, PROJ)  teacher-forced word embeddings
    slab_ref,        # (SLAB_ROWS, 128)      packed weights/biases (one DMA)
    out_ref,         # (NUM_WORDS*B, VOCAB_PAD)
):
    # ---------------- one-time weight loads (static slab slices) ----------------
    w_v     = slab_ref[ROW_WV:ROW_WV + 2 * FRAME_SIZE, 0:PROJ]          # (128, 32)
    w_v2    = slab_ref[ROW_WV2:ROW_WV2 + FRAME_SIZE, 0:PROJ]            # (64, 32)
    att1_w  = slab_ref[ROW_ATT1:ROW_ATT1 + HID, 0:PROJ]                 # (32, 32)
    w_i1    = slab_ref[ROW_WINIT1:ROW_WINIT1 + PROJ, 0:2 * HID]         # (32, 64)
    w_i2    = slab_ref[ROW_WINIT2:ROW_WINIT2 + 2 * HID, 0:2 * HID]      # (64, 64)
    w_gates = slab_ref[ROW_WGATES:ROW_WGATES + PROJ + HID, 0:4 * HID]   # (64, 128)
    wout    = slab_ref[ROW_WOUT:ROW_WOUT + HID, 0:VOCAB_PAD]            # (32, 128)
    b_v   = slab_ref[ROW_BIAS + 0:ROW_BIAS + 1, 0:PROJ]                 # (1, 32)
    b_v2  = slab_ref[ROW_BIAS + 1:ROW_BIAS + 2, 0:PROJ]                 # (1, 32)  incl. att1_b + att2_b
    w3    = slab_ref[ROW_BIAS + 2:ROW_BIAS + 3, 0:PROJ]                 # (1, 32)  attention linear3 row
    b_i1  = slab_ref[ROW_BIAS + 3:ROW_BIAS + 4, 0:2 * HID]              # (1, 64)
    b_i2  = slab_ref[ROW_BIAS + 4:ROW_BIAS + 5, 0:2 * HID]              # (1, 64)
    bg    = slab_ref[ROW_BIAS + 5:ROW_BIAS + 6, 0:4 * HID]              # (1, 128)
    bout  = slab_ref[ROW_BIAS + 6:ROW_BIAS + 7, 0:VOCAB_PAD]            # (1, 128)

    # ---------------- step-invariant front-end ----------------
    x_bm  = frames_ref[:, 0:2 * FRAME_SIZE]                 # (B*NF, 2F) rows b*NF+f
    xs_fm = frames_ref[:, 2 * FRAME_SIZE:3 * FRAME_SIZE]    # (B*NF, F)  rows f*B+b

    # v = frame_embed(cat[vs, vf - vs]) folded into one K=128 matmul.
    v_flat = _dot(x_bm, w_v) + b_v                                        # (B*NF, P)
    # Hoisted (B, P, NF) layout so per-step context is a lane-axis reduce.
    v3_t = jnp.swapaxes(v_flat.reshape(B, NUM_FRAMES, PROJ), 1, 2)        # (B, P, NF)

    # Step-invariant attention term att2(vs) (+ folded att1/att2 biases),
    # already in frame-major row order (row k -> frame k//B, batch k%B).
    v2_fm = _dot(xs_fm, w_v2) + b_v2                                      # (B*NF, P)

    # LSTM state init: tanh(Sequential(Linear,Tanh,Linear,Tanh)(mean_v)), h & c fused.
    mean_v = jnp.mean(v3_t, axis=-1)                                      # (B, P)
    x1 = jnp.tanh(_dot(mean_v, w_i1) + b_i1)                              # (B, 2H)
    hc = jnp.tanh(jnp.tanh(_dot(x1, w_i2) + b_i2))                        # outer F.tanh in module
    h = hc[:, :HID]
    c = hc[:, HID:]

    # ---------------- decode loop (teacher forcing, fully unrolled) ----------
    h_steps = []
    for i in range(NUM_WORDS):
        # Attention scores directly in the "scrambled" (B, NF) layout of the
        # original torch.cat(e, 0).view(bsz, num_frames) indexing:
        # frame-major flat order == scrambled flat order.
        hp_rep = jnp.tile(_dot(h, att1_w), (NUM_FRAMES, 1))               # (B*NF, P), row k -> hp[k % B]
        x_att = jnp.tanh(hp_rep + v2_fm)                                  # (B*NF, P) frame-major
        scores = jnp.sum(x_att.reshape(B, NUM_FRAMES, PROJ) * w3, axis=-1)  # (B, NF) scrambled

        # softmax over the (scrambled) frame axis (exact divide: weights sum to 1)
        m = jnp.max(scores, axis=-1, keepdims=True)
        pexp = jnp.exp(scores - m)
        a = pexp / jnp.sum(pexp, axis=-1, keepdims=True)                  # (B, NF)

        # context == bmm(a, v): sublane splat of a, lane-axis reduce over frames
        ctx = jnp.sum(a[:, None, :] * v3_t, axis=-1)                      # (B, P)

        # LSTMCell with a single fused K=64 gate matmul over [t | h]
        t = wemb_ref[i] + ctx                                             # (B, P)
        gates = _dot(jnp.concatenate([t, h], axis=1), w_gates) + bg       # (B, 4H)
        i_g = _sigmoid(gates[:, 0 * HID:1 * HID])
        f_g = _sigmoid(gates[:, 1 * HID:2 * HID])
        g_g = jnp.tanh(gates[:, 2 * HID:3 * HID])
        o_g = _sigmoid(gates[:, 3 * HID:4 * HID])
        c = f_g * c + i_g * g_g
        h = o_g * jnp.tanh(c)
        h_steps.append(h)

    # ---- vocab projection hoisted out of the loop: one matmul, one dense store ----
    h_all = jnp.concatenate(h_steps, axis=0)                              # (NW*B, H)
    out_ref[...] = _dot(h_all, wout) + bout                               # (NW*B, VOCAB_PAD)


# ---------------------------------------------------------------------------
# One-time parameter preparation: algebraic folds + packing into ONE slab.
# ---------------------------------------------------------------------------
def prepare_params(p):
    wvs_t = p['vs_w'].T                              # (F, P)
    wvf_t = p['vf_w'].T                              # (F, P)
    wfa = p['fe_w'][:, :PROJ].T                      # (P, P)  acts on vs
    wfb = p['fe_w'][:, PROJ:].T                      # (P, P)  acts on vr

    # v = vs@(Wfa - Wfb) + vf@Wfb + bfe, with vs = xs@Wvs_t + bvs etc.
    w_v = jnp.concatenate([wvs_t @ (wfa - wfb), wvf_t @ wfb], axis=0)     # (2F, P)
    b_v = p['vs_b'] @ (wfa - wfb) + p['vf_b'] @ wfb + p['fe_b']           # (P,)

    # v2 = att2(vs) folded onto raw xs; att1_b folded in too (hp = h @ att1_w only).
    watt2_t = p['att2_w'].T
    w_v2 = wvs_t @ watt2_t                                                # (F, P)
    b_v2 = p['vs_b'] @ watt2_t + p['att2_b'] + p['att1_b']                # (P,)

    # fused h/c init MLPs: layer 1 concat along N, layer 2 block-diagonal.
    w_init1 = jnp.concatenate([p['inith1_w'].T, p['initc1_w'].T], axis=1)  # (P, 2H)
    b_init1 = jnp.concatenate([p['inith1_b'], p['initc1_b']])              # (2H,)
    z = jnp.zeros((HID, HID), F32)
    w_init2 = jnp.concatenate(
        [jnp.concatenate([p['inith2_w'].T, z], axis=1),
         jnp.concatenate([z, p['initc2_w'].T], axis=1)], axis=0)           # (2H, 2H)
    b_init2 = jnp.concatenate([p['inith2_b'], p['initc2_b']])              # (2H,)

    # LSTMCell gates fused over [t | h] lanes, PyTorch gate order (i, f, g, o).
    w_gates = jnp.concatenate([p['lstm_wih'].T, p['lstm_whh'].T], axis=0)  # (P+H, 4H)
    b_gates = p['lstm_bih'] + p['lstm_bhh']                                # (4H,)

    # vocab projection padded to 128 lanes.
    wout_pad = jnp.zeros((HID, VOCAB_PAD), F32).at[:, :VOCAB_SIZE].set(p['out_w'].T)
    bout_pad = jnp.zeros((VOCAB_PAD,), F32).at[:VOCAB_SIZE].set(p['out_b'])

    # ---- pack everything into one lane-dense (SLAB_ROWS, 128) slab ----
    slab = jnp.zeros((SLAB_ROWS, SLAB_LANES), F32)

    def put(s, row, mat):
        mat = jnp.asarray(mat, F32)
        if mat.ndim == 1:
            mat = mat[None, :]
        return s.at[row:row + mat.shape[0], :mat.shape[1]].set(mat)

    slab = put(slab, ROW_WV, w_v)
    slab = put(slab, ROW_WV2, w_v2)
    slab = put(slab, ROW_ATT1, p['att1_w'].T)        # (HID, PROJ)
    slab = put(slab, ROW_WINIT1, w_init1)
    slab = put(slab, ROW_WINIT2, w_init2)
    slab = put(slab, ROW_WGATES, w_gates)
    slab = put(slab, ROW_WOUT, wout_pad)
    slab = put(slab, ROW_BIAS + 0, b_v)
    slab = put(slab, ROW_BIAS + 1, b_v2)
    slab = put(slab, ROW_BIAS + 2, p['att3_w'][0])   # linear3 row (no bias)
    slab = put(slab, ROW_BIAS + 3, b_init1)
    slab = put(slab, ROW_BIAS + 4, b_init2)
    slab = put(slab, ROW_BIAS + 5, b_gates)
    slab = put(slab, ROW_BIAS + 6, bout_pad)

    return dict(word_emb=p['word_emb'], slab=slab)


# ---------------------------------------------------------------------------
# Full forward (training path, always teacher-forced): one pallas_call.
# ---------------------------------------------------------------------------
def decoder_forward(prep, video_feats, captions):
    bsz = video_feats.shape[0]

    # One packed frame input: lanes [0:128] = [xs | xf] batch-major rows (b*NF+f),
    # lanes [128:192] = xs frame-major rows (f*B+b) for the step-invariant att2 term.
    x_bm = video_feats.reshape(bsz * NUM_FRAMES, 2 * FRAME_SIZE)
    xs_fm = jnp.transpose(video_feats[:, :, :FRAME_SIZE], (1, 0, 2)).reshape(
        NUM_FRAMES * bsz, FRAME_SIZE)
    frames = jnp.concatenate([x_bm, xs_fm], axis=1)                      # (B*NF, 3F)

    # Teacher forcing (ratio=1.0): word input at step i is <start> for i==0,
    # otherwise captions[:, i-1].  Embedding gather stays as one XLA gather.
    start = jnp.full((bsz, 1), START_ID, dtype=jnp.int32)
    word_ids_in = jnp.concatenate([start, captions[:, :NUM_WORDS - 1]], axis=1)
    word_embs = jnp.transpose(prep['word_emb'][word_ids_in], (1, 0, 2))  # (NW, B, P)

    flat = pl.pallas_call(
        decoder_fused_kernel,
        in_specs=_vmem_specs(3),
        out_specs=pl.BlockSpec(memory_space=pltpu.MemorySpace.VMEM),
        out_shape=jax.ShapeDtypeStruct((NUM_WORDS * bsz, VOCAB_PAD), F32),
    )(frames, word_embs, prep['slab'])

    # (NW*B, VOCAB_PAD) -> (B, NW, VOCAB)
    out = flat.reshape(NUM_WORDS, bsz, VOCAB_PAD)
    return jnp.transpose(out, (1, 0, 2))[:, :, :VOCAB_SIZE]


# ---------------------------------------------------------------------------
# Deterministic parameter init (shapes match the nn.Module __init__)
# ---------------------------------------------------------------------------
def init_params(key):
    ks = list(jax.random.split(key, 24))
    std = math.sqrt(2.0 / (FRAME_SIZE + PROJ))

    def nrm(k, shape, s):
        return (s * jax.random.normal(k, shape)).astype(F32)

    def uni(k, shape, a):
        return jax.random.uniform(k, shape, dtype=F32, minval=-a, maxval=a)

    p = {}
    p['vs_w'] = nrm(ks[0], (PROJ, FRAME_SIZE), std)
    p['vs_b'] = jnp.zeros((PROJ,), F32)
    p['vf_w'] = nrm(ks[1], (PROJ, FRAME_SIZE), std)
    p['vf_b'] = jnp.zeros((PROJ,), F32)

    fe_bound = 1.0 / math.sqrt(2 * PROJ)
    p['fe_w'] = uni(ks[2], (PROJ, 2 * PROJ), fe_bound)
    p['fe_b'] = uni(ks[3], (PROJ,), fe_bound)

    h_bound = 1.0 / math.sqrt(HID)
    p_bound = 1.0 / math.sqrt(PROJ)
    p['att1_w'] = uni(ks[4], (PROJ, HID), h_bound)
    p['att1_b'] = uni(ks[5], (PROJ,), h_bound)
    p['att2_w'] = uni(ks[6], (PROJ, PROJ), p_bound)
    p['att2_b'] = uni(ks[7], (PROJ,), p_bound)
    p['att3_w'] = uni(ks[8], (1, PROJ), p_bound)       # linear3, no bias

    p['word_emb'] = uni(ks[9], (VOCAB_SIZE, PROJ), 1.73)

    p['lstm_wih'] = uni(ks[10], (4 * HID, PROJ), h_bound)
    p['lstm_whh'] = uni(ks[11], (4 * HID, HID), h_bound)
    p['lstm_bih'] = uni(ks[12], (4 * HID,), h_bound)
    p['lstm_bhh'] = uni(ks[13], (4 * HID,), h_bound)

    p['inith1_w'] = uni(ks[14], (HID, PROJ), p_bound)
    p['inith1_b'] = uni(ks[15], (HID,), p_bound)
    p['inith2_w'] = uni(ks[16], (HID, HID), h_bound)
    p['inith2_b'] = uni(ks[17], (HID,), h_bound)
    p['initc1_w'] = uni(ks[18], (HID, PROJ), p_bound)
    p['initc1_b'] = uni(ks[19], (HID,), p_bound)
    p['initc2_w'] = uni(ks[20], (HID, HID), h_bound)
    p['initc2_b'] = uni(ks[21], (HID,), h_bound)

    p['out_w'] = uni(ks[22], (VOCAB_SIZE, HID), 0.08)
    p['out_b'] = jnp.zeros((VOCAB_SIZE,), F32)
    return p


if __name__ == "__main__":
    key = jax.random.PRNGKey(0)
    kp, kv, kc = jax.random.split(key, 3)

    params = init_params(kp)
    prep = prepare_params(params)          # one-time weight fold + slab packing

    video_feats = jax.random.normal(kv, (B, NUM_FRAMES, 2 * FRAME_SIZE), dtype=F32)
    # nonzero tokens so the original early-break (captions[:, i].sum() == 0) never fires
    captions = jax.random.randint(kc, (B, NUM_WORDS), 1, VOCAB_SIZE, dtype=jnp.int32)

    fwd = jax.jit(decoder_forward)
    outputs = fwd(prep, video_feats, captions)
    jax.block_until_ready(outputs)

    assert outputs.shape == (B, NUM_WORDS, VOCAB_SIZE)
    assert bool(jnp.all(jnp.isfinite(outputs)))
    print("KERNEL_OK")
</pallas_src>

<mosaic_0001>
module attributes {stable_mosaic.version = 11 : i64} {
  func.func @decoder_fused_kernel(%arg0: memref<16x192xf32, #tpu.memory_space<vmem>>, %arg1: memref<6x2x32xf32, #tpu.memory_space<vmem>>, %arg2: memref<424x128xf32, #tpu.memory_space<vmem>>, %arg3: memref<12x128xf32, #tpu.memory_space<vmem>>) attributes {dimension_semantics = [], scalar_prefetch = 0 : i64, scratch_operands = 0 : i64, tpu.core_type = #tpu.core_type<tc>} {
    %c0 = arith.constant 0 : index
    %c0_0 = arith.constant 0 : index
    %0 = vector.load %arg2[%c0, %c0_0] : memref<424x128xf32, #tpu.memory_space<vmem>>, vector<128x32xf32>
    %c128 = arith.constant 128 : index
    %c0_1 = arith.constant 0 : index
    %1 = vector.load %arg2[%c128, %c0_1] : memref<424x128xf32, #tpu.memory_space<vmem>>, vector<64x32xf32>
    %c192 = arith.constant 192 : index
    %c0_2 = arith.constant 0 : index
    %2 = vector.load %arg2[%c192, %c0_2] : memref<424x128xf32, #tpu.memory_space<vmem>>, vector<32x32xf32>
    %c224 = arith.constant 224 : index
    %c0_3 = arith.constant 0 : index
    %3 = vector.load %arg2[%c224, %c0_3] : memref<424x128xf32, #tpu.memory_space<vmem>>, vector<32x64xf32>
    %c256 = arith.constant 256 : index
    %c0_4 = arith.constant 0 : index
    %4 = vector.load %arg2[%c256, %c0_4] : memref<424x128xf32, #tpu.memory_space<vmem>>, vector<64x64xf32>
    %c320 = arith.constant 320 : index
    %c0_5 = arith.constant 0 : index
    %5 = vector.load %arg2[%c320, %c0_5] : memref<424x128xf32, #tpu.memory_space<vmem>>, vector<64x128xf32>
    %c384 = arith.constant 384 : index
    %c0_6 = arith.constant 0 : index
    %6 = vector.load %arg2[%c384, %c0_6] : memref<424x128xf32, #tpu.memory_space<vmem>>, vector<32x128xf32>
    %c416 = arith.constant 416 : index
    %c0_7 = arith.constant 0 : index
    %7 = vector.load %arg2[%c416, %c0_7] : memref<424x128xf32, #tpu.memory_space<vmem>>, vector<1x32xf32>
    %c417 = arith.constant 417 : index
    %c0_8 = arith.constant 0 : index
    %8 = vector.load %arg2[%c417, %c0_8] : memref<424x128xf32, #tpu.memory_space<vmem>>, vector<1x32xf32>
    %c418 = arith.constant 418 : index
    %c0_9 = arith.constant 0 : index
    %9 = vector.load %arg2[%c418, %c0_9] : memref<424x128xf32, #tpu.memory_space<vmem>>, vector<1x32xf32>
    %c419 = arith.constant 419 : index
    %c0_10 = arith.constant 0 : index
    %10 = vector.load %arg2[%c419, %c0_10] : memref<424x128xf32, #tpu.memory_space<vmem>>, vector<1x64xf32>
    %c420 = arith.constant 420 : index
    %c0_11 = arith.constant 0 : index
    %11 = vector.load %arg2[%c420, %c0_11] : memref<424x128xf32, #tpu.memory_space<vmem>>, vector<1x64xf32>
    %c421 = arith.constant 421 : index
    %c0_12 = arith.constant 0 : index
    %12 = vector.load %arg2[%c421, %c0_12] : memref<424x128xf32, #tpu.memory_space<vmem>>, vector<1x128xf32>
    %c422 = arith.constant 422 : index
    %c0_13 = arith.constant 0 : index
    %13 = vector.load %arg2[%c422, %c0_13] : memref<424x128xf32, #tpu.memory_space<vmem>>, vector<1x128xf32>
    %c0_14 = arith.constant 0 : index
    %c0_15 = arith.constant 0 : index
    %14 = vector.load %arg0[%c0_14, %c0_15] : memref<16x192xf32, #tpu.memory_space<vmem>>, vector<16x128xf32>
    %c0_16 = arith.constant 0 : index
    %c128_17 = arith.constant 128 : index
    %15 = vector.load %arg0[%c0_16, %c128_17] : memref<16x192xf32, #tpu.memory_space<vmem>>, vector<16x64xf32>
    %cst = arith.constant dense<0.000000e+00> : vector<16x32xf32>
    %16 = tpu.matmul %14, %0, %cst {dimension_numbers = #tpu.dot_dimension_numbers<[1], [0], [0], [1], [0, 0, 1, 1], [], []>} : vector<16x128xf32>, vector<128x32xf32>, vector<16x32xf32> -> vector<16x32xf32>
    %17 = vector.broadcast %7 : vector<1x32xf32> to vector<16x32xf32>
    %18 = arith.addf %16, %17 : vector<16x32xf32>
    %19 = vector.shape_cast %18 : vector<16x32xf32> to vector<2x8x32xf32>
    %20 = tpu.transpose %19, [0, 2, 1] : vector<2x8x32xf32> -> vector<2x32x8xf32>
    %cst_18 = arith.constant dense<0.000000e+00> : vector<16x32xf32>
    %21 = tpu.matmul %15, %1, %cst_18 {dimension_numbers = #tpu.dot_dimension_numbers<[1], [0], [0], [1], [0, 0, 1, 1], [], []>} : vector<16x64xf32>, vector<64x32xf32>, vector<16x32xf32> -> vector<16x32xf32>
    %22 = vector.broadcast %8 : vector<1x32xf32> to vector<16x32xf32>
    %23 = arith.addf %21, %22 : vector<16x32xf32>
    %cst_19 = arith.constant dense<0.000000e+00> : vector<2x32xf32>
    %24 = vector.multi_reduction <add>, %20, %cst_19 [2] : vector<2x32x8xf32> to vector<2x32xf32>
    %cst_20 = arith.constant 8.000000e+00 : f32
    %25 = vector.broadcast %cst_20 : f32 to vector<2x32xf32>
    %26 = arith.divf %24, %25 : vector<2x32xf32>
    %cst_21 = arith.constant dense<0.000000e+00> : vector<2x64xf32>
    %27 = tpu.matmul %26, %3, %cst_21 {dimension_numbers = #tpu.dot_dimension_numbers<[1], [0], [0], [1], [0, 0, 1, 1], [], []>} : vector<2x32xf32>, vector<32x64xf32>, vector<2x64xf32> -> vector<2x64xf32>
    %28 = vector.broadcast %10 : vector<1x64xf32> to vector<2x64xf32>
    %29 = arith.addf %27, %28 : vector<2x64xf32>
    %30 = math.tanh %29 : vector<2x64xf32>
    %cst_22 = arith.constant dense<0.000000e+00> : vector<2x64xf32>
    %31 = tpu.matmul %30, %4, %cst_22 {dimension_numbers = #tpu.dot_dimension_numbers<[1], [0], [0], [1], [0, 0, 1, 1], [], []>} : vector<2x64xf32>, vector<64x64xf32>, vector<2x64xf32> -> vector<2x64xf32>
    %32 = vector.broadcast %11 : vector<1x64xf32> to vector<2x64xf32>
    %33 = arith.addf %31, %32 : vector<2x64xf32>
    %34 = math.tanh %33 : vector<2x64xf32>
    %35 = math.tanh %34 : vector<2x64xf32>
    %36 = vector.extract_strided_slice %35 {offsets = [0, 0], sizes = [2, 32], strides = [1, 1]} : vector<2x64xf32> to vector<2x32xf32>
    %37 = vector.extract_strided_slice %35 {offsets = [0, 32], sizes = [2, 32], strides = [1, 1]} : vector<2x64xf32> to vector<2x32xf32>
    %cst_23 = arith.constant dense<0.000000e+00> : vector<2x32xf32>
    %38 = tpu.matmul %36, %2, %cst_23 {dimension_numbers = #tpu.dot_dimension_numbers<[1], [0], [0], [1], [0, 0, 1, 1], [], []>} : vector<2x32xf32>, vector<32x32xf32>, vector<2x32xf32> -> vector<2x32xf32>
    %39 = tpu.concatenate %38, %38, %38, %38, %38, %38, %38, %38 in 0 : vector<2x32xf32>, vector<2x32xf32>, vector<2x32xf32>, vector<2x32xf32>, vector<2x32xf32>, vector<2x32xf32>, vector<2x32xf32>, vector<2x32xf32> -> vector<16x32xf32>
    %40 = arith.addf %39, %23 : vector<16x32xf32>
    %41 = math.tanh %40 : vector<16x32xf32>
    %42 = vector.shape_cast %41 : vector<16x32xf32> to vector<2x8x32xf32>
    %43 = vector.shape_cast %9 : vector<1x32xf32> to vector<1x1x32xf32>
    %44 = vector.broadcast %43 : vector<1x1x32xf32> to vector<2x8x32xf32>
    %45 = arith.mulf %42, %44 : vector<2x8x32xf32>
    %cst_24 = arith.constant dense<0.000000e+00> : vector<2x8xf32>
    %46 = vector.multi_reduction <add>, %45, %cst_24 [2] : vector<2x8x32xf32> to vector<2x8xf32>
    %cst_25 = arith.constant dense<0xFF800000> : vector<2xf32>
    %47 = vector.multi_reduction <maximumf>, %46, %cst_25 [1] : vector<2x8xf32> to vector<2xf32>
    %48 = vector.shape_cast %47 : vector<2xf32> to vector<2x1xf32>
    %49 = vector.broadcast %48 : vector<2x1xf32> to vector<2x8xf32>
    %50 = arith.subf %46, %49 : vector<2x8xf32>
    %51 = math.exp %50 : vector<2x8xf32>
    %cst_26 = arith.constant dense<0.000000e+00> : vector<2xf32>
    %52 = vector.multi_reduction <add>, %51, %cst_26 [1] : vector<2x8xf32> to vector<2xf32>
    %53 = vector.shape_cast %52 : vector<2xf32> to vector<2x1xf32>
    %54 = vector.broadcast %53 : vector<2x1xf32> to vector<2x8xf32>
    %55 = arith.divf %51, %54 : vector<2x8xf32>
    %56 = vector.shape_cast %55 : vector<2x8xf32> to vector<2x1x8xf32>
    %57 = vector.broadcast %56 : vector<2x1x8xf32> to vector<2x32x8xf32>
    %58 = arith.mulf %57, %20 : vector<2x32x8xf32>
    %cst_27 = arith.constant dense<0.000000e+00> : vector<2x32xf32>
    %59 = vector.multi_reduction <add>, %58, %cst_27 [2] : vector<2x32x8xf32> to vector<2x32xf32>
    %c0_28 = arith.constant 0 : index
    %c0_29 = arith.constant 0 : index
    %c0_30 = arith.constant 0 : index
    %60 = vector.load %arg1[%c0_28, %c0_29, %c0_30] : memref<6x2x32xf32, #tpu.memory_space<vmem>>, vector<1x2x32xf32>
    %61 = vector.shape_cast %60 : vector<1x2x32xf32> to vector<2x32xf32>
    %62 = arith.addf %61, %59 : vector<2x32xf32>
    %63 = tpu.concatenate %62, %36 in 1 : vector<2x32xf32>, vector<2x32xf32> -> vector<2x64xf32>
    %cst_31 = arith.constant dense<0.000000e+00> : vector<2x128xf32>
    %64 = tpu.matmul %63, %5, %cst_31 {dimension_numbers = #tpu.dot_dimension_numbers<[1], [0], [0], [1], [0, 0, 1, 1], [], []>} : vector<2x64xf32>, vector<64x128xf32>, vector<2x128xf32> -> vector<2x128xf32>
    %65 = vector.broadcast %12 : vector<1x128xf32> to vector<2x128xf32>
    %66 = arith.addf %64, %65 : vector<2x128xf32>
    %67 = vector.extract_strided_slice %66 {offsets = [0, 0], sizes = [2, 32], strides = [1, 1]} : vector<2x128xf32> to vector<2x32xf32>
    %cst_32 = arith.constant 5.000000e-01 : f32
    %68 = vector.broadcast %cst_32 : f32 to vector<2x32xf32>
    %69 = arith.mulf %68, %67 : vector<2x32xf32>
    %70 = math.tanh %69 : vector<2x32xf32>
    %cst_33 = arith.constant 5.000000e-01 : f32
    %71 = vector.broadcast %cst_33 : f32 to vector<2x32xf32>
    %72 = arith.mulf %71, %70 : vector<2x32xf32>
    %cst_34 = arith.constant 5.000000e-01 : f32
    %73 = vector.broadcast %cst_34 : f32 to vector<2x32xf32>
    %74 = arith.addf %72, %73 : vector<2x32xf32>
    %75 = vector.extract_strided_slice %66 {offsets = [0, 32], sizes = [2, 32], strides = [1, 1]} : vector<2x128xf32> to vector<2x32xf32>
    %cst_35 = arith.constant 5.000000e-01 : f32
    %76 = vector.broadcast %cst_35 : f32 to vector<2x32xf32>
    %77 = arith.mulf %76, %75 : vector<2x32xf32>
    %78 = math.tanh %77 : vector<2x32xf32>
    %cst_36 = arith.constant 5.000000e-01 : f32
    %79 = vector.broadcast %cst_36 : f32 to vector<2x32xf32>
    %80 = arith.mulf %79, %78 : vector<2x32xf32>
    %cst_37 = arith.constant 5.000000e-01 : f32
    %81 = vector.broadcast %cst_37 : f32 to vector<2x32xf32>
    %82 = arith.addf %80, %81 : vector<2x32xf32>
    %83 = vector.extract_strided_slice %66 {offsets = [0, 64], sizes = [2, 32], strides = [1, 1]} : vector<2x128xf32> to vector<2x32xf32>
    %84 = math.tanh %83 : vector<2x32xf32>
    %85 = vector.extract_strided_slice %66 {offsets = [0, 96], sizes = [2, 32], strides = [1, 1]} : vector<2x128xf32> to vector<2x32xf32>
    %cst_38 = arith.constant 5.000000e-01 : f32
    %86 = vector.broadcast %cst_38 : f32 to vector<2x32xf32>
    %87 = arith.mulf %86, %85 : vector<2x32xf32>
    %88 = math.tanh %87 : vector<2x32xf32>
    %cst_39 = arith.constant 5.000000e-01 : f32
    %89 = vector.broadcast %cst_39 : f32 to vector<2x32xf32>
    %90 = arith.mulf %89, %88 : vector<2x32xf32>
    %cst_40 = arith.constant 5.000000e-01 : f32
    %91 = vector.broadcast %cst_40 : f32 to vector<2x32xf32>
    %92 = arith.addf %90, %91 : vector<2x32xf32>
    %93 = arith.mulf %82, %37 : vector<2x32xf32>
    %94 = arith.mulf %74, %84 : vector<2x32xf32>
    %95 = arith.addf %93, %94 : vector<2x32xf32>
    %96 = math.tanh %95 : vector<2x32xf32>
    %97 = arith.mulf %92, %96 : vector<2x32xf32>
    %cst_41 = arith.constant dense<0.000000e+00> : vector<2x32xf32>
    %98 = tpu.matmul %97, %2, %cst_41 {dimension_numbers = #tpu.dot_dimension_numbers<[1], [0], [0], [1], [0, 0, 1, 1], [], []>} : vector<2x32xf32>, vector<32x32xf32>, vector<2x32xf32> -> vector<2x32xf32>
    %99 = tpu.concatenate %98, %98, %98, %98, %98, %98, %98, %98 in 0 : vector<2x32xf32>, vector<2x32xf32>, vector<2x32xf32>, vector<2x32xf32>, vector<2x32xf32>, vector<2x32xf32>, vector<2x32xf32>, vector<2x32xf32> -> vector<16x32xf32>
    %100 = arith.addf %99, %23 : vector<16x32xf32>
    %101 = math.tanh %100 : vector<16x32xf32>
    %102 = vector.shape_cast %101 : vector<16x32xf32> to vector<2x8x32xf32>
    %103 = vector.shape_cast %9 : vector<1x32xf32> to vector<1x1x32xf32>
    %104 = vector.broadcast %103 : vector<1x1x32xf32> to vector<2x8x32xf32>
    %105 = arith.mulf %102, %104 : vector<2x8x32xf32>
    %cst_42 = arith.constant dense<0.000000e+00> : vector<2x8xf32>
    %106 = vector.multi_reduction <add>, %105, %cst_42 [2] : vector<2x8x32xf32> to vector<2x8xf32>
    %cst_43 = arith.constant dense<0xFF800000> : vector<2xf32>
    %107 = vector.multi_reduction <maximumf>, %106, %cst_43 [1] : vector<2x8xf32> to vector<2xf32>
    %108 = vector.shape_cast %107 : vector<2xf32> to vector<2x1xf32>
    %109 = vector.broadcast %108 : vector<2x1xf32> to vector<2x8xf32>
    %110 = arith.subf %106, %109 : vector<2x8xf32>
    %111 = math.exp %110 : vector<2x8xf32>
    %cst_44 = arith.constant dense<0.000000e+00> : vector<2xf32>
    %112 = vector.multi_reduction <add>, %111, %cst_44 [1] : vector<2x8xf32> to vector<2xf32>
    %113 = vector.shape_cast %112 : vector<2xf32> to vector<2x1xf32>
    %114 = vector.broadcast %113 : vector<2x1xf32> to vector<2x8xf32>
    %115 = arith.divf %111, %114 : vector<2x8xf32>
    %116 = vector.shape_cast %115 : vector<2x8xf32> to vector<2x1x8xf32>
    %117 = vector.broadcast %116 : vector<2x1x8xf32> to vector<2x32x8xf32>
    %118 = arith.mulf %117, %20 : vector<2x32x8xf32>
    %cst_45 = arith.constant dense<0.000000e+00> : vector<2x32xf32>
    %119 = vector.multi_reduction <add>, %118, %cst_45 [2] : vector<2x32x8xf32> to vector<2x32xf32>
    %c1 = arith.constant 1 : index
    %c0_46 = arith.constant 0 : index
    %c0_47 = arith.constant 0 : index
    %120 = vector.load %arg1[%c1, %c0_46, %c0_47] : memref<6x2x32xf32, #tpu.memory_space<vmem>>, vector<1x2x32xf32>
    %121 = vector.shape_cast %120 : vector<1x2x32xf32> to vector<2x32xf32>
    %122 = arith.addf %121, %119 : vector<2x32xf32>
    %123 = tpu.concatenate %122, %97 in 1 : vector<2x32xf32>, vector<2x32xf32> -> vector<2x64xf32>
    %cst_48 = arith.constant dense<0.000000e+00> : vector<2x128xf32>
    %124 = tpu.matmul %123, %5, %cst_48 {dimension_numbers = #tpu.dot_dimension_numbers<[1], [0], [0], [1], [0, 0, 1, 1], [], []>} : vector<2x64xf32>, vector<64x128xf32>, vector<2x128xf32> -> vector<2x128xf32>
    %125 = vector.broadcast %12 : vector<1x128xf32> to vector<2x128xf32>
    %126 = arith.addf %124, %125 : vector<2x128xf32>
    %127 = vector.extract_strided_slice %126 {offsets = [0, 0], sizes = [2, 32], strides = [1, 1]} : vector<2x128xf32> to vector<2x32xf32>
    %cst_49 = arith.constant 5.000000e-01 : f32
    %128 = vector.broadcast %cst_49 : f32 to vector<2x32xf32>
    %129 = arith.mulf %128, %127 : vector<2x32xf32>
    %130 = math.tanh %129 : vector<2x32xf32>
    %cst_50 = arith.constant 5.000000e-01 : f32
    %131 = vector.broadcast %cst_50 : f32 to vector<2x32xf32>
    %132 = arith.mulf %131, %130 : vector<2x32xf32>
    %cst_51 = arith.constant 5.000000e-01 : f32
    %133 = vector.broadcast %cst_51 : f32 to vector<2x32xf32>
    %134 = arith.addf %132, %133 : vector<2x32xf32>
    %135 = vector.extract_strided_slice %126 {offsets = [0, 32], sizes = [2, 32], strides = [1, 1]} : vector<2x128xf32> to vector<2x32xf32>
    %cst_52 = arith.constant 5.000000e-01 : f32
    %136 = vector.broadcast %cst_52 : f32 to vector<2x32xf32>
    %137 = arith.mulf %136, %135 : vector<2x32xf32>
    %138 = math.tanh %137 : vector<2x32xf32>
    %cst_53 = arith.constant 5.000000e-01 : f32
    %139 = vector.broadcast %cst_53 : f32 to vector<2x32xf32>
    %140 = arith.mulf %139, %138 : vector<2x32xf32>
    %cst_54 = arith.constant 5.000000e-01 : f32
    %141 = vector.broadcast %cst_54 : f32 to vector<2x32xf32>
    %142 = arith.addf %140, %141 : vector<2x32xf32>
    %143 = vector.extract_strided_slice %126 {offsets = [0, 64], sizes = [2, 32], strides = [1, 1]} : vector<2x128xf32> to vector<2x32xf32>
    %144 = math.tanh %143 : vector<2x32xf32>
    %145 = vector.extract_strided_slice %126 {offsets = [0, 96], sizes = [2, 32], strides = [1, 1]} : vector<2x128xf32> to vector<2x32xf32>
    %cst_55 = arith.constant 5.000000e-01 : f32
    %146 = vector.broadcast %cst_55 : f32 to vector<2x32xf32>
    %147 = arith.mulf %146, %145 : vector<2x32xf32>
    %148 = math.tanh %147 : vector<2x32xf32>
    %cst_56 = arith.constant 5.000000e-01 : f32
    %149 = vector.broadcast %cst_56 : f32 to vector<2x32xf32>
    %150 = arith.mulf %149, %148 : vector<2x32xf32>
    %cst_57 = arith.constant 5.000000e-01 : f32
    %151 = vector.broadcast %cst_57 : f32 to vector<2x32xf32>
    %152 = arith.addf %150, %151 : vector<2x32xf32>
    %153 = arith.mulf %142, %95 : vector<2x32xf32>
    %154 = arith.mulf %134, %144 : vector<2x32xf32>
    %155 = arith.addf %153, %154 : vector<2x32xf32>
    %156 = math.tanh %155 : vector<2x32xf32>
    %157 = arith.mulf %152, %156 : vector<2x32xf32>
    %cst_58 = arith.constant dense<0.000000e+00> : vector<2x32xf32>
    %158 = tpu.matmul %157, %2, %cst_58 {dimension_numbers = #tpu.dot_dimension_numbers<[1], [0], [0], [1], [0, 0, 1, 1], [], []>} : vector<2x32xf32>, vector<32x32xf32>, vector<2x32xf32> -> vector<2x32xf32>
    %159 = tpu.concatenate %158, %158, %158, %158, %158, %158, %158, %158 in 0 : vector<2x32xf32>, vector<2x32xf32>, vector<2x32xf32>, vector<2x32xf32>, vector<2x32xf32>, vector<2x32xf32>, vector<2x32xf32>, vector<2x32xf32> -> vector<16x32xf32>
    %160 = arith.addf %159, %23 : vector<16x32xf32>
    %161 = math.tanh %160 : vector<16x32xf32>
    %162 = vector.shape_cast %161 : vector<16x32xf32> to vector<2x8x32xf32>
    %163 = vector.shape_cast %9 : vector<1x32xf32> to vector<1x1x32xf32>
    %164 = vector.broadcast %163 : vector<1x1x32xf32> to vector<2x8x32xf32>
    %165 = arith.mulf %162, %164 : vector<2x8x32xf32>
    %cst_59 = arith.constant dense<0.000000e+00> : vector<2x8xf32>
    %166 = vector.multi_reduction <add>, %165, %cst_59 [2] : vector<2x8x32xf32> to vector<2x8xf32>
    %cst_60 = arith.constant dense<0xFF800000> : vector<2xf32>
    %167 = vector.multi_reduction <maximumf>, %166, %cst_60 [1] : vector<2x8xf32> to vector<2xf32>
    %168 = vector.shape_cast %167 : vector<2xf32> to vector<2x1xf32>
    %169 = vector.broadcast %168 : vector<2x1xf32> to vector<2x8xf32>
    %170 = arith.subf %166, %169 : vector<2x8xf32>
    %171 = math.exp %170 : vector<2x8xf32>
    %cst_61 = arith.constant dense<0.000000e+00> : vector<2xf32>
    %172 = vector.multi_reduction <add>, %171, %cst_61 [1] : vector<2x8xf32> to vector<2xf32>
    %173 = vector.shape_cast %172 : vector<2xf32> to vector<2x1xf32>
    %174 = vector.broadcast %173 : vector<2x1xf32> to vector<2x8xf32>
    %175 = arith.divf %171, %174 : vector<2x8xf32>
    %176 = vector.shape_cast %175 : vector<2x8xf32> to vector<2x1x8xf32>
    %177 = vector.broadcast %176 : vector<2x1x8xf32> to vector<2x32x8xf32>
    %178 = arith.mulf %177, %20 : vector<2x32x8xf32>
    %cst_62 = arith.constant dense<0.000000e+00> : vector<2x32xf32>
    %179 = vector.multi_reduction <add>, %178, %cst_62 [2] : vector<2x32x8xf32> to vector<2x32xf32>
    %c2 = arith.constant 2 : index
    %c0_63 = arith.constant 0 : index
    %c0_64 = arith.constant 0 : index
    %180 = vector.load %arg1[%c2, %c0_63, %c0_64] : memref<6x2x32xf32, #tpu.memory_space<vmem>>, vector<1x2x32xf32>
    %181 = vector.shape_cast %180 : vector<1x2x32xf32> to vector<2x32xf32>
    %182 = arith.addf %181, %179 : vector<2x32xf32>
    %183 = tpu.concatenate %182, %157 in 1 : vector<2x32xf32>, vector<2x32xf32> -> vector<2x64xf32>
    %cst_65 = arith.constant dense<0.000000e+00> : vector<2x128xf32>
    %184 = tpu.matmul %183, %5, %cst_65 {dimension_numbers = #tpu.dot_dimension_numbers<[1], [0], [0], [1], [0, 0, 1, 1], [], []>} : vector<2x64xf32>, vector<64x128xf32>, vector<2x128xf32> -> vector<2x128xf32>
    %185 = vector.broadcast %12 : vector<1x128xf32> to vector<2x128xf32>
    %186 = arith.addf %184, %185 : vector<2x128xf32>
    %187 = vector.extract_strided_slice %186 {offsets = [0, 0], sizes = [2, 32], strides = [1, 1]} : vector<2x128xf32> to vector<2x32xf32>
    %cst_66 = arith.constant 5.000000e-01 : f32
    %188 = vector.broadcast %cst_66 : f32 to vector<2x32xf32>
    %189 = arith.mulf %188, %187 : vector<2x32xf32>
    %190 = math.tanh %189 : vector<2x32xf32>
    %cst_67 = arith.constant 5.000000e-01 : f32
    %191 = vector.broadcast %cst_67 : f32 to vector<2x32xf32>
    %192 = arith.mulf %191, %190 : vector<2x32xf32>
    %cst_68 = arith.constant 5.000000e-01 : f32
    %193 = vector.broadcast %cst_68 : f32 to vector<2x32xf32>
    %194 = arith.addf %192, %193 : vector<2x32xf32>
    %195 = vector.extract_strided_slice %186 {offsets = [0, 32], sizes = [2, 32], strides = [1, 1]} : vector<2x128xf32> to vector<2x32xf32>
    %cst_69 = arith.constant 5.000000e-01 : f32
    %196 = vector.broadcast %cst_69 : f32 to vector<2x32xf32>
    %197 = arith.mulf %196, %195 : vector<2x32xf32>
    %198 = math.tanh %197 : vector<2x32xf32>
    %cst_70 = arith.constant 5.000000e-01 : f32
    %199 = vector.broadcast %cst_70 : f32 to vector<2x32xf32>
    %200 = arith.mulf %199, %198 : vector<2x32xf32>
    %cst_71 = arith.constant 5.000000e-01 : f32
    %201 = vector.broadcast %cst_71 : f32 to vector<2x32xf32>
    %202 = arith.addf %200, %201 : vector<2x32xf32>
    %203 = vector.extract_strided_slice %186 {offsets = [0, 64], sizes = [2, 32], strides = [1, 1]} : vector<2x128xf32> to vector<2x32xf32>
    %204 = math.tanh %203 : vector<2x32xf32>
    %205 = vector.extract_strided_slice %186 {offsets = [0, 96], sizes = [2, 32], strides = [1, 1]} : vector<2x128xf32> to vector<2x32xf32>
    %cst_72 = arith.constant 5.000000e-01 : f32
    %206 = vector.broadcast %cst_72 : f32 to vector<2x32xf32>
    %207 = arith.mulf %206, %205 : vector<2x32xf32>
    %208 = math.tanh %207 : vector<2x32xf32>
    %cst_73 = arith.constant 5.000000e-01 : f32
    %209 = vector.broadcast %cst_73 : f32 to vector<2x32xf32>
    %210 = arith.mulf %209, %208 : vector<2x32xf32>
    %cst_74 = arith.constant 5.000000e-01 : f32
    %211 = vector.broadcast %cst_74 : f32 to vector<2x32xf32>
    %212 = arith.addf %210, %211 : vector<2x32xf32>
    %213 = arith.mulf %202, %155 : vector<2x32xf32>
    %214 = arith.mulf %194, %204 : vector<2x32xf32>
    %215 = arith.addf %213, %214 : vector<2x32xf32>
    %216 = math.tanh %215 : vector<2x32xf32>
    %217 = arith.mulf %212, %216 : vector<2x32xf32>
    %cst_75 = arith.constant dense<0.000000e+00> : vector<2x32xf32>
    %218 = tpu.matmul %217, %2, %cst_75 {dimension_numbers = #tpu.dot_dimension_numbers<[1], [0], [0], [1], [0, 0, 1, 1], [], []>} : vector<2x32xf32>, vector<32x32xf32>, vector<2x32xf32> -> vector<2x32xf32>
    %219 = tpu.concatenate %218, %218, %218, %218, %218, %218, %218, %218 in 0 : vector<2x32xf32>, vector<2x32xf32>, vector<2x32xf32>, vector<2x32xf32>, vector<2x32xf32>, vector<2x32xf32>, vector<2x32xf32>, vector<2x32xf32> -> vector<16x32xf32>
    %220 = arith.addf %219, %23 : vector<16x32xf32>
    %221 = math.tanh %220 : vector<16x32xf32>
    %222 = vector.shape_cast %221 : vector<16x32xf32> to vector<2x8x32xf32>
    %223 = vector.shape_cast %9 : vector<1x32xf32> to vector<1x1x32xf32>
    %224 = vector.broadcast %223 : vector<1x1x32xf32> to vector<2x8x32xf32>
    %225 = arith.mulf %222, %224 : vector<2x8x32xf32>
    %cst_76 = arith.constant dense<0.000000e+00> : vector<2x8xf32>
    %226 = vector.multi_reduction <add>, %225, %cst_76 [2] : vector<2x8x32xf32> to vector<2x8xf32>
    %cst_77 = arith.constant dense<0xFF800000> : vector<2xf32>
    %227 = vector.multi_reduction <maximumf>, %226, %cst_77 [1] : vector<2x8xf32> to vector<2xf32>
    %228 = vector.shape_cast %227 : vector<2xf32> to vector<2x1xf32>
    %229 = vector.broadcast %228 : vector<2x1xf32> to vector<2x8xf32>
    %230 = arith.subf %226, %229 : vector<2x8xf32>
    %231 = math.exp %230 : vector<2x8xf32>
    %cst_78 = arith.constant dense<0.000000e+00> : vector<2xf32>
    %232 = vector.multi_reduction <add>, %231, %cst_78 [1] : vector<2x8xf32> to vector<2xf32>
    %233 = vector.shape_cast %232 : vector<2xf32> to vector<2x1xf32>
    %234 = vector.broadcast %233 : vector<2x1xf32> to vector<2x8xf32>
    %235 = arith.divf %231, %234 : vector<2x8xf32>
    %236 = vector.shape_cast %235 : vector<2x8xf32> to vector<2x1x8xf32>
    %237 = vector.broadcast %236 : vector<2x1x8xf32> to vector<2x32x8xf32>
    %238 = arith.mulf %237, %20 : vector<2x32x8xf32>
    %cst_79 = arith.constant dense<0.000000e+00> : vector<2x32xf32>
    %239 = vector.multi_reduction <add>, %238, %cst_79 [2] : vector<2x32x8xf32> to vector<2x32xf32>
    %c3 = arith.constant 3 : index
    %c0_80 = arith.constant 0 : index
    %c0_81 = arith.constant 0 : index
    %240 = vector.load %arg1[%c3, %c0_80, %c0_81] : memref<6x2x32xf32, #tpu.memory_space<vmem>>, vector<1x2x32xf32>
    %241 = vector.shape_cast %240 : vector<1x2x32xf32> to vector<2x32xf32>
    %242 = arith.addf %241, %239 : vector<2x32xf32>
    %243 = tpu.concatenate %242, %217 in 1 : vector<2x32xf32>, vector<2x32xf32> -> vector<2x64xf32>
    %cst_82 = arith.constant dense<0.000000e+00> : vector<2x128xf32>
    %244 = tpu.matmul %243, %5, %cst_82 {dimension_numbers = #tpu.dot_dimension_numbers<[1], [0], [0], [1], [0, 0, 1, 1], [], []>} : vector<2x64xf32>, vector<64x128xf32>, vector<2x128xf32> -> vector<2x128xf32>
    %245 = vector.broadcast %12 : vector<1x128xf32> to vector<2x128xf32>
    %246 = arith.addf %244, %245 : vector<2x128xf32>
    %247 = vector.extract_strided_slice %246 {offsets = [0, 0], sizes = [2, 32], strides = [1, 1]} : vector<2x128xf32> to vector<2x32xf32>
    %cst_83 = arith.constant 5.000000e-01 : f32
    %248 = vector.broadcast %cst_83 : f32 to vector<2x32xf32>
    %249 = arith.mulf %248, %247 : vector<2x32xf32>
    %250 = math.tanh %249 : vector<2x32xf32>
    %cst_84 = arith.constant 5.000000e-01 : f32
    %251 = vector.broadcast %cst_84 : f32 to vector<2x32xf32>
    %252 = arith.mulf %251, %250 : vector<2x32xf32>
    %cst_85 = arith.constant 5.000000e-01 : f32
    %253 = vector.broadcast %cst_85 : f32 to vector<2x32xf32>
    %254 = arith.addf %252, %253 : vector<2x32xf32>
    %255 = vector.extract_strided_slice %246 {offsets = [0, 32], sizes = [2, 32], strides = [1, 1]} : vector<2x128xf32> to vector<2x32xf32>
    %cst_86 = arith.constant 5.000000e-01 : f32
    %256 = vector.broadcast %cst_86 : f32 to vector<2x32xf32>
    %257 = arith.mulf %256, %255 : vector<2x32xf32>
    %258 = math.tanh %257 : vector<2x32xf32>
    %cst_87 = arith.constant 5.000000e-01 : f32
    %259 = vector.broadcast %cst_87 : f32 to vector<2x32xf32>
    %260 = arith.mulf %259, %258 : vector<2x32xf32>
    %cst_88 = arith.constant 5.000000e-01 : f32
    %261 = vector.broadcast %cst_88 : f32 to vector<2x32xf32>
    %262 = arith.addf %260, %261 : vector<2x32xf32>
    %263 = vector.extract_strided_slice %246 {offsets = [0, 64], sizes = [2, 32], strides = [1, 1]} : vector<2x128xf32> to vector<2x32xf32>
    %264 = math.tanh %263 : vector<2x32xf32>
    %265 = vector.extract_strided_slice %246 {offsets = [0, 96], sizes = [2, 32], strides = [1, 1]} : vector<2x128xf32> to vector<2x32xf32>
    %cst_89 = arith.constant 5.000000e-01 : f32
    %266 = vector.broadcast %cst_89 : f32 to vector<2x32xf32>
    %267 = arith.mulf %266, %265 : vector<2x32xf32>
    %268 = math.tanh %267 : vector<2x32xf32>
    %cst_90 = arith.constant 5.000000e-01 : f32
    %269 = vector.broadcast %cst_90 : f32 to vector<2x32xf32>
    %270 = arith.mulf %269, %268 : vector<2x32xf32>
    %cst_91 = arith.constant 5.000000e-01 : f32
    %271 = vector.broadcast %cst_91 : f32 to vector<2x32xf32>
    %272 = arith.addf %270, %271 : vector<2x32xf32>
    %273 = arith.mulf %262, %215 : vector<2x32xf32>
    %274 = arith.mulf %254, %264 : vector<2x32xf32>
    %275 = arith.addf %273, %274 : vector<2x32xf32>
    %276 = math.tanh %275 : vector<2x32xf32>
    %277 = arith.mulf %272, %276 : vector<2x32xf32>
    %cst_92 = arith.constant dense<0.000000e+00> : vector<2x32xf32>
    %278 = tpu.matmul %277, %2, %cst_92 {dimension_numbers = #tpu.dot_dimension_numbers<[1], [0], [0], [1], [0, 0, 1, 1], [], []>} : vector<2x32xf32>, vector<32x32xf32>, vector<2x32xf32> -> vector<2x32xf32>
    %279 = tpu.concatenate %278, %278, %278, %278, %278, %278, %278, %278 in 0 : vector<2x32xf32>, vector<2x32xf32>, vector<2x32xf32>, vector<2x32xf32>, vector<2x32xf32>, vector<2x32xf32>, vector<2x32xf32>, vector<2x32xf32> -> vector<16x32xf32>
    %280 = arith.addf %279, %23 : vector<16x32xf32>
    %281 = math.tanh %280 : vector<16x32xf32>
    %282 = vector.shape_cast %281 : vector<16x32xf32> to vector<2x8x32xf32>
    %283 = vector.shape_cast %9 : vector<1x32xf32> to vector<1x1x32xf32>
    %284 = vector.broadcast %283 : vector<1x1x32xf32> to vector<2x8x32xf32>
    %285 = arith.mulf %282, %284 : vector<2x8x32xf32>
    %cst_93 = arith.constant dense<0.000000e+00> : vector<2x8xf32>
    %286 = vector.multi_reduction <add>, %285, %cst_93 [2] : vector<2x8x32xf32> to vector<2x8xf32>
    %cst_94 = arith.constant dense<0xFF800000> : vector<2xf32>
    %287 = vector.multi_reduction <maximumf>, %286, %cst_94 [1] : vector<2x8xf32> to vector<2xf32>
    %288 = vector.shape_cast %287 : vector<2xf32> to vector<2x1xf32>
    %289 = vector.broadcast %288 : vector<2x1xf32> to vector<2x8xf32>
    %290 = arith.subf %286, %289 : vector<2x8xf32>
    %291 = math.exp %290 : vector<2x8xf32>
    %cst_95 = arith.constant dense<0.000000e+00> : vector<2xf32>
    %292 = vector.multi_reduction <add>, %291, %cst_95 [1] : vector<2x8xf32> to vector<2xf32>
    %293 = vector.shape_cast %292 : vector<2xf32> to vector<2x1xf32>
    %294 = vector.broadcast %293 : vector<2x1xf32> to vector<2x8xf32>
    %295 = arith.divf %291, %294 : vector<2x8xf32>
    %296 = vector.shape_cast %295 : vector<2x8xf32> to vector<2x1x8xf32>
    %297 = vector.broadcast %296 : vector<2x1x8xf32> to vector<2x32x8xf32>
    %298 = arith.mulf %297, %20 : vector<2x32x8xf32>
    %cst_96 = arith.constant dense<0.000000e+00> : vector<2x32xf32>
    %299 = vector.multi_reduction <add>, %298, %cst_96 [2] : vector<2x32x8xf32> to vector<2x32xf32>
    %c4 = arith.constant 4 : index
    %c0_97 = arith.constant 0 : index
    %c0_98 = arith.constant 0 : index
    %300 = vector.load %arg1[%c4, %c0_97, %c0_98] : memref<6x2x32xf32, #tpu.memory_space<vmem>>, vector<1x2x32xf32>
    %301 = vector.shape_cast %300 : vector<1x2x32xf32> to vector<2x32xf32>
    %302 = arith.addf %301, %299 : vector<2x32xf32>
    %303 = tpu.concatenate %302, %277 in 1 : vector<2x32xf32>, vector<2x32xf32> -> vector<2x64xf32>
    %cst_99 = arith.constant dense<0.000000e+00> : vector<2x128xf32>
    %304 = tpu.matmul %303, %5, %cst_99 {dimension_numbers = #tpu.dot_dimension_numbers<[1], [0], [0], [1], [0, 0, 1, 1], [], []>} : vector<2x64xf32>, vector<64x128xf32>, vector<2x128xf32> -> vector<2x128xf32>
    %305 = vector.broadcast %12 : vector<1x128xf32> to vector<2x128xf32>
    %306 = arith.addf %304, %305 : vector<2x128xf32>
    %307 = vector.extract_strided_slice %306 {offsets = [0, 0], sizes = [2, 32], strides = [1, 1]} : vector<2x128xf32> to vector<2x32xf32>
    %cst_100 = arith.constant 5.000000e-01 : f32
    %308 = vector.broadcast %cst_100 : f32 to vector<2x32xf32>
    %309 = arith.mulf %308, %307 : vector<2x32xf32>
    %310 = math.tanh %309 : vector<2x32xf32>
    %cst_101 = arith.constant 5.000000e-01 : f32
    %311 = vector.broadcast %cst_101 : f32 to vector<2x32xf32>
    %312 = arith.mulf %311, %310 : vector<2x32xf32>
    %cst_102 = arith.constant 5.000000e-01 : f32
    %313 = vector.broadcast %cst_102 : f32 to vector<2x32xf32>
    %314 = arith.addf %312, %313 : vector<2x32xf32>
    %315 = vector.extract_strided_slice %306 {offsets = [0, 32], sizes = [2, 32], strides = [1, 1]} : vector<2x128xf32> to vector<2x32xf32>
    %cst_103 = arith.constant 5.000000e-01 : f32
    %316 = vector.broadcast %cst_103 : f32 to vector<2x32xf32>
    %317 = arith.mulf %316, %315 : vector<2x32xf32>
    %318 = math.tanh %317 : vector<2x32xf32>
    %cst_104 = arith.constant 5.000000e-01 : f32
    %319 = vector.broadcast %cst_104 : f32 to vector<2x32xf32>
    %320 = arith.mulf %319, %318 : vector<2x32xf32>
    %cst_105 = arith.constant 5.000000e-01 : f32
    %321 = vector.broadcast %cst_105 : f32 to vector<2x32xf32>
    %322 = arith.addf %320, %321 : vector<2x32xf32>
    %323 = vector.extract_strided_slice %306 {offsets = [0, 64], sizes = [2, 32], strides = [1, 1]} : vector<2x128xf32> to vector<2x32xf32>
    %324 = math.tanh %323 : vector<2x32xf32>
    %325 = vector.extract_strided_slice %306 {offsets = [0, 96], sizes = [2, 32], strides = [1, 1]} : vector<2x128xf32> to vector<2x32xf32>
    %cst_106 = arith.constant 5.000000e-01 : f32
    %326 = vector.broadcast %cst_106 : f32 to vector<2x32xf32>
    %327 = arith.mulf %326, %325 : vector<2x32xf32>
    %328 = math.tanh %327 : vector<2x32xf32>
    %cst_107 = arith.constant 5.000000e-01 : f32
    %329 = vector.broadcast %cst_107 : f32 to vector<2x32xf32>
    %330 = arith.mulf %329, %328 : vector<2x32xf32>
    %cst_108 = arith.constant 5.000000e-01 : f32
    %331 = vector.broadcast %cst_108 : f32 to vector<2x32xf32>
    %332 = arith.addf %330, %331 : vector<2x32xf32>
    %333 = arith.mulf %322, %275 : vector<2x32xf32>
    %334 = arith.mulf %314, %324 : vector<2x32xf32>
    %335 = arith.addf %333, %334 : vector<2x32xf32>
    %336 = math.tanh %335 : vector<2x32xf32>
    %337 = arith.mulf %332, %336 : vector<2x32xf32>
    %cst_109 = arith.constant dense<0.000000e+00> : vector<2x32xf32>
    %338 = tpu.matmul %337, %2, %cst_109 {dimension_numbers = #tpu.dot_dimension_numbers<[1], [0], [0], [1], [0, 0, 1, 1], [], []>} : vector<2x32xf32>, vector<32x32xf32>, vector<2x32xf32> -> vector<2x32xf32>
    %339 = tpu.concatenate %338, %338, %338, %338, %338, %338, %338, %338 in 0 : vector<2x32xf32>, vector<2x32xf32>, vector<2x32xf32>, vector<2x32xf32>, vector<2x32xf32>, vector<2x32xf32>, vector<2x32xf32>, vector<2x32xf32> -> vector<16x32xf32>
    %340 = arith.addf %339, %23 : vector<16x32xf32>
    %341 = math.tanh %340 : vector<16x32xf32>
    %342 = vector.shape_cast %341 : vector<16x32xf32> to vector<2x8x32xf32>
    %343 = vector.shape_cast %9 : vector<1x32xf32> to vector<1x1x32xf32>
    %344 = vector.broadcast %343 : vector<1x1x32xf32> to vector<2x8x32xf32>
    %345 = arith.mulf %342, %344 : vector<2x8x32xf32>
    %cst_110 = arith.constant dense<0.000000e+00> : vector<2x8xf32>
    %346 = vector.multi_reduction <add>, %345, %cst_110 [2] : vector<2x8x32xf32> to vector<2x8xf32>
    %cst_111 = arith.constant dense<0xFF800000> : vector<2xf32>
    %347 = vector.multi_reduction <maximumf>, %346, %cst_111 [1] : vector<2x8xf32> to vector<2xf32>
    %348 = vector.shape_cast %347 : vector<2xf32> to vector<2x1xf32>
    %349 = vector.broadcast %348 : vector<2x1xf32> to vector<2x8xf32>
    %350 = arith.subf %346, %349 : vector<2x8xf32>
    %351 = math.exp %350 : vector<2x8xf32>
    %cst_112 = arith.constant dense<0.000000e+00> : vector<2xf32>
    %352 = vector.multi_reduction <add>, %351, %cst_112 [1] : vector<2x8xf32> to vector<2xf32>
    %353 = vector.shape_cast %352 : vector<2xf32> to vector<2x1xf32>
    %354 = vector.broadcast %353 : vector<2x1xf32> to vector<2x8xf32>
    %355 = arith.divf %351, %354 : vector<2x8xf32>
    %356 = vector.shape_cast %355 : vector<2x8xf32> to vector<2x1x8xf32>
    %357 = vector.broadcast %356 : vector<2x1x8xf32> to vector<2x32x8xf32>
    %358 = arith.mulf %357, %20 : vector<2x32x8xf32>
    %cst_113 = arith.constant dense<0.000000e+00> : vector<2x32xf32>
    %359 = vector.multi_reduction <add>, %358, %cst_113 [2] : vector<2x32x8xf32> to vector<2x32xf32>
    %c5 = arith.constant 5 : index
    %c0_114 = arith.constant 0 : index
    %c0_115 = arith.constant 0 : index
    %360 = vector.load %arg1[%c5, %c0_114, %c0_115] : memref<6x2x32xf32, #tpu.memory_space<vmem>>, vector<1x2x32xf32>
    %361 = vector.shape_cast %360 : vector<1x2x32xf32> to vector<2x32xf32>
    %362 = arith.addf %361, %359 : vector<2x32xf32>
    %363 = tpu.concatenate %362, %337 in 1 : vector<2x32xf32>, vector<2x32xf32> -> vector<2x64xf32>
    %cst_116 = arith.constant dense<0.000000e+00> : vector<2x128xf32>
    %364 = tpu.matmul %363, %5, %cst_116 {dimension_numbers = #tpu.dot_dimension_numbers<[1], [0], [0], [1], [0, 0, 1, 1], [], []>} : vector<2x64xf32>, vector<64x128xf32>, vector<2x128xf32> -> vector<2x128xf32>
    %365 = vector.broadcast %12 : vector<1x128xf32> to vector<2x128xf32>
    %366 = arith.addf %364, %365 : vector<2x128xf32>
    %367 = vector.extract_strided_slice %366 {offsets = [0, 0], sizes = [2, 32], strides = [1, 1]} : vector<2x128xf32> to vector<2x32xf32>
    %cst_117 = arith.constant 5.000000e-01 : f32
    %368 = vector.broadcast %cst_117 : f32 to vector<2x32xf32>
    %369 = arith.mulf %368, %367 : vector<2x32xf32>
    %370 = math.tanh %369 : vector<2x32xf32>
    %cst_118 = arith.constant 5.000000e-01 : f32
    %371 = vector.broadcast %cst_118 : f32 to vector<2x32xf32>
    %372 = arith.mulf %371, %370 : vector<2x32xf32>
    %cst_119 = arith.constant 5.000000e-01 : f32
    %373 = vector.broadcast %cst_119 : f32 to vector<2x32xf32>
    %374 = arith.addf %372, %373 : vector<2x32xf32>
    %375 = vector.extract_strided_slice %366 {offsets = [0, 32], sizes = [2, 32], strides = [1, 1]} : vector<2x128xf32> to vector<2x32xf32>
    %cst_120 = arith.constant 5.000000e-01 : f32
    %376 = vector.broadcast %cst_120 : f32 to vector<2x32xf32>
    %377 = arith.mulf %376, %375 : vector<2x32xf32>
    %378 = math.tanh %377 : vector<2x32xf32>
    %cst_121 = arith.constant 5.000000e-01 : f32
    %379 = vector.broadcast %cst_121 : f32 to vector<2x32xf32>
    %380 = arith.mulf %379, %378 : vector<2x32xf32>
    %cst_122 = arith.constant 5.000000e-01 : f32
    %381 = vector.broadcast %cst_122 : f32 to vector<2x32xf32>
    %382 = arith.addf %380, %381 : vector<2x32xf32>
    %383 = vector.extract_strided_slice %366 {offsets = [0, 64], sizes = [2, 32], strides = [1, 1]} : vector<2x128xf32> to vector<2x32xf32>
    %384 = math.tanh %383 : vector<2x32xf32>
    %385 = vector.extract_strided_slice %366 {offsets = [0, 96], sizes = [2, 32], strides = [1, 1]} : vector<2x128xf32> to vector<2x32xf32>
    %cst_123 = arith.constant 5.000000e-01 : f32
    %386 = vector.broadcast %cst_123 : f32 to vector<2x32xf32>
    %387 = arith.mulf %386, %385 : vector<2x32xf32>
    %388 = math.tanh %387 : vector<2x32xf32>
    %cst_124 = arith.constant 5.000000e-01 : f32
    %389 = vector.broadcast %cst_124 : f32 to vector<2x32xf32>
    %390 = arith.mulf %389, %388 : vector<2x32xf32>
    %cst_125 = arith.constant 5.000000e-01 : f32
    %391 = vector.broadcast %cst_125 : f32 to vector<2x32xf32>
    %392 = arith.addf %390, %391 : vector<2x32xf32>
    %393 = arith.mulf %382, %335 : vector<2x32xf32>
    %394 = arith.mulf %374, %384 : vector<2x32xf32>
    %395 = arith.addf %393, %394 : vector<2x32xf32>
    %396 = math.tanh %395 : vector<2x32xf32>
    %397 = arith.mulf %392, %396 : vector<2x32xf32>
    %398 = tpu.concatenate %97, %157, %217, %277, %337, %397 in 0 : vector<2x32xf32>, vector<2x32xf32>, vector<2x32xf32>, vector<2x32xf32>, vector<2x32xf32>, vector<2x32xf32> -> vector<12x32xf32>
    %cst_126 = arith.constant dense<0.000000e+00> : vector<12x128xf32>
    %399 = tpu.matmul %398, %6, %cst_126 {dimension_numbers = #tpu.dot_dimension_numbers<[1], [0], [0], [1], [0, 0, 1, 1], [], []>} : vector<12x32xf32>, vector<32x128xf32>, vector<12x128xf32> -> vector<12x128xf32>
    %400 = vector.broadcast %13 : vector<1x128xf32> to vector<12x128xf32>
    %401 = arith.addf %399, %400 : vector<12x128xf32>
    %c0_127 = arith.constant 0 : index
    %c0_128 = arith.constant 0 : index
    %402 = vector.load %arg3[%c0_127, %c0_128] : memref<12x128xf32, #tpu.memory_space<vmem>>, vector<12x128xf32>
    tpu.vector_store %arg3[%c0_127, %c0_128], %401 {strides = array<i32>} : memref<12x128xf32, #tpu.memory_space<vmem>>, vector<12x128xf32>,
    return
  }
}

</mosaic_0001>

<llo_original>
// kernel: decoder_forward.1
$region0: #{decoder_forward.1}
  #allocation0 [shape = 'u32[]', space=smem, size = 0x4, offset = 0x4, fixed_abs, tag = 'smem constant byte address 0x4 - core index']
  #allocation1 [shape = 'u32[144,128]{1,0:T(1,128)}', space=vmem, size = 0x12000, scoped, tag = 'internal scratch']
  %s0 = inlined_call_operand.vmem [shape: f32[16,192], index: 0, kind: input, shape index: {}]
  %s1 = inlined_call_operand.vmem [shape: f32[6,2,32], index: 1, kind: input, shape index: {}]
  %s2 = inlined_call_operand.hbm [shape: f32[424,128], index: 2, kind: input, shape index: {}]
  %s3 = inlined_call_operand.vmem [shape: f32[12,128], index: 3, kind: output, shape index: {}]
  %s4 = sld [smem:[#allocation0]]
  $region26: #{decoder_forward.1} parent=0
    _
  %s6 = ssub.s32 1, %s4
  %s7 = scalar_select 0, %s6, %s4
  $region1: #{decoder_forward.1} parent=0
    #allocation2 [shape = 'u8[217088]{0}', space=vmem, size = 0x35000, scoped, tag = 'input window, operand 2, single buffered']
    #allocation3 [shape = 's32[1]{0}', space=sflag, size = 0x4, scoped, tag = 'scoped memory for decoder_forward.1']
    %8 = vsyncpa [#allocation3], 0
    // Predicated region
    $region2: #{decoder_forward.1} parent=1 // pred_check
      _
    $region3: #{decoder_forward.1} parent=1 // pred_check_branch
      %10 = sbr.rel (0) target = $region5
    $region4: #{decoder_forward.1} parent=1 // pred_region
      _
    $region5: #{decoder_forward.1} parent=1 // pred_fallthru
      _
    // Predicated region
    $region6: #{decoder_forward.1} parent=1 // pred_check
      _
    $region7: #{decoder_forward.1} parent=1 // pred_check_branch
      %12 = sbr.rel (0) target = $region9
    $region8: #{decoder_forward.1} parent=1 // pred_region
      _
    $region9: #{decoder_forward.1} parent=1 // pred_fallthru
      _
    // Predicated region
    $region10: #{decoder_forward.1} parent=1 // pred_check
      _
    $region11: #{decoder_forward.1} parent=1 // pred_check_branch
      %14 = sbr.rel (0) target = $region13
    $region12: #{decoder_forward.1} parent=1 // pred_region
      %s16 = ssub.s32 6784, 6784
      %17 = vsyncadd [#allocation3], %s16
      %s18 = sshll.u32 [#allocation2], 4
      %s19 = int_to_ptr.vmem [resolvable:$true] %s18
      %24 = dma.hbm_to_vmem [thread:$0]  %s2, 6784, %s19, [#allocation3], 128, 128, 8
    $region13: #{decoder_forward.1} parent=1 // pred_fallthru
      _
    // Predicated region
    $region14: #{decoder_forward.1} parent=1 // pred_check
      _
    $region15: #{decoder_forward.1} parent=1 // pred_check_branch
      %26 = sbr.rel (0) target = $region17
    $region16: #{decoder_forward.1} parent=1 // pred_region
      %27 = dma.done [#allocation3], 6784
    $region17: #{decoder_forward.1} parent=1 // pred_fallthru
      _
    %v28 = vld [vmem:[#allocation2] sm:$0xff]
    %v29 = vld [vmem:[#allocation2 + $0x8] sm:$0xff]
    %v30 = vld [vmem:[#allocation2 + $0x10] sm:$0xff]
    %v31 = vld [vmem:[#allocation2 + $0x18] sm:$0xff]
    %v32 = vld [vmem:[#allocation2 + $0x20] sm:$0xff]
    %v33 = vld [vmem:[#allocation2 + $0x28] sm:$0xff]
    %v34 = vld [vmem:[#allocation2 + $0x30] sm:$0xff]
    %v35 = vld [vmem:[#allocation2 + $0x38] sm:$0xff]
    %v36 = vld [vmem:[#allocation2 + $0x40] sm:$0xff]
    %v37 = vld [vmem:[#allocation2 + $0x48] sm:$0xff]
    %v38 = vld [vmem:[#allocation2 + $0x50] sm:$0xff]
    %v39 = vld [vmem:[#allocation2 + $0x58] sm:$0xff]
    %v40 = vld [vmem:[#allocation2 + $0x60] sm:$0xff]
    %v41 = vld [vmem:[#allocation2 + $0x68] sm:$0xff]
    %v42 = vld [vmem:[#allocation2 + $0x70] sm:$0xff]
    %v43 = vld [vmem:[#allocation2 + $0x78] sm:$0xff]
    %v44 = vld [vmem:[#allocation2 + $0x80] sm:$0xff]
    %v45 = vld [vmem:[#allocation2 + $0x88] sm:$0xff]
    %v46 = vld [vmem:[#allocation2 + $0x90] sm:$0xff]
    %v47 = vld [vmem:[#allocation2 + $0x98] sm:$0xff]
    %v48 = vld [vmem:[#allocation2 + $0xa0] sm:$0xff]
    %v49 = vld [vmem:[#allocation2 + $0xa8] sm:$0xff]
    %v50 = vld [vmem:[#allocation2 + $0xb0] sm:$0xff]
    %v51 = vld [vmem:[#allocation2 + $0xb8] sm:$0xff]
    %v52 = vld [vmem:[#allocation2 + $0xc0] sm:$0xff]
    %v53 = vld [vmem:[#allocation2 + $0xc8] sm:$0xff]
    %v54 = vld [vmem:[#allocation2 + $0xd0] sm:$0xff]
    %v55 = vld [vmem:[#allocation2 + $0xd8] sm:$0xff]
    %v56 = vld [vmem:[#allocation2 + $0xe0] sm:$0xff]
    %v57 = vld [vmem:[#allocation2 + $0xe8] sm:$0xff]
    %v58 = vld [vmem:[#allocation2 + $0xf0] sm:$0xff]
    %v59 = vld [vmem:[#allocation2 + $0xf8] sm:$0xff]
    %v60 = vld [vmem:[#allocation2 + $0x100] sm:$0xff]
    %v61 = vld [vmem:[#allocation2 + $0x108] sm:$0xff]
    %v62 = vld [vmem:[#allocation2 + $0x110] sm:$0xff]
    %v63 = vld [vmem:[#allocation2 + $0x118] sm:$0xff]
    %v64 = vld [vmem:[#allocation2 + $0x120] sm:$0xff]
    %v65 = vld [vmem:[#allocation2 + $0x128] sm:$0xff]
    %v66 = vld [vmem:[#allocation2 + $0x130] sm:$0xff]
    %v67 = vld [vmem:[#allocation2 + $0x138] sm:$0xff]
    %v68 = vld [vmem:[#allocation2 + $0x140] sm:$0xff]
    %v69 = vld [vmem:[#allocation2 + $0x148] sm:$0xff]
    %v70 = vld [vmem:[#allocation2 + $0x150] sm:$0xff]
    %v71 = vld [vmem:[#allocation2 + $0x158] sm:$0xff]
    %v72 = vld [vmem:[#allocation2 + $0x160] sm:$0xff]
    %v73 = vld [vmem:[#allocation2 + $0x168] sm:$0xff]
    %v74 = vld [vmem:[#allocation2 + $0x170] sm:$0xff]
    %v75 = vld [vmem:[#allocation2 + $0x178] sm:$0xff]
    %v76 = vld [vmem:[#allocation2 + $0x180] sm:$0xff]
    %v77 = vld [vmem:[#allocation2 + $0x188] sm:$0xff]
    %v78 = vld [vmem:[#allocation2 + $0x190] sm:$0xff]
    %v79 = vld [vmem:[#allocation2 + $0x198] sm:$0xff]
    %v80 = vld [vmem:[#allocation2 + $0x1a0] sm:$0x1]
    %v81 = vld [vmem:[#allocation2 + $0x1a1] sm:$0x1]
    %v82 = vld [vmem:[#allocation2 + $0x1a2] sm:$0x1]
    %v83 = vld [vmem:[#allocation2 + $0x1a3] sm:$0x1]
    %v84 = vld [vmem:[#allocation2 + $0x1a4] sm:$0x1]
    %v85 = vld [vmem:[#allocation2 + $0x1a5] sm:$0x1]
    %v86 = vld [vmem:[#allocation2 + $0x1a6] sm:$0x1]
    %v87 = vld [vmem:[%s0] sm:$0xff]
    %v88 = vld [vmem:[%s0 + $0x10] sm:$0xff]
    %v89 = vld [vmem:[%s0 + $0x8] sm:$0xff]
    %v90 = vld [vmem:[%s0 + $0x18] sm:$0xff]
    %v91 = vlaneseq
    %v92 = vshrl.u32 %v91, 7
    %v93 = vsub.s32 0, %v92
    %v94 = vrot.slane %v80, %v93
    %95 = vmatprep.subr.mxu0 0.0
    %96 = vmatpush1.msra.mxu0 %v28
    %97 = vmatprep.subr.mxu0 0.0
    %98 = vmatpush1.msra.mxu0 %v29
    %99 = vmatprep.subr.mxu0 0.0
    %100 = vmatpush1.msra.mxu0 %v30
    %101 = vmatprep.subr.mxu0 0.0
    %102 = vmatpush1.msra.mxu0 %v31
    %103 = vmatprep.subr.mxu0 0.0
    %104 = vmatpush1.msra.mxu0 %v32
    %105 = vmatprep.subr.mxu0 0.0
    %106 = vmatpush1.msra.mxu0 %v33
    %107 = vmatprep.subr.mxu0 0.0
    %108 = vmatpush1.msra.mxu0 %v34
    %109 = vmatprep.subr.mxu0 0.0
    %110 = vmatpush1.msra.mxu0 %v35
    %111 = vmatprep.subr.mxu0 0.0
    %112 = vmatpush1.msra.mxu0 %v36
    %113 = vmatprep.subr.mxu0 0.0
    %114 = vmatpush1.msra.mxu0 %v37
    %115 = vmatprep.subr.mxu0 0.0
    %116 = vmatpush1.msra.mxu0 %v38
    %117 = vmatprep.subr.mxu0 0.0
    %118 = vmatpush1.msra.mxu0 %v39
    %119 = vmatprep.subr.mxu0 0.0
    %120 = vmatpush1.msra.mxu0 %v40
    %121 = vmatprep.subr.mxu0 0.0
    %122 = vmatpush1.msra.mxu0 %v41
    %123 = vmatprep.subr.mxu0 0.0
    %124 = vmatpush1.msra.mxu0 %v42
    %125 = vmatprep.subr.mxu0 0.0
    %126 = vmatpush1.msra.mxu0 %v43
    %127 = vmatprep.subr.mxu0 0.0
    %128 = vmatpush1.msra.mxu0 0.0
    %129 = vmatprep.subr.mxu0 0.0
    %130 = vmatpush1.msra.mxu0 0.0
    %131 = vmatprep.subr.mxu0 0.0
    %132 = vmatpush1.msra.mxu0 0.0
    %133 = vmatprep.subr.mxu0 0.0
    %134 = vmatpush1.msra.mxu0 0.0
    %135 = vmatprep.subr.mxu0 0.0
    %136 = vmatpush1.msra.mxu0 0.0
    %137 = vmatprep.subr.mxu0 0.0
    %138 = vmatpush1.msra.mxu0 0.0
    %139 = vmatprep.subr.mxu0 0.0
    %140 = vmatpush1.msra.mxu0 0.0
    %141 = vmatprep.subr.mxu0 0.0
    %142 = vmatpush1.msra.mxu0 0.0
    %143 = vmatprep.subr.mxu0 0.0
    %144 = vmatpush1.msra.mxu0 0.0
    %145 = vmatprep.subr.mxu0 0.0
    %146 = vmatpush1.msra.mxu0 0.0
    %147 = vmatprep.subr.mxu0 0.0
    %148 = vmatpush1.msra.mxu0 0.0
    %149 = vmatprep.subr.mxu0 0.0
    %150 = vmatpush1.msra.mxu0 0.0
    %151 = vmatprep.subr.mxu0 0.0
    %152 = vmatpush1.msra.mxu0 0.0
    %153 = vmatprep.subr.mxu0 0.0
    %154 = vmatpush1.msra.mxu0 0.0
    %155 = vmatprep.subr.mxu0 0.0
    %156 = vmatpush1.msra.mxu0 0.0
    %157 = vmatprep.subr.mxu0 0.0
    %158 = vmatpush1.msra.mxu0 0.0
    %159 = vmatprep.mubr.f32.mxu0 0.0
    %160 = vmatmul.mubr.f32.gmra.mrb[0].mxu0 %v87
    %v161 = vpop.f32.mrb[0].mxu0
    %v162 = vadd.f32 %v94, %v161
    %v163 = vpop.f32.mrb[0].mxu0
    %164 = vmatprep.mubr.f32.mxu0 0.0
    %165 = vmatmul.mubr.f32.gmra.mrb[0].mxu0 %v88
    %v166 = vpop.f32.mrb[0].mxu0
    %v167 = vadd.f32 %v94, %v166
    %v168 = vpop.f32.mrb[0].mxu0
    %169 = vdwg.mxu0
    %170 = vxpose.xlu0.b32.start [1/16] %v162, 128
    %171 = vxpose.xlu0.b32.cont [2/16] 0.0, 128
    %172 = vxpose.xlu0.b32.cont [3/16] 0.0, 128
    %173 = vxpose.xlu0.b32.cont [4/16] 0.0, 128
    %174 = vxpose.xlu0.b32.cont [5/16] 0.0, 128
    %175 = vxpose.xlu0.b32.cont [6/16] 0.0, 128
    %176 = vxpose.xlu0.b32.cont [7/16] 0.0, 128
    %177 = vxpose.xlu0.b32.cont [8/16] 0.0, 128
    %178 = vxpose.xlu0.b32.cont [9/16] 0.0, 128
    %179 = vxpose.xlu0.b32.cont [10/16] 0.0, 128
    %180 = vxpose.xlu0.b32.cont [11/16] 0.0, 128
    %181 = vxpose.xlu0.b32.cont [12/16] 0.0, 128
    %182 = vxpose.xlu0.b32.cont [13/16] 0.0, 128
    %183 = vxpose.xlu0.b32.cont [14/16] 0.0, 128
    %184 = vxpose.xlu0.b32.cont [15/16] 0.0, 128
    %185 = vxpose.xlu0.b32.end [16/16] 0.0, 128
    %v186 = vpop.trf.xlu0
    %v187 = vpop.trf.xlu0
    %v188 = vpop.trf.xlu0
    %v189 = vpop.trf.xlu0
    %v190 = vpop.trf.xlu0
    %v191 = vpop.trf.xlu0
    %v192 = vpop.trf.xlu0
    %v193 = vpop.trf.xlu0
    %v194 = vpop.trf.xlu0
    %v195 = vpop.trf.xlu0
    %v196 = vpop.trf.xlu0
    %v197 = vpop.trf.xlu0
    %v198 = vpop.trf.xlu0
    %v199 = vpop.trf.xlu0
    %v200 = vpop.trf.xlu0
    %v201 = vpop.trf.xlu0
    %202 = vxpose.xlu0.b32.start [1/16] %v167, 128
    %203 = vxpose.xlu0.b32.cont [2/16] 0.0, 128
    %204 = vxpose.xlu0.b32.cont [3/16] 0.0, 128
    %205 = vxpose.xlu0.b32.cont [4/16] 0.0, 128
    %206 = vxpose.xlu0.b32.cont [5/16] 0.0, 128
    %207 = vxpose.xlu0.b32.cont [6/16] 0.0, 128
    %208 = vxpose.xlu0.b32.cont [7/16] 0.0, 128
    %209 = vxpose.xlu0.b32.cont [8/16] 0.0, 128
    %210 = vxpose.xlu0.b32.cont [9/16] 0.0, 128
    %211 = vxpose.xlu0.b32.cont [10/16] 0.0, 128
    %212 = vxpose.xlu0.b32.cont [11/16] 0.0, 128
    %213 = vxpose.xlu0.b32.cont [12/16] 0.0, 128
    %214 = vxpose.xlu0.b32.cont [13/16] 0.0, 128
    %215 = vxpose.xlu0.b32.cont [14/16] 0.0, 128
    %216 = vxpose.xlu0.b32.cont [15/16] 0.0, 128
    %217 = vxpose.xlu0.b32.end [16/16] 0.0, 128
    %v218 = vpop.trf.xlu0
    %v219 = vpop.trf.xlu0
    %v220 = vpop.trf.xlu0
    %v221 = vpop.trf.xlu0
    %v222 = vpop.trf.xlu0
    %v223 = vpop.trf.xlu0
    %v224 = vpop.trf.xlu0
    %v225 = vpop.trf.xlu0
    %v226 = vpop.trf.xlu0
    %v227 = vpop.trf.xlu0
    %v228 = vpop.trf.xlu0
    %v229 = vpop.trf.xlu0
    %v230 = vpop.trf.xlu0
    %v231 = vpop.trf.xlu0
    %v232 = vpop.trf.xlu0
    %v233 = vpop.trf.xlu0
    %v234 = vlaneseq
    %v235 = vshrl.u32 %v234, 7
    %v236 = vsub.s32 0, %v235
    %v237 = vrot.slane %v81, %v236
    %vm238 = vcmask 523264
    %v240 = vsel %vm238, %v89, 0
    %v243 = vsel %vm238, %v90, 0
    %245 = vmatprep.subr.mxu0 0.0
    %246 = vmatpush1.msra.mxu0 %v44
    %247 = vmatprep.subr.mxu0 0.0
    %248 = vmatpush1.msra.mxu0 %v45
    %249 = vmatprep.subr.mxu0 0.0
    %250 = vmatpush1.msra.mxu0 %v46
    %251 = vmatprep.subr.mxu0 0.0
    %252 = vmatpush1.msra.mxu0 %v47
    %253 = vmatprep.subr.mxu0 0.0
    %254 = vmatpush1.msra.mxu0 %v48
    %255 = vmatprep.subr.mxu0 0.0
    %256 = vmatpush1.msra.mxu0 %v49
    %257 = vmatprep.subr.mxu0 0.0
    %258 = vmatpush1.msra.mxu0 %v50
    %259 = vmatprep.subr.mxu0 0.0
    %260 = vmatpush1.msra.mxu0 %v51
    %261 = vmatprep.subr.mxu0 0.0
    %262 = vmatpush1.msra.mxu0 0.0
    %263 = vmatprep.subr.mxu0 0.0
    %264 = vmatpush1.msra.mxu0 0.0
    %265 = vmatprep.subr.mxu0 0.0
    %266 = vmatpush1.msra.mxu0 0.0
    %267 = vmatprep.subr.mxu0 0.0
    %268 = vmatpush1.msra.mxu0 0.0
    %269 = vmatprep.subr.mxu0 0.0
    %270 = vmatpush1.msra.mxu0 0.0
    %271 = vmatprep.subr.mxu0 0.0
    %272 = vmatpush1.msra.mxu0 0.0
    %273 = vmatprep.subr.mxu0 0.0
    %274 = vmatpush1.msra.mxu0 0.0
    %275 = vmatprep.subr.mxu0 0.0
    %276 = vmatpush1.msra.mxu0 0.0
    %277 = vmatprep.subr.mxu0 0.0
    %278 = vmatpush1.msra.mxu0 0.0
    %279 = vmatprep.subr.mxu0 0.0
    %280 = vmatpush1.msra.mxu0 0.0
    %281 = vmatprep.subr.mxu0 0.0
    %282 = vmatpush1.msra.mxu0 0.0
    %283 = vmatprep.subr.mxu0 0.0
    %284 = vmatpush1.msra.mxu0 0.0
    %285 = vmatprep.subr.mxu0 0.0
    %286 = vmatpush1.msra.mxu0 0.0
    %287 = vmatprep.subr.mxu0 0.0
    %288 = vmatpush1.msra.mxu0 0.0
    %289 = vmatprep.subr.mxu0 0.0
    %290 = vmatpush1.msra.mxu0 0.0
    %291 = vmatprep.subr.mxu0 0.0
    %292 = vmatpush1.msra.mxu0 0.0
    %293 = vmatprep.subr.mxu0 0.0
    %294 = vmatpush1.msra.mxu0 0.0
    %295 = vmatprep.subr.mxu0 0.0
    %296 = vmatpush1.msra.mxu0 0.0
    %297 = vmatprep.subr.mxu0 0.0
    %298 = vmatpush1.msra.mxu0 0.0
    %299 = vmatprep.subr.mxu0 0.0
    %300 = vmatpush1.msra.mxu0 0.0
    %301 = vmatprep.subr.mxu0 0.0
    %302 = vmatpush1.msra.mxu0 0.0
    %303 = vmatprep.subr.mxu0 0.0
    %304 = vmatpush1.msra.mxu0 0.0
    %305 = vmatprep.subr.mxu0 0.0
    %306 = vmatpush1.msra.mxu0 0.0
    %307 = vmatprep.subr.mxu0 0.0
    %308 = vmatpush1.msra.mxu0 0.0
    %309 = vmatprep.mubr.f32.mxu0 0.0
    %310 = vmatmul.mubr.f32.gmra.mrb[0].mxu0 %v240
    %v311 = vpop.f32.mrb[0].mxu0
    %v312 = vadd.f32 %v237, %v311
    %v313 = vpop.f32.mrb[0].mxu0
    %314 = vmatprep.mubr.f32.mxu0 0.0
    %315 = vmatmul.mubr.f32.gmra.mrb[0].mxu0 %v243
    %v316 = vpop.f32.mrb[0].mxu0
    %v317 = vadd.f32 %v237, %v316
    %v318 = vpop.f32.mrb[0].mxu0
    %319 = vdwg.mxu0
    %vm320 = vcmask 64512
    %v321 = vsel %vm320, %v186, 0.0
    %322 = vadd.xlane.f32.xlu0 %v321
    %v323 = vpop.xlane.xlu0 %322
    %v324 = vsel %vm320, %v187, 0.0
    %325 = vadd.xlane.f32.xlu0 %v324
    %v326 = vpop.xlane.xlu0 %325
    %v327 = vsel %vm320, %v188, 0.0
    %328 = vadd.xlane.f32.xlu0 %v327
    %v329 = vpop.xlane.xlu0 %328
    %v330 = vsel %vm320, %v189, 0.0
    %331 = vadd.xlane.f32.xlu0 %v330
    %v332 = vpop.xlane.xlu0 %331
    %v333 = vsel %vm320, %v218, 0.0
    %334 = vadd.xlane.f32.xlu0 %v333
    %v335 = vpop.xlane.xlu0 %334
    %v336 = vsel %vm320, %v219, 0.0
    %337 = vadd.xlane.f32.xlu0 %v336
    %v338 = vpop.xlane.xlu0 %337
    %v339 = vsel %vm320, %v220, 0.0
    %340 = vadd.xlane.f32.xlu0 %v339
    %v341 = vpop.xlane.xlu0 %340
    %v342 = vsel %vm320, %v221, 0.0
    %343 = vadd.xlane.f32.xlu0 %v342
    %v344 = vpop.xlane.xlu0 %343
    %v345 = vrcp.pop 8.0
    %v346 = vmul.f32 %v323, %v345
    %v347 = vmul.f32 %v326, %v345
    %v348 = vmul.f32 %v329, %v345
    %v349 = vmul.f32 %v332, %v345
    %v350 = vmul.f32 %v335, %v345
    %v351 = vmul.f32 %v338, %v345
    %v352 = vmul.f32 %v341, %v345
    %v353 = vmul.f32 %v344, %v345
    %v354 = vlaneseq
    %v355 = vshrl.u32 %v354, 7
    %v356 = vsub.s32 0, %v355
    %v357 = vrot.slane %v83, %v356
    %v366 = vlaneseq
    %v367 = vand.u32 %v366, 127
    %v368 = vlaneseq
    %v369 = vshrl.u32 %v368, 7
    %v370 = vsub.s32 %v367, %v369
    %v371 = vrot.slane %v346, %v370
    %v372 = vadd.s32 %v367, 4294967288
    %v373 = vlaneseq
    %v374 = vshrl.u32 %v373, 7
    %v375 = vsub.s32 %v372, %v374
    %v376 = vrot.slane %v347, %v375
    %vm377 = vcmask 130112
    %v378 = vsel %vm377, %v376, %v371
    %v379 = vadd.s32 %v367, 4294967280
    %v380 = vlaneseq
    %v381 = vshrl.u32 %v380, 7
    %v382 = vsub.s32 %v379, %v381
    %v383 = vrot.slane %v348, %v382
    %vm384 = vcmask 195712
    %v385 = vsel %vm384, %v383, %v378
    %v386 = vadd.s32 %v367, 4294967272
    %v387 = vlaneseq
    %v388 = vshrl.u32 %v387, 7
    %v389 = vsub.s32 %v386, %v388
    %v390 = vrot.slane %v349, %v389
    %vm391 = vcmask 261312
    %v392 = vsel %vm391, %v390, %v385
    %v393 = vlaneseq
    %v394 = vshrl.u32 %v393, 7
    %v395 = vsub.s32 %v367, %v394
    %v396 = vrot.slane %v350, %v395
    %v397 = vlaneseq
    %v398 = vshrl.u32 %v397, 7
    %v399 = vsub.s32 %v372, %v398
    %v400 = vrot.slane %v351, %v399
    %v401 = vsel %vm377, %v400, %v396
    %v402 = vlaneseq
    %v403 = vshrl.u32 %v402, 7
    %v404 = vsub.s32 %v379, %v403
    %v405 = vrot.slane %v352, %v404
    %v406 = vsel %vm384, %v405, %v401
    %v407 = vlaneseq
    %v408 = vshrl.u32 %v407, 7
    %v409 = vsub.s32 %v386, %v408
    %v410 = vrot.slane %v353, %v409
    %v411 = vsel %vm391, %v410, %v406
    %vm412 = vcmask 1041409
    %v413 = vsel %vm412, %v411, %v392
    %vm414 = vcmask 261120
    %v415 = vsel %vm414, %v413, 0
    %417 = vmatprep.subr.mxu0 0.0
    %418 = vmatpush1.msra.mxu0 %v56
    %419 = vmatprep.subr.mxu0 0.0
    %420 = vmatpush1.msra.mxu0 %v57
    %421 = vmatprep.subr.mxu0 0.0
    %422 = vmatpush1.msra.mxu0 %v58
    %423 = vmatprep.subr.mxu0 0.0
    %424 = vmatpush1.msra.mxu0 %v59
    %425 = vmatprep.subr.mxu0 0.0
    %426 = vmatpush1.msra.mxu0 0.0
    %427 = vmatprep.subr.mxu0 0.0
    %428 = vmatpush1.msra.mxu0 0.0
    %429 = vmatprep.subr.mxu0 0.0
    %430 = vmatpush1.msra.mxu0 0.0
    %431 = vmatprep.subr.mxu0 0.0
    %432 = vmatpush1.msra.mxu0 0.0
    %433 = vmatprep.subr.mxu0 0.0
    %434 = vmatpush1.msra.mxu0 0.0
    %435 = vmatprep.subr.mxu0 0.0
    %436 = vmatpush1.msra.mxu0 0.0
    %437 = vmatprep.subr.mxu0 0.0
    %438 = vmatpush1.msra.mxu0 0.0
    %439 = vmatprep.subr.mxu0 0.0
    %440 = vmatpush1.msra.mxu0 0.0
    %441 = vmatprep.subr.mxu0 0.0
    %442 = vmatpush1.msra.mxu0 0.0
    %443 = vmatprep.subr.mxu0 0.0
    %444 = vmatpush1.msra.mxu0 0.0
    %445 = vmatprep.subr.mxu0 0.0
    %446 = vmatpush1.msra.mxu0 0.0
    %447 = vmatprep.subr.mxu0 0.0
    %448 = vmatpush1.msra.mxu0 0.0
    %449 = vmatprep.subr.mxu0 0.0
    %450 = vmatpush1.msra.mxu0 0.0
    %451 = vmatprep.subr.mxu0 0.0
    %452 = vmatpush1.msra.mxu0 0.0
    %453 = vmatprep.subr.mxu0 0.0
    %454 = vmatpush1.msra.mxu0 0.0
    %455 = vmatprep.subr.mxu0 0.0
    %456 = vmatpush1.msra.mxu0 0.0
    %457 = vmatprep.subr.mxu0 0.0
    %458 = vmatpush1.msra.mxu0 0.0
    %459 = vmatprep.subr.mxu0 0.0
    %460 = vmatpush1.msra.mxu0 0.0
    %461 = vmatprep.subr.mxu0 0.0
    %462 = vmatpush1.msra.mxu0 0.0
    %463 = vmatprep.subr.mxu0 0.0
    %464 = vmatpush1.msra.mxu0 0.0
    %465 = vmatprep.subr.mxu0 0.0
    %466 = vmatpush1.msra.mxu0 0.0
    %467 = vmatprep.subr.mxu0 0.0
    %468 = vmatpush1.msra.mxu0 0.0
    %469 = vmatprep.subr.mxu0 0.0
    %470 = vmatpush1.msra.mxu0 0.0
    %471 = vmatprep.subr.mxu0 0.0
    %472 = vmatpush1.msra.mxu0 0.0
    %473 = vmatprep.subr.mxu0 0.0
    %474 = vmatpush1.msra.mxu0 0.0
    %475 = vmatprep.subr.mxu0 0.0
    %476 = vmatpush1.msra.mxu0 0.0
    %477 = vmatprep.subr.mxu0 0.0
    %478 = vmatpush1.msra.mxu0 0.0
    %479 = vmatprep.subr.mxu0 0.0
    %480 = vmatpush1.msra.mxu0 0.0
    %481 = vmatprep.mubr.f32.mxu0 0.0
    %482 = vmatmul.mubr.f32.gmra.mrb[0].mxu0 %v415
    %v483 = vpop.f32.mrb[0].mxu0
    %v484 = vadd.f32 %v357, %v483
    %v485 = vpop.f32.mrb[0].mxu0
    %486 = vdwg.mxu0
    %v487 = vtanh.pop %v484
    %v488 = vlaneseq
    %v489 = vshrl.u32 %v488, 7
    %v490 = vsub.s32 0, %v489
    %v491 = vrot.slane %v84, %v490
    %v493 = vsel %vm238, %v487, 0
    %495 = vmatprep.subr.mxu0 0.0
    %496 = vmatpush1.msra.mxu0 %v60
    %497 = vmatprep.subr.mxu0 0.0
    %498 = vmatpush1.msra.mxu0 %v61
    %499 = vmatprep.subr.mxu0 0.0
    %500 = vmatpush1.msra.mxu0 %v62
    %501 = vmatprep.subr.mxu0 0.0
    %502 = vmatpush1.msra.mxu0 %v63
    %503 = vmatprep.subr.mxu0 0.0
    %504 = vmatpush1.msra.mxu0 %v64
    %505 = vmatprep.subr.mxu0 0.0
    %506 = vmatpush1.msra.mxu0 %v65
    %507 = vmatprep.subr.mxu0 0.0
    %508 = vmatpush1.msra.mxu0 %v66
    %509 = vmatprep.subr.mxu0 0.0
    %510 = vmatpush1.msra.mxu0 %v67
    %511 = vmatprep.subr.mxu0 0.0
    %512 = vmatpush1.msra.mxu0 0.0
    %513 = vmatprep.subr.mxu0 0.0
    %514 = vmatpush1.msra.mxu0 0.0
    %515 = vmatprep.subr.mxu0 0.0
    %516 = vmatpush1.msra.mxu0 0.0
    %517 = vmatprep.subr.mxu0 0.0
    %518 = vmatpush1.msra.mxu0 0.0
    %519 = vmatprep.subr.mxu0 0.0
    %520 = vmatpush1.msra.mxu0 0.0
    %521 = vmatprep.subr.mxu0 0.0
    %522 = vmatpush1.msra.mxu0 0.0
    %523 = vmatprep.subr.mxu0 0.0
    %524 = vmatpush1.msra.mxu0 0.0
    %525 = vmatprep.subr.mxu0 0.0
    %526 = vmatpush1.msra.mxu0 0.0
    %527 = vmatprep.subr.mxu0 0.0
    %528 = vmatpush1.msra.mxu0 0.0
    %529 = vmatprep.subr.mxu0 0.0
    %530 = vmatpush1.msra.mxu0 0.0
    %531 = vmatprep.subr.mxu0 0.0
    %532 = vmatpush1.msra.mxu0 0.0
    %533 = vmatprep.subr.mxu0 0.0
    %534 = vmatpush1.msra.mxu0 0.0
    %535 = vmatprep.subr.mxu0 0.0
    %536 = vmatpush1.msra.mxu0 0.0
    %537 = vmatprep.subr.mxu0 0.0
    %538 = vmatpush1.msra.mxu0 0.0
    %539 = vmatprep.subr.mxu0 0.0
    %540 = vmatpush1.msra.mxu0 0.0
    %541 = vmatprep.subr.mxu0 0.0
    %542 = vmatpush1.msra.mxu0 0.0
    %543 = vmatprep.subr.mxu0 0.0
    %544 = vmatpush1.msra.mxu0 0.0
    %545 = vmatprep.subr.mxu0 0.0
    %546 = vmatpush1.msra.mxu0 0.0
    %547 = vmatprep.subr.mxu0 0.0
    %548 = vmatpush1.msra.mxu0 0.0
    %549 = vmatprep.subr.mxu0 0.0
    %550 = vmatpush1.msra.mxu0 0.0
    %551 = vmatprep.subr.mxu0 0.0
    %552 = vmatpush1.msra.mxu0 0.0
    %553 = vmatprep.subr.mxu0 0.0
    %554 = vmatpush1.msra.mxu0 0.0
    %555 = vmatprep.subr.mxu0 0.0
    %556 = vmatpush1.msra.mxu0 0.0
    %557 = vmatprep.subr.mxu0 0.0
    %558 = vmatpush1.msra.mxu0 0.0
    %559 = vmatprep.mubr.f32.mxu0 0.0
    %560 = vmatmul.mubr.f32.gmra.mrb[0].mxu0 %v493
    %v561 = vpop.f32.mrb[0].mxu0
    %v562 = vadd.f32 %v491, %v561
    %v563 = vpop.f32.mrb[0].mxu0
    %564 = vdwg.mxu0
    %v565 = vtanh.pop %v562
    %v566 = vtanh.pop %v565
    %v568 = vsel %vm414, %v566, 0
    %570 = vmatprep.subr.mxu0 0.0
    %571 = vmatpush1.msra.mxu0 %v52
    %572 = vmatprep.subr.mxu0 0.0
    %573 = vmatpush1.msra.mxu0 %v53
    %574 = vmatprep.subr.mxu0 0.0
    %575 = vmatpush1.msra.mxu0 %v54
    %576 = vmatprep.subr.mxu0 0.0
    %577 = vmatpush1.msra.mxu0 %v55
    %578 = vmatprep.subr.mxu0 0.0
    %579 = vmatpush1.msra.mxu0 0.0
    %580 = vmatprep.subr.mxu0 0.0
    %581 = vmatpush1.msra.mxu0 0.0
    %582 = vmatprep.subr.mxu0 0.0
    %583 = vmatpush1.msra.mxu0 0.0
    %584 = vmatprep.subr.mxu0 0.0
    %585 = vmatpush1.msra.mxu0 0.0
    %586 = vmatprep.subr.mxu0 0.0
    %587 = vmatpush1.msra.mxu0 0.0
    %588 = vmatprep.subr.mxu0 0.0
    %589 = vmatpush1.msra.mxu0 0.0
    %590 = vmatprep.subr.mxu0 0.0
    %591 = vmatpush1.msra.mxu0 0.0
    %592 = vmatprep.subr.mxu0 0.0
    %593 = vmatpush1.msra.mxu0 0.0
    %594 = vmatprep.subr.mxu0 0.0
    %595 = vmatpush1.msra.mxu0 0.0
    %596 = vmatprep.subr.mxu0 0.0
    %597 = vmatpush1.msra.mxu0 0.0
    %598 = vmatprep.subr.mxu0 0.0
    %599 = vmatpush1.msra.mxu0 0.0
    %600 = vmatprep.subr.mxu0 0.0
    %601 = vmatpush1.msra.mxu0 0.0
    %602 = vmatprep.subr.mxu0 0.0
    %603 = vmatpush1.msra.mxu0 0.0
    %604 = vmatprep.subr.mxu0 0.0
    %605 = vmatpush1.msra.mxu0 0.0
    %606 = vmatprep.subr.mxu0 0.0
    %607 = vmatpush1.msra.mxu0 0.0
    %608 = vmatprep.subr.mxu0 0.0
    %609 = vmatpush1.msra.mxu0 0.0
    %610 = vmatprep.subr.mxu0 0.0
    %611 = vmatpush1.msra.mxu0 0.0
    %612 = vmatprep.subr.mxu0 0.0
    %613 = vmatpush1.msra.mxu0 0.0
    %614 = vmatprep.subr.mxu0 0.0
    %615 = vmatpush1.msra.mxu0 0.0
    %616 = vmatprep.subr.mxu0 0.0
    %617 = vmatpush1.msra.mxu0 0.0
    %618 = vmatprep.subr.mxu0 0.0
    %619 = vmatpush1.msra.mxu0 0.0
    %620 = vmatprep.subr.mxu0 0.0
    %621 = vmatpush1.msra.mxu0 0.0
    %622 = vmatprep.subr.mxu0 0.0
    %623 = vmatpush1.msra.mxu0 0.0
    %624 = vmatprep.subr.mxu0 0.0
    %625 = vmatpush1.msra.mxu0 0.0
    %626 = vmatprep.subr.mxu0 0.0
    %627 = vmatpush1.msra.mxu0 0.0
    %628 = vmatprep.subr.mxu0 0.0
    %629 = vmatpush1.msra.mxu0 0.0
    %630 = vmatprep.subr.mxu0 0.0
    %631 = vmatpush1.msra.mxu0 0.0
    %632 = vmatprep.subr.mxu0 0.0
    %633 = vmatpush1.msra.mxu0 0.0
    %634 = vmatprep.mubr.f32.mxu0 0.0
    %635 = vmatmul.mubr.f32.gmra.mrb[0].mxu0 %v568
    %v636 = vpop.f32.mrb[0].mxu0
    %v637 = vadd.f32 0.0, %v636
    %v638 = vpop.f32.mrb[0].mxu0
    %639 = vdwg.mxu0
    %v641 = vrot.slane %v637, 6
    %v643 = vrot.slane %v637, 4
    %v645 = vrot.slane %v637, 2
    %vm647 = vcmask 1041408
    %v648 = vsel %vm647, %v637, %v641
    %vm649 = vcmask 1043456
    %v650 = vsel %vm649, %v648, %v643
    %vm651 = vcmask 1045504
    %v652 = vsel %vm651, %v650, %v645
    %v653 = vadd.f32 %v652, %v312
    %v654 = vadd.f32 %v652, %v317
    %v655 = vtanh.pop %v653
    %v656 = vtanh.pop %v654
    %v657 = vlaneseq
    %v658 = vshrl.u32 %v657, 7
    %v659 = vsub.s32 0, %v658
    %v660 = vrot.slane %v82, %v659
    %v661 = vmul.f32 %v655, %v660
    %v662 = vmul.f32 %v656, %v660
    %v663 = vsel %vm414, %v661, 0.0
    %664 = vadd.xlane.f32.xlu0 %v663
    %v665 = vpop.xlane.xlu0 %664
    %v666 = vsel %vm414, %v662, 0.0
    %667 = vadd.xlane.f32.xlu0 %v666
    %v668 = vpop.xlane.xlu0 %667
    %v671 = vlaneseq
    %v672 = vshrl.u32 %v671, 7
    %v673 = vsub.s32 %v367, %v672
    %v674 = vrot.slane %v665, %v673
    %v675 = vlaneseq
    %v676 = vshrl.u32 %v675, 7
    %v677 = vsub.s32 %v367, %v676
    %v678 = vrot.slane %v668, %v677
    %v679 = vsel %vm412, %v678, %v674
    %vm681 = vcmask 58368
    %v682 = vsel %vm681, %v679, -inf
    %683 = vmax.xlane.f32.xlu0 %v682
    %v684 = vpop.xlane.xlu0 %683
    %v686 = vlaneseq
    %v687 = vshrl.u32 %v686, 7
    %v688 = vsub.s32 0, %v687
    %v689 = vrot.slane %v684, %v688
    %v690 = vlaneseq
    %v691 = vshrl.u32 %v690, 7
    %v692 = vsub.s32 1, %v691
    %v693 = vrot.slane %v684, %v692
    %v696 = vsub.f32 %v665, %v689
    %v697 = vsub.f32 %v668, %v693
    %v698 = vmul.f32 %v696, 1.442695
    %v699 = vpow.pop %v698
    %v700 = vmul.f32 %v697, 1.442695
    %v701 = vpow.pop %v700
    %704 = vset.pattern.permute.xlu0 0
    %705 = vperm.xlu0 %704, %v699
    %v706 = vpop.permute.xlu0 %705
    %707 = vset.pattern.permute.xlu0 0
    %708 = vperm.xlu0 %707, %v701
    %v709 = vpop.permute.xlu0 %708
    %v710 = vlaneseq
    %v711 = vshrl.u32 %v710, 7
    %v712 = vsub.s32 %v367, %v711
    %v713 = vrot.slane %v706, %v712
    %v714 = vlaneseq
    %v715 = vshrl.u32 %v714, 7
    %v716 = vsub.s32 %v367, %v715
    %v717 = vrot.slane %v709, %v716
    %v718 = vsel %vm412, %v717, %v713
    %v720 = vsel %vm681, %v718, 0.0
    %721 = vadd.xlane.f32.xlu0 %v720
    %v722 = vpop.xlane.xlu0 %721
    %v724 = vlaneseq
    %v725 = vshrl.u32 %v724, 7
    %v726 = vsub.s32 0, %v725
    %v727 = vrot.slane %v722, %v726
    %v728 = vlaneseq
    %v729 = vshrl.u32 %v728, 7
    %v730 = vsub.s32 1, %v729
    %v731 = vrot.slane %v722, %v730
    %v734 = vrcp.pop %v727
    %v735 = vmul.f32 %v699, %v734
    %v736 = vrcp.pop %v731
    %v737 = vmul.f32 %v701, %v736
    %v746 = vlaneseq
    %v747 = vshrl.u32 %v746, 7
    %v748 = vsub.s32 0, %v747
    %v749 = vrot.slane %v186, %v748
    %751 = vbcast.lane.b32.xlu0 %v749, 256
    %v752 = vpop.permute.xlu0 %751
    %v753 = vlaneseq
    %v754 = vshrl.u32 %v753, 7
    %v755 = vsub.s32 1, %v754
    %v756 = vrot.slane %v186, %v755
    %758 = vbcast.lane.b32.xlu0 %v756, 256
    %v759 = vpop.permute.xlu0 %758
    %v760 = vlaneseq
    %v761 = vshrl.u32 %v760, 7
    %v762 = vsub.s32 2, %v761
    %v763 = vrot.slane %v186, %v762
    %765 = vbcast.lane.b32.xlu0 %v763, 256
    %v766 = vpop.permute.xlu0 %765
    %v767 = vlaneseq
    %v768 = vshrl.u32 %v767, 7
    %v769 = vsub.s32 3, %v768
    %v770 = vrot.slane %v186, %v769
    %772 = vbcast.lane.b32.xlu0 %v770, 256
    %v773 = vpop.permute.xlu0 %772
    %v774 = vlaneseq
    %v775 = vshrl.u32 %v774, 7
    %v776 = vsub.s32 4, %v775
    %v777 = vrot.slane %v186, %v776
    %779 = vbcast.lane.b32.xlu0 %v777, 256
    %v780 = vpop.permute.xlu0 %779
    %v781 = vlaneseq
    %v782 = vshrl.u32 %v781, 7
    %v783 = vsub.s32 5, %v782
    %v784 = vrot.slane %v186, %v783
    %786 = vbcast.lane.b32.xlu0 %v784, 256
    %v787 = vpop.permute.xlu0 %786
    %v788 = vlaneseq
    %v789 = vshrl.u32 %v788, 7
    %v790 = vsub.s32 6, %v789
    %v791 = vrot.slane %v186, %v790
    %793 = vbcast.lane.b32.xlu0 %v791, 256
    %v794 = vpop.permute.xlu0 %793
    %v795 = vlaneseq
    %v796 = vshrl.u32 %v795, 7
    %v797 = vsub.s32 7, %v796
    %v798 = vrot.slane %v186, %v797
    %800 = vbcast.lane.b32.xlu0 %v798, 256
    %v801 = vpop.permute.xlu0 %800
    %v802 = vlaneseq
    %v803 = vshrl.u32 %v802, 7
    %v804 = vsub.s32 0, %v803
    %v805 = vrot.slane %v187, %v804
    %807 = vbcast.lane.b32.xlu0 %v805, 256
    %v808 = vpop.permute.xlu0 %807
    %v809 = vlaneseq
    %v810 = vshrl.u32 %v809, 7
    %v811 = vsub.s32 1, %v810
    %v812 = vrot.slane %v187, %v811
    %814 = vbcast.lane.b32.xlu0 %v812, 256
    %v815 = vpop.permute.xlu0 %814
    %v816 = vlaneseq
    %v817 = vshrl.u32 %v816, 7
    %v818 = vsub.s32 2, %v817
    %v819 = vrot.slane %v187, %v818
    %821 = vbcast.lane.b32.xlu0 %v819, 256
    %v822 = vpop.permute.xlu0 %821
    %v823 = vlaneseq
    %v824 = vshrl.u32 %v823, 7
    %v825 = vsub.s32 3, %v824
    %v826 = vrot.slane %v187, %v825
    %828 = vbcast.lane.b32.xlu0 %v826, 256
    %v829 = vpop.permute.xlu0 %828
    %v830 = vlaneseq
    %v831 = vshrl.u32 %v830, 7
    %v832 = vsub.s32 4, %v831
    %v833 = vrot.slane %v187, %v832
    %835 = vbcast.lane.b32.xlu0 %v833, 256
    %v836 = vpop.permute.xlu0 %835
    %v837 = vlaneseq
    %v838 = vshrl.u32 %v837, 7
    %v839 = vsub.s32 5, %v838
    %v840 = vrot.slane %v187, %v839
    %842 = vbcast.lane.b32.xlu0 %v840, 256
    %v843 = vpop.permute.xlu0 %842
    %v844 = vlaneseq
    %v845 = vshrl.u32 %v844, 7
    %v846 = vsub.s32 6, %v845
    %v847 = vrot.slane %v187, %v846
    %849 = vbcast.lane.b32.xlu0 %v847, 256
    %v850 = vpop.permute.xlu0 %849
    %v851 = vlaneseq
    %v852 = vshrl.u32 %v851, 7
    %v853 = vsub.s32 7, %v852
    %v854 = vrot.slane %v187, %v853
    %856 = vbcast.lane.b32.xlu0 %v854, 256
    %v857 = vpop.permute.xlu0 %856
    %v858 = vlaneseq
    %v859 = vshrl.u32 %v858, 7
    %v860 = vsub.s32 0, %v859
    %v861 = vrot.slane %v188, %v860
    %863 = vbcast.lane.b32.xlu0 %v861, 256
    %v864 = vpop.permute.xlu0 %863
    %v865 = vlaneseq
    %v866 = vshrl.u32 %v865, 7
    %v867 = vsub.s32 1, %v866
    %v868 = vrot.slane %v188, %v867
    %870 = vbcast.lane.b32.xlu0 %v868, 256
    %v871 = vpop.permute.xlu0 %870
    %v872 = vlaneseq
    %v873 = vshrl.u32 %v872, 7
    %v874 = vsub.s32 2, %v873
    %v875 = vrot.slane %v188, %v874
    %877 = vbcast.lane.b32.xlu0 %v875, 256
    %v878 = vpop.permute.xlu0 %877
    %v879 = vlaneseq
    %v880 = vshrl.u32 %v879, 7
    %v881 = vsub.s32 3, %v880
    %v882 = vrot.slane %v188, %v881
    %884 = vbcast.lane.b32.xlu0 %v882, 256
    %v885 = vpop.permute.xlu0 %884
    %v886 = vlaneseq
    %v887 = vshrl.u32 %v886, 7
    %v888 = vsub.s32 4, %v887
    %v889 = vrot.slane %v188, %v888
    %891 = vbcast.lane.b32.xlu0 %v889, 256
    %v892 = vpop.permute.xlu0 %891
    %v893 = vlaneseq
    %v894 = vshrl.u32 %v893, 7
    %v895 = vsub.s32 5, %v894
    %v896 = vrot.slane %v188, %v895
    %898 = vbcast.lane.b32.xlu0 %v896, 256
    %v899 = vpop.permute.xlu0 %898
    %v900 = vlaneseq
    %v901 = vshrl.u32 %v900, 7
    %v902 = vsub.s32 6, %v901
    %v903 = vrot.slane %v188, %v902
    %905 = vbcast.lane.b32.xlu0 %v903, 256
    %v906 = vpop.permute.xlu0 %905
    %v907 = vlaneseq
    %v908 = vshrl.u32 %v907, 7
    %v909 = vsub.s32 7, %v908
    %v910 = vrot.slane %v188, %v909
    %912 = vbcast.lane.b32.xlu0 %v910, 256
    %v913 = vpop.permute.xlu0 %912
    %v914 = vlaneseq
    %v915 = vshrl.u32 %v914, 7
    %v916 = vsub.s32 0, %v915
    %v917 = vrot.slane %v189, %v916
    %919 = vbcast.lane.b32.xlu0 %v917, 256
    %v920 = vpop.permute.xlu0 %919
    %v921 = vlaneseq
    %v922 = vshrl.u32 %v921, 7
    %v923 = vsub.s32 1, %v922
    %v924 = vrot.slane %v189, %v923
    %926 = vbcast.lane.b32.xlu0 %v924, 256
    %v927 = vpop.permute.xlu0 %926
    %v928 = vlaneseq
    %v929 = vshrl.u32 %v928, 7
    %v930 = vsub.s32 2, %v929
    %v931 = vrot.slane %v189, %v930
    %933 = vbcast.lane.b32.xlu0 %v931, 256
    %v934 = vpop.permute.xlu0 %933
    %v935 = vlaneseq
    %v936 = vshrl.u32 %v935, 7
    %v937 = vsub.s32 3, %v936
    %v938 = vrot.slane %v189, %v937
    %940 = vbcast.lane.b32.xlu0 %v938, 256
    %v941 = vpop.permute.xlu0 %940
    %v942 = vlaneseq
    %v943 = vshrl.u32 %v942, 7
    %v944 = vsub.s32 4, %v943
    %v945 = vrot.slane %v189, %v944
    %947 = vbcast.lane.b32.xlu0 %v945, 256
    %v948 = vpop.permute.xlu0 %947
    %v949 = vlaneseq
    %v950 = vshrl.u32 %v949, 7
    %v951 = vsub.s32 5, %v950
    %v952 = vrot.slane %v189, %v951
    %954 = vbcast.lane.b32.xlu0 %v952, 256
    %v955 = vpop.permute.xlu0 %954
    %v956 = vlaneseq
    %v957 = vshrl.u32 %v956, 7
    %v958 = vsub.s32 6, %v957
    %v959 = vrot.slane %v189, %v958
    %961 = vbcast.lane.b32.xlu0 %v959, 256
    %v962 = vpop.permute.xlu0 %961
    %v963 = vlaneseq
    %v964 = vshrl.u32 %v963, 7
    %v965 = vsub.s32 7, %v964
    %v966 = vrot.slane %v189, %v965
    %968 = vbcast.lane.b32.xlu0 %v966, 256
    %v969 = vpop.permute.xlu0 %968
    %v970 = vlaneseq
    %v971 = vshrl.u32 %v970, 7
    %v972 = vsub.s32 0, %v971
    %v973 = vrot.slane %v218, %v972
    %975 = vbcast.lane.b32.xlu0 %v973, 256
    %v976 = vpop.permute.xlu0 %975
    %v977 = vlaneseq
    %v978 = vshrl.u32 %v977, 7
    %v979 = vsub.s32 1, %v978
    %v980 = vrot.slane %v218, %v979
    %982 = vbcast.lane.b32.xlu0 %v980, 256
    %v983 = vpop.permute.xlu0 %982
    %v984 = vlaneseq
    %v985 = vshrl.u32 %v984, 7
    %v986 = vsub.s32 2, %v985
    %v987 = vrot.slane %v218, %v986
    %989 = vbcast.lane.b32.xlu0 %v987, 256
    %v990 = vpop.permute.xlu0 %989
    %v991 = vlaneseq
    %v992 = vshrl.u32 %v991, 7
    %v993 = vsub.s32 3, %v992
    %v994 = vrot.slane %v218, %v993
    %996 = vbcast.lane.b32.xlu0 %v994, 256
    %v997 = vpop.permute.xlu0 %996
    %v998 = vlaneseq
    %v999 = vshrl.u32 %v998, 7
    %v1000 = vsub.s32 4, %v999
    %v1001 = vrot.slane %v218, %v1000
    %1003 = vbcast.lane.b32.xlu0 %v1001, 256
    %v1004 = vpop.permute.xlu0 %1003
    %v1005 = vlaneseq
    %v1006 = vshrl.u32 %v1005, 7
    %v1007 = vsub.s32 5, %v1006
    %v1008 = vrot.slane %v218, %v1007
    %1010 = vbcast.lane.b32.xlu0 %v1008, 256
    %v1011 = vpop.permute.xlu0 %1010
    %v1012 = vlaneseq
    %v1013 = vshrl.u32 %v1012, 7
    %v1014 = vsub.s32 6, %v1013
    %v1015 = vrot.slane %v218, %v1014
    %1017 = vbcast.lane.b32.xlu0 %v1015, 256
    %v1018 = vpop.permute.xlu0 %1017
    %v1019 = vlaneseq
    %v1020 = vshrl.u32 %v1019, 7
    %v1021 = vsub.s32 7, %v1020
    %v1022 = vrot.slane %v218, %v1021
    %1024 = vbcast.lane.b32.xlu0 %v1022, 256
    %v1025 = vpop.permute.xlu0 %1024
    %v1026 = vlaneseq
    %v1027 = vshrl.u32 %v1026, 7
    %v1028 = vsub.s32 0, %v1027
    %v1029 = vrot.slane %v219, %v1028
    %1031 = vbcast.lane.b32.xlu0 %v1029, 256
    %v1032 = vpop.permute.xlu0 %1031
    %v1033 = vlaneseq
    %v1034 = vshrl.u32 %v1033, 7
    %v1035 = vsub.s32 1, %v1034
    %v1036 = vrot.slane %v219, %v1035
    %1038 = vbcast.lane.b32.xlu0 %v1036, 256
    %v1039 = vpop.permute.xlu0 %1038
    %v1040 = vlaneseq
    %v1041 = vshrl.u32 %v1040, 7
    %v1042 = vsub.s32 2, %v1041
    %v1043 = vrot.slane %v219, %v1042
    %1045 = vbcast.lane.b32.xlu0 %v1043, 256
    %v1046 = vpop.permute.xlu0 %1045
    %v1047 = vlaneseq
    %v1048 = vshrl.u32 %v1047, 7
    %v1049 = vsub.s32 3, %v1048
    %v1050 = vrot.slane %v219, %v1049
    %1052 = vbcast.lane.b32.xlu0 %v1050, 256
    %v1053 = vpop.permute.xlu0 %1052
    %v1054 = vlaneseq
    %v1055 = vshrl.u32 %v1054, 7
    %v1056 = vsub.s32 4, %v1055
    %v1057 = vrot.slane %v219, %v1056
    %1059 = vbcast.lane.b32.xlu0 %v1057, 256
    %v1060 = vpop.permute.xlu0 %1059
    %v1061 = vlaneseq
    %v1062 = vshrl.u32 %v1061, 7
    %v1063 = vsub.s32 5, %v1062
    %v1064 = vrot.slane %v219, %v1063
    %1066 = vbcast.lane.b32.xlu0 %v1064, 256
    %v1067 = vpop.permute.xlu0 %1066
    %v1068 = vlaneseq
    %v1069 = vshrl.u32 %v1068, 7
    %v1070 = vsub.s32 6, %v1069
    %v1071 = vrot.slane %v219, %v1070
    %1073 = vbcast.lane.b32.xlu0 %v1071, 256
    %v1074 = vpop.permute.xlu0 %1073
    %v1075 = vlaneseq
    %v1076 = vshrl.u32 %v1075, 7
    %v1077 = vsub.s32 7, %v1076
    %v1078 = vrot.slane %v219, %v1077
    %1080 = vbcast.lane.b32.xlu0 %v1078, 256
    %v1081 = vpop.permute.xlu0 %1080
    %v1082 = vlaneseq
    %v1083 = vshrl.u32 %v1082, 7
    %v1084 = vsub.s32 0, %v1083
    %v1085 = vrot.slane %v220, %v1084
    %1087 = vbcast.lane.b32.xlu0 %v1085, 256
    %v1088 = vpop.permute.xlu0 %1087
    %v1089 = vlaneseq
    %v1090 = vshrl.u32 %v1089, 7
    %v1091 = vsub.s32 1, %v1090
    %v1092 = vrot.slane %v220, %v1091
    %1094 = vbcast.lane.b32.xlu0 %v1092, 256
    %v1095 = vpop.permute.xlu0 %1094
    %v1096 = vlaneseq
    %v1097 = vshrl.u32 %v1096, 7
    %v1098 = vsub.s32 2, %v1097
    %v1099 = vrot.slane %v220, %v1098
    %1101 = vbcast.lane.b32.xlu0 %v1099, 256
    %v1102 = vpop.permute.xlu0 %1101
    %v1103 = vlaneseq
    %v1104 = vshrl.u32 %v1103, 7
    %v1105 = vsub.s32 3, %v1104
    %v1106 = vrot.slane %v220, %v1105
    %1108 = vbcast.lane.b32.xlu0 %v1106, 256
    %v1109 = vpop.permute.xlu0 %1108
    %v1110 = vlaneseq
    %v1111 = vshrl.u32 %v1110, 7
    %v1112 = vsub.s32 4, %v1111
    %v1113 = vrot.slane %v220, %v1112
    %1115 = vbcast.lane.b32.xlu0 %v1113, 256
    %v1116 = vpop.permute.xlu0 %1115
    %v1117 = vlaneseq
    %v1118 = vshrl.u32 %v1117, 7
    %v1119 = vsub.s32 5, %v1118
    %v1120 = vrot.slane %v220, %v1119
    %1122 = vbcast.lane.b32.xlu0 %v1120, 256
    %v1123 = vpop.permute.xlu0 %1122
    %v1124 = vlaneseq
    %v1125 = vshrl.u32 %v1124, 7
    %v1126 = vsub.s32 6, %v1125
    %v1127 = vrot.slane %v220, %v1126
    %1129 = vbcast.lane.b32.xlu0 %v1127, 256
    %v1130 = vpop.permute.xlu0 %1129
    %v1131 = vlaneseq
    %v1132 = vshrl.u32 %v1131, 7
    %v1133 = vsub.s32 7, %v1132
    %v1134 = vrot.slane %v220, %v1133
    %1136 = vbcast.lane.b32.xlu0 %v1134, 256
    %v1137 = vpop.permute.xlu0 %1136
    %v1138 = vlaneseq
    %v1139 = vshrl.u32 %v1138, 7
    %v1140 = vsub.s32 0, %v1139
    %v1141 = vrot.slane %v221, %v1140
    %1143 = vbcast.lane.b32.xlu0 %v1141, 256
    %v1144 = vpop.permute.xlu0 %1143
    %v1145 = vlaneseq
    %v1146 = vshrl.u32 %v1145, 7
    %v1147 = vsub.s32 1, %v1146
    %v1148 = vrot.slane %v221, %v1147
    %1150 = vbcast.lane.b32.xlu0 %v1148, 256
    %v1151 = vpop.permute.xlu0 %1150
    %v1152 = vlaneseq
    %v1153 = vshrl.u32 %v1152, 7
    %v1154 = vsub.s32 2, %v1153
    %v1155 = vrot.slane %v221, %v1154
    %1157 = vbcast.lane.b32.xlu0 %v1155, 256
    %v1158 = vpop.permute.xlu0 %1157
    %v1159 = vlaneseq
    %v1160 = vshrl.u32 %v1159, 7
    %v1161 = vsub.s32 3, %v1160
    %v1162 = vrot.slane %v221, %v1161
    %1164 = vbcast.lane.b32.xlu0 %v1162, 256
    %v1165 = vpop.permute.xlu0 %1164
    %v1166 = vlaneseq
    %v1167 = vshrl.u32 %v1166, 7
    %v1168 = vsub.s32 4, %v1167
    %v1169 = vrot.slane %v221, %v1168
    %1171 = vbcast.lane.b32.xlu0 %v1169, 256
    %v1172 = vpop.permute.xlu0 %1171
    %v1173 = vlaneseq
    %v1174 = vshrl.u32 %v1173, 7
    %v1175 = vsub.s32 5, %v1174
    %v1176 = vrot.slane %v221, %v1175
    %1178 = vbcast.lane.b32.xlu0 %v1176, 256
    %v1179 = vpop.permute.xlu0 %1178
    %v1180 = vlaneseq
    %v1181 = vshrl.u32 %v1180, 7
    %v1182 = vsub.s32 6, %v1181
    %v1183 = vrot.slane %v221, %v1182
    %1185 = vbcast.lane.b32.xlu0 %v1183, 256
    %v1186 = vpop.permute.xlu0 %1185
    %v1187 = vlaneseq
    %v1188 = vshrl.u32 %v1187, 7
    %v1189 = vsub.s32 7, %v1188
    %v1190 = vrot.slane %v221, %v1189
    %1192 = vbcast.lane.b32.xlu0 %v1190, 256
    %v1193 = vpop.permute.xlu0 %1192
    %v1258 = vmul.f32 %v735, %v752
    %v1259 = vmul.f32 %v735, %v759
    %v1260 = vmul.f32 %v735, %v766
    %v1261 = vmul.f32 %v735, %v773
    %v1262 = vmul.f32 %v735, %v780
    %v1263 = vmul.f32 %v735, %v787
    %v1264 = vmul.f32 %v735, %v794
    %v1265 = vmul.f32 %v735, %v801
    %v1266 = vmul.f32 %v735, %v808
    %v1267 = vmul.f32 %v735, %v815
    %v1268 = vmul.f32 %v735, %v822
    %v1269 = vmul.f32 %v735, %v829
    %v1270 = vmul.f32 %v735, %v836
    %v1271 = vmul.f32 %v735, %v843
    %v1272 = vmul.f32 %v735, %v850
    %v1273 = vmul.f32 %v735, %v857
    %v1274 = vmul.f32 %v735, %v864
    %v1275 = vmul.f32 %v735, %v871
    %v1276 = vmul.f32 %v735, %v878
    %v1277 = vmul.f32 %v735, %v885
    %v1278 = vmul.f32 %v735, %v892
    %v1279 = vmul.f32 %v735, %v899
    %v1280 = vmul.f32 %v735, %v906
    %v1281 = vmul.f32 %v735, %v913
    %v1282 = vmul.f32 %v735, %v920
    %v1283 = vmul.f32 %v735, %v927
    %v1284 = vmul.f32 %v735, %v934
    %v1285 = vmul.f32 %v735, %v941
    %v1286 = vmul.f32 %v735, %v948
    %v1287 = vmul.f32 %v735, %v955
    %v1288 = vmul.f32 %v735, %v962
    %v1289 = vmul.f32 %v735, %v969
    %v1290 = vmul.f32 %v737, %v976
    %v1291 = vmul.f32 %v737, %v983
    %v1292 = vmul.f32 %v737, %v990
    %v1293 = vmul.f32 %v737, %v997
    %v1294 = vmul.f32 %v737, %v1004
    %v1295 = vmul.f32 %v737, %v1011
    %v1296 = vmul.f32 %v737, %v1018
    %v1297 = vmul.f32 %v737, %v1025
    %v1298 = vmul.f32 %v737, %v1032
    %v1299 = vmul.f32 %v737, %v1039
    %v1300 = vmul.f32 %v737, %v1046
    %v1301 = vmul.f32 %v737, %v1053
    %v1302 = vmul.f32 %v737, %v1060
    %v1303 = vmul.f32 %v737, %v1067
    %v1304 = vmul.f32 %v737, %v1074
    %v1305 = vmul.f32 %v737, %v1081
    %v1306 = vmul.f32 %v737, %v1088
    %v1307 = vmul.f32 %v737, %v1095
    %v1308 = vmul.f32 %v737, %v1102
    %v1309 = vmul.f32 %v737, %v1109
    %v1310 = vmul.f32 %v737, %v1116
    %v1311 = vmul.f32 %v737, %v1123
    %v1312 = vmul.f32 %v737, %v1130
    %v1313 = vmul.f32 %v737, %v1137
    %v1314 = vmul.f32 %v737, %v1144
    %v1315 = vmul.f32 %v737, %v1151
    %v1316 = vmul.f32 %v737, %v1158
    %v1317 = vmul.f32 %v737, %v1165
    %v1318 = vmul.f32 %v737, %v1172
    %v1319 = vmul.f32 %v737, %v1179
    %v1320 = vmul.f32 %v737, %v1186
    %v1321 = vmul.f32 %v737, %v1193
    %1386 = vset.pattern.permute.xlu0 0
    %1387 = vperm.xlu0 %1386, %v1258
    %v1388 = vpop.permute.xlu0 %1387
    %1389 = vset.pattern.permute.xlu0 0
    %1390 = vperm.xlu0 %1389, %v1259
    %v1391 = vpop.permute.xlu0 %1390
    %1392 = vset.pattern.permute.xlu0 0
    %1393 = vperm.xlu0 %1392, %v1260
    %v1394 = vpop.permute.xlu0 %1393
    %1395 = vset.pattern.permute.xlu0 0
    %1396 = vperm.xlu0 %1395, %v1261
    %v1397 = vpop.permute.xlu0 %1396
    %1398 = vset.pattern.permute.xlu0 0
    %1399 = vperm.xlu0 %1398, %v1262
    %v1400 = vpop.permute.xlu0 %1399
    %1401 = vset.pattern.permute.xlu0 0
    %1402 = vperm.xlu0 %1401, %v1263
    %v1403 = vpop.permute.xlu0 %1402
    %1404 = vset.pattern.permute.xlu0 0
    %1405 = vperm.xlu0 %1404, %v1264
    %v1406 = vpop.permute.xlu0 %1405
    %1407 = vset.pattern.permute.xlu0 0
    %1408 = vperm.xlu0 %1407, %v1265
    %v1409 = vpop.permute.xlu0 %1408
    %1410 = vset.pattern.permute.xlu0 0
    %1411 = vperm.xlu0 %1410, %v1266
    %v1412 = vpop.permute.xlu0 %1411
    %1413 = vset.pattern.permute.xlu0 0
    %1414 = vperm.xlu0 %1413, %v1267
    %v1415 = vpop.permute.xlu0 %1414
    %1416 = vset.pattern.permute.xlu0 0
    %1417 = vperm.xlu0 %1416, %v1268
    %v1418 = vpop.permute.xlu0 %1417
    %1419 = vset.pattern.permute.xlu0 0
    %1420 = vperm.xlu0 %1419, %v1269
    %v1421 = vpop.permute.xlu0 %1420
    %1422 = vset.pattern.permute.xlu0 0
    %1423 = vperm.xlu0 %1422, %v1270
    %v1424 = vpop.permute.xlu0 %1423
    %1425 = vset.pattern.permute.xlu0 0
    %1426 = vperm.xlu0 %1425, %v1271
    %v1427 = vpop.permute.xlu0 %1426
    %1428 = vset.pattern.permute.xlu0 0
    %1429 = vperm.xlu0 %1428, %v1272
    %v1430 = vpop.permute.xlu0 %1429
    %1431 = vset.pattern.permute.xlu0 0
    %1432 = vperm.xlu0 %1431, %v1273
    %v1433 = vpop.permute.xlu0 %1432
    %1434 = vset.pattern.permute.xlu0 0
    %1435 = vperm.xlu0 %1434, %v1274
    %v1436 = vpop.permute.xlu0 %1435
    %1437 = vset.pattern.permute.xlu0 0
    %1438 = vperm.xlu0 %1437, %v1275
    %v1439 = vpop.permute.xlu0 %1438
    %1440 = vset.pattern.permute.xlu0 0
    %1441 = vperm.xlu0 %1440, %v1276
    %v1442 = vpop.permute.xlu0 %1441
    %1443 = vset.pattern.permute.xlu0 0
    %1444 = vperm.xlu0 %1443, %v1277
    %v1445 = vpop.permute.xlu0 %1444
    %1446 = vset.pattern.permute.xlu0 0
    %1447 = vperm.xlu0 %1446, %v1278
    %v1448 = vpop.permute.xlu0 %1447
    %1449 = vset.pattern.permute.xlu0 0
    %1450 = vperm.xlu0 %1449, %v1279
    %v1451 = vpop.permute.xlu0 %1450
    %1452 = vset.pattern.permute.xlu0 0
    %1453 = vperm.xlu0 %1452, %v1280
    %v1454 = vpop.permute.xlu0 %1453
    %1455 = vset.pattern.permute.xlu0 0
    %1456 = vperm.xlu0 %1455, %v1281
    %v1457 = vpop.permute.xlu0 %1456
    %1458 = vset.pattern.permute.xlu0 0
    %1459 = vperm.xlu0 %1458, %v1282
    %v1460 = vpop.permute.xlu0 %1459
    %1461 = vset.pattern.permute.xlu0 0
    %1462 = vperm.xlu0 %1461, %v1283
    %v1463 = vpop.permute.xlu0 %1462
    %1464 = vset.pattern.permute.xlu0 0
    %1465 = vperm.xlu0 %1464, %v1284
    %v1466 = vpop.permute.xlu0 %1465
    %1467 = vset.pattern.permute.xlu0 0
    %1468 = vperm.xlu0 %1467, %v1285
    %v1469 = vpop.permute.xlu0 %1468
    %1470 = vset.pattern.permute.xlu0 0
    %1471 = vperm.xlu0 %1470, %v1286
    %v1472 = vpop.permute.xlu0 %1471
    %1473 = vset.pattern.permute.xlu0 0
    %1474 = vperm.xlu0 %1473, %v1287
    %v1475 = vpop.permute.xlu0 %1474
    %1476 = vset.pattern.permute.xlu0 0
    %1477 = vperm.xlu0 %1476, %v1288
    %v1478 = vpop.permute.xlu0 %1477
    %1479 = vset.pattern.permute.xlu0 0
    %1480 = vperm.xlu0 %1479, %v1289
    %v1481 = vpop.permute.xlu0 %1480
    %1482 = vset.pattern.permute.xlu0 0
    %1483 = vperm.xlu0 %1482, %v1290
    %v1484 = vpop.permute.xlu0 %1483
    %1485 = vset.pattern.permute.xlu0 0
    %1486 = vperm.xlu0 %1485, %v1291
    %v1487 = vpop.permute.xlu0 %1486
    %1488 = vset.pattern.permute.xlu0 0
    %1489 = vperm.xlu0 %1488, %v1292
    %v1490 = vpop.permute.xlu0 %1489
    %1491 = vset.pattern.permute.xlu0 0
    %1492 = vperm.xlu0 %1491, %v1293
    %v1493 = vpop.permute.xlu0 %1492
    %1494 = vset.pattern.permute.xlu0 0
    %1495 = vperm.xlu0 %1494, %v1294
    %v1496 = vpop.permute.xlu0 %1495
    %1497 = vset.pattern.permute.xlu0 0
    %1498 = vperm.xlu0 %1497, %v1295
    %v1499 = vpop.permute.xlu0 %1498
    %1500 = vset.pattern.permute.xlu0 0
    %1501 = vperm.xlu0 %1500, %v1296
    %v1502 = vpop.permute.xlu0 %1501
    %1503 = vset.pattern.permute.xlu0 0
    %1504 = vperm.xlu0 %1503, %v1297
    %v1505 = vpop.permute.xlu0 %1504
    %1506 = vset.pattern.permute.xlu0 0
    %1507 = vperm.xlu0 %1506, %v1298
    %v1508 = vpop.permute.xlu0 %1507
    %1509 = vset.pattern.permute.xlu0 0
    %1510 = vperm.xlu0 %1509, %v1299
    %v1511 = vpop.permute.xlu0 %1510
    %1512 = vset.pattern.permute.xlu0 0
    %1513 = vperm.xlu0 %1512, %v1300
    %v1514 = vpop.permute.xlu0 %1513
    %1515 = vset.pattern.permute.xlu0 0
    %1516 = vperm.xlu0 %1515, %v1301
    %v1517 = vpop.permute.xlu0 %1516
    %1518 = vset.pattern.permute.xlu0 0
    %1519 = vperm.xlu0 %1518, %v1302
    %v1520 = vpop.permute.xlu0 %1519
    %1521 = vset.pattern.permute.xlu0 0
    %1522 = vperm.xlu0 %1521, %v1303
    %v1523 = vpop.permute.xlu0 %1522
    %1524 = vset.pattern.permute.xlu0 0
    %1525 = vperm.xlu0 %1524, %v1304
    %v1526 = vpop.permute.xlu0 %1525
    %1527 = vset.pattern.permute.xlu0 0
    %1528 = vperm.xlu0 %1527, %v1305
    %v1529 = vpop.permute.xlu0 %1528
    %1530 = vset.pattern.permute.xlu0 0
    %1531 = vperm.xlu0 %1530, %v1306
    %v1532 = vpop.permute.xlu0 %1531
    %1533 = vset.pattern.permute.xlu0 0
    %1534 = vperm.xlu0 %1533, %v1307
    %v1535 = vpop.permute.xlu0 %1534
    %1536 = vset.pattern.permute.xlu0 0
    %1537 = vperm.xlu0 %1536, %v1308
    %v1538 = vpop.permute.xlu0 %1537
    %1539 = vset.pattern.permute.xlu0 0
    %1540 = vperm.xlu0 %1539, %v1309
    %v1541 = vpop.permute.xlu0 %1540
    %1542 = vset.pattern.permute.xlu0 0
    %1543 = vperm.xlu0 %1542, %v1310
    %v1544 = vpop.permute.xlu0 %1543
    %1545 = vset.pattern.permute.xlu0 0
    %1546 = vperm.xlu0 %1545, %v1311
    %v1547 = vpop.permute.xlu0 %1546
    %1548 = vset.pattern.permute.xlu0 0
    %1549 = vperm.xlu0 %1548, %v1312
    %v1550 = vpop.permute.xlu0 %1549
    %1551 = vset.pattern.permute.xlu0 0
    %1552 = vperm.xlu0 %1551, %v1313
    %v1553 = vpop.permute.xlu0 %1552
    %1554 = vset.pattern.permute.xlu0 0
    %1555 = vperm.xlu0 %1554, %v1314
    %v1556 = vpop.permute.xlu0 %1555
    %1557 = vset.pattern.permute.xlu0 0
    %1558 = vperm.xlu0 %1557, %v1315
    %v1559 = vpop.permute.xlu0 %1558
    %1560 = vset.pattern.permute.xlu0 0
    %1561 = vperm.xlu0 %1560, %v1316
    %v1562 = vpop.permute.xlu0 %1561
    %1563 = vset.pattern.permute.xlu0 0
    %1564 = vperm.xlu0 %1563, %v1317
    %v1565 = vpop.permute.xlu0 %1564
    %1566 = vset.pattern.permute.xlu0 0
    %1567 = vperm.xlu0 %1566, %v1318
    %v1568 = vpop.permute.xlu0 %1567
    %1569 = vset.pattern.permute.xlu0 0
    %1570 = vperm.xlu0 %1569, %v1319
    %v1571 = vpop.permute.xlu0 %1570
    %1572 = vset.pattern.permute.xlu0 0
    %1573 = vperm.xlu0 %1572, %v1320
    %v1574 = vpop.permute.xlu0 %1573
    %1575 = vset.pattern.permute.xlu0 0
    %1576 = vperm.xlu0 %1575, %v1321
    %v1577 = vpop.permute.xlu0 %1576
    %v1578 = vlaneseq
    %v1579 = vshrl.u32 %v1578, 7
    %v1580 = vsub.s32 %v367, %v1579
    %v1581 = vrot.slane %v1388, %v1580
    %v1582 = vlaneseq
    %v1583 = vshrl.u32 %v1582, 7
    %v1584 = vsub.s32 %v367, %v1583
    %v1585 = vrot.slane %v1391, %v1584
    %v1586 = vlaneseq
    %v1587 = vshrl.u32 %v1586, 7
    %v1588 = vsub.s32 %v367, %v1587
    %v1589 = vrot.slane %v1394, %v1588
    %v1590 = vlaneseq
    %v1591 = vshrl.u32 %v1590, 7
    %v1592 = vsub.s32 %v367, %v1591
    %v1593 = vrot.slane %v1397, %v1592
    %v1594 = vlaneseq
    %v1595 = vshrl.u32 %v1594, 7
    %v1596 = vsub.s32 %v367, %v1595
    %v1597 = vrot.slane %v1400, %v1596
    %v1598 = vlaneseq
    %v1599 = vshrl.u32 %v1598, 7
    %v1600 = vsub.s32 %v367, %v1599
    %v1601 = vrot.slane %v1403, %v1600
    %v1602 = vlaneseq
    %v1603 = vshrl.u32 %v1602, 7
    %v1604 = vsub.s32 %v367, %v1603
    %v1605 = vrot.slane %v1406, %v1604
    %v1606 = vlaneseq
    %v1607 = vshrl.u32 %v1606, 7
    %v1608 = vsub.s32 %v367, %v1607
    %v1609 = vrot.slane %v1409, %v1608
    %v1610 = vlaneseq
    %v1611 = vshrl.u32 %v1610, 7
    %v1612 = vsub.s32 %v367, %v1611
    %v1613 = vrot.slane %v1412, %v1612
    %v1614 = vlaneseq
    %v1615 = vshrl.u32 %v1614, 7
    %v1616 = vsub.s32 %v367, %v1615
    %v1617 = vrot.slane %v1415, %v1616
    %v1618 = vlaneseq
    %v1619 = vshrl.u32 %v1618, 7
    %v1620 = vsub.s32 %v367, %v1619
    %v1621 = vrot.slane %v1418, %v1620
    %v1622 = vlaneseq
    %v1623 = vshrl.u32 %v1622, 7
    %v1624 = vsub.s32 %v367, %v1623
    %v1625 = vrot.slane %v1421, %v1624
    %v1626 = vlaneseq
    %v1627 = vshrl.u32 %v1626, 7
    %v1628 = vsub.s32 %v367, %v1627
    %v1629 = vrot.slane %v1424, %v1628
    %v1630 = vlaneseq
    %v1631 = vshrl.u32 %v1630, 7
    %v1632 = vsub.s32 %v367, %v1631
    %v1633 = vrot.slane %v1427, %v1632
    %v1634 = vlaneseq
    %v1635 = vshrl.u32 %v1634, 7
    %v1636 = vsub.s32 %v367, %v1635
    %v1637 = vrot.slane %v1430, %v1636
    %v1638 = vlaneseq
    %v1639 = vshrl.u32 %v1638, 7
    %v1640 = vsub.s32 %v367, %v1639
    %v1641 = vrot.slane %v1433, %v1640
    %v1642 = vlaneseq
    %v1643 = vshrl.u32 %v1642, 7
    %v1644 = vsub.s32 %v367, %v1643
    %v1645 = vrot.slane %v1436, %v1644
    %v1646 = vlaneseq
    %v1647 = vshrl.u32 %v1646, 7
    %v1648 = vsub.s32 %v367, %v1647
    %v1649 = vrot.slane %v1439, %v1648
    %v1650 = vlaneseq
    %v1651 = vshrl.u32 %v1650, 7
    %v1652 = vsub.s32 %v367, %v1651
    %v1653 = vrot.slane %v1442, %v1652
    %v1654 = vlaneseq
    %v1655 = vshrl.u32 %v1654, 7
    %v1656 = vsub.s32 %v367, %v1655
    %v1657 = vrot.slane %v1445, %v1656
    %v1658 = vlaneseq
    %v1659 = vshrl.u32 %v1658, 7
    %v1660 = vsub.s32 %v367, %v1659
    %v1661 = vrot.slane %v1448, %v1660
    %v1662 = vlaneseq
    %v1663 = vshrl.u32 %v1662, 7
    %v1664 = vsub.s32 %v367, %v1663
    %v1665 = vrot.slane %v1451, %v1664
    %v1666 = vlaneseq
    %v1667 = vshrl.u32 %v1666, 7
    %v1668 = vsub.s32 %v367, %v1667
    %v1669 = vrot.slane %v1454, %v1668
    %v1670 = vlaneseq
    %v1671 = vshrl.u32 %v1670, 7
    %v1672 = vsub.s32 %v367, %v1671
    %v1673 = vrot.slane %v1457, %v1672
    %v1674 = vlaneseq
    %v1675 = vshrl.u32 %v1674, 7
    %v1676 = vsub.s32 %v367, %v1675
    %v1677 = vrot.slane %v1460, %v1676
    %v1678 = vlaneseq
    %v1679 = vshrl.u32 %v1678, 7
    %v1680 = vsub.s32 %v367, %v1679
    %v1681 = vrot.slane %v1463, %v1680
    %v1682 = vlaneseq
    %v1683 = vshrl.u32 %v1682, 7
    %v1684 = vsub.s32 %v367, %v1683
    %v1685 = vrot.slane %v1466, %v1684
    %v1686 = vlaneseq
    %v1687 = vshrl.u32 %v1686, 7
    %v1688 = vsub.s32 %v367, %v1687
    %v1689 = vrot.slane %v1469, %v1688
    %v1690 = vlaneseq
    %v1691 = vshrl.u32 %v1690, 7
    %v1692 = vsub.s32 %v367, %v1691
    %v1693 = vrot.slane %v1472, %v1692
    %v1694 = vlaneseq
    %v1695 = vshrl.u32 %v1694, 7
    %v1696 = vsub.s32 %v367, %v1695
    %v1697 = vrot.slane %v1475, %v1696
    %v1698 = vlaneseq
    %v1699 = vshrl.u32 %v1698, 7
    %v1700 = vsub.s32 %v367, %v1699
    %v1701 = vrot.slane %v1478, %v1700
    %v1702 = vlaneseq
    %v1703 = vshrl.u32 %v1702, 7
    %v1704 = vsub.s32 %v367, %v1703
    %v1705 = vrot.slane %v1481, %v1704
    %v1706 = vlaneseq
    %v1707 = vshrl.u32 %v1706, 7
    %v1708 = vsub.s32 %v367, %v1707
    %v1709 = vrot.slane %v1484, %v1708
    %v1710 = vlaneseq
    %v1711 = vshrl.u32 %v1710, 7
    %v1712 = vsub.s32 %v367, %v1711
    %v1713 = vrot.slane %v1487, %v1712
    %v1714 = vlaneseq
    %v1715 = vshrl.u32 %v1714, 7
    %v1716 = vsub.s32 %v367, %v1715
    %v1717 = vrot.slane %v1490, %v1716
    %v1718 = vlaneseq
    %v1719 = vshrl.u32 %v1718, 7
    %v1720 = vsub.s32 %v367, %v1719
    %v1721 = vrot.slane %v1493, %v1720
    %v1722 = vlaneseq
    %v1723 = vshrl.u32 %v1722, 7
    %v1724 = vsub.s32 %v367, %v1723
    %v1725 = vrot.slane %v1496, %v1724
    %v1726 = vlaneseq
    %v1727 = vshrl.u32 %v1726, 7
    %v1728 = vsub.s32 %v367, %v1727
    %v1729 = vrot.slane %v1499, %v1728
    %v1730 = vlaneseq
    %v1731 = vshrl.u32 %v1730, 7
    %v1732 = vsub.s32 %v367, %v1731
    %v1733 = vrot.slane %v1502, %v1732
    %v1734 = vlaneseq
    %v1735 = vshrl.u32 %v1734, 7
    %v1736 = vsub.s32 %v367, %v1735
    %v1737 = vrot.slane %v1505, %v1736
    %v1738 = vlaneseq
    %v1739 = vshrl.u32 %v1738, 7
    %v1740 = vsub.s32 %v367, %v1739
    %v1741 = vrot.slane %v1508, %v1740
    %v1742 = vlaneseq
    %v1743 = vshrl.u32 %v1742, 7
    %v1744 = vsub.s32 %v367, %v1743
    %v1745 = vrot.slane %v1511, %v1744
    %v1746 = vlaneseq
    %v1747 = vshrl.u32 %v1746, 7
    %v1748 = vsub.s32 %v367, %v1747
    %v1749 = vrot.slane %v1514, %v1748
    %v1750 = vlaneseq
    %v1751 = vshrl.u32 %v1750, 7
    %v1752 = vsub.s32 %v367, %v1751
    %v1753 = vrot.slane %v1517, %v1752
    %v1754 = vlaneseq
    %v1755 = vshrl.u32 %v1754, 7
    %v1756 = vsub.s32 %v367, %v1755
    %v1757 = vrot.slane %v1520, %v1756
    %v1758 = vlaneseq
    %v1759 = vshrl.u32 %v1758, 7
    %v1760 = vsub.s32 %v367, %v1759
    %v1761 = vrot.slane %v1523, %v1760
    %v1762 = vlaneseq
    %v1763 = vshrl.u32 %v1762, 7
    %v1764 = vsub.s32 %v367, %v1763
    %v1765 = vrot.slane %v1526, %v1764
    %v1766 = vlaneseq
    %v1767 = vshrl.u32 %v1766, 7
    %v1768 = vsub.s32 %v367, %v1767
    %v1769 = vrot.slane %v1529, %v1768
    %v1770 = vlaneseq
    %v1771 = vshrl.u32 %v1770, 7
    %v1772 = vsub.s32 %v367, %v1771
    %v1773 = vrot.slane %v1532, %v1772
    %v1774 = vlaneseq
    %v1775 = vshrl.u32 %v1774, 7
    %v1776 = vsub.s32 %v367, %v1775
    %v1777 = vrot.slane %v1535, %v1776
    %v1778 = vlaneseq
    %v1779 = vshrl.u32 %v1778, 7
    %v1780 = vsub.s32 %v367, %v1779
    %v1781 = vrot.slane %v1538, %v1780
    %v1782 = vlaneseq
    %v1783 = vshrl.u32 %v1782, 7
    %v1784 = vsub.s32 %v367, %v1783
    %v1785 = vrot.slane %v1541, %v1784
    %v1786 = vlaneseq
    %v1787 = vshrl.u32 %v1786, 7
    %v1788 = vsub.s32 %v367, %v1787
    %v1789 = vrot.slane %v1544, %v1788
    %v1790 = vlaneseq
    %v1791 = vshrl.u32 %v1790, 7
    %v1792 = vsub.s32 %v367, %v1791
    %v1793 = vrot.slane %v1547, %v1792
    %v1794 = vlaneseq
    %v1795 = vshrl.u32 %v1794, 7
    %v1796 = vsub.s32 %v367, %v1795
    %v1797 = vrot.slane %v1550, %v1796
    %v1798 = vlaneseq
    %v1799 = vshrl.u32 %v1798, 7
    %v1800 = vsub.s32 %v367, %v1799
    %v1801 = vrot.slane %v1553, %v1800
    %v1802 = vlaneseq
    %v1803 = vshrl.u32 %v1802, 7
    %v1804 = vsub.s32 %v367, %v1803
    %v1805 = vrot.slane %v1556, %v1804
    %v1806 = vlaneseq
    %v1807 = vshrl.u32 %v1806, 7
    %v1808 = vsub.s32 %v367, %v1807
    %v1809 = vrot.slane %v1559, %v1808
    %v1810 = vlaneseq
    %v1811 = vshrl.u32 %v1810, 7
    %v1812 = vsub.s32 %v367, %v1811
    %v1813 = vrot.slane %v1562, %v1812
    %v1814 = vlaneseq
    %v1815 = vshrl.u32 %v1814, 7
    %v1816 = vsub.s32 %v367, %v1815
    %v1817 = vrot.slane %v1565, %v1816
    %v1818 = vlaneseq
    %v1819 = vshrl.u32 %v1818, 7
    %v1820 = vsub.s32 %v367, %v1819
    %v1821 = vrot.slane %v1568, %v1820
    %v1822 = vlaneseq
    %v1823 = vshrl.u32 %v1822, 7
    %v1824 = vsub.s32 %v367, %v1823
    %v1825 = vrot.slane %v1571, %v1824
    %v1826 = vlaneseq
    %v1827 = vshrl.u32 %v1826, 7
    %v1828 = vsub.s32 %v367, %v1827
    %v1829 = vrot.slane %v1574, %v1828
    %v1830 = vlaneseq
    %v1831 = vshrl.u32 %v1830, 7
    %v1832 = vsub.s32 %v367, %v1831
    %v1833 = vrot.slane %v1577, %v1832
    %v1834 = vsel %vm412, %v1585, %v1581
    %vm1835 = vcmask 1042434
    %v1836 = vsel %vm1835, %v1589, %v1834
    %vm1837 = vcmask 1043459
    %v1838 = vsel %vm1837, %v1593, %v1836
    %vm1839 = vcmask 1044484
    %v1840 = vsel %vm1839, %v1597, %v1838
    %vm1841 = vcmask 1045509
    %v1842 = vsel %vm1841, %v1601, %v1840
    %vm1843 = vcmask 1046534
    %v1844 = vsel %vm1843, %v1605, %v1842
    %vm1845 = vcmask 1047559
    %v1846 = vsel %vm1845, %v1609, %v1844
    %v1847 = vsel %vm412, %v1617, %v1613
    %v1848 = vsel %vm1835, %v1621, %v1847
    %v1849 = vsel %vm1837, %v1625, %v1848
    %v1850 = vsel %vm1839, %v1629, %v1849
    %v1851 = vsel %vm1841, %v1633, %v1850
    %v1852 = vsel %vm1843, %v1637, %v1851
    %v1853 = vsel %vm1845, %v1641, %v1852
    %v1854 = vsel %vm412, %v1649, %v1645
    %v1855 = vsel %vm1835, %v1653, %v1854
    %v1856 = vsel %vm1837, %v1657, %v1855
    %v1857 = vsel %vm1839, %v1661, %v1856
    %v1858 = vsel %vm1841, %v1665, %v1857
    %v1859 = vsel %vm1843, %v1669, %v1858
    %v1860 = vsel %vm1845, %v1673, %v1859
    %v1861 = vsel %vm412, %v1681, %v1677
    %v1862 = vsel %vm1835, %v1685, %v1861
    %v1863 = vsel %vm1837, %v1689, %v1862
    %v1864 = vsel %vm1839, %v1693, %v1863
    %v1865 = vsel %vm1841, %v1697, %v1864
    %v1866 = vsel %vm1843, %v1701, %v1865
    %v1867 = vsel %vm1845, %v1705, %v1866
    %v1868 = vsel %vm412, %v1713, %v1709
    %v1869 = vsel %vm1835, %v1717, %v1868
    %v1870 = vsel %vm1837, %v1721, %v1869
    %v1871 = vsel %vm1839, %v1725, %v1870
    %v1872 = vsel %vm1841, %v1729, %v1871
    %v1873 = vsel %vm1843, %v1733, %v1872
    %v1874 = vsel %vm1845, %v1737, %v1873
    %v1875 = vsel %vm412, %v1745, %v1741
    %v1876 = vsel %vm1835, %v1749, %v1875
    %v1877 = vsel %vm1837, %v1753, %v1876
    %v1878 = vsel %vm1839, %v1757, %v1877
    %v1879 = vsel %vm1841, %v1761, %v1878
    %v1880 = vsel %vm1843, %v1765, %v1879
    %v1881 = vsel %vm1845, %v1769, %v1880
    %v1882 = vsel %vm412, %v1777, %v1773
    %v1883 = vsel %vm1835, %v1781, %v1882
    %v1884 = vsel %vm1837, %v1785, %v1883
    %v1885 = vsel %vm1839, %v1789, %v1884
    %v1886 = vsel %vm1841, %v1793, %v1885
    %v1887 = vsel %vm1843, %v1797, %v1886
    %v1888 = vsel %vm1845, %v1801, %v1887
    %v1889 = vsel %vm412, %v1809, %v1805
    %v1890 = vsel %vm1835, %v1813, %v1889
    %v1891 = vsel %vm1837, %v1817, %v1890
    %v1892 = vsel %vm1839, %v1821, %v1891
    %v1893 = vsel %vm1841, %v1825, %v1892
    %v1894 = vsel %vm1843, %v1829, %v1893
    %v1895 = vsel %vm1845, %v1833, %v1894
    %v1904 = vsel %vm320, %v1846, 0.0
    %1905 = vadd.xlane.f32.xlu0 %v1904
    %v1906 = vpop.xlane.xlu0 %1905
    %v1907 = vsel %vm320, %v1853, 0.0
    %1908 = vadd.xlane.f32.xlu0 %v1907
    %v1909 = vpop.xlane.xlu0 %1908
    %v1910 = vsel %vm320, %v1860, 0.0
    %1911 = vadd.xlane.f32.xlu0 %v1910
    %v1912 = vpop.xlane.xlu0 %1911
    %v1913 = vsel %vm320, %v1867, 0.0
    %1914 = vadd.xlane.f32.xlu0 %v1913
    %v1915 = vpop.xlane.xlu0 %1914
    %v1916 = vsel %vm320, %v1874, 0.0
    %1917 = vadd.xlane.f32.xlu0 %v1916
    %v1918 = vpop.xlane.xlu0 %1917
    %v1919 = vsel %vm320, %v1881, 0.0
    %1920 = vadd.xlane.f32.xlu0 %v1919
    %v1921 = vpop.xlane.xlu0 %1920
    %v1922 = vsel %vm320, %v1888, 0.0
    %1923 = vadd.xlane.f32.xlu0 %v1922
    %v1924 = vpop.xlane.xlu0 %1923
    %v1925 = vsel %vm320, %v1895, 0.0
    %1926 = vadd.xlane.f32.xlu0 %v1925
    %v1927 = vpop.xlane.xlu0 %1926
    %v1928 = vld [vmem:[%s1] sm:$0x3]
    %v1937 = vlaneseq
    %v1938 = vshrl.u32 %v1937, 7
    %v1939 = vsub.s32 %v367, %v1938
    %v1940 = vrot.slane %v1906, %v1939
    %v1941 = vlaneseq
    %v1942 = vshrl.u32 %v1941, 7
    %v1943 = vsub.s32 %v372, %v1942
    %v1944 = vrot.slane %v1909, %v1943
    %v1945 = vsel %vm377, %v1944, %v1940
    %v1946 = vlaneseq
    %v1947 = vshrl.u32 %v1946, 7
    %v1948 = vsub.s32 %v379, %v1947
    %v1949 = vrot.slane %v1912, %v1948
    %v1950 = vsel %vm384, %v1949, %v1945
    %v1951 = vlaneseq
    %v1952 = vshrl.u32 %v1951, 7
    %v1953 = vsub.s32 %v386, %v1952
    %v1954 = vrot.slane %v1915, %v1953
    %v1955 = vsel %vm391, %v1954, %v1950
    %v1956 = vlaneseq
    %v1957 = vshrl.u32 %v1956, 7
    %v1958 = vsub.s32 %v367, %v1957
    %v1959 = vrot.slane %v1918, %v1958
    %v1960 = vlaneseq
    %v1961 = vshrl.u32 %v1960, 7
    %v1962 = vsub.s32 %v372, %v1961
    %v1963 = vrot.slane %v1921, %v1962
    %v1964 = vsel %vm377, %v1963, %v1959
    %v1965 = vlaneseq
    %v1966 = vshrl.u32 %v1965, 7
    %v1967 = vsub.s32 %v379, %v1966
    %v1968 = vrot.slane %v1924, %v1967
    %v1969 = vsel %vm384, %v1968, %v1964
    %v1970 = vlaneseq
    %v1971 = vshrl.u32 %v1970, 7
    %v1972 = vsub.s32 %v386, %v1971
    %v1973 = vrot.slane %v1927, %v1972
    %v1974 = vsel %vm391, %v1973, %v1969
    %v1975 = vsel %vm412, %v1974, %v1955
    %v1977 = vadd.f32 %v1928, %v1975
    %1978 = vrot.lane.b32.xlu0 %v566, 32
    %v1979 = vpop.permute.xlu0 %1978
    %v1981 = vsel %vm414, %v1977, %v1979
    %v1982 = vlaneseq
    %v1983 = vshrl.u32 %v1982, 7
    %v1984 = vsub.s32 0, %v1983
    %v1985 = vrot.slane %v85, %v1984
    %v1987 = vsel %vm238, %v1981, 0
    %1989 = vmatprep.subr.mxu0 0.0
    %1990 = vmatpush1.msra.mxu0 %v68
    %1991 = vmatprep.subr.mxu0 0.0
    %1992 = vmatpush1.msra.mxu0 %v69
    %1993 = vmatprep.subr.mxu0 0.0
    %1994 = vmatpush1.msra.mxu0 %v70
    %1995 = vmatprep.subr.mxu0 0.0
    %1996 = vmatpush1.msra.mxu0 %v71
    %1997 = vmatprep.subr.mxu0 0.0
    %1998 = vmatpush1.msra.mxu0 %v72
    %1999 = vmatprep.subr.mxu0 0.0
    %2000 = vmatpush1.msra.mxu0 %v73
    %2001 = vmatprep.subr.mxu0 0.0
    %2002 = vmatpush1.msra.mxu0 %v74
    %2003 = vmatprep.subr.mxu0 0.0
    %2004 = vmatpush1.msra.mxu0 %v75
    %2005 = vmatprep.subr.mxu0 0.0
    %2006 = vmatpush1.msra.mxu0 0.0
    %2007 = vmatprep.subr.mxu0 0.0
    %2008 = vmatpush1.msra.mxu0 0.0
    %2009 = vmatprep.subr.mxu0 0.0
    %2010 = vmatpush1.msra.mxu0 0.0
    %2011 = vmatprep.subr.mxu0 0.0
    %2012 = vmatpush1.msra.mxu0 0.0
    %2013 = vmatprep.subr.mxu0 0.0
    %2014 = vmatpush1.msra.mxu0 0.0
    %2015 = vmatprep.subr.mxu0 0.0
    %2016 = vmatpush1.msra.mxu0 0.0
    %2017 = vmatprep.subr.mxu0 0.0
    %2018 = vmatpush1.msra.mxu0 0.0
    %2019 = vmatprep.subr.mxu0 0.0
    %2020 = vmatpush1.msra.mxu0 0.0
    %2021 = vmatprep.subr.mxu0 0.0
    %2022 = vmatpush1.msra.mxu0 0.0
    %2023 = vmatprep.subr.mxu0 0.0
    %2024 = vmatpush1.msra.mxu0 0.0
    %2025 = vmatprep.subr.mxu0 0.0
    %2026 = vmatpush1.msra.mxu0 0.0
    %2027 = vmatprep.subr.mxu0 0.0
    %2028 = vmatpush1.msra.mxu0 0.0
    %2029 = vmatprep.subr.mxu0 0.0
    %2030 = vmatpush1.msra.mxu0 0.0
    %2031 = vmatprep.subr.mxu0 0.0
    %2032 = vmatpush1.msra.mxu0 0.0
    %2033 = vmatprep.subr.mxu0 0.0
    %2034 = vmatpush1.msra.mxu0 0.0
    %2035 = vmatprep.subr.mxu0 0.0
    %2036 = vmatpush1.msra.mxu0 0.0
    %2037 = vmatprep.subr.mxu0 0.0
    %2038 = vmatpush1.msra.mxu0 0.0
    %2039 = vmatprep.subr.mxu0 0.0
    %2040 = vmatpush1.msra.mxu0 0.0
    %2041 = vmatprep.subr.mxu0 0.0
    %2042 = vmatpush1.msra.mxu0 0.0
    %2043 = vmatprep.subr.mxu0 0.0
    %2044 = vmatpush1.msra.mxu0 0.0
    %2045 = vmatprep.subr.mxu0 0.0
    %2046 = vmatpush1.msra.mxu0 0.0
    %2047 = vmatprep.subr.mxu0 0.0
    %2048 = vmatpush1.msra.mxu0 0.0
    %2049 = vmatprep.subr.mxu0 0.0
    %2050 = vmatpush1.msra.mxu0 0.0
    %2051 = vmatprep.subr.mxu0 0.0
    %2052 = vmatpush1.msra.mxu0 0.0
    %2053 = vmatprep.mubr.f32.mxu0 0.0
    %2054 = vmatmul.mubr.f32.gmra.mrb[0].mxu0 %v1987
    %v2055 = vpop.f32.mrb[0].mxu0
    %v2056 = vadd.f32 %v1985, %v2055
    %v2057 = vpop.f32.mrb[0].mxu0
    %2058 = vdwg.mxu0
    %v2059 = vmul.f32 %v2056, 0.5
    %v2060 = vtanh.pop %v2059
    %v2061 = vmul.f32 %v2060, 0.5
    %v2062 = vadd.f32 %v2061, 0.5
    %v2063 = vtanh.pop %v2056
    %v2064 = vmul.f32 %v2062, %v566
    %2066 = vrot.lane.b32.xlu0 %v2063, 64
    %v2067 = vpop.permute.xlu0 %2066
    %v2069 = vmul.f32 %v2062, %v2067
    %2071 = vrot.lane.b32.xlu0 %v2069, 32
    %v2072 = vpop.permute.xlu0 %2071
    %v2074 = vadd.f32 %v2064, %v2072
    %v2075 = vtanh.pop %v2074
    %2077 = vrot.lane.b32.xlu0 %v2075, 64
    %v2078 = vpop.permute.xlu0 %2077
    %v2080 = vmul.f32 %v2062, %v2078
    %2082 = vrot.lane.b32.xlu0 %v2080, 32
    %v2083 = vpop.permute.xlu0 %2082
    %v2084 = vsel %vm414, %v2083, 0
    %2086 = vmatprep.subr.mxu0 0.0
    %2087 = vmatpush1.msra.mxu0 %v52
    %2088 = vmatprep.subr.mxu0 0.0
    %2089 = vmatpush1.msra.mxu0 %v53
    %2090 = vmatprep.subr.mxu0 0.0
    %2091 = vmatpush1.msra.mxu0 %v54
    %2092 = vmatprep.subr.mxu0 0.0
    %2093 = vmatpush1.msra.mxu0 %v55
    %2094 = vmatprep.subr.mxu0 0.0
    %2095 = vmatpush1.msra.mxu0 0.0
    %2096 = vmatprep.subr.mxu0 0.0
    %2097 = vmatpush1.msra.mxu0 0.0
    %2098 = vmatprep.subr.mxu0 0.0
    %2099 = vmatpush1.msra.mxu0 0.0
    %2100 = vmatprep.subr.mxu0 0.0
    %2101 = vmatpush1.msra.mxu0 0.0
    %2102 = vmatprep.subr.mxu0 0.0
    %2103 = vmatpush1.msra.mxu0 0.0
    %2104 = vmatprep.subr.mxu0 0.0
    %2105 = vmatpush1.msra.mxu0 0.0
    %2106 = vmatprep.subr.mxu0 0.0
    %2107 = vmatpush1.msra.mxu0 0.0
    %2108 = vmatprep.subr.mxu0 0.0
    %2109 = vmatpush1.msra.mxu0 0.0
    %2110 = vmatprep.subr.mxu0 0.0
    %2111 = vmatpush1.msra.mxu0 0.0
    %2112 = vmatprep.subr.mxu0 0.0
    %2113 = vmatpush1.msra.mxu0 0.0
    %2114 = vmatprep.subr.mxu0 0.0
    %2115 = vmatpush1.msra.mxu0 0.0
    %2116 = vmatprep.subr.mxu0 0.0
    %2117 = vmatpush1.msra.mxu0 0.0
    %2118 = vmatprep.subr.mxu0 0.0
    %2119 = vmatpush1.msra.mxu0 0.0
    %2120 = vmatprep.subr.mxu0 0.0
    %2121 = vmatpush1.msra.mxu0 0.0
    %2122 = vmatprep.subr.mxu0 0.0
    %2123 = vmatpush1.msra.mxu0 0.0
    %2124 = vmatprep.subr.mxu0 0.0
    %2125 = vmatpush1.msra.mxu0 0.0
    %2126 = vmatprep.subr.mxu0 0.0
    %2127 = vmatpush1.msra.mxu0 0.0
    %2128 = vmatprep.subr.mxu0 0.0
    %2129 = vmatpush1.msra.mxu0 0.0
    %2130 = vmatprep.subr.mxu0 0.0
    %2131 = vmatpush1.msra.mxu0 0.0
    %2132 = vmatprep.subr.mxu0 0.0
    %2133 = vmatpush1.msra.mxu0 0.0
    %2134 = vmatprep.subr.mxu0 0.0
    %2135 = vmatpush1.msra.mxu0 0.0
    %2136 = vmatprep.subr.mxu0 0.0
    %2137 = vmatpush1.msra.mxu0 0.0
    %2138 = vmatprep.subr.mxu0 0.0
    %2139 = vmatpush1.msra.mxu0 0.0
    %2140 = vmatprep.subr.mxu0 0.0
    %2141 = vmatpush1.msra.mxu0 0.0
    %2142 = vmatprep.subr.mxu0 0.0
    %2143 = vmatpush1.msra.mxu0 0.0
    %2144 = vmatprep.subr.mxu0 0.0
    %2145 = vmatpush1.msra.mxu0 0.0
    %2146 = vmatprep.subr.mxu0 0.0
    %2147 = vmatpush1.msra.mxu0 0.0
    %2148 = vmatprep.subr.mxu0 0.0
    %2149 = vmatpush1.msra.mxu0 0.0
    %2150 = vmatprep.mubr.f32.mxu0 0.0
    %2151 = vmatmul.mubr.f32.gmra.mrb[0].mxu0 %v2084
    %v2152 = vpop.f32.mrb[0].mxu0
    %v2153 = vadd.f32 0.0, %v2152
    %v2154 = vpop.f32.mrb[0].mxu0
    %2155 = vdwg.mxu0
    %v2157 = vrot.slane %v2153, 6
    %v2159 = vrot.slane %v2153, 4
    %v2161 = vrot.slane %v2153, 2
    %v2163 = vsel %vm647, %v2153, %v2157
    %v2164 = vsel %vm649, %v2163, %v2159
    %v2165 = vsel %vm651, %v2164, %v2161
    %v2166 = vadd.f32 %v2165, %v312
    %v2167 = vadd.f32 %v2165, %v317
    %v2168 = vtanh.pop %v2166
    %v2169 = vtanh.pop %v2167
    %v2170 = vmul.f32 %v2168, %v660
    %v2171 = vmul.f32 %v2169, %v660
    %v2172 = vsel %vm414, %v2170, 0.0
    %2173 = vadd.xlane.f32.xlu0 %v2172
    %v2174 = vpop.xlane.xlu0 %2173
    %v2175 = vsel %vm414, %v2171, 0.0
    %2176 = vadd.xlane.f32.xlu0 %v2175
    %v2177 = vpop.xlane.xlu0 %2176
    %v2180 = vlaneseq
    %v2181 = vshrl.u32 %v2180, 7
    %v2182 = vsub.s32 %v367, %v2181
    %v2183 = vrot.slane %v2174, %v2182
    %v2184 = vlaneseq
    %v2185 = vshrl.u32 %v2184, 7
    %v2186 = vsub.s32 %v367, %v2185
    %v2187 = vrot.slane %v2177, %v2186
    %v2188 = vsel %vm412, %v2187, %v2183
    %v2190 = vsel %vm681, %v2188, -inf
    %2191 = vmax.xlane.f32.xlu0 %v2190
    %v2192 = vpop.xlane.xlu0 %2191
    %v2194 = vlaneseq
    %v2195 = vshrl.u32 %v2194, 7
    %v2196 = vsub.s32 0, %v2195
    %v2197 = vrot.slane %v2192, %v2196
    %v2198 = vlaneseq
    %v2199 = vshrl.u32 %v2198, 7
    %v2200 = vsub.s32 1, %v2199
    %v2201 = vrot.slane %v2192, %v2200
    %v2204 = vsub.f32 %v2174, %v2197
    %v2205 = vsub.f32 %v2177, %v2201
    %v2206 = vmul.f32 %v2204, 1.442695
    %v2207 = vpow.pop %v2206
    %v2208 = vmul.f32 %v2205, 1.442695
    %v2209 = vpow.pop %v2208
    %2212 = vset.pattern.permute.xlu0 0
    %2213 = vperm.xlu0 %2212, %v2207
    %v2214 = vpop.permute.xlu0 %2213
    %2215 = vset.pattern.permute.xlu0 0
    %2216 = vperm.xlu0 %2215, %v2209
    %v2217 = vpop.permute.xlu0 %2216
    %v2218 = vlaneseq
    %v2219 = vshrl.u32 %v2218, 7
    %v2220 = vsub.s32 %v367, %v2219
    %v2221 = vrot.slane %v2214, %v2220
    %v2222 = vlaneseq
    %v2223 = vshrl.u32 %v2222, 7
    %v2224 = vsub.s32 %v367, %v2223
    %v2225 = vrot.slane %v2217, %v2224
    %v2226 = vsel %vm412, %v2225, %v2221
    %v2228 = vsel %vm681, %v2226, 0.0
    %2229 = vadd.xlane.f32.xlu0 %v2228
    %v2230 = vpop.xlane.xlu0 %2229
    %v2232 = vlaneseq
    %v2233 = vshrl.u32 %v2232, 7
    %v2234 = vsub.s32 0, %v2233
    %v2235 = vrot.slane %v2230, %v2234
    %v2236 = vlaneseq
    %v2237 = vshrl.u32 %v2236, 7
    %v2238 = vsub.s32 1, %v2237
    %v2239 = vrot.slane %v2230, %v2238
    %v2242 = vrcp.pop %v2235
    %v2243 = vmul.f32 %v2207, %v2242
    %v2244 = vrcp.pop %v2239
    %v2245 = vmul.f32 %v2209, %v2244
    %v2246 = vmul.f32 %v2243, %v752
    %v2247 = vmul.f32 %v2243, %v759
    %v2248 = vmul.f32 %v2243, %v766
    %v2249 = vmul.f32 %v2243, %v773
    %v2250 = vmul.f32 %v2243, %v780
    %v2251 = vmul.f32 %v2243, %v787
    %v2252 = vmul.f32 %v2243, %v794
    %v2253 = vmul.f32 %v2243, %v801
    %v2254 = vmul.f32 %v2243, %v808
    %v2255 = vmul.f32 %v2243, %v815
    %v2256 = vmul.f32 %v2243, %v822
    %v2257 = vmul.f32 %v2243, %v829
    %v2258 = vmul.f32 %v2243, %v836
    %v2259 = vmul.f32 %v2243, %v843
    %v2260 = vmul.f32 %v2243, %v850
    %v2261 = vmul.f32 %v2243, %v857
    %v2262 = vmul.f32 %v2243, %v864
    %v2263 = vmul.f32 %v2243, %v871
    %v2264 = vmul.f32 %v2243, %v878
    %v2265 = vmul.f32 %v2243, %v885
    %v2266 = vmul.f32 %v2243, %v892
    %v2267 = vmul.f32 %v2243, %v899
    %v2268 = vmul.f32 %v2243, %v906
    %v2269 = vmul.f32 %v2243, %v913
    %v2270 = vmul.f32 %v2243, %v920
    %v2271 = vmul.f32 %v2243, %v927
    %v2272 = vmul.f32 %v2243, %v934
    %v2273 = vmul.f32 %v2243, %v941
    %v2274 = vmul.f32 %v2243, %v948
    %v2275 = vmul.f32 %v2243, %v955
    %v2276 = vmul.f32 %v2243, %v962
    %v2277 = vmul.f32 %v2243, %v969
    %v2278 = vmul.f32 %v2245, %v976
    %v2279 = vmul.f32 %v2245, %v983
    %v2280 = vmul.f32 %v2245, %v990
    %v2281 = vmul.f32 %v2245, %v997
    %v2282 = vmul.f32 %v2245, %v1004
    %v2283 = vmul.f32 %v2245, %v1011
    %v2284 = vmul.f32 %v2245, %v1018
    %v2285 = vmul.f32 %v2245, %v1025
    %v2286 = vmul.f32 %v2245, %v1032
    %v2287 = vmul.f32 %v2245, %v1039
    %v2288 = vmul.f32 %v2245, %v1046
    %v2289 = vmul.f32 %v2245, %v1053
    %v2290 = vmul.f32 %v2245, %v1060
    %v2291 = vmul.f32 %v2245, %v1067
    %v2292 = vmul.f32 %v2245, %v1074
    %v2293 = vmul.f32 %v2245, %v1081
    %v2294 = vmul.f32 %v2245, %v1088
    %v2295 = vmul.f32 %v2245, %v1095
    %v2296 = vmul.f32 %v2245, %v1102
    %v2297 = vmul.f32 %v2245, %v1109
    %v2298 = vmul.f32 %v2245, %v1116
    %v2299 = vmul.f32 %v2245, %v1123
    %v2300 = vmul.f32 %v2245, %v1130
    %v2301 = vmul.f32 %v2245, %v1137
    %v2302 = vmul.f32 %v2245, %v1144
    %v2303 = vmul.f32 %v2245, %v1151
    %v2304 = vmul.f32 %v2245, %v1158
    %v2305 = vmul.f32 %v2245, %v1165
    %v2306 = vmul.f32 %v2245, %v1172
    %v2307 = vmul.f32 %v2245, %v1179
    %v2308 = vmul.f32 %v2245, %v1186
    %v2309 = vmul.f32 %v2245, %v1193
    %2374 = vset.pattern.permute.xlu0 0
    %2375 = vperm.xlu0 %2374, %v2246
    %v2376 = vpop.permute.xlu0 %2375
    %2377 = vset.pattern.permute.xlu0 0
    %2378 = vperm.xlu0 %2377, %v2247
    %v2379 = vpop.permute.xlu0 %2378
    %2380 = vset.pattern.permute.xlu0 0
    %2381 = vperm.xlu0 %2380, %v2248
    %v2382 = vpop.permute.xlu0 %2381
    %2383 = vset.pattern.permute.xlu0 0
    %2384 = vperm.xlu0 %2383, %v2249
    %v2385 = vpop.permute.xlu0 %2384
    %2386 = vset.pattern.permute.xlu0 0
    %2387 = vperm.xlu0 %2386, %v2250
    %v2388 = vpop.permute.xlu0 %2387
    %2389 = vset.pattern.permute.xlu0 0
    %2390 = vperm.xlu0 %2389, %v2251
    %v2391 = vpop.permute.xlu0 %2390
    %2392 = vset.pattern.permute.xlu0 0
    %2393 = vperm.xlu0 %2392, %v2252
    %v2394 = vpop.permute.xlu0 %2393
    %2395 = vset.pattern.permute.xlu0 0
    %2396 = vperm.xlu0 %2395, %v2253
    %v2397 = vpop.permute.xlu0 %2396
    %2398 = vset.pattern.permute.xlu0 0
    %2399 = vperm.xlu0 %2398, %v2254
    %v2400 = vpop.permute.xlu0 %2399
    %2401 = vset.pattern.permute.xlu0 0
    %2402 = vperm.xlu0 %2401, %v2255
    %v2403 = vpop.permute.xlu0 %2402
    %2404 = vset.pattern.permute.xlu0 0
    %2405 = vperm.xlu0 %2404, %v2256
    %v2406 = vpop.permute.xlu0 %2405
    %2407 = vset.pattern.permute.xlu0 0
    %2408 = vperm.xlu0 %2407, %v2257
    %v2409 = vpop.permute.xlu0 %2408
    %2410 = vset.pattern.permute.xlu0 0
    %2411 = vperm.xlu0 %2410, %v2258
    %v2412 = vpop.permute.xlu0 %2411
    %2413 = vset.pattern.permute.xlu0 0
    %2414 = vperm.xlu0 %2413, %v2259
    %v2415 = vpop.permute.xlu0 %2414
    %2416 = vset.pattern.permute.xlu0 0
    %2417 = vperm.xlu0 %2416, %v2260
    %v2418 = vpop.permute.xlu0 %2417
    %2419 = vset.pattern.permute.xlu0 0
    %2420 = vperm.xlu0 %2419, %v2261
    %v2421 = vpop.permute.xlu0 %2420
    %2422 = vset.pattern.permute.xlu0 0
    %2423 = vperm.xlu0 %2422, %v2262
    %v2424 = vpop.permute.xlu0 %2423
    %2425 = vset.pattern.permute.xlu0 0
    %2426 = vperm.xlu0 %2425, %v2263
    %v2427 = vpop.permute.xlu0 %2426
    %2428 = vset.pattern.permute.xlu0 0
    %2429 = vperm.xlu0 %2428, %v2264
    %v2430 = vpop.permute.xlu0 %2429
    %2431 = vset.pattern.permute.xlu0 0
    %2432 = vperm.xlu0 %2431, %v2265
    %v2433 = vpop.permute.xlu0 %2432
    %2434 = vset.pattern.permute.xlu0 0
    %2435 = vperm.xlu0 %2434, %v2266
    %v2436 = vpop.permute.xlu0 %2435
    %2437 = vset.pattern.permute.xlu0 0
    %2438 = vperm.xlu0 %2437, %v2267
    %v2439 = vpop.permute.xlu0 %2438
    %2440 = vset.pattern.permute.xlu0 0
    %2441 = vperm.xlu0 %2440, %v2268
    %v2442 = vpop.permute.xlu0 %2441
    %2443 = vset.pattern.permute.xlu0 0
    %2444 = vperm.xlu0 %2443, %v2269
    %v2445 = vpop.permute.xlu0 %2444
    %2446 = vset.pattern.permute.xlu0 0
    %2447 = vperm.xlu0 %2446, %v2270
    %v2448 = vpop.permute.xlu0 %2447
    %2449 = vset.pattern.permute.xlu0 0
    %2450 = vperm.xlu0 %2449, %v2271
    %v2451 = vpop.permute.xlu0 %2450
    %2452 = vset.pattern.permute.xlu0 0
    %2453 = vperm.xlu0 %2452, %v2272
    %v2454 = vpop.permute.xlu0 %2453
    %2455 = vset.pattern.permute.xlu0 0
    %2456 = vperm.xlu0 %2455, %v2273
    %v2457 = vpop.permute.xlu0 %2456
    %2458 = vset.pattern.permute.xlu0 0
    %2459 = vperm.xlu0 %2458, %v2274
    %v2460 = vpop.permute.xlu0 %2459
    %2461 = vset.pattern.permute.xlu0 0
    %2462 = vperm.xlu0 %2461, %v2275
    %v2463 = vpop.permute.xlu0 %2462
    %2464 = vset.pattern.permute.xlu0 0
    %2465 = vperm.xlu0 %2464, %v2276
    %v2466 = vpop.permute.xlu0 %2465
    %2467 = vset.pattern.permute.xlu0 0
    %2468 = vperm.xlu0 %2467, %v2277
    %v2469 = vpop.permute.xlu0 %2468
    %2470 = vset.pattern.permute.xlu0 0
    %2471 = vperm.xlu0 %2470, %v2278
    %v2472 = vpop.permute.xlu0 %2471
    %2473 = vset.pattern.permute.xlu0 0
    %2474 = vperm.xlu0 %2473, %v2279
    %v2475 = vpop.permute.xlu0 %2474
    %2476 = vset.pattern.permute.xlu0 0
    %2477 = vperm.xlu0 %2476, %v2280
    %v2478 = vpop.permute.xlu0 %2477
    %2479 = vset.pattern.permute.xlu0 0
    %2480 = vperm.xlu0 %2479, %v2281
    %v2481 = vpop.permute.xlu0 %2480
    %2482 = vset.pattern.permute.xlu0 0
    %2483 = vperm.xlu0 %2482, %v2282
    %v2484 = vpop.permute.xlu0 %2483
    %2485 = vset.pattern.permute.xlu0 0
    %2486 = vperm.xlu0 %2485, %v2283
    %v2487 = vpop.permute.xlu0 %2486
    %2488 = vset.pattern.permute.xlu0 0
    %2489 = vperm.xlu0 %2488, %v2284
    %v2490 = vpop.permute.xlu0 %2489
    %2491 = vset.pattern.permute.xlu0 0
    %2492 = vperm.xlu0 %2491, %v2285
    %v2493 = vpop.permute.xlu0 %2492
    %2494 = vset.pattern.permute.xlu0 0
    %2495 = vperm.xlu0 %2494, %v2286
    %v2496 = vpop.permute.xlu0 %2495
    %2497 = vset.pattern.permute.xlu0 0
    %2498 = vperm.xlu0 %2497, %v2287
    %v2499 = vpop.permute.xlu0 %2498
    %2500 = vset.pattern.permute.xlu0 0
    %2501 = vperm.xlu0 %2500, %v2288
    %v2502 = vpop.permute.xlu0 %2501
    %2503 = vset.pattern.permute.xlu0 0
    %2504 = vperm.xlu0 %2503, %v2289
    %v2505 = vpop.permute.xlu0 %2504
    %2506 = vset.pattern.permute.xlu0 0
    %2507 = vperm.xlu0 %2506, %v2290
    %v2508 = vpop.permute.xlu0 %2507
    %2509 = vset.pattern.permute.xlu0 0
    %2510 = vperm.xlu0 %2509, %v2291
    %v2511 = vpop.permute.xlu0 %2510
    %2512 = vset.pattern.permute.xlu0 0
    %2513 = vperm.xlu0 %2512, %v2292
    %v2514 = vpop.permute.xlu0 %2513
    %2515 = vset.pattern.permute.xlu0 0
    %2516 = vperm.xlu0 %2515, %v2293
    %v2517 = vpop.permute.xlu0 %2516
    %2518 = vset.pattern.permute.xlu0 0
    %2519 = vperm.xlu0 %2518, %v2294
    %v2520 = vpop.permute.xlu0 %2519
    %2521 = vset.pattern.permute.xlu0 0
    %2522 = vperm.xlu0 %2521, %v2295
    %v2523 = vpop.permute.xlu0 %2522
    %2524 = vset.pattern.permute.xlu0 0
    %2525 = vperm.xlu0 %2524, %v2296
    %v2526 = vpop.permute.xlu0 %2525
    %2527 = vset.pattern.permute.xlu0 0
    %2528 = vperm.xlu0 %2527, %v2297
    %v2529 = vpop.permute.xlu0 %2528
    %2530 = vset.pattern.permute.xlu0 0
    %2531 = vperm.xlu0 %2530, %v2298
    %v2532 = vpop.permute.xlu0 %2531
    %2533 = vset.pattern.permute.xlu0 0
    %2534 = vperm.xlu0 %2533, %v2299
    %v2535 = vpop.permute.xlu0 %2534
    %2536 = vset.pattern.permute.xlu0 0
    %2537 = vperm.xlu0 %2536, %v2300
    %v2538 = vpop.permute.xlu0 %2537
    %2539 = vset.pattern.permute.xlu0 0
    %2540 = vperm.xlu0 %2539, %v2301
    %v2541 = vpop.permute.xlu0 %2540
    %2542 = vset.pattern.permute.xlu0 0
    %2543 = vperm.xlu0 %2542, %v2302
    %v2544 = vpop.permute.xlu0 %2543
    %2545 = vset.pattern.permute.xlu0 0
    %2546 = vperm.xlu0 %2545, %v2303
    %v2547 = vpop.permute.xlu0 %2546
    %2548 = vset.pattern.permute.xlu0 0
    %2549 = vperm.xlu0 %2548, %v2304
    %v2550 = vpop.permute.xlu0 %2549
    %2551 = vset.pattern.permute.xlu0 0
    %2552 = vperm.xlu0 %2551, %v2305
    %v2553 = vpop.permute.xlu0 %2552
    %2554 = vset.pattern.permute.xlu0 0
    %2555 = vperm.xlu0 %2554, %v2306
    %v2556 = vpop.permute.xlu0 %2555
    %2557 = vset.pattern.permute.xlu0 0
    %2558 = vperm.xlu0 %2557, %v2307
    %v2559 = vpop.permute.xlu0 %2558
    %2560 = vset.pattern.permute.xlu0 0
    %2561 = vperm.xlu0 %2560, %v2308
    %v2562 = vpop.permute.xlu0 %2561
    %2563 = vset.pattern.permute.xlu0 0
    %2564 = vperm.xlu0 %2563, %v2309
    %v2565 = vpop.permute.xlu0 %2564
    %v2566 = vlaneseq
    %v2567 = vshrl.u32 %v2566, 7
    %v2568 = vsub.s32 %v367, %v2567
    %v2569 = vrot.slane %v2376, %v2568
    %v2570 = vlaneseq
    %v2571 = vshrl.u32 %v2570, 7
    %v2572 = vsub.s32 %v367, %v2571
    %v2573 = vrot.slane %v2379, %v2572
    %v2574 = vlaneseq
    %v2575 = vshrl.u32 %v2574, 7
    %v2576 = vsub.s32 %v367, %v2575
    %v2577 = vrot.slane %v2382, %v2576
    %v2578 = vlaneseq
    %v2579 = vshrl.u32 %v2578, 7
    %v2580 = vsub.s32 %v367, %v2579
    %v2581 = vrot.slane %v2385, %v2580
    %v2582 = vlaneseq
    %v2583 = vshrl.u32 %v2582, 7
    %v2584 = vsub.s32 %v367, %v2583
    %v2585 = vrot.slane %v2388, %v2584
    %v2586 = vlaneseq
    %v2587 = vshrl.u32 %v2586, 7
    %v2588 = vsub.s32 %v367, %v2587
    %v2589 = vrot.slane %v2391, %v2588
    %v2590 = vlaneseq
    %v2591 = vshrl.u32 %v2590, 7
    %v2592 = vsub.s32 %v367, %v2591
    %v2593 = vrot.slane %v2394, %v2592
    %v2594 = vlaneseq
    %v2595 = vshrl.u32 %v2594, 7
    %v2596 = vsub.s32 %v367, %v2595
    %v2597 = vrot.slane %v2397, %v2596
    %v2598 = vlaneseq
    %v2599 = vshrl.u32 %v2598, 7
    %v2600 = vsub.s32 %v367, %v2599
    %v2601 = vrot.slane %v2400, %v2600
    %v2602 = vlaneseq
    %v2603 = vshrl.u32 %v2602, 7
    %v2604 = vsub.s32 %v367, %v2603
    %v2605 = vrot.slane %v2403, %v2604
    %v2606 = vlaneseq
    %v2607 = vshrl.u32 %v2606, 7
    %v2608 = vsub.s32 %v367, %v2607
    %v2609 = vrot.slane %v2406, %v2608
    %v2610 = vlaneseq
    %v2611 = vshrl.u32 %v2610, 7
    %v2612 = vsub.s32 %v367, %v2611
    %v2613 = vrot.slane %v2409, %v2612
    %v2614 = vlaneseq
    %v2615 = vshrl.u32 %v2614, 7
    %v2616 = vsub.s32 %v367, %v2615
    %v2617 = vrot.slane %v2412, %v2616
    %v2618 = vlaneseq
    %v2619 = vshrl.u32 %v2618, 7
    %v2620 = vsub.s32 %v367, %v2619
    %v2621 = vrot.slane %v2415, %v2620
    %v2622 = vlaneseq
    %v2623 = vshrl.u32 %v2622, 7
    %v2624 = vsub.s32 %v367, %v2623
    %v2625 = vrot.slane %v2418, %v2624
    %v2626 = vlaneseq
    %v2627 = vshrl.u32 %v2626, 7
    %v2628 = vsub.s32 %v367, %v2627
    %v2629 = vrot.slane %v2421, %v2628
    %v2630 = vlaneseq
    %v2631 = vshrl.u32 %v2630, 7
    %v2632 = vsub.s32 %v367, %v2631
    %v2633 = vrot.slane %v2424, %v2632
    %v2634 = vlaneseq
    %v2635 = vshrl.u32 %v2634, 7
    %v2636 = vsub.s32 %v367, %v2635
    %v2637 = vrot.slane %v2427, %v2636
    %v2638 = vlaneseq
    %v2639 = vshrl.u32 %v2638, 7
    %v2640 = vsub.s32 %v367, %v2639
    %v2641 = vrot.slane %v2430, %v2640
    %v2642 = vlaneseq
    %v2643 = vshrl.u32 %v2642, 7
    %v2644 = vsub.s32 %v367, %v2643
    %v2645 = vrot.slane %v2433, %v2644
    %v2646 = vlaneseq
    %v2647 = vshrl.u32 %v2646, 7
    %v2648 = vsub.s32 %v367, %v2647
    %v2649 = vrot.slane %v2436, %v2648
    %v2650 = vlaneseq
    %v2651 = vshrl.u32 %v2650, 7
    %v2652 = vsub.s32 %v367, %v2651
    %v2653 = vrot.slane %v2439, %v2652
    %v2654 = vlaneseq
    %v2655 = vshrl.u32 %v2654, 7
    %v2656 = vsub.s32 %v367, %v2655
    %v2657 = vrot.slane %v2442, %v2656
    %v2658 = vlaneseq
    %v2659 = vshrl.u32 %v2658, 7
    %v2660 = vsub.s32 %v367, %v2659
    %v2661 = vrot.slane %v2445, %v2660
    %v2662 = vlaneseq
    %v2663 = vshrl.u32 %v2662, 7
    %v2664 = vsub.s32 %v367, %v2663
    %v2665 = vrot.slane %v2448, %v2664
    %v2666 = vlaneseq
    %v2667 = vshrl.u32 %v2666, 7
    %v2668 = vsub.s32 %v367, %v2667
    %v2669 = vrot.slane %v2451, %v2668
    %v2670 = vlaneseq
    %v2671 = vshrl.u32 %v2670, 7
    %v2672 = vsub.s32 %v367, %v2671
    %v2673 = vrot.slane %v2454, %v2672
    %v2674 = vlaneseq
    %v2675 = vshrl.u32 %v2674, 7
    %v2676 = vsub.s32 %v367, %v2675
    %v2677 = vrot.slane %v2457, %v2676
    %v2678 = vlaneseq
    %v2679 = vshrl.u32 %v2678, 7
    %v2680 = vsub.s32 %v367, %v2679
    %v2681 = vrot.slane %v2460, %v2680
    %v2682 = vlaneseq
    %v2683 = vshrl.u32 %v2682, 7
    %v2684 = vsub.s32 %v367, %v2683
    %v2685 = vrot.slane %v2463, %v2684
    %v2686 = vlaneseq
    %v2687 = vshrl.u32 %v2686, 7
    %v2688 = vsub.s32 %v367, %v2687
    %v2689 = vrot.slane %v2466, %v2688
    %v2690 = vlaneseq
    %v2691 = vshrl.u32 %v2690, 7
    %v2692 = vsub.s32 %v367, %v2691
    %v2693 = vrot.slane %v2469, %v2692
    %v2694 = vlaneseq
    %v2695 = vshrl.u32 %v2694, 7
    %v2696 = vsub.s32 %v367, %v2695
    %v2697 = vrot.slane %v2472, %v2696
    %v2698 = vlaneseq
    %v2699 = vshrl.u32 %v2698, 7
    %v2700 = vsub.s32 %v367, %v2699
    %v2701 = vrot.slane %v2475, %v2700
    %v2702 = vlaneseq
    %v2703 = vshrl.u32 %v2702, 7
    %v2704 = vsub.s32 %v367, %v2703
    %v2705 = vrot.slane %v2478, %v2704
    %v2706 = vlaneseq
    %v2707 = vshrl.u32 %v2706, 7
    %v2708 = vsub.s32 %v367, %v2707
    %v2709 = vrot.slane %v2481, %v2708
    %v2710 = vlaneseq
    %v2711 = vshrl.u32 %v2710, 7
    %v2712 = vsub.s32 %v367, %v2711
    %v2713 = vrot.slane %v2484, %v2712
    %v2714 = vlaneseq
    %v2715 = vshrl.u32 %v2714, 7
    %v2716 = vsub.s32 %v367, %v2715
    %v2717 = vrot.slane %v2487, %v2716
    %v2718 = vlaneseq
    %v2719 = vshrl.u32 %v2718, 7
    %v2720 = vsub.s32 %v367, %v2719
    %v2721 = vrot.slane %v2490, %v2720
    %v2722 = vlaneseq
    %v2723 = vshrl.u32 %v2722, 7
    %v2724 = vsub.s32 %v367, %v2723
    %v2725 = vrot.slane %v2493, %v2724
    %v2726 = vlaneseq
    %v2727 = vshrl.u32 %v2726, 7
    %v2728 = vsub.s32 %v367, %v2727
    %v2729 = vrot.slane %v2496, %v2728
    %v2730 = vlaneseq
    %v2731 = vshrl.u32 %v2730, 7
    %v2732 = vsub.s32 %v367, %v2731
    %v2733 = vrot.slane %v2499, %v2732
    %v2734 = vlaneseq
    %v2735 = vshrl.u32 %v2734, 7
    %v2736 = vsub.s32 %v367, %v2735
    %v2737 = vrot.slane %v2502, %v2736
    %v2738 = vlaneseq
    %v2739 = vshrl.u32 %v2738, 7
    %v2740 = vsub.s32 %v367, %v2739
    %v2741 = vrot.slane %v2505, %v2740
    %v2742 = vlaneseq
    %v2743 = vshrl.u32 %v2742, 7
    %v2744 = vsub.s32 %v367, %v2743
    %v2745 = vrot.slane %v2508, %v2744
    %v2746 = vlaneseq
    %v2747 = vshrl.u32 %v2746, 7
    %v2748 = vsub.s32 %v367, %v2747
    %v2749 = vrot.slane %v2511, %v2748
    %v2750 = vlaneseq
    %v2751 = vshrl.u32 %v2750, 7
    %v2752 = vsub.s32 %v367, %v2751
    %v2753 = vrot.slane %v2514, %v2752
    %v2754 = vlaneseq
    %v2755 = vshrl.u32 %v2754, 7
    %v2756 = vsub.s32 %v367, %v2755
    %v2757 = vrot.slane %v2517, %v2756
    %v2758 = vlaneseq
    %v2759 = vshrl.u32 %v2758, 7
    %v2760 = vsub.s32 %v367, %v2759
    %v2761 = vrot.slane %v2520, %v2760
    %v2762 = vlaneseq
    %v2763 = vshrl.u32 %v2762, 7
    %v2764 = vsub.s32 %v367, %v2763
    %v2765 = vrot.slane %v2523, %v2764
    %v2766 = vlaneseq
    %v2767 = vshrl.u32 %v2766, 7
    %v2768 = vsub.s32 %v367, %v2767
    %v2769 = vrot.slane %v2526, %v2768
    %v2770 = vlaneseq
    %v2771 = vshrl.u32 %v2770, 7
    %v2772 = vsub.s32 %v367, %v2771
    %v2773 = vrot.slane %v2529, %v2772
    %v2774 = vlaneseq
    %v2775 = vshrl.u32 %v2774, 7
    %v2776 = vsub.s32 %v367, %v2775
    %v2777 = vrot.slane %v2532, %v2776
    %v2778 = vlaneseq
    %v2779 = vshrl.u32 %v2778, 7
    %v2780 = vsub.s32 %v367, %v2779
    %v2781 = vrot.slane %v2535, %v2780
    %v2782 = vlaneseq
    %v2783 = vshrl.u32 %v2782, 7
    %v2784 = vsub.s32 %v367, %v2783
    %v2785 = vrot.slane %v2538, %v2784
    %v2786 = vlaneseq
    %v2787 = vshrl.u32 %v2786, 7
    %v2788 = vsub.s32 %v367, %v2787
    %v2789 = vrot.slane %v2541, %v2788
    %v2790 = vlaneseq
    %v2791 = vshrl.u32 %v2790, 7
    %v2792 = vsub.s32 %v367, %v2791
    %v2793 = vrot.slane %v2544, %v2792
    %v2794 = vlaneseq
    %v2795 = vshrl.u32 %v2794, 7
    %v2796 = vsub.s32 %v367, %v2795
    %v2797 = vrot.slane %v2547, %v2796
    %v2798 = vlaneseq
    %v2799 = vshrl.u32 %v2798, 7
    %v2800 = vsub.s32 %v367, %v2799
    %v2801 = vrot.slane %v2550, %v2800
    %v2802 = vlaneseq
    %v2803 = vshrl.u32 %v2802, 7
    %v2804 = vsub.s32 %v367, %v2803
    %v2805 = vrot.slane %v2553, %v2804
    %v2806 = vlaneseq
    %v2807 = vshrl.u32 %v2806, 7
    %v2808 = vsub.s32 %v367, %v2807
    %v2809 = vrot.slane %v2556, %v2808
    %v2810 = vlaneseq
    %v2811 = vshrl.u32 %v2810, 7
    %v2812 = vsub.s32 %v367, %v2811
    %v2813 = vrot.slane %v2559, %v2812
    %v2814 = vlaneseq
    %v2815 = vshrl.u32 %v2814, 7
    %v2816 = vsub.s32 %v367, %v2815
    %v2817 = vrot.slane %v2562, %v2816
    %v2818 = vlaneseq
    %v2819 = vshrl.u32 %v2818, 7
    %v2820 = vsub.s32 %v367, %v2819
    %v2821 = vrot.slane %v2565, %v2820
    %v2822 = vsel %vm412, %v2573, %v2569
    %v2823 = vsel %vm1835, %v2577, %v2822
    %v2824 = vsel %vm1837, %v2581, %v2823
    %v2825 = vsel %vm1839, %v2585, %v2824
    %v2826 = vsel %vm1841, %v2589, %v2825
    %v2827 = vsel %vm1843, %v2593, %v2826
    %v2828 = vsel %vm1845, %v2597, %v2827
    %v2829 = vsel %vm412, %v2605, %v2601
    %v2830 = vsel %vm1835, %v2609, %v2829
    %v2831 = vsel %vm1837, %v2613, %v2830
    %v2832 = vsel %vm1839, %v2617, %v2831
    %v2833 = vsel %vm1841, %v2621, %v2832
    %v2834 = vsel %vm1843, %v2625, %v2833
    %v2835 = vsel %vm1845, %v2629, %v2834
    %v2836 = vsel %vm412, %v2637, %v2633
    %v2837 = vsel %vm1835, %v2641, %v2836
    %v2838 = vsel %vm1837, %v2645, %v2837
    %v2839 = vsel %vm1839, %v2649, %v2838
    %v2840 = vsel %vm1841, %v2653, %v2839
    %v2841 = vsel %vm1843, %v2657, %v2840
    %v2842 = vsel %vm1845, %v2661, %v2841
    %v2843 = vsel %vm412, %v2669, %v2665
    %v2844 = vsel %vm1835, %v2673, %v2843
    %v2845 = vsel %vm1837, %v2677, %v2844
    %v2846 = vsel %vm1839, %v2681, %v2845
    %v2847 = vsel %vm1841, %v2685, %v2846
    %v2848 = vsel %vm1843, %v2689, %v2847
    %v2849 = vsel %vm1845, %v2693, %v2848
    %v2850 = vsel %vm412, %v2701, %v2697
    %v2851 = vsel %vm1835, %v2705, %v2850
    %v2852 = vsel %vm1837, %v2709, %v2851
    %v2853 = vsel %vm1839, %v2713, %v2852
    %v2854 = vsel %vm1841, %v2717, %v2853
    %v2855 = vsel %vm1843, %v2721, %v2854
    %v2856 = vsel %vm1845, %v2725, %v2855
    %v2857 = vsel %vm412, %v2733, %v2729
    %v2858 = vsel %vm1835, %v2737, %v2857
    %v2859 = vsel %vm1837, %v2741, %v2858
    %v2860 = vsel %vm1839, %v2745, %v2859
    %v2861 = vsel %vm1841, %v2749, %v2860
    %v2862 = vsel %vm1843, %v2753, %v2861
    %v2863 = vsel %vm1845, %v2757, %v2862
    %v2864 = vsel %vm412, %v2765, %v2761
    %v2865 = vsel %vm1835, %v2769, %v2864
    %v2866 = vsel %vm1837, %v2773, %v2865
    %v2867 = vsel %vm1839, %v2777, %v2866
    %v2868 = vsel %vm1841, %v2781, %v2867
    %v2869 = vsel %vm1843, %v2785, %v2868
    %v2870 = vsel %vm1845, %v2789, %v2869
    %v2871 = vsel %vm412, %v2797, %v2793
    %v2872 = vsel %vm1835, %v2801, %v2871
    %v2873 = vsel %vm1837, %v2805, %v2872
    %v2874 = vsel %vm1839, %v2809, %v2873
    %v2875 = vsel %vm1841, %v2813, %v2874
    %v2876 = vsel %vm1843, %v2817, %v2875
    %v2877 = vsel %vm1845, %v2821, %v2876
    %v2886 = vsel %vm320, %v2828, 0.0
    %2887 = vadd.xlane.f32.xlu0 %v2886
    %v2888 = vpop.xlane.xlu0 %2887
    %v2889 = vsel %vm320, %v2835, 0.0
    %2890 = vadd.xlane.f32.xlu0 %v2889
    %v2891 = vpop.xlane.xlu0 %2890
    %v2892 = vsel %vm320, %v2842, 0.0
    %2893 = vadd.xlane.f32.xlu0 %v2892
    %v2894 = vpop.xlane.xlu0 %2893
    %v2895 = vsel %vm320, %v2849, 0.0
    %2896 = vadd.xlane.f32.xlu0 %v2895
    %v2897 = vpop.xlane.xlu0 %2896
    %v2898 = vsel %vm320, %v2856, 0.0
    %2899 = vadd.xlane.f32.xlu0 %v2898
    %v2900 = vpop.xlane.xlu0 %2899
    %v2901 = vsel %vm320, %v2863, 0.0
    %2902 = vadd.xlane.f32.xlu0 %v2901
    %v2903 = vpop.xlane.xlu0 %2902
    %v2904 = vsel %vm320, %v2870, 0.0
    %2905 = vadd.xlane.f32.xlu0 %v2904
    %v2906 = vpop.xlane.xlu0 %2905
    %v2907 = vsel %vm320, %v2877, 0.0
    %2908 = vadd.xlane.f32.xlu0 %v2907
    %v2909 = vpop.xlane.xlu0 %2908
    %s2910 = scalar_lea.vmem %s1, 2
    %v2911 = vld [vmem:[%s2910] sm:$0x3]
    %v2920 = vlaneseq
    %v2921 = vshrl.u32 %v2920, 7
    %v2922 = vsub.s32 %v367, %v2921
    %v2923 = vrot.slane %v2888, %v2922
    %v2924 = vlaneseq
    %v2925 = vshrl.u32 %v2924, 7
    %v2926 = vsub.s32 %v372, %v2925
    %v2927 = vrot.slane %v2891, %v2926
    %v2928 = vsel %vm377, %v2927, %v2923
    %v2929 = vlaneseq
    %v2930 = vshrl.u32 %v2929, 7
    %v2931 = vsub.s32 %v379, %v2930
    %v2932 = vrot.slane %v2894, %v2931
    %v2933 = vsel %vm384, %v2932, %v2928
    %v2934 = vlaneseq
    %v2935 = vshrl.u32 %v2934, 7
    %v2936 = vsub.s32 %v386, %v2935
    %v2937 = vrot.slane %v2897, %v2936
    %v2938 = vsel %vm391, %v2937, %v2933
    %v2939 = vlaneseq
    %v2940 = vshrl.u32 %v2939, 7
    %v2941 = vsub.s32 %v367, %v2940
    %v2942 = vrot.slane %v2900, %v2941
    %v2943 = vlaneseq
    %v2944 = vshrl.u32 %v2943, 7
    %v2945 = vsub.s32 %v372, %v2944
    %v2946 = vrot.slane %v2903, %v2945
    %v2947 = vsel %vm377, %v2946, %v2942
    %v2948 = vlaneseq
    %v2949 = vshrl.u32 %v2948, 7
    %v2950 = vsub.s32 %v379, %v2949
    %v2951 = vrot.slane %v2906, %v2950
    %v2952 = vsel %vm384, %v2951, %v2947
    %v2953 = vlaneseq
    %v2954 = vshrl.u32 %v2953, 7
    %v2955 = vsub.s32 %v386, %v2954
    %v2956 = vrot.slane %v2909, %v2955
    %v2957 = vsel %vm391, %v2956, %v2952
    %v2958 = vsel %vm412, %v2957, %v2938
    %v2960 = vadd.f32 %v2911, %v2958
    %2961 = vrot.lane.b32.xlu0 %v2080, 64
    %v2962 = vpop.permute.xlu0 %2961
    %v2964 = vsel %vm414, %v2960, %v2962
    %v2966 = vsel %vm238, %v2964, 0
    %2968 = vmatprep.subr.mxu0 0.0
    %2969 = vmatpush1.msra.mxu0 %v68
    %2970 = vmatprep.subr.mxu0 0.0
    %2971 = vmatpush1.msra.mxu0 %v69
    %2972 = vmatprep.subr.mxu0 0.0
    %2973 = vmatpush1.msra.mxu0 %v70
    %2974 = vmatprep.subr.mxu0 0.0
    %2975 = vmatpush1.msra.mxu0 %v71
    %2976 = vmatprep.subr.mxu0 0.0
    %2977 = vmatpush1.msra.mxu0 %v72
    %2978 = vmatprep.subr.mxu0 0.0
    %2979 = vmatpush1.msra.mxu0 %v73
    %2980 = vmatprep.subr.mxu0 0.0
    %2981 = vmatpush1.msra.mxu0 %v74
    %2982 = vmatprep.subr.mxu0 0.0
    %2983 = vmatpush1.msra.mxu0 %v75
    %2984 = vmatprep.subr.mxu0 0.0
    %2985 = vmatpush1.msra.mxu0 0.0
    %2986 = vmatprep.subr.mxu0 0.0
    %2987 = vmatpush1.msra.mxu0 0.0
    %2988 = vmatprep.subr.mxu0 0.0
    %2989 = vmatpush1.msra.mxu0 0.0
    %2990 = vmatprep.subr.mxu0 0.0
    %2991 = vmatpush1.msra.mxu0 0.0
    %2992 = vmatprep.subr.mxu0 0.0
    %2993 = vmatpush1.msra.mxu0 0.0
    %2994 = vmatprep.subr.mxu0 0.0
    %2995 = vmatpush1.msra.mxu0 0.0
    %2996 = vmatprep.subr.mxu0 0.0
    %2997 = vmatpush1.msra.mxu0 0.0
    %2998 = vmatprep.subr.mxu0 0.0
    %2999 = vmatpush1.msra.mxu0 0.0
    %3000 = vmatprep.subr.mxu0 0.0
    %3001 = vmatpush1.msra.mxu0 0.0
    %3002 = vmatprep.subr.mxu0 0.0
    %3003 = vmatpush1.msra.mxu0 0.0
    %3004 = vmatprep.subr.mxu0 0.0
    %3005 = vmatpush1.msra.mxu0 0.0
    %3006 = vmatprep.subr.mxu0 0.0
    %3007 = vmatpush1.msra.mxu0 0.0
    %3008 = vmatprep.subr.mxu0 0.0
    %3009 = vmatpush1.msra.mxu0 0.0
    %3010 = vmatprep.subr.mxu0 0.0
    %3011 = vmatpush1.msra.mxu0 0.0
    %3012 = vmatprep.subr.mxu0 0.0
    %3013 = vmatpush1.msra.mxu0 0.0
    %3014 = vmatprep.subr.mxu0 0.0
    %3015 = vmatpush1.msra.mxu0 0.0
    %3016 = vmatprep.subr.mxu0 0.0
    %3017 = vmatpush1.msra.mxu0 0.0
    %3018 = vmatprep.subr.mxu0 0.0
    %3019 = vmatpush1.msra.mxu0 0.0
    %3020 = vmatprep.subr.mxu0 0.0
    %3021 = vmatpush1.msra.mxu0 0.0
    %3022 = vmatprep.subr.mxu0 0.0
    %3023 = vmatpush1.msra.mxu0 0.0
    %3024 = vmatprep.subr.mxu0 0.0
    %3025 = vmatpush1.msra.mxu0 0.0
    %3026 = vmatprep.subr.mxu0 0.0
    %3027 = vmatpush1.msra.mxu0 0.0
    %3028 = vmatprep.subr.mxu0 0.0
    %3029 = vmatpush1.msra.mxu0 0.0
    %3030 = vmatprep.subr.mxu0 0.0
    %3031 = vmatpush1.msra.mxu0 0.0
    %3032 = vmatprep.mubr.f32.mxu0 0.0
    %3033 = vmatmul.mubr.f32.gmra.mrb[0].mxu0 %v2966
    %v3034 = vpop.f32.mrb[0].mxu0
    %v3035 = vadd.f32 %v1985, %v3034
    %v3036 = vpop.f32.mrb[0].mxu0
    %3037 = vdwg.mxu0
    %v3038 = vmul.f32 %v3035, 0.5
    %v3039 = vtanh.pop %v3038
    %v3040 = vmul.f32 %v3039, 0.5
    %v3041 = vadd.f32 %v3040, 0.5
    %v3042 = vtanh.pop %v3035
    %v3043 = vmul.f32 %v3041, %v2074
    %3045 = vrot.lane.b32.xlu0 %v3042, 64
    %v3046 = vpop.permute.xlu0 %3045
    %v3048 = vmul.f32 %v3041, %v3046
    %3050 = vrot.lane.b32.xlu0 %v3048, 32
    %v3051 = vpop.permute.xlu0 %3050
    %v3053 = vadd.f32 %v3043, %v3051
    %v3054 = vtanh.pop %v3053
    %3056 = vrot.lane.b32.xlu0 %v3054, 64
    %v3057 = vpop.permute.xlu0 %3056
    %v3059 = vmul.f32 %v3041, %v3057
    %3061 = vrot.lane.b32.xlu0 %v3059, 32
    %v3062 = vpop.permute.xlu0 %3061
    %v3063 = vsel %vm414, %v3062, 0
    %3065 = vmatprep.subr.mxu0 0.0
    %3066 = vmatpush1.msra.mxu0 %v52
    %3067 = vmatprep.subr.mxu0 0.0
    %3068 = vmatpush1.msra.mxu0 %v53
    %3069 = vmatprep.subr.mxu0 0.0
    %3070 = vmatpush1.msra.mxu0 %v54
    %3071 = vmatprep.subr.mxu0 0.0
    %3072 = vmatpush1.msra.mxu0 %v55
    %3073 = vmatprep.subr.mxu0 0.0
    %3074 = vmatpush1.msra.mxu0 0.0
    %3075 = vmatprep.subr.mxu0 0.0
    %3076 = vmatpush1.msra.mxu0 0.0
    %3077 = vmatprep.subr.mxu0 0.0
    %3078 = vmatpush1.msra.mxu0 0.0
    %3079 = vmatprep.subr.mxu0 0.0
    %3080 = vmatpush1.msra.mxu0 0.0
    %3081 = vmatprep.subr.mxu0 0.0
    %3082 = vmatpush1.msra.mxu0 0.0
    %3083 = vmatprep.subr.mxu0 0.0
    %3084 = vmatpush1.msra.mxu0 0.0
    %3085 = vmatprep.subr.mxu0 0.0
    %3086 = vmatpush1.msra.mxu0 0.0
    %3087 = vmatprep.subr.mxu0 0.0
    %3088 = vmatpush1.msra.mxu0 0.0
    %3089 = vmatprep.subr.mxu0 0.0
    %3090 = vmatpush1.msra.mxu0 0.0
    %3091 = vmatprep.subr.mxu0 0.0
    %3092 = vmatpush1.msra.mxu0 0.0
    %3093 = vmatprep.subr.mxu0 0.0
    %3094 = vmatpush1.msra.mxu0 0.0
    %3095 = vmatprep.subr.mxu0 0.0
    %3096 = vmatpush1.msra.mxu0 0.0
    %3097 = vmatprep.subr.mxu0 0.0
    %3098 = vmatpush1.msra.mxu0 0.0
    %3099 = vmatprep.subr.mxu0 0.0
    %3100 = vmatpush1.msra.mxu0 0.0
    %3101 = vmatprep.subr.mxu0 0.0
    %3102 = vmatpush1.msra.mxu0 0.0
    %3103 = vmatprep.subr.mxu0 0.0
    %3104 = vmatpush1.msra.mxu0 0.0
    %3105 = vmatprep.subr.mxu0 0.0
    %3106 = vmatpush1.msra.mxu0 0.0
    %3107 = vmatprep.subr.mxu0 0.0
    %3108 = vmatpush1.msra.mxu0 0.0
    %3109 = vmatprep.subr.mxu0 0.0
    %3110 = vmatpush1.msra.mxu0 0.0
    %3111 = vmatprep.subr.mxu0 0.0
    %3112 = vmatpush1.msra.mxu0 0.0
    %3113 = vmatprep.subr.mxu0 0.0
    %3114 = vmatpush1.msra.mxu0 0.0
    %3115 = vmatprep.subr.mxu0 0.0
    %3116 = vmatpush1.msra.mxu0 0.0
    %3117 = vmatprep.subr.mxu0 0.0
    %3118 = vmatpush1.msra.mxu0 0.0
    %3119 = vmatprep.subr.mxu0 0.0
    %3120 = vmatpush1.msra.mxu0 0.0
    %3121 = vmatprep.subr.mxu0 0.0
    %3122 = vmatpush1.msra.mxu0 0.0
    %3123 = vmatprep.subr.mxu0 0.0
    %3124 = vmatpush1.msra.mxu0 0.0
    %3125 = vmatprep.subr.mxu0 0.0
    %3126 = vmatpush1.msra.mxu0 0.0
    %3127 = vmatprep.subr.mxu0 0.0
    %3128 = vmatpush1.msra.mxu0 0.0
    %3129 = vmatprep.mubr.f32.mxu0 0.0
    %3130 = vmatmul.mubr.f32.gmra.mrb[0].mxu0 %v3063
    %v3131 = vpop.f32.mrb[0].mxu0
    %v3132 = vadd.f32 0.0, %v3131
    %v3133 = vpop.f32.mrb[0].mxu0
    %3134 = vdwg.mxu0
    %v3136 = vrot.slane %v3132, 6
    %v3138 = vrot.slane %v3132, 4
    %v3140 = vrot.slane %v3132, 2
    %v3142 = vsel %vm647, %v3132, %v3136
    %v3143 = vsel %vm649, %v3142, %v3138
    %v3144 = vsel %vm651, %v3143, %v3140
    %v3145 = vadd.f32 %v3144, %v312
    %v3146 = vadd.f32 %v3144, %v317
    %v3147 = vtanh.pop %v3145
    %v3148 = vtanh.pop %v3146
    %v3149 = vmul.f32 %v3147, %v660
    %v3150 = vmul.f32 %v3148, %v660
    %v3151 = vsel %vm414, %v3149, 0.0
    %3152 = vadd.xlane.f32.xlu0 %v3151
    %v3153 = vpop.xlane.xlu0 %3152
    %v3154 = vsel %vm414, %v3150, 0.0
    %3155 = vadd.xlane.f32.xlu0 %v3154
    %v3156 = vpop.xlane.xlu0 %3155
    %v3159 = vlaneseq
    %v3160 = vshrl.u32 %v3159, 7
    %v3161 = vsub.s32 %v367, %v3160
    %v3162 = vrot.slane %v3153, %v3161
    %v3163 = vlaneseq
    %v3164 = vshrl.u32 %v3163, 7
    %v3165 = vsub.s32 %v367, %v3164
    %v3166 = vrot.slane %v3156, %v3165
    %v3167 = vsel %vm412, %v3166, %v3162
    %v3169 = vsel %vm681, %v3167, -inf
    %3170 = vmax.xlane.f32.xlu0 %v3169
    %v3171 = vpop.xlane.xlu0 %3170
    %v3173 = vlaneseq
    %v3174 = vshrl.u32 %v3173, 7
    %v3175 = vsub.s32 0, %v3174
    %v3176 = vrot.slane %v3171, %v3175
    %v3177 = vlaneseq
    %v3178 = vshrl.u32 %v3177, 7
    %v3179 = vsub.s32 1, %v3178
    %v3180 = vrot.slane %v3171, %v3179
    %v3183 = vsub.f32 %v3153, %v3176
    %v3184 = vsub.f32 %v3156, %v3180
    %v3185 = vmul.f32 %v3183, 1.442695
    %v3186 = vpow.pop %v3185
    %v3187 = vmul.f32 %v3184, 1.442695
    %v3188 = vpow.pop %v3187
    %3191 = vset.pattern.permute.xlu0 0
    %3192 = vperm.xlu0 %3191, %v3186
    %v3193 = vpop.permute.xlu0 %3192
    %3194 = vset.pattern.permute.xlu0 0
    %3195 = vperm.xlu0 %3194, %v3188
    %v3196 = vpop.permute.xlu0 %3195
    %v3197 = vlaneseq
    %v3198 = vshrl.u32 %v3197, 7
    %v3199 = vsub.s32 %v367, %v3198
    %v3200 = vrot.slane %v3193, %v3199
    %v3201 = vlaneseq
    %v3202 = vshrl.u32 %v3201, 7
    %v3203 = vsub.s32 %v367, %v3202
    %v3204 = vrot.slane %v3196, %v3203
    %v3205 = vsel %vm412, %v3204, %v3200
    %v3207 = vsel %vm681, %v3205, 0.0
    %3208 = vadd.xlane.f32.xlu0 %v3207
    %v3209 = vpop.xlane.xlu0 %3208
    %v3211 = vlaneseq
    %v3212 = vshrl.u32 %v3211, 7
    %v3213 = vsub.s32 0, %v3212
    %v3214 = vrot.slane %v3209, %v3213
    %v3215 = vlaneseq
    %v3216 = vshrl.u32 %v3215, 7
    %v3217 = vsub.s32 1, %v3216
    %v3218 = vrot.slane %v3209, %v3217
    %v3221 = vrcp.pop %v3214
    %v3222 = vmul.f32 %v3186, %v3221
    %v3223 = vrcp.pop %v3218
    %v3224 = vmul.f32 %v3188, %v3223
    %v3225 = vmul.f32 %v3222, %v752
    %v3226 = vmul.f32 %v3222, %v759
    %v3227 = vmul.f32 %v3222, %v766
    %v3228 = vmul.f32 %v3222, %v773
    %v3229 = vmul.f32 %v3222, %v780
    %v3230 = vmul.f32 %v3222, %v787
    %v3231 = vmul.f32 %v3222, %v794
    %v3232 = vmul.f32 %v3222, %v801
    %v3233 = vmul.f32 %v3222, %v808
    %v3234 = vmul.f32 %v3222, %v815
    %v3235 = vmul.f32 %v3222, %v822
    %v3236 = vmul.f32 %v3222, %v829
    %v3237 = vmul.f32 %v3222, %v836
    %v3238 = vmul.f32 %v3222, %v843
    %v3239 = vmul.f32 %v3222, %v850
    %v3240 = vmul.f32 %v3222, %v857
    %v3241 = vmul.f32 %v3222, %v864
    %v3242 = vmul.f32 %v3222, %v871
    %v3243 = vmul.f32 %v3222, %v878
    %v3244 = vmul.f32 %v3222, %v885
    %v3245 = vmul.f32 %v3222, %v892
    %v3246 = vmul.f32 %v3222, %v899
    %v3247 = vmul.f32 %v3222, %v906
    %v3248 = vmul.f32 %v3222, %v913
    %v3249 = vmul.f32 %v3222, %v920
    %v3250 = vmul.f32 %v3222, %v927
    %v3251 = vmul.f32 %v3222, %v934
    %v3252 = vmul.f32 %v3222, %v941
    %v3253 = vmul.f32 %v3222, %v948
    %v3254 = vmul.f32 %v3222, %v955
    %v3255 = vmul.f32 %v3222, %v962
    %v3256 = vmul.f32 %v3222, %v969
    %v3257 = vmul.f32 %v3224, %v976
    %v3258 = vmul.f32 %v3224, %v983
    %v3259 = vmul.f32 %v3224, %v990
    %v3260 = vmul.f32 %v3224, %v997
    %v3261 = vmul.f32 %v3224, %v1004
    %v3262 = vmul.f32 %v3224, %v1011
    %v3263 = vmul.f32 %v3224, %v1018
    %v3264 = vmul.f32 %v3224, %v1025
    %v3265 = vmul.f32 %v3224, %v1032
    %v3266 = vmul.f32 %v3224, %v1039
    %v3267 = vmul.f32 %v3224, %v1046
    %v3268 = vmul.f32 %v3224, %v1053
    %v3269 = vmul.f32 %v3224, %v1060
    %v3270 = vmul.f32 %v3224, %v1067
    %v3271 = vmul.f32 %v3224, %v1074
    %v3272 = vmul.f32 %v3224, %v1081
    %v3273 = vmul.f32 %v3224, %v1088
    %v3274 = vmul.f32 %v3224, %v1095
    %v3275 = vmul.f32 %v3224, %v1102
    %v3276 = vmul.f32 %v3224, %v1109
    %v3277 = vmul.f32 %v3224, %v1116
    %v3278 = vmul.f32 %v3224, %v1123
    %v3279 = vmul.f32 %v3224, %v1130
    %v3280 = vmul.f32 %v3224, %v1137
    %v3281 = vmul.f32 %v3224, %v1144
    %v3282 = vmul.f32 %v3224, %v1151
    %v3283 = vmul.f32 %v3224, %v1158
    %v3284 = vmul.f32 %v3224, %v1165
    %v3285 = vmul.f32 %v3224, %v1172
    %v3286 = vmul.f32 %v3224, %v1179
    %v3287 = vmul.f32 %v3224, %v1186
    %v3288 = vmul.f32 %v3224, %v1193
    %3353 = vset.pattern.permute.xlu0 0
    %3354 = vperm.xlu0 %3353, %v3225
    %v3355 = vpop.permute.xlu0 %3354
    %3356 = vset.pattern.permute.xlu0 0
    %3357 = vperm.xlu0 %3356, %v3226
    %v3358 = vpop.permute.xlu0 %3357
    %3359 = vset.pattern.permute.xlu0 0
    %3360 = vperm.xlu0 %3359, %v3227
    %v3361 = vpop.permute.xlu0 %3360
    %3362 = vset.pattern.permute.xlu0 0
    %3363 = vperm.xlu0 %3362, %v3228
    %v3364 = vpop.permute.xlu0 %3363
    %3365 = vset.pattern.permute.xlu0 0
    %3366 = vperm.xlu0 %3365, %v3229
    %v3367 = vpop.permute.xlu0 %3366
    %3368 = vset.pattern.permute.xlu0 0
    %3369 = vperm.xlu0 %3368, %v3230
    %v3370 = vpop.permute.xlu0 %3369
    %3371 = vset.pattern.permute.xlu0 0
    %3372 = vperm.xlu0 %3371, %v3231
    %v3373 = vpop.permute.xlu0 %3372
    %3374 = vset.pattern.permute.xlu0 0
    %3375 = vperm.xlu0 %3374, %v3232
    %v3376 = vpop.permute.xlu0 %3375
    %3377 = vset.pattern.permute.xlu0 0
    %3378 = vperm.xlu0 %3377, %v3233
    %v3379 = vpop.permute.xlu0 %3378
    %3380 = vset.pattern.permute.xlu0 0
    %3381 = vperm.xlu0 %3380, %v3234
    %v3382 = vpop.permute.xlu0 %3381
    %3383 = vset.pattern.permute.xlu0 0
    %3384 = vperm.xlu0 %3383, %v3235
    %v3385 = vpop.permute.xlu0 %3384
    %3386 = vset.pattern.permute.xlu0 0
    %3387 = vperm.xlu0 %3386, %v3236
    %v3388 = vpop.permute.xlu0 %3387
    %3389 = vset.pattern.permute.xlu0 0
    %3390 = vperm.xlu0 %3389, %v3237
    %v3391 = vpop.permute.xlu0 %3390
    %3392 = vset.pattern.permute.xlu0 0
    %3393 = vperm.xlu0 %3392, %v3238
    %v3394 = vpop.permute.xlu0 %3393
    %3395 = vset.pattern.permute.xlu0 0
    %3396 = vperm.xlu0 %3395, %v3239
    %v3397 = vpop.permute.xlu0 %3396
    %3398 = vset.pattern.permute.xlu0 0
    %3399 = vperm.xlu0 %3398, %v3240
    %v3400 = vpop.permute.xlu0 %3399
    %3401 = vset.pattern.permute.xlu0 0
    %3402 = vperm.xlu0 %3401, %v3241
    %v3403 = vpop.permute.xlu0 %3402
    %3404 = vset.pattern.permute.xlu0 0
    %3405 = vperm.xlu0 %3404, %v3242
    %v3406 = vpop.permute.xlu0 %3405
    %3407 = vset.pattern.permute.xlu0 0
    %3408 = vperm.xlu0 %3407, %v3243
    %v3409 = vpop.permute.xlu0 %3408
    %3410 = vset.pattern.permute.xlu0 0
    %3411 = vperm.xlu0 %3410, %v3244
    %v3412 = vpop.permute.xlu0 %3411
    %3413 = vset.pattern.permute.xlu0 0
    %3414 = vperm.xlu0 %3413, %v3245
    %v3415 = vpop.permute.xlu0 %3414
    %3416 = vset.pattern.permute.xlu0 0
    %3417 = vperm.xlu0 %3416, %v3246
    %v3418 = vpop.permute.xlu0 %3417
    %3419 = vset.pattern.permute.xlu0 0
    %3420 = vperm.xlu0 %3419, %v3247
    %v3421 = vpop.permute.xlu0 %3420
    %3422 = vset.pattern.permute.xlu0 0
    %3423 = vperm.xlu0 %3422, %v3248
    %v3424 = vpop.permute.xlu0 %3423
    %3425 = vset.pattern.permute.xlu0 0
    %3426 = vperm.xlu0 %3425, %v3249
    %v3427 = vpop.permute.xlu0 %3426
    %3428 = vset.pattern.permute.xlu0 0
    %3429 = vperm.xlu0 %3428, %v3250
    %v3430 = vpop.permute.xlu0 %3429
    %3431 = vset.pattern.permute.xlu0 0
    %3432 = vperm.xlu0 %3431, %v3251
    %v3433 = vpop.permute.xlu0 %3432
    %3434 = vset.pattern.permute.xlu0 0
    %3435 = vperm.xlu0 %3434, %v3252
    %v3436 = vpop.permute.xlu0 %3435
    %3437 = vset.pattern.permute.xlu0 0
    %3438 = vperm.xlu0 %3437, %v3253
    %v3439 = vpop.permute.xlu0 %3438
    %3440 = vset.pattern.permute.xlu0 0
    %3441 = vperm.xlu0 %3440, %v3254
    %v3442 = vpop.permute.xlu0 %3441
    %3443 = vset.pattern.permute.xlu0 0
    %3444 = vperm.xlu0 %3443, %v3255
    %v3445 = vpop.permute.xlu0 %3444
    %3446 = vset.pattern.permute.xlu0 0
    %3447 = vperm.xlu0 %3446, %v3256
    %v3448 = vpop.permute.xlu0 %3447
    %3449 = vset.pattern.permute.xlu0 0
    %3450 = vperm.xlu0 %3449, %v3257
    %v3451 = vpop.permute.xlu0 %3450
    %3452 = vset.pattern.permute.xlu0 0
    %3453 = vperm.xlu0 %3452, %v3258
    %v3454 = vpop.permute.xlu0 %3453
    %3455 = vset.pattern.permute.xlu0 0
    %3456 = vperm.xlu0 %3455, %v3259
    %v3457 = vpop.permute.xlu0 %3456
    %3458 = vset.pattern.permute.xlu0 0
    %3459 = vperm.xlu0 %3458, %v3260
    %v3460 = vpop.permute.xlu0 %3459
    %3461 = vset.pattern.permute.xlu0 0
    %3462 = vperm.xlu0 %3461, %v3261
    %v3463 = vpop.permute.xlu0 %3462
    %3464 = vset.pattern.permute.xlu0 0
    %3465 = vperm.xlu0 %3464, %v3262
    %v3466 = vpop.permute.xlu0 %3465
    %3467 = vset.pattern.permute.xlu0 0
    %3468 = vperm.xlu0 %3467, %v3263
    %v3469 = vpop.permute.xlu0 %3468
    %3470 = vset.pattern.permute.xlu0 0
    %3471 = vperm.xlu0 %3470, %v3264
    %v3472 = vpop.permute.xlu0 %3471
    %3473 = vset.pattern.permute.xlu0 0
    %3474 = vperm.xlu0 %3473, %v3265
    %v3475 = vpop.permute.xlu0 %3474
    %3476 = vset.pattern.permute.xlu0 0
    %3477 = vperm.xlu0 %3476, %v3266
    %v3478 = vpop.permute.xlu0 %3477
    %3479 = vset.pattern.permute.xlu0 0
    %3480 = vperm.xlu0 %3479, %v3267
    %v3481 = vpop.permute.xlu0 %3480
    %3482 = vset.pattern.permute.xlu0 0
    %3483 = vperm.xlu0 %3482, %v3268
    %v3484 = vpop.permute.xlu0 %3483
    %3485 = vset.pattern.permute.xlu0 0
    %3486 = vperm.xlu0 %3485, %v3269
    %v3487 = vpop.permute.xlu0 %3486
    %3488 = vset.pattern.permute.xlu0 0
    %3489 = vperm.xlu0 %3488, %v3270
    %v3490 = vpop.permute.xlu0 %3489
    %3491 = vset.pattern.permute.xlu0 0
    %3492 = vperm.xlu0 %3491, %v3271
    %v3493 = vpop.permute.xlu0 %3492
    %3494 = vset.pattern.permute.xlu0 0
    %3495 = vperm.xlu0 %3494, %v3272
    %v3496 = vpop.permute.xlu0 %3495
    %3497 = vset.pattern.permute.xlu0 0
    %3498 = vperm.xlu0 %3497, %v3273
    %v3499 = vpop.permute.xlu0 %3498
    %3500 = vset.pattern.permute.xlu0 0
    %3501 = vperm.xlu0 %3500, %v3274
    %v3502 = vpop.permute.xlu0 %3501
    %3503 = vset.pattern.permute.xlu0 0
    %3504 = vperm.xlu0 %3503, %v3275
    %v3505 = vpop.permute.xlu0 %3504
    %3506 = vset.pattern.permute.xlu0 0
    %3507 = vperm.xlu0 %3506, %v3276
    %v3508 = vpop.permute.xlu0 %3507
    %3509 = vset.pattern.permute.xlu0 0
    %3510 = vperm.xlu0 %3509, %v3277
    %v3511 = vpop.permute.xlu0 %3510
    %3512 = vset.pattern.permute.xlu0 0
    %3513 = vperm.xlu0 %3512, %v3278
    %v3514 = vpop.permute.xlu0 %3513
    %3515 = vset.pattern.permute.xlu0 0
    %3516 = vperm.xlu0 %3515, %v3279
    %v3517 = vpop.permute.xlu0 %3516
    %3518 = vset.pattern.permute.xlu0 0
    %3519 = vperm.xlu0 %3518, %v3280
    %v3520 = vpop.permute.xlu0 %3519
    %3521 = vset.pattern.permute.xlu0 0
    %3522 = vperm.xlu0 %3521, %v3281
    %v3523 = vpop.permute.xlu0 %3522
    %3524 = vset.pattern.permute.xlu0 0
    %3525 = vperm.xlu0 %3524, %v3282
    %v3526 = vpop.permute.xlu0 %3525
    %3527 = vset.pattern.permute.xlu0 0
    %3528 = vperm.xlu0 %3527, %v3283
    %v3529 = vpop.permute.xlu0 %3528
    %3530 = vset.pattern.permute.xlu0 0
    %3531 = vperm.xlu0 %3530, %v3284
    %v3532 = vpop.permute.xlu0 %3531
    %3533 = vset.pattern.permute.xlu0 0
    %3534 = vperm.xlu0 %3533, %v3285
    %v3535 = vpop.permute.xlu0 %3534
    %3536 = vset.pattern.permute.xlu0 0
    %3537 = vperm.xlu0 %3536, %v3286
    %v3538 = vpop.permute.xlu0 %3537
    %3539 = vset.pattern.permute.xlu0 0
    %3540 = vperm.xlu0 %3539, %v3287
    %v3541 = vpop.permute.xlu0 %3540
    %3542 = vset.pattern.permute.xlu0 0
    %3543 = vperm.xlu0 %3542, %v3288
    %v3544 = vpop.permute.xlu0 %3543
    %v3545 = vlaneseq
    %v3546 = vshrl.u32 %v3545, 7
    %v3547 = vsub.s32 %v367, %v3546
    %v3548 = vrot.slane %v3355, %v3547
    %v3549 = vlaneseq
    %v3550 = vshrl.u32 %v3549, 7
    %v3551 = vsub.s32 %v367, %v3550
    %v3552 = vrot.slane %v3358, %v3551
    %v3553 = vlaneseq
    %v3554 = vshrl.u32 %v3553, 7
    %v3555 = vsub.s32 %v367, %v3554
    %v3556 = vrot.slane %v3361, %v3555
    %v3557 = vlaneseq
    %v3558 = vshrl.u32 %v3557, 7
    %v3559 = vsub.s32 %v367, %v3558
    %v3560 = vrot.slane %v3364, %v3559
    %v3561 = vlaneseq
    %v3562 = vshrl.u32 %v3561, 7
    %v3563 = vsub.s32 %v367, %v3562
    %v3564 = vrot.slane %v3367, %v3563
    %v3565 = vlaneseq
    %v3566 = vshrl.u32 %v3565, 7
    %v3567 = vsub.s32 %v367, %v3566
    %v3568 = vrot.slane %v3370, %v3567
    %v3569 = vlaneseq
    %v3570 = vshrl.u32 %v3569, 7
    %v3571 = vsub.s32 %v367, %v3570
    %v3572 = vrot.slane %v3373, %v3571
    %v3573 = vlaneseq
    %v3574 = vshrl.u32 %v3573, 7
    %v3575 = vsub.s32 %v367, %v3574
    %v3576 = vrot.slane %v3376, %v3575
    %v3577 = vlaneseq
    %v3578 = vshrl.u32 %v3577, 7
    %v3579 = vsub.s32 %v367, %v3578
    %v3580 = vrot.slane %v3379, %v3579
    %v3581 = vlaneseq
    %v3582 = vshrl.u32 %v3581, 7
    %v3583 = vsub.s32 %v367, %v3582
    %v3584 = vrot.slane %v3382, %v3583
    %v3585 = vlaneseq
    %v3586 = vshrl.u32 %v3585, 7
    %v3587 = vsub.s32 %v367, %v3586
    %v3588 = vrot.slane %v3385, %v3587
    %v3589 = vlaneseq
    %v3590 = vshrl.u32 %v3589, 7
    %v3591 = vsub.s32 %v367, %v3590
    %v3592 = vrot.slane %v3388, %v3591
    %v3593 = vlaneseq
    %v3594 = vshrl.u32 %v3593, 7
    %v3595 = vsub.s32 %v367, %v3594
    %v3596 = vrot.slane %v3391, %v3595
    %v3597 = vlaneseq
    %v3598 = vshrl.u32 %v3597, 7
    %v3599 = vsub.s32 %v367, %v3598
    %v3600 = vrot.slane %v3394, %v3599
    %v3601 = vlaneseq
    %v3602 = vshrl.u32 %v3601, 7
    %v3603 = vsub.s32 %v367, %v3602
    %v3604 = vrot.slane %v3397, %v3603
    %v3605 = vlaneseq
    %v3606 = vshrl.u32 %v3605, 7
    %v3607 = vsub.s32 %v367, %v3606
    %v3608 = vrot.slane %v3400, %v3607
    %v3609 = vlaneseq
    %v3610 = vshrl.u32 %v3609, 7
    %v3611 = vsub.s32 %v367, %v3610
    %v3612 = vrot.slane %v3403, %v3611
    %v3613 = vlaneseq
    %v3614 = vshrl.u32 %v3613, 7
    %v3615 = vsub.s32 %v367, %v3614
    %v3616 = vrot.slane %v3406, %v3615
    %v3617 = vlaneseq
    %v3618 = vshrl.u32 %v3617, 7
    %v3619 = vsub.s32 %v367, %v3618
    %v3620 = vrot.slane %v3409, %v3619
    %v3621 = vlaneseq
    %v3622 = vshrl.u32 %v3621, 7
    %v3623 = vsub.s32 %v367, %v3622
    %v3624 = vrot.slane %v3412, %v3623
    %v3625 = vlaneseq
    %v3626 = vshrl.u32 %v3625, 7
    %v3627 = vsub.s32 %v367, %v3626
    %v3628 = vrot.slane %v3415, %v3627
    %v3629 = vlaneseq
    %v3630 = vshrl.u32 %v3629, 7
    %v3631 = vsub.s32 %v367, %v3630
    %v3632 = vrot.slane %v3418, %v3631
    %v3633 = vlaneseq
    %v3634 = vshrl.u32 %v3633, 7
    %v3635 = vsub.s32 %v367, %v3634
    %v3636 = vrot.slane %v3421, %v3635
    %v3637 = vlaneseq
    %v3638 = vshrl.u32 %v3637, 7
    %v3639 = vsub.s32 %v367, %v3638
    %v3640 = vrot.slane %v3424, %v3639
    %v3641 = vlaneseq
    %v3642 = vshrl.u32 %v3641, 7
    %v3643 = vsub.s32 %v367, %v3642
    %v3644 = vrot.slane %v3427, %v3643
    %v3645 = vlaneseq
    %v3646 = vshrl.u32 %v3645, 7
    %v3647 = vsub.s32 %v367, %v3646
    %v3648 = vrot.slane %v3430, %v3647
    %v3649 = vlaneseq
    %v3650 = vshrl.u32 %v3649, 7
    %v3651 = vsub.s32 %v367, %v3650
    %v3652 = vrot.slane %v3433, %v3651
    %v3653 = vlaneseq
    %v3654 = vshrl.u32 %v3653, 7
    %v3655 = vsub.s32 %v367, %v3654
    %v3656 = vrot.slane %v3436, %v3655
    %v3657 = vlaneseq
    %v3658 = vshrl.u32 %v3657, 7
    %v3659 = vsub.s32 %v367, %v3658
    %v3660 = vrot.slane %v3439, %v3659
    %v3661 = vlaneseq
    %v3662 = vshrl.u32 %v3661, 7
    %v3663 = vsub.s32 %v367, %v3662
    %v3664 = vrot.slane %v3442, %v3663
    %v3665 = vlaneseq
    %v3666 = vshrl.u32 %v3665, 7
    %v3667 = vsub.s32 %v367, %v3666
    %v3668 = vrot.slane %v3445, %v3667
    %v3669 = vlaneseq
    %v3670 = vshrl.u32 %v3669, 7
    %v3671 = vsub.s32 %v367, %v3670
    %v3672 = vrot.slane %v3448, %v3671
    %v3673 = vlaneseq
    %v3674 = vshrl.u32 %v3673, 7
    %v3675 = vsub.s32 %v367, %v3674
    %v3676 = vrot.slane %v3451, %v3675
    %v3677 = vlaneseq
    %v3678 = vshrl.u32 %v3677, 7
    %v3679 = vsub.s32 %v367, %v3678
    %v3680 = vrot.slane %v3454, %v3679
    %v3681 = vlaneseq
    %v3682 = vshrl.u32 %v3681, 7
    %v3683 = vsub.s32 %v367, %v3682
    %v3684 = vrot.slane %v3457, %v3683
    %v3685 = vlaneseq
    %v3686 = vshrl.u32 %v3685, 7
    %v3687 = vsub.s32 %v367, %v3686
    %v3688 = vrot.slane %v3460, %v3687
    %v3689 = vlaneseq
    %v3690 = vshrl.u32 %v3689, 7
    %v3691 = vsub.s32 %v367, %v3690
    %v3692 = vrot.slane %v3463, %v3691
    %v3693 = vlaneseq
    %v3694 = vshrl.u32 %v3693, 7
    %v3695 = vsub.s32 %v367, %v3694
    %v3696 = vrot.slane %v3466, %v3695
    %v3697 = vlaneseq
    %v3698 = vshrl.u32 %v3697, 7
    %v3699 = vsub.s32 %v367, %v3698
    %v3700 = vrot.slane %v3469, %v3699
    %v3701 = vlaneseq
    %v3702 = vshrl.u32 %v3701, 7
    %v3703 = vsub.s32 %v367, %v3702
    %v3704 = vrot.slane %v3472, %v3703
    %v3705 = vlaneseq
    %v3706 = vshrl.u32 %v3705, 7
    %v3707 = vsub.s32 %v367, %v3706
    %v3708 = vrot.slane %v3475, %v3707
    %v3709 = vlaneseq
    %v3710 = vshrl.u32 %v3709, 7
    %v3711 = vsub.s32 %v367, %v3710
    %v3712 = vrot.slane %v3478, %v3711
    %v3713 = vlaneseq
    %v3714 = vshrl.u32 %v3713, 7
    %v3715 = vsub.s32 %v367, %v3714
    %v3716 = vrot.slane %v3481, %v3715
    %v3717 = vlaneseq
    %v3718 = vshrl.u32 %v3717, 7
    %v3719 = vsub.s32 %v367, %v3718
    %v3720 = vrot.slane %v3484, %v3719
    %v3721 = vlaneseq
    %v3722 = vshrl.u32 %v3721, 7
    %v3723 = vsub.s32 %v367, %v3722
    %v3724 = vrot.slane %v3487, %v3723
    %v3725 = vlaneseq
    %v3726 = vshrl.u32 %v3725, 7
    %v3727 = vsub.s32 %v367, %v3726
    %v3728 = vrot.slane %v3490, %v3727
    %v3729 = vlaneseq
    %v3730 = vshrl.u32 %v3729, 7
    %v3731 = vsub.s32 %v367, %v3730
    %v3732 = vrot.slane %v3493, %v3731
    %v3733 = vlaneseq
    %v3734 = vshrl.u32 %v3733, 7
    %v3735 = vsub.s32 %v367, %v3734
    %v3736 = vrot.slane %v3496, %v3735
    %v3737 = vlaneseq
    %v3738 = vshrl.u32 %v3737, 7
    %v3739 = vsub.s32 %v367, %v3738
    %v3740 = vrot.slane %v3499, %v3739
    %v3741 = vlaneseq
    %v3742 = vshrl.u32 %v3741, 7
    %v3743 = vsub.s32 %v367, %v3742
    %v3744 = vrot.slane %v3502, %v3743
    %v3745 = vlaneseq
    %v3746 = vshrl.u32 %v3745, 7
    %v3747 = vsub.s32 %v367, %v3746
    %v3748 = vrot.slane %v3505, %v3747
    %v3749 = vlaneseq
    %v3750 = vshrl.u32 %v3749, 7
    %v3751 = vsub.s32 %v367, %v3750
    %v3752 = vrot.slane %v3508, %v3751
    %v3753 = vlaneseq
    %v3754 = vshrl.u32 %v3753, 7
    %v3755 = vsub.s32 %v367, %v3754
    %v3756 = vrot.slane %v3511, %v3755
    %v3757 = vlaneseq
    %v3758 = vshrl.u32 %v3757, 7
    %v3759 = vsub.s32 %v367, %v3758
    %v3760 = vrot.slane %v3514, %v3759
    %v3761 = vlaneseq
    %v3762 = vshrl.u32 %v3761, 7
    %v3763 = vsub.s32 %v367, %v3762
    %v3764 = vrot.slane %v3517, %v3763
    %v3765 = vlaneseq
    %v3766 = vshrl.u32 %v3765, 7
    %v3767 = vsub.s32 %v367, %v3766
    %v3768 = vrot.slane %v3520, %v3767
    %v3769 = vlaneseq
    %v3770 = vshrl.u32 %v3769, 7
    %v3771 = vsub.s32 %v367, %v3770
    %v3772 = vrot.slane %v3523, %v3771
    %v3773 = vlaneseq
    %v3774 = vshrl.u32 %v3773, 7
    %v3775 = vsub.s32 %v367, %v3774
    %v3776 = vrot.slane %v3526, %v3775
    %v3777 = vlaneseq
    %v3778 = vshrl.u32 %v3777, 7
    %v3779 = vsub.s32 %v367, %v3778
    %v3780 = vrot.slane %v3529, %v3779
    %v3781 = vlaneseq
    %v3782 = vshrl.u32 %v3781, 7
    %v3783 = vsub.s32 %v367, %v3782
    %v3784 = vrot.slane %v3532, %v3783
    %v3785 = vlaneseq
    %v3786 = vshrl.u32 %v3785, 7
    %v3787 = vsub.s32 %v367, %v3786
    %v3788 = vrot.slane %v3535, %v3787
    %v3789 = vlaneseq
    %v3790 = vshrl.u32 %v3789, 7
    %v3791 = vsub.s32 %v367, %v3790
    %v3792 = vrot.slane %v3538, %v3791
    %v3793 = vlaneseq
    %v3794 = vshrl.u32 %v3793, 7
    %v3795 = vsub.s32 %v367, %v3794
    %v3796 = vrot.slane %v3541, %v3795
    %v3797 = vlaneseq
    %v3798 = vshrl.u32 %v3797, 7
    %v3799 = vsub.s32 %v367, %v3798
    %v3800 = vrot.slane %v3544, %v3799
    %v3801 = vsel %vm412, %v3552, %v3548
    %v3802 = vsel %vm1835, %v3556, %v3801
    %v3803 = vsel %vm1837, %v3560, %v3802
    %v3804 = vsel %vm1839, %v3564, %v3803
    %v3805 = vsel %vm1841, %v3568, %v3804
    %v3806 = vsel %vm1843, %v3572, %v3805
    %v3807 = vsel %vm1845, %v3576, %v3806
    %v3808 = vsel %vm412, %v3584, %v3580
    %v3809 = vsel %vm1835, %v3588, %v3808
    %v3810 = vsel %vm1837, %v3592, %v3809
    %v3811 = vsel %vm1839, %v3596, %v3810
    %v3812 = vsel %vm1841, %v3600, %v3811
    %v3813 = vsel %vm1843, %v3604, %v3812
    %v3814 = vsel %vm1845, %v3608, %v3813
    %v3815 = vsel %vm412, %v3616, %v3612
    %v3816 = vsel %vm1835, %v3620, %v3815
    %v3817 = vsel %vm1837, %v3624, %v3816
    %v3818 = vsel %vm1839, %v3628, %v3817
    %v3819 = vsel %vm1841, %v3632, %v3818
    %v3820 = vsel %vm1843, %v3636, %v3819
    %v3821 = vsel %vm1845, %v3640, %v3820
    %v3822 = vsel %vm412, %v3648, %v3644
    %v3823 = vsel %vm1835, %v3652, %v3822
    %v3824 = vsel %vm1837, %v3656, %v3823
    %v3825 = vsel %vm1839, %v3660, %v3824
    %v3826 = vsel %vm1841, %v3664, %v3825
    %v3827 = vsel %vm1843, %v3668, %v3826
    %v3828 = vsel %vm1845, %v3672, %v3827
    %v3829 = vsel %vm412, %v3680, %v3676
    %v3830 = vsel %vm1835, %v3684, %v3829
    %v3831 = vsel %vm1837, %v3688, %v3830
    %v3832 = vsel %vm1839, %v3692, %v3831
    %v3833 = vsel %vm1841, %v3696, %v3832
    %v3834 = vsel %vm1843, %v3700, %v3833
    %v3835 = vsel %vm1845, %v3704, %v3834
    %v3836 = vsel %vm412, %v3712, %v3708
    %v3837 = vsel %vm1835, %v3716, %v3836
    %v3838 = vsel %vm1837, %v3720, %v3837
    %v3839 = vsel %vm1839, %v3724, %v3838
    %v3840 = vsel %vm1841, %v3728, %v3839
    %v3841 = vsel %vm1843, %v3732, %v3840
    %v3842 = vsel %vm1845, %v3736, %v3841
    %v3843 = vsel %vm412, %v3744, %v3740
    %v3844 = vsel %vm1835, %v3748, %v3843
    %v3845 = vsel %vm1837, %v3752, %v3844
    %v3846 = vsel %vm1839, %v3756, %v3845
    %v3847 = vsel %vm1841, %v3760, %v3846
    %v3848 = vsel %vm1843, %v3764, %v3847
    %v3849 = vsel %vm1845, %v3768, %v3848
    %v3850 = vsel %vm412, %v3776, %v3772
    %v3851 = vsel %vm1835, %v3780, %v3850
    %v3852 = vsel %vm1837, %v3784, %v3851
    %v3853 = vsel %vm1839, %v3788, %v3852
    %v3854 = vsel %vm1841, %v3792, %v3853
    %v3855 = vsel %vm1843, %v3796, %v3854
    %v3856 = vsel %vm1845, %v3800, %v3855
    %v3865 = vsel %vm320, %v3807, 0.0
    %3866 = vadd.xlane.f32.xlu0 %v3865
    %v3867 = vpop.xlane.xlu0 %3866
    %v3868 = vsel %vm320, %v3814, 0.0
    %3869 = vadd.xlane.f32.xlu0 %v3868
    %v3870 = vpop.xlane.xlu0 %3869
    %v3871 = vsel %vm320, %v3821, 0.0
    %3872 = vadd.xlane.f32.xlu0 %v3871
    %v3873 = vpop.xlane.xlu0 %3872
    %v3874 = vsel %vm320, %v3828, 0.0
    %3875 = vadd.xlane.f32.xlu0 %v3874
    %v3876 = vpop.xlane.xlu0 %3875
    %v3877 = vsel %vm320, %v3835, 0.0
    %3878 = vadd.xlane.f32.xlu0 %v3877
    %v3879 = vpop.xlane.xlu0 %3878
    %v3880 = vsel %vm320, %v3842, 0.0
    %3881 = vadd.xlane.f32.xlu0 %v3880
    %v3882 = vpop.xlane.xlu0 %3881
    %v3883 = vsel %vm320, %v3849, 0.0
    %3884 = vadd.xlane.f32.xlu0 %v3883
    %v3885 = vpop.xlane.xlu0 %3884
    %v3886 = vsel %vm320, %v3856, 0.0
    %3887 = vadd.xlane.f32.xlu0 %v3886
    %v3888 = vpop.xlane.xlu0 %3887
    %s3889 = scalar_lea.vmem %s1, 4
    %v3890 = vld [vmem:[%s3889] sm:$0x3]
    %v3899 = vlaneseq
    %v3900 = vshrl.u32 %v3899, 7
    %v3901 = vsub.s32 %v367, %v3900
    %v3902 = vrot.slane %v3867, %v3901
    %v3903 = vlaneseq
    %v3904 = vshrl.u32 %v3903, 7
    %v3905 = vsub.s32 %v372, %v3904
    %v3906 = vrot.slane %v3870, %v3905
    %v3907 = vsel %vm377, %v3906, %v3902
    %v3908 = vlaneseq
    %v3909 = vshrl.u32 %v3908, 7
    %v3910 = vsub.s32 %v379, %v3909
    %v3911 = vrot.slane %v3873, %v3910
    %v3912 = vsel %vm384, %v3911, %v3907
    %v3913 = vlaneseq
    %v3914 = vshrl.u32 %v3913, 7
    %v3915 = vsub.s32 %v386, %v3914
    %v3916 = vrot.slane %v3876, %v3915
    %v3917 = vsel %vm391, %v3916, %v3912
    %v3918 = vlaneseq
    %v3919 = vshrl.u32 %v3918, 7
    %v3920 = vsub.s32 %v367, %v3919
    %v3921 = vrot.slane %v3879, %v3920
    %v3922 = vlaneseq
    %v3923 = vshrl.u32 %v3922, 7
    %v3924 = vsub.s32 %v372, %v3923
    %v3925 = vrot.slane %v3882, %v3924
    %v3926 = vsel %vm377, %v3925, %v3921
    %v3927 = vlaneseq
    %v3928 = vshrl.u32 %v3927, 7
    %v3929 = vsub.s32 %v379, %v3928
    %v3930 = vrot.slane %v3885, %v3929
    %v3931 = vsel %vm384, %v3930, %v3926
    %v3932 = vlaneseq
    %v3933 = vshrl.u32 %v3932, 7
    %v3934 = vsub.s32 %v386, %v3933
    %v3935 = vrot.slane %v3888, %v3934
    %v3936 = vsel %vm391, %v3935, %v3931
    %v3937 = vsel %vm412, %v3936, %v3917
    %v3939 = vadd.f32 %v3890, %v3937
    %3940 = vrot.lane.b32.xlu0 %v3059, 64
    %v3941 = vpop.permute.xlu0 %3940
    %v3943 = vsel %vm414, %v3939, %v3941
    %v3945 = vsel %vm238, %v3943, 0
    %3947 = vmatprep.subr.mxu0 0.0
    %3948 = vmatpush1.msra.mxu0 %v68
    %3949 = vmatprep.subr.mxu0 0.0
    %3950 = vmatpush1.msra.mxu0 %v69
    %3951 = vmatprep.subr.mxu0 0.0
    %3952 = vmatpush1.msra.mxu0 %v70
    %3953 = vmatprep.subr.mxu0 0.0
    %3954 = vmatpush1.msra.mxu0 %v71
    %3955 = vmatprep.subr.mxu0 0.0
    %3956 = vmatpush1.msra.mxu0 %v72
    %3957 = vmatprep.subr.mxu0 0.0
    %3958 = vmatpush1.msra.mxu0 %v73
    %3959 = vmatprep.subr.mxu0 0.0
    %3960 = vmatpush1.msra.mxu0 %v74
    %3961 = vmatprep.subr.mxu0 0.0
    %3962 = vmatpush1.msra.mxu0 %v75
    %3963 = vmatprep.subr.mxu0 0.0
    %3964 = vmatpush1.msra.mxu0 0.0
    %3965 = vmatprep.subr.mxu0 0.0
    %3966 = vmatpush1.msra.mxu0 0.0
    %3967 = vmatprep.subr.mxu0 0.0
    %3968 = vmatpush1.msra.mxu0 0.0
    %3969 = vmatprep.subr.mxu0 0.0
    %3970 = vmatpush1.msra.mxu0 0.0
    %3971 = vmatprep.subr.mxu0 0.0
    %3972 = vmatpush1.msra.mxu0 0.0
    %3973 = vmatprep.subr.mxu0 0.0
    %3974 = vmatpush1.msra.mxu0 0.0
    %3975 = vmatprep.subr.mxu0 0.0
    %3976 = vmatpush1.msra.mxu0 0.0
    %3977 = vmatprep.subr.mxu0 0.0
    %3978 = vmatpush1.msra.mxu0 0.0
    %3979 = vmatprep.subr.mxu0 0.0
    %3980 = vmatpush1.msra.mxu0 0.0
    %3981 = vmatprep.subr.mxu0 0.0
    %3982 = vmatpush1.msra.mxu0 0.0
    %3983 = vmatprep.subr.mxu0 0.0
    %3984 = vmatpush1.msra.mxu0 0.0
    %3985 = vmatprep.subr.mxu0 0.0
    %3986 = vmatpush1.msra.mxu0 0.0
    %3987 = vmatprep.subr.mxu0 0.0
    %3988 = vmatpush1.msra.mxu0 0.0
    %3989 = vmatprep.subr.mxu0 0.0
    %3990 = vmatpush1.msra.mxu0 0.0
    %3991 = vmatprep.subr.mxu0 0.0
    %3992 = vmatpush1.msra.mxu0 0.0
    %3993 = vmatprep.subr.mxu0 0.0
    %3994 = vmatpush1.msra.mxu0 0.0
    %3995 = vmatprep.subr.mxu0 0.0
    %3996 = vmatpush1.msra.mxu0 0.0
    %3997 = vmatprep.subr.mxu0 0.0
    %3998 = vmatpush1.msra.mxu0 0.0
    %3999 = vmatprep.subr.mxu0 0.0
    %4000 = vmatpush1.msra.mxu0 0.0
    %4001 = vmatprep.subr.mxu0 0.0
    %4002 = vmatpush1.msra.mxu0 0.0
    %4003 = vmatprep.subr.mxu0 0.0
    %4004 = vmatpush1.msra.mxu0 0.0
    %4005 = vmatprep.subr.mxu0 0.0
    %4006 = vmatpush1.msra.mxu0 0.0
    %4007 = vmatprep.subr.mxu0 0.0
    %4008 = vmatpush1.msra.mxu0 0.0
    %4009 = vmatprep.subr.mxu0 0.0
    %4010 = vmatpush1.msra.mxu0 0.0
    %4011 = vmatprep.mubr.f32.mxu0 0.0
    %4012 = vmatmul.mubr.f32.gmra.mrb[0].mxu0 %v3945
    %v4013 = vpop.f32.mrb[0].mxu0
    %v4014 = vadd.f32 %v1985, %v4013
    %v4015 = vpop.f32.mrb[0].mxu0
    %4016 = vdwg.mxu0
    %v4017 = vmul.f32 %v4014, 0.5
    %v4018 = vtanh.pop %v4017
    %v4019 = vmul.f32 %v4018, 0.5
    %v4020 = vadd.f32 %v4019, 0.5
    %v4021 = vtanh.pop %v4014
    %v4022 = vmul.f32 %v4020, %v3053
    %4024 = vrot.lane.b32.xlu0 %v4021, 64
    %v4025 = vpop.permute.xlu0 %4024
    %v4027 = vmul.f32 %v4020, %v4025
    %4029 = vrot.lane.b32.xlu0 %v4027, 32
    %v4030 = vpop.permute.xlu0 %4029
    %v4032 = vadd.f32 %v4022, %v4030
    %v4033 = vtanh.pop %v4032
    %4035 = vrot.lane.b32.xlu0 %v4033, 64
    %v4036 = vpop.permute.xlu0 %4035
    %v4038 = vmul.f32 %v4020, %v4036
    %4040 = vrot.lane.b32.xlu0 %v4038, 32
    %v4041 = vpop.permute.xlu0 %4040
    %v4042 = vsel %vm414, %v4041, 0
    %4044 = vmatprep.subr.mxu0 0.0
    %4045 = vmatpush1.msra.mxu0 %v52
    %4046 = vmatprep.subr.mxu0 0.0
    %4047 = vmatpush1.msra.mxu0 %v53
    %4048 = vmatprep.subr.mxu0 0.0
    %4049 = vmatpush1.msra.mxu0 %v54
    %4050 = vmatprep.subr.mxu0 0.0
    %4051 = vmatpush1.msra.mxu0 %v55
    %4052 = vmatprep.subr.mxu0 0.0
    %4053 = vmatpush1.msra.mxu0 0.0
    %4054 = vmatprep.subr.mxu0 0.0
    %4055 = vmatpush1.msra.mxu0 0.0
    %4056 = vmatprep.subr.mxu0 0.0
    %4057 = vmatpush1.msra.mxu0 0.0
    %4058 = vmatprep.subr.mxu0 0.0
    %4059 = vmatpush1.msra.mxu0 0.0
    %4060 = vmatprep.subr.mxu0 0.0
    %4061 = vmatpush1.msra.mxu0 0.0
    %4062 = vmatprep.subr.mxu0 0.0
    %4063 = vmatpush1.msra.mxu0 0.0
    %4064 = vmatprep.subr.mxu0 0.0
    %4065 = vmatpush1.msra.mxu0 0.0
    %4066 = vmatprep.subr.mxu0 0.0
    %4067 = vmatpush1.msra.mxu0 0.0
    %4068 = vmatprep.subr.mxu0 0.0
    %4069 = vmatpush1.msra.mxu0 0.0
    %4070 = vmatprep.subr.mxu0 0.0
    %4071 = vmatpush1.msra.mxu0 0.0
    %4072 = vmatprep.subr.mxu0 0.0
    %4073 = vmatpush1.msra.mxu0 0.0
    %4074 = vmatprep.subr.mxu0 0.0
    %4075 = vmatpush1.msra.mxu0 0.0
    %4076 = vmatprep.subr.mxu0 0.0
    %4077 = vmatpush1.msra.mxu0 0.0
    %4078 = vmatprep.subr.mxu0 0.0
    %4079 = vmatpush1.msra.mxu0 0.0
    %4080 = vmatprep.subr.mxu0 0.0
    %4081 = vmatpush1.msra.mxu0 0.0
    %4082 = vmatprep.subr.mxu0 0.0
    %4083 = vmatpush1.msra.mxu0 0.0
    %4084 = vmatprep.subr.mxu0 0.0
    %4085 = vmatpush1.msra.mxu0 0.0
    %4086 = vmatprep.subr.mxu0 0.0
    %4087 = vmatpush1.msra.mxu0 0.0
    %4088 = vmatprep.subr.mxu0 0.0
    %4089 = vmatpush1.msra.mxu0 0.0
    %4090 = vmatprep.subr.mxu0 0.0
    %4091 = vmatpush1.msra.mxu0 0.0
    %4092 = vmatprep.subr.mxu0 0.0
    %4093 = vmatpush1.msra.mxu0 0.0
    %4094 = vmatprep.subr.mxu0 0.0
    %4095 = vmatpush1.msra.mxu0 0.0
    %4096 = vmatprep.subr.mxu0 0.0
    %4097 = vmatpush1.msra.mxu0 0.0
    %4098 = vmatprep.subr.mxu0 0.0
    %4099 = vmatpush1.msra.mxu0 0.0
    %4100 = vmatprep.subr.mxu0 0.0
    %4101 = vmatpush1.msra.mxu0 0.0
    %4102 = vmatprep.subr.mxu0 0.0
    %4103 = vmatpush1.msra.mxu0 0.0
    %4104 = vmatprep.subr.mxu0 0.0
    %4105 = vmatpush1.msra.mxu0 0.0
    %4106 = vmatprep.subr.mxu0 0.0
    %4107 = vmatpush1.msra.mxu0 0.0
    %4108 = vmatprep.mubr.f32.mxu0 0.0
    %4109 = vmatmul.mubr.f32.gmra.mrb[0].mxu0 %v4042
    %v4110 = vpop.f32.mrb[0].mxu0
    %v4111 = vadd.f32 0.0, %v4110
    %v4112 = vpop.f32.mrb[0].mxu0
    %4113 = vdwg.mxu0
    %v4115 = vrot.slane %v4111, 6
    %v4117 = vrot.slane %v4111, 4
    %v4119 = vrot.slane %v4111, 2
    %v4121 = vsel %vm647, %v4111, %v4115
    %v4122 = vsel %vm649, %v4121, %v4117
    %v4123 = vsel %vm651, %v4122, %v4119
    %v4124 = vadd.f32 %v4123, %v312
    %v4125 = vadd.f32 %v4123, %v317
    %v4126 = vtanh.pop %v4124
    %v4127 = vtanh.pop %v4125
    %v4128 = vmul.f32 %v4126, %v660
    %v4129 = vmul.f32 %v4127, %v660
    %v4130 = vsel %vm414, %v4128, 0.0
    %4131 = vadd.xlane.f32.xlu0 %v4130
    %v4132 = vpop.xlane.xlu0 %4131
    %v4133 = vsel %vm414, %v4129, 0.0
    %4134 = vadd.xlane.f32.xlu0 %v4133
    %v4135 = vpop.xlane.xlu0 %4134
    %v4138 = vlaneseq
    %v4139 = vshrl.u32 %v4138, 7
    %v4140 = vsub.s32 %v367, %v4139
    %v4141 = vrot.slane %v4132, %v4140
    %v4142 = vlaneseq
    %v4143 = vshrl.u32 %v4142, 7
    %v4144 = vsub.s32 %v367, %v4143
    %v4145 = vrot.slane %v4135, %v4144
    %v4146 = vsel %vm412, %v4145, %v4141
    %v4148 = vsel %vm681, %v4146, -inf
    %4149 = vmax.xlane.f32.xlu0 %v4148
    %v4150 = vpop.xlane.xlu0 %4149
    %v4152 = vlaneseq
    %v4153 = vshrl.u32 %v4152, 7
    %v4154 = vsub.s32 0, %v4153
    %v4155 = vrot.slane %v4150, %v4154
    %v4156 = vlaneseq
    %v4157 = vshrl.u32 %v4156, 7
    %v4158 = vsub.s32 1, %v4157
    %v4159 = vrot.slane %v4150, %v4158
    %v4162 = vsub.f32 %v4132, %v4155
    %v4163 = vsub.f32 %v4135, %v4159
    %v4164 = vmul.f32 %v4162, 1.442695
    %v4165 = vpow.pop %v4164
    %v4166 = vmul.f32 %v4163, 1.442695
    %v4167 = vpow.pop %v4166
    %4170 = vset.pattern.permute.xlu0 0
    %4171 = vperm.xlu0 %4170, %v4165
    %v4172 = vpop.permute.xlu0 %4171
    %4173 = vset.pattern.permute.xlu0 0
    %4174 = vperm.xlu0 %4173, %v4167
    %v4175 = vpop.permute.xlu0 %4174
    %v4176 = vlaneseq
    %v4177 = vshrl.u32 %v4176, 7
    %v4178 = vsub.s32 %v367, %v4177
    %v4179 = vrot.slane %v4172, %v4178
    %v4180 = vlaneseq
    %v4181 = vshrl.u32 %v4180, 7
    %v4182 = vsub.s32 %v367, %v4181
    %v4183 = vrot.slane %v4175, %v4182
    %v4184 = vsel %vm412, %v4183, %v4179
    %v4186 = vsel %vm681, %v4184, 0.0
    %4187 = vadd.xlane.f32.xlu0 %v4186
    %v4188 = vpop.xlane.xlu0 %4187
    %v4190 = vlaneseq
    %v4191 = vshrl.u32 %v4190, 7
    %v4192 = vsub.s32 0, %v4191
    %v4193 = vrot.slane %v4188, %v4192
    %v4194 = vlaneseq
    %v4195 = vshrl.u32 %v4194, 7
    %v4196 = vsub.s32 1, %v4195
    %v4197 = vrot.slane %v4188, %v4196
    %v4200 = vrcp.pop %v4193
    %v4201 = vmul.f32 %v4165, %v4200
    %v4202 = vrcp.pop %v4197
    %v4203 = vmul.f32 %v4167, %v4202
    %v4204 = vmul.f32 %v4201, %v752
    %v4205 = vmul.f32 %v4201, %v759
    %v4206 = vmul.f32 %v4201, %v766
    %v4207 = vmul.f32 %v4201, %v773
    %v4208 = vmul.f32 %v4201, %v780
    %v4209 = vmul.f32 %v4201, %v787
    %v4210 = vmul.f32 %v4201, %v794
    %v4211 = vmul.f32 %v4201, %v801
    %v4212 = vmul.f32 %v4201, %v808
    %v4213 = vmul.f32 %v4201, %v815
    %v4214 = vmul.f32 %v4201, %v822
    %v4215 = vmul.f32 %v4201, %v829
    %v4216 = vmul.f32 %v4201, %v836
    %v4217 = vmul.f32 %v4201, %v843
    %v4218 = vmul.f32 %v4201, %v850
    %v4219 = vmul.f32 %v4201, %v857
    %v4220 = vmul.f32 %v4201, %v864
    %v4221 = vmul.f32 %v4201, %v871
    %v4222 = vmul.f32 %v4201, %v878
    %v4223 = vmul.f32 %v4201, %v885
    %v4224 = vmul.f32 %v4201, %v892
    %v4225 = vmul.f32 %v4201, %v899
    %v4226 = vmul.f32 %v4201, %v906
    %v4227 = vmul.f32 %v4201, %v913
    %v4228 = vmul.f32 %v4201, %v920
    %v4229 = vmul.f32 %v4201, %v927
    %v4230 = vmul.f32 %v4201, %v934
    %v4231 = vmul.f32 %v4201, %v941
    %v4232 = vmul.f32 %v4201, %v948
    %v4233 = vmul.f32 %v4201, %v955
    %v4234 = vmul.f32 %v4201, %v962
    %v4235 = vmul.f32 %v4201, %v969
    %v4236 = vmul.f32 %v4203, %v976
    %v4237 = vmul.f32 %v4203, %v983
    %v4238 = vmul.f32 %v4203, %v990
    %v4239 = vmul.f32 %v4203, %v997
    %v4240 = vmul.f32 %v4203, %v1004
    %v4241 = vmul.f32 %v4203, %v1011
    %v4242 = vmul.f32 %v4203, %v1018
    %v4243 = vmul.f32 %v4203, %v1025
    %v4244 = vmul.f32 %v4203, %v1032
    %v4245 = vmul.f32 %v4203, %v1039
    %v4246 = vmul.f32 %v4203, %v1046
    %v4247 = vmul.f32 %v4203, %v1053
    %v4248 = vmul.f32 %v4203, %v1060
    %v4249 = vmul.f32 %v4203, %v1067
    %v4250 = vmul.f32 %v4203, %v1074
    %v4251 = vmul.f32 %v4203, %v1081
    %v4252 = vmul.f32 %v4203, %v1088
    %v4253 = vmul.f32 %v4203, %v1095
    %v4254 = vmul.f32 %v4203, %v1102
    %v4255 = vmul.f32 %v4203, %v1109
    %v4256 = vmul.f32 %v4203, %v1116
    %v4257 = vmul.f32 %v4203, %v1123
    %v4258 = vmul.f32 %v4203, %v1130
    %v4259 = vmul.f32 %v4203, %v1137
    %v4260 = vmul.f32 %v4203, %v1144
    %v4261 = vmul.f32 %v4203, %v1151
    %v4262 = vmul.f32 %v4203, %v1158
    %v4263 = vmul.f32 %v4203, %v1165
    %v4264 = vmul.f32 %v4203, %v1172
    %v4265 = vmul.f32 %v4203, %v1179
    %v4266 = vmul.f32 %v4203, %v1186
    %v4267 = vmul.f32 %v4203, %v1193
    %4332 = vset.pattern.permute.xlu0 0
    %4333 = vperm.xlu0 %4332, %v4204
    %v4334 = vpop.permute.xlu0 %4333
    %4335 = vset.pattern.permute.xlu0 0
    %4336 = vperm.xlu0 %4335, %v4205
    %v4337 = vpop.permute.xlu0 %4336
    %4338 = vset.pattern.permute.xlu0 0
    %4339 = vperm.xlu0 %4338, %v4206
    %v4340 = vpop.permute.xlu0 %4339
    %4341 = vset.pattern.permute.xlu0 0
    %4342 = vperm.xlu0 %4341, %v4207
    %v4343 = vpop.permute.xlu0 %4342
    %4344 = vset.pattern.permute.xlu0 0
    %4345 = vperm.xlu0 %4344, %v4208
    %v4346 = vpop.permute.xlu0 %4345
    %4347 = vset.pattern.permute.xlu0 0
    %4348 = vperm.xlu0 %4347, %v4209
    %v4349 = vpop.permute.xlu0 %4348
    %4350 = vset.pattern.permute.xlu0 0
    %4351 = vperm.xlu0 %4350, %v4210
    %v4352 = vpop.permute.xlu0 %4351
    %4353 = vset.pattern.permute.xlu0 0
    %4354 = vperm.xlu0 %4353, %v4211
    %v4355 = vpop.permute.xlu0 %4354
    %4356 = vset.pattern.permute.xlu0 0
    %4357 = vperm.xlu0 %4356, %v4212
    %v4358 = vpop.permute.xlu0 %4357
    %4359 = vset.pattern.permute.xlu0 0
    %4360 = vperm.xlu0 %4359, %v4213
    %v4361 = vpop.permute.xlu0 %4360
    %4362 = vset.pattern.permute.xlu0 0
    %4363 = vperm.xlu0 %4362, %v4214
    %v4364 = vpop.permute.xlu0 %4363
    %4365 = vset.pattern.permute.xlu0 0
    %4366 = vperm.xlu0 %4365, %v4215
    %v4367 = vpop.permute.xlu0 %4366
    %4368 = vset.pattern.permute.xlu0 0
    %4369 = vperm.xlu0 %4368, %v4216
    %v4370 = vpop.permute.xlu0 %4369
    %4371 = vset.pattern.permute.xlu0 0
    %4372 = vperm.xlu0 %4371, %v4217
    %v4373 = vpop.permute.xlu0 %4372
    %4374 = vset.pattern.permute.xlu0 0
    %4375 = vperm.xlu0 %4374, %v4218
    %v4376 = vpop.permute.xlu0 %4375
    %4377 = vset.pattern.permute.xlu0 0
    %4378 = vperm.xlu0 %4377, %v4219
    %v4379 = vpop.permute.xlu0 %4378
    %4380 = vset.pattern.permute.xlu0 0
    %4381 = vperm.xlu0 %4380, %v4220
    %v4382 = vpop.permute.xlu0 %4381
    %4383 = vset.pattern.permute.xlu0 0
    %4384 = vperm.xlu0 %4383, %v4221
    %v4385 = vpop.permute.xlu0 %4384
    %4386 = vset.pattern.permute.xlu0 0
    %4387 = vperm.xlu0 %4386, %v4222
    %v4388 = vpop.permute.xlu0 %4387
    %4389 = vset.pattern.permute.xlu0 0
    %4390 = vperm.xlu0 %4389, %v4223
    %v4391 = vpop.permute.xlu0 %4390
    %4392 = vset.pattern.permute.xlu0 0
    %4393 = vperm.xlu0 %4392, %v4224
    %v4394 = vpop.permute.xlu0 %4393
    %4395 = vset.pattern.permute.xlu0 0
    %4396 = vperm.xlu0 %4395, %v4225
    %v4397 = vpop.permute.xlu0 %4396
    %4398 = vset.pattern.permute.xlu0 0
    %4399 = vperm.xlu0 %4398, %v4226
    %v4400 = vpop.permute.xlu0 %4399
    %4401 = vset.pattern.permute.xlu0 0
    %4402 = vperm.xlu0 %4401, %v4227
    %v4403 = vpop.permute.xlu0 %4402
    %4404 = vset.pattern.permute.xlu0 0
    %4405 = vperm.xlu0 %4404, %v4228
    %v4406 = vpop.permute.xlu0 %4405
    %4407 = vset.pattern.permute.xlu0 0
    %4408 = vperm.xlu0 %4407, %v4229
    %v4409 = vpop.permute.xlu0 %4408
    %4410 = vset.pattern.permute.xlu0 0
    %4411 = vperm.xlu0 %4410, %v4230
    %v4412 = vpop.permute.xlu0 %4411
    %4413 = vset.pattern.permute.xlu0 0
    %4414 = vperm.xlu0 %4413, %v4231
    %v4415 = vpop.permute.xlu0 %4414
    %4416 = vset.pattern.permute.xlu0 0
    %4417 = vperm.xlu0 %4416, %v4232
    %v4418 = vpop.permute.xlu0 %4417
    %4419 = vset.pattern.permute.xlu0 0
    %4420 = vperm.xlu0 %4419, %v4233
    %v4421 = vpop.permute.xlu0 %4420
    %4422 = vset.pattern.permute.xlu0 0
    %4423 = vperm.xlu0 %4422, %v4234
    %v4424 = vpop.permute.xlu0 %4423
    %4425 = vset.pattern.permute.xlu0 0
    %4426 = vperm.xlu0 %4425, %v4235
    %v4427 = vpop.permute.xlu0 %4426
    %4428 = vset.pattern.permute.xlu0 0
    %4429 = vperm.xlu0 %4428, %v4236
    %v4430 = vpop.permute.xlu0 %4429
    %4431 = vset.pattern.permute.xlu0 0
    %4432 = vperm.xlu0 %4431, %v4237
    %v4433 = vpop.permute.xlu0 %4432
    %4434 = vset.pattern.permute.xlu0 0
    %4435 = vperm.xlu0 %4434, %v4238
    %v4436 = vpop.permute.xlu0 %4435
    %4437 = vset.pattern.permute.xlu0 0
    %4438 = vperm.xlu0 %4437, %v4239
    %v4439 = vpop.permute.xlu0 %4438
    %4440 = vset.pattern.permute.xlu0 0
    %4441 = vperm.xlu0 %4440, %v4240
    %v4442 = vpop.permute.xlu0 %4441
    %4443 = vset.pattern.permute.xlu0 0
    %4444 = vperm.xlu0 %4443, %v4241
    %v4445 = vpop.permute.xlu0 %4444
    %4446 = vset.pattern.permute.xlu0 0
    %4447 = vperm.xlu0 %4446, %v4242
    %v4448 = vpop.permute.xlu0 %4447
    %4449 = vset.pattern.permute.xlu0 0
    %4450 = vperm.xlu0 %4449, %v4243
    %v4451 = vpop.permute.xlu0 %4450
    %4452 = vset.pattern.permute.xlu0 0
    %4453 = vperm.xlu0 %4452, %v4244
    %v4454 = vpop.permute.xlu0 %4453
    %4455 = vset.pattern.permute.xlu0 0
    %4456 = vperm.xlu0 %4455, %v4245
    %v4457 = vpop.permute.xlu0 %4456
    %4458 = vset.pattern.permute.xlu0 0
    %4459 = vperm.xlu0 %4458, %v4246
    %v4460 = vpop.permute.xlu0 %4459
    %4461 = vset.pattern.permute.xlu0 0
    %4462 = vperm.xlu0 %4461, %v4247
    %v4463 = vpop.permute.xlu0 %4462
    %4464 = vset.pattern.permute.xlu0 0
    %4465 = vperm.xlu0 %4464, %v4248
    %v4466 = vpop.permute.xlu0 %4465
    %4467 = vset.pattern.permute.xlu0 0
    %4468 = vperm.xlu0 %4467, %v4249
    %v4469 = vpop.permute.xlu0 %4468
    %4470 = vset.pattern.permute.xlu0 0
    %4471 = vperm.xlu0 %4470, %v4250
    %v4472 = vpop.permute.xlu0 %4471
    %4473 = vset.pattern.permute.xlu0 0
    %4474 = vperm.xlu0 %4473, %v4251
    %v4475 = vpop.permute.xlu0 %4474
    %4476 = vset.pattern.permute.xlu0 0
    %4477 = vperm.xlu0 %4476, %v4252
    %v4478 = vpop.permute.xlu0 %4477
    %4479 = vset.pattern.permute.xlu0 0
    %4480 = vperm.xlu0 %4479, %v4253
    %v4481 = vpop.permute.xlu0 %4480
    %4482 = vset.pattern.permute.xlu0 0
    %4483 = vperm.xlu0 %4482, %v4254
    %v4484 = vpop.permute.xlu0 %4483
    %4485 = vset.pattern.permute.xlu0 0
    %4486 = vperm.xlu0 %4485, %v4255
    %v4487 = vpop.permute.xlu0 %4486
    %4488 = vset.pattern.permute.xlu0 0
    %4489 = vperm.xlu0 %4488, %v4256
    %v4490 = vpop.permute.xlu0 %4489
    %4491 = vset.pattern.permute.xlu0 0
    %4492 = vperm.xlu0 %4491, %v4257
    %v4493 = vpop.permute.xlu0 %4492
    %4494 = vset.pattern.permute.xlu0 0
    %4495 = vperm.xlu0 %4494, %v4258
    %v4496 = vpop.permute.xlu0 %4495
    %4497 = vset.pattern.permute.xlu0 0
    %4498 = vperm.xlu0 %4497, %v4259
    %v4499 = vpop.permute.xlu0 %4498
    %4500 = vset.pattern.permute.xlu0 0
    %4501 = vperm.xlu0 %4500, %v4260
    %v4502 = vpop.permute.xlu0 %4501
    %4503 = vset.pattern.permute.xlu0 0
    %4504 = vperm.xlu0 %4503, %v4261
    %v4505 = vpop.permute.xlu0 %4504
    %4506 = vset.pattern.permute.xlu0 0
    %4507 = vperm.xlu0 %4506, %v4262
    %v4508 = vpop.permute.xlu0 %4507
    %4509 = vset.pattern.permute.xlu0 0
    %4510 = vperm.xlu0 %4509, %v4263
    %v4511 = vpop.permute.xlu0 %4510
    %4512 = vset.pattern.permute.xlu0 0
    %4513 = vperm.xlu0 %4512, %v4264
    %v4514 = vpop.permute.xlu0 %4513
    %4515 = vset.pattern.permute.xlu0 0
    %4516 = vperm.xlu0 %4515, %v4265
    %v4517 = vpop.permute.xlu0 %4516
    %4518 = vset.pattern.permute.xlu0 0
    %4519 = vperm.xlu0 %4518, %v4266
    %v4520 = vpop.permute.xlu0 %4519
    %4521 = vset.pattern.permute.xlu0 0
    %4522 = vperm.xlu0 %4521, %v4267
    %v4523 = vpop.permute.xlu0 %4522
    %v4524 = vlaneseq
    %v4525 = vshrl.u32 %v4524, 7
    %v4526 = vsub.s32 %v367, %v4525
    %v4527 = vrot.slane %v4334, %v4526
    %v4528 = vlaneseq
    %v4529 = vshrl.u32 %v4528, 7
    %v4530 = vsub.s32 %v367, %v4529
    %v4531 = vrot.slane %v4337, %v4530
    %v4532 = vlaneseq
    %v4533 = vshrl.u32 %v4532, 7
    %v4534 = vsub.s32 %v367, %v4533
    %v4535 = vrot.slane %v4340, %v4534
    %v4536 = vlaneseq
    %v4537 = vshrl.u32 %v4536, 7
    %v4538 = vsub.s32 %v367, %v4537
    %v4539 = vrot.slane %v4343, %v4538
    %v4540 = vlaneseq
    %v4541 = vshrl.u32 %v4540, 7
    %v4542 = vsub.s32 %v367, %v4541
    %v4543 = vrot.slane %v4346, %v4542
    %v4544 = vlaneseq
    %v4545 = vshrl.u32 %v4544, 7
    %v4546 = vsub.s32 %v367, %v4545
    %v4547 = vrot.slane %v4349, %v4546
    %v4548 = vlaneseq
    %v4549 = vshrl.u32 %v4548, 7
    %v4550 = vsub.s32 %v367, %v4549
    %v4551 = vrot.slane %v4352, %v4550
    %v4552 = vlaneseq
    %v4553 = vshrl.u32 %v4552, 7
    %v4554 = vsub.s32 %v367, %v4553
    %v4555 = vrot.slane %v4355, %v4554
    %v4556 = vlaneseq
    %v4557 = vshrl.u32 %v4556, 7
    %v4558 = vsub.s32 %v367, %v4557
    %v4559 = vrot.slane %v4358, %v4558
    %v4560 = vlaneseq
    %v4561 = vshrl.u32 %v4560, 7
    %v4562 = vsub.s32 %v367, %v4561
    %v4563 = vrot.slane %v4361, %v4562
    %v4564 = vlaneseq
    %v4565 = vshrl.u32 %v4564, 7
    %v4566 = vsub.s32 %v367, %v4565
    %v4567 = vrot.slane %v4364, %v4566
    %v4568 = vlaneseq
    %v4569 = vshrl.u32 %v4568, 7
    %v4570 = vsub.s32 %v367, %v4569
    %v4571 = vrot.slane %v4367, %v4570
    %v4572 = vlaneseq
    %v4573 = vshrl.u32 %v4572, 7
    %v4574 = vsub.s32 %v367, %v4573
    %v4575 = vrot.slane %v4370, %v4574
    %v4576 = vlaneseq
    %v4577 = vshrl.u32 %v4576, 7
    %v4578 = vsub.s32 %v367, %v4577
    %v4579 = vrot.slane %v4373, %v4578
    %v4580 = vlaneseq
    %v4581 = vshrl.u32 %v4580, 7
    %v4582 = vsub.s32 %v367, %v4581
    %v4583 = vrot.slane %v4376, %v4582
    %v4584 = vlaneseq
    %v4585 = vshrl.u32 %v4584, 7
    %v4586 = vsub.s32 %v367, %v4585
    %v4587 = vrot.slane %v4379, %v4586
    %v4588 = vlaneseq
    %v4589 = vshrl.u32 %v4588, 7
    %v4590 = vsub.s32 %v367, %v4589
    %v4591 = vrot.slane %v4382, %v4590
    %v4592 = vlaneseq
    %v4593 = vshrl.u32 %v4592, 7
    %v4594 = vsub.s32 %v367, %v4593
    %v4595 = vrot.slane %v4385, %v4594
    %v4596 = vlaneseq
    %v4597 = vshrl.u32 %v4596, 7
    %v4598 = vsub.s32 %v367, %v4597
    %v4599 = vrot.slane %v4388, %v4598
    %v4600 = vlaneseq
    %v4601 = vshrl.u32 %v4600, 7
    %v4602 = vsub.s32 %v367, %v4601
    %v4603 = vrot.slane %v4391, %v4602
    %v4604 = vlaneseq
    %v4605 = vshrl.u32 %v4604, 7
    %v4606 = vsub.s32 %v367, %v4605
    %v4607 = vrot.slane %v4394, %v4606
    %v4608 = vlaneseq
    %v4609 = vshrl.u32 %v4608, 7
    %v4610 = vsub.s32 %v367, %v4609
    %v4611 = vrot.slane %v4397, %v4610
    %v4612 = vlaneseq
    %v4613 = vshrl.u32 %v4612, 7
    %v4614 = vsub.s32 %v367, %v4613
    %v4615 = vrot.slane %v4400, %v4614
    %v4616 = vlaneseq
    %v4617 = vshrl.u32 %v4616, 7
    %v4618 = vsub.s32 %v367, %v4617
    %v4619 = vrot.slane %v4403, %v4618
    %v4620 = vlaneseq
    %v4621 = vshrl.u32 %v4620, 7
    %v4622 = vsub.s32 %v367, %v4621
    %v4623 = vrot.slane %v4406, %v4622
    %v4624 = vlaneseq
    %v4625 = vshrl.u32 %v4624, 7
    %v4626 = vsub.s32 %v367, %v4625
    %v4627 = vrot.slane %v4409, %v4626
    %v4628 = vlaneseq
    %v4629 = vshrl.u32 %v4628, 7
    %v4630 = vsub.s32 %v367, %v4629
    %v4631 = vrot.slane %v4412, %v4630
    %v4632 = vlaneseq
    %v4633 = vshrl.u32 %v4632, 7
    %v4634 = vsub.s32 %v367, %v4633
    %v4635 = vrot.slane %v4415, %v4634
    %v4636 = vlaneseq
    %v4637 = vshrl.u32 %v4636, 7
    %v4638 = vsub.s32 %v367, %v4637
    %v4639 = vrot.slane %v4418, %v4638
    %v4640 = vlaneseq
    %v4641 = vshrl.u32 %v4640, 7
    %v4642 = vsub.s32 %v367, %v4641
    %v4643 = vrot.slane %v4421, %v4642
    %v4644 = vlaneseq
    %v4645 = vshrl.u32 %v4644, 7
    %v4646 = vsub.s32 %v367, %v4645
    %v4647 = vrot.slane %v4424, %v4646
    %v4648 = vlaneseq
    %v4649 = vshrl.u32 %v4648, 7
    %v4650 = vsub.s32 %v367, %v4649
    %v4651 = vrot.slane %v4427, %v4650
    %v4652 = vlaneseq
    %v4653 = vshrl.u32 %v4652, 7
    %v4654 = vsub.s32 %v367, %v4653
    %v4655 = vrot.slane %v4430, %v4654
    %v4656 = vlaneseq
    %v4657 = vshrl.u32 %v4656, 7
    %v4658 = vsub.s32 %v367, %v4657
    %v4659 = vrot.slane %v4433, %v4658
    %v4660 = vlaneseq
    %v4661 = vshrl.u32 %v4660, 7
    %v4662 = vsub.s32 %v367, %v4661
    %v4663 = vrot.slane %v4436, %v4662
    %v4664 = vlaneseq
    %v4665 = vshrl.u32 %v4664, 7
    %v4666 = vsub.s32 %v367, %v4665
    %v4667 = vrot.slane %v4439, %v4666
    %v4668 = vlaneseq
    %v4669 = vshrl.u32 %v4668, 7
    %v4670 = vsub.s32 %v367, %v4669
    %v4671 = vrot.slane %v4442, %v4670
    %v4672 = vlaneseq
    %v4673 = vshrl.u32 %v4672, 7
    %v4674 = vsub.s32 %v367, %v4673
    %v4675 = vrot.slane %v4445, %v4674
    %v4676 = vlaneseq
    %v4677 = vshrl.u32 %v4676, 7
    %v4678 = vsub.s32 %v367, %v4677
    %v4679 = vrot.slane %v4448, %v4678
    %v4680 = vlaneseq
    %v4681 = vshrl.u32 %v4680, 7
    %v4682 = vsub.s32 %v367, %v4681
    %v4683 = vrot.slane %v4451, %v4682
    %v4684 = vlaneseq
    %v4685 = vshrl.u32 %v4684, 7
    %v4686 = vsub.s32 %v367, %v4685
    %v4687 = vrot.slane %v4454, %v4686
    %v4688 = vlaneseq
    %v4689 = vshrl.u32 %v4688, 7
    %v4690 = vsub.s32 %v367, %v4689
    %v4691 = vrot.slane %v4457, %v4690
    %v4692 = vlaneseq
    %v4693 = vshrl.u32 %v4692, 7
    %v4694 = vsub.s32 %v367, %v4693
    %v4695 = vrot.slane %v4460, %v4694
    %v4696 = vlaneseq
    %v4697 = vshrl.u32 %v4696, 7
    %v4698 = vsub.s32 %v367, %v4697
    %v4699 = vrot.slane %v4463, %v4698
    %v4700 = vlaneseq
    %v4701 = vshrl.u32 %v4700, 7
    %v4702 = vsub.s32 %v367, %v4701
    %v4703 = vrot.slane %v4466, %v4702
    %v4704 = vlaneseq
    %v4705 = vshrl.u32 %v4704, 7
    %v4706 = vsub.s32 %v367, %v4705
    %v4707 = vrot.slane %v4469, %v4706
    %v4708 = vlaneseq
    %v4709 = vshrl.u32 %v4708, 7
    %v4710 = vsub.s32 %v367, %v4709
    %v4711 = vrot.slane %v4472, %v4710
    %v4712 = vlaneseq
    %v4713 = vshrl.u32 %v4712, 7
    %v4714 = vsub.s32 %v367, %v4713
    %v4715 = vrot.slane %v4475, %v4714
    %v4716 = vlaneseq
    %v4717 = vshrl.u32 %v4716, 7
    %v4718 = vsub.s32 %v367, %v4717
    %v4719 = vrot.slane %v4478, %v4718
    %v4720 = vlaneseq
    %v4721 = vshrl.u32 %v4720, 7
    %v4722 = vsub.s32 %v367, %v4721
    %v4723 = vrot.slane %v4481, %v4722
    %v4724 = vlaneseq
    %v4725 = vshrl.u32 %v4724, 7
    %v4726 = vsub.s32 %v367, %v4725
    %v4727 = vrot.slane %v4484, %v4726
    %v4728 = vlaneseq
    %v4729 = vshrl.u32 %v4728, 7
    %v4730 = vsub.s32 %v367, %v4729
    %v4731 = vrot.slane %v4487, %v4730
    %v4732 = vlaneseq
    %v4733 = vshrl.u32 %v4732, 7
    %v4734 = vsub.s32 %v367, %v4733
    %v4735 = vrot.slane %v4490, %v4734
    %v4736 = vlaneseq
    %v4737 = vshrl.u32 %v4736, 7
    %v4738 = vsub.s32 %v367, %v4737
    %v4739 = vrot.slane %v4493, %v4738
    %v4740 = vlaneseq
    %v4741 = vshrl.u32 %v4740, 7
    %v4742 = vsub.s32 %v367, %v4741
    %v4743 = vrot.slane %v4496, %v4742
    %v4744 = vlaneseq
    %v4745 = vshrl.u32 %v4744, 7
    %v4746 = vsub.s32 %v367, %v4745
    %v4747 = vrot.slane %v4499, %v4746
    %v4748 = vlaneseq
    %v4749 = vshrl.u32 %v4748, 7
    %v4750 = vsub.s32 %v367, %v4749
    %v4751 = vrot.slane %v4502, %v4750
    %v4752 = vlaneseq
    %v4753 = vshrl.u32 %v4752, 7
    %v4754 = vsub.s32 %v367, %v4753
    %v4755 = vrot.slane %v4505, %v4754
    %v4756 = vlaneseq
    %v4757 = vshrl.u32 %v4756, 7
    %v4758 = vsub.s32 %v367, %v4757
    %v4759 = vrot.slane %v4508, %v4758
    %v4760 = vlaneseq
    %v4761 = vshrl.u32 %v4760, 7
    %v4762 = vsub.s32 %v367, %v4761
    %v4763 = vrot.slane %v4511, %v4762
    %v4764 = vlaneseq
    %v4765 = vshrl.u32 %v4764, 7
    %v4766 = vsub.s32 %v367, %v4765
    %v4767 = vrot.slane %v4514, %v4766
    %v4768 = vlaneseq
    %v4769 = vshrl.u32 %v4768, 7
    %v4770 = vsub.s32 %v367, %v4769
    %v4771 = vrot.slane %v4517, %v4770
    %v4772 = vlaneseq
    %v4773 = vshrl.u32 %v4772, 7
    %v4774 = vsub.s32 %v367, %v4773
    %v4775 = vrot.slane %v4520, %v4774
    %v4776 = vlaneseq
    %v4777 = vshrl.u32 %v4776, 7
    %v4778 = vsub.s32 %v367, %v4777
    %v4779 = vrot.slane %v4523, %v4778
    %v4780 = vsel %vm412, %v4531, %v4527
    %v4781 = vsel %vm1835, %v4535, %v4780
    %v4782 = vsel %vm1837, %v4539, %v4781
    %v4783 = vsel %vm1839, %v4543, %v4782
    %v4784 = vsel %vm1841, %v4547, %v4783
    %v4785 = vsel %vm1843, %v4551, %v4784
    %v4786 = vsel %vm1845, %v4555, %v4785
    %v4787 = vsel %vm412, %v4563, %v4559
    %v4788 = vsel %vm1835, %v4567, %v4787
    %v4789 = vsel %vm1837, %v4571, %v4788
    %v4790 = vsel %vm1839, %v4575, %v4789
    %v4791 = vsel %vm1841, %v4579, %v4790
    %v4792 = vsel %vm1843, %v4583, %v4791
    %v4793 = vsel %vm1845, %v4587, %v4792
    %v4794 = vsel %vm412, %v4595, %v4591
    %v4795 = vsel %vm1835, %v4599, %v4794
    %v4796 = vsel %vm1837, %v4603, %v4795
    %v4797 = vsel %vm1839, %v4607, %v4796
    %v4798 = vsel %vm1841, %v4611, %v4797
    %v4799 = vsel %vm1843, %v4615, %v4798
    %v4800 = vsel %vm1845, %v4619, %v4799
    %v4801 = vsel %vm412, %v4627, %v4623
    %v4802 = vsel %vm1835, %v4631, %v4801
    %v4803 = vsel %vm1837, %v4635, %v4802
    %v4804 = vsel %vm1839, %v4639, %v4803
    %v4805 = vsel %vm1841, %v4643, %v4804
    %v4806 = vsel %vm1843, %v4647, %v4805
    %v4807 = vsel %vm1845, %v4651, %v4806
    %v4808 = vsel %vm412, %v4659, %v4655
    %v4809 = vsel %vm1835, %v4663, %v4808
    %v4810 = vsel %vm1837, %v4667, %v4809
    %v4811 = vsel %vm1839, %v4671, %v4810
    %v4812 = vsel %vm1841, %v4675, %v4811
    %v4813 = vsel %vm1843, %v4679, %v4812
    %v4814 = vsel %vm1845, %v4683, %v4813
    %v4815 = vsel %vm412, %v4691, %v4687
    %v4816 = vsel %vm1835, %v4695, %v4815
    %v4817 = vsel %vm1837, %v4699, %v4816
    %v4818 = vsel %vm1839, %v4703, %v4817
    %v4819 = vsel %vm1841, %v4707, %v4818
    %v4820 = vsel %vm1843, %v4711, %v4819
    %v4821 = vsel %vm1845, %v4715, %v4820
    %v4822 = vsel %vm412, %v4723, %v4719
    %v4823 = vsel %vm1835, %v4727, %v4822
    %v4824 = vsel %vm1837, %v4731, %v4823
    %v4825 = vsel %vm1839, %v4735, %v4824
    %v4826 = vsel %vm1841, %v4739, %v4825
    %v4827 = vsel %vm1843, %v4743, %v4826
    %v4828 = vsel %vm1845, %v4747, %v4827
    %v4829 = vsel %vm412, %v4755, %v4751
    %v4830 = vsel %vm1835, %v4759, %v4829
    %v4831 = vsel %vm1837, %v4763, %v4830
    %v4832 = vsel %vm1839, %v4767, %v4831
    %v4833 = vsel %vm1841, %v4771, %v4832
    %v4834 = vsel %vm1843, %v4775, %v4833
    %v4835 = vsel %vm1845, %v4779, %v4834
    %v4844 = vsel %vm320, %v4786, 0.0
    %4845 = vadd.xlane.f32.xlu0 %v4844
    %v4846 = vpop.xlane.xlu0 %4845
    %v4847 = vsel %vm320, %v4793, 0.0
    %4848 = vadd.xlane.f32.xlu0 %v4847
    %v4849 = vpop.xlane.xlu0 %4848
    %v4850 = vsel %vm320, %v4800, 0.0
    %4851 = vadd.xlane.f32.xlu0 %v4850
    %v4852 = vpop.xlane.xlu0 %4851
    %v4853 = vsel %vm320, %v4807, 0.0
    %4854 = vadd.xlane.f32.xlu0 %v4853
    %v4855 = vpop.xlane.xlu0 %4854
    %v4856 = vsel %vm320, %v4814, 0.0
    %4857 = vadd.xlane.f32.xlu0 %v4856
    %v4858 = vpop.xlane.xlu0 %4857
    %v4859 = vsel %vm320, %v4821, 0.0
    %4860 = vadd.xlane.f32.xlu0 %v4859
    %v4861 = vpop.xlane.xlu0 %4860
    %v4862 = vsel %vm320, %v4828, 0.0
    %4863 = vadd.xlane.f32.xlu0 %v4862
    %v4864 = vpop.xlane.xlu0 %4863
    %v4865 = vsel %vm320, %v4835, 0.0
    %4866 = vadd.xlane.f32.xlu0 %v4865
    %v4867 = vpop.xlane.xlu0 %4866
    %s4868 = scalar_lea.vmem %s1, 6
    %v4869 = vld [vmem:[%s4868] sm:$0x3]
    %v4878 = vlaneseq
    %v4879 = vshrl.u32 %v4878, 7
    %v4880 = vsub.s32 %v367, %v4879
    %v4881 = vrot.slane %v4846, %v4880
    %v4882 = vlaneseq
    %v4883 = vshrl.u32 %v4882, 7
    %v4884 = vsub.s32 %v372, %v4883
    %v4885 = vrot.slane %v4849, %v4884
    %v4886 = vsel %vm377, %v4885, %v4881
    %v4887 = vlaneseq
    %v4888 = vshrl.u32 %v4887, 7
    %v4889 = vsub.s32 %v379, %v4888
    %v4890 = vrot.slane %v4852, %v4889
    %v4891 = vsel %vm384, %v4890, %v4886
    %v4892 = vlaneseq
    %v4893 = vshrl.u32 %v4892, 7
    %v4894 = vsub.s32 %v386, %v4893
    %v4895 = vrot.slane %v4855, %v4894
    %v4896 = vsel %vm391, %v4895, %v4891
    %v4897 = vlaneseq
    %v4898 = vshrl.u32 %v4897, 7
    %v4899 = vsub.s32 %v367, %v4898
    %v4900 = vrot.slane %v4858, %v4899
    %v4901 = vlaneseq
    %v4902 = vshrl.u32 %v4901, 7
    %v4903 = vsub.s32 %v372, %v4902
    %v4904 = vrot.slane %v4861, %v4903
    %v4905 = vsel %vm377, %v4904, %v4900
    %v4906 = vlaneseq
    %v4907 = vshrl.u32 %v4906, 7
    %v4908 = vsub.s32 %v379, %v4907
    %v4909 = vrot.slane %v4864, %v4908
    %v4910 = vsel %vm384, %v4909, %v4905
    %v4911 = vlaneseq
    %v4912 = vshrl.u32 %v4911, 7
    %v4913 = vsub.s32 %v386, %v4912
    %v4914 = vrot.slane %v4867, %v4913
    %v4915 = vsel %vm391, %v4914, %v4910
    %v4916 = vsel %vm412, %v4915, %v4896
    %v4918 = vadd.f32 %v4869, %v4916
    %4919 = vrot.lane.b32.xlu0 %v4038, 64
    %v4920 = vpop.permute.xlu0 %4919
    %v4922 = vsel %vm414, %v4918, %v4920
    %v4924 = vsel %vm238, %v4922, 0
    %4926 = vmatprep.subr.mxu0 0.0
    %4927 = vmatpush1.msra.mxu0 %v68
    %4928 = vmatprep.subr.mxu0 0.0
    %4929 = vmatpush1.msra.mxu0 %v69
    %4930 = vmatprep.subr.mxu0 0.0
    %4931 = vmatpush1.msra.mxu0 %v70
    %4932 = vmatprep.subr.mxu0 0.0
    %4933 = vmatpush1.msra.mxu0 %v71
    %4934 = vmatprep.subr.mxu0 0.0
    %4935 = vmatpush1.msra.mxu0 %v72
    %4936 = vmatprep.subr.mxu0 0.0
    %4937 = vmatpush1.msra.mxu0 %v73
    %4938 = vmatprep.subr.mxu0 0.0
    %4939 = vmatpush1.msra.mxu0 %v74
    %4940 = vmatprep.subr.mxu0 0.0
    %4941 = vmatpush1.msra.mxu0 %v75
    %4942 = vmatprep.subr.mxu0 0.0
    %4943 = vmatpush1.msra.mxu0 0.0
    %4944 = vmatprep.subr.mxu0 0.0
    %4945 = vmatpush1.msra.mxu0 0.0
    %4946 = vmatprep.subr.mxu0 0.0
    %4947 = vmatpush1.msra.mxu0 0.0
    %4948 = vmatprep.subr.mxu0 0.0
    %4949 = vmatpush1.msra.mxu0 0.0
    %4950 = vmatprep.subr.mxu0 0.0
    %4951 = vmatpush1.msra.mxu0 0.0
    %4952 = vmatprep.subr.mxu0 0.0
    %4953 = vmatpush1.msra.mxu0 0.0
    %4954 = vmatprep.subr.mxu0 0.0
    %4955 = vmatpush1.msra.mxu0 0.0
    %4956 = vmatprep.subr.mxu0 0.0
    %4957 = vmatpush1.msra.mxu0 0.0
    %4958 = vmatprep.subr.mxu0 0.0
    %4959 = vmatpush1.msra.mxu0 0.0
    %4960 = vmatprep.subr.mxu0 0.0
    %4961 = vmatpush1.msra.mxu0 0.0
    %4962 = vmatprep.subr.mxu0 0.0
    %4963 = vmatpush1.msra.mxu0 0.0
    %4964 = vmatprep.subr.mxu0 0.0
    %4965 = vmatpush1.msra.mxu0 0.0
    %4966 = vmatprep.subr.mxu0 0.0
    %4967 = vmatpush1.msra.mxu0 0.0
    %4968 = vmatprep.subr.mxu0 0.0
    %4969 = vmatpush1.msra.mxu0 0.0
    %4970 = vmatprep.subr.mxu0 0.0
    %4971 = vmatpush1.msra.mxu0 0.0
    %4972 = vmatprep.subr.mxu0 0.0
    %4973 = vmatpush1.msra.mxu0 0.0
    %4974 = vmatprep.subr.mxu0 0.0
    %4975 = vmatpush1.msra.mxu0 0.0
    %4976 = vmatprep.subr.mxu0 0.0
    %4977 = vmatpush1.msra.mxu0 0.0
    %4978 = vmatprep.subr.mxu0 0.0
    %4979 = vmatpush1.msra.mxu0 0.0
    %4980 = vmatprep.subr.mxu0 0.0
    %4981 = vmatpush1.msra.mxu0 0.0
    %4982 = vmatprep.subr.mxu0 0.0
    %4983 = vmatpush1.msra.mxu0 0.0
    %4984 = vmatprep.subr.mxu0 0.0
    %4985 = vmatpush1.msra.mxu0 0.0
    %4986 = vmatprep.subr.mxu0 0.0
    %4987 = vmatpush1.msra.mxu0 0.0
    %4988 = vmatprep.subr.mxu0 0.0
    %4989 = vmatpush1.msra.mxu0 0.0
    %4990 = vmatprep.mubr.f32.mxu0 0.0
    %4991 = vmatmul.mubr.f32.gmra.mrb[0].mxu0 %v4924
    %v4992 = vpop.f32.mrb[0].mxu0
    %v4993 = vadd.f32 %v1985, %v4992
    %v4994 = vpop.f32.mrb[0].mxu0
    %4995 = vdwg.mxu0
    %v4996 = vmul.f32 %v4993, 0.5
    %v4997 = vtanh.pop %v4996
    %v4998 = vmul.f32 %v4997, 0.5
    %v4999 = vadd.f32 %v4998, 0.5
    %v5000 = vtanh.pop %v4993
    %v5001 = vmul.f32 %v4999, %v4032
    %5003 = vrot.lane.b32.xlu0 %v5000, 64
    %v5004 = vpop.permute.xlu0 %5003
    %v5006 = vmul.f32 %v4999, %v5004
    %5008 = vrot.lane.b32.xlu0 %v5006, 32
    %v5009 = vpop.permute.xlu0 %5008
    %v5011 = vadd.f32 %v5001, %v5009
    %v5012 = vtanh.pop %v5011
    %5014 = vrot.lane.b32.xlu0 %v5012, 64
    %v5015 = vpop.permute.xlu0 %5014
    %v5017 = vmul.f32 %v4999, %v5015
    %5019 = vrot.lane.b32.xlu0 %v5017, 32
    %v5020 = vpop.permute.xlu0 %5019
    %v5021 = vsel %vm414, %v5020, 0
    %5023 = vmatprep.subr.mxu0 0.0
    %5024 = vmatpush1.msra.mxu0 %v52
    %5025 = vmatprep.subr.mxu0 0.0
    %5026 = vmatpush1.msra.mxu0 %v53
    %5027 = vmatprep.subr.mxu0 0.0
    %5028 = vmatpush1.msra.mxu0 %v54
    %5029 = vmatprep.subr.mxu0 0.0
    %5030 = vmatpush1.msra.mxu0 %v55
    %5031 = vmatprep.subr.mxu0 0.0
    %5032 = vmatpush1.msra.mxu0 0.0
    %5033 = vmatprep.subr.mxu0 0.0
    %5034 = vmatpush1.msra.mxu0 0.0
    %5035 = vmatprep.subr.mxu0 0.0
    %5036 = vmatpush1.msra.mxu0 0.0
    %5037 = vmatprep.subr.mxu0 0.0
    %5038 = vmatpush1.msra.mxu0 0.0
    %5039 = vmatprep.subr.mxu0 0.0
    %5040 = vmatpush1.msra.mxu0 0.0
    %5041 = vmatprep.subr.mxu0 0.0
    %5042 = vmatpush1.msra.mxu0 0.0
    %5043 = vmatprep.subr.mxu0 0.0
    %5044 = vmatpush1.msra.mxu0 0.0
    %5045 = vmatprep.subr.mxu0 0.0
    %5046 = vmatpush1.msra.mxu0 0.0
    %5047 = vmatprep.subr.mxu0 0.0
    %5048 = vmatpush1.msra.mxu0 0.0
    %5049 = vmatprep.subr.mxu0 0.0
    %5050 = vmatpush1.msra.mxu0 0.0
    %5051 = vmatprep.subr.mxu0 0.0
    %5052 = vmatpush1.msra.mxu0 0.0
    %5053 = vmatprep.subr.mxu0 0.0
    %5054 = vmatpush1.msra.mxu0 0.0
    %5055 = vmatprep.subr.mxu0 0.0
    %5056 = vmatpush1.msra.mxu0 0.0
    %5057 = vmatprep.subr.mxu0 0.0
    %5058 = vmatpush1.msra.mxu0 0.0
    %5059 = vmatprep.subr.mxu0 0.0
    %5060 = vmatpush1.msra.mxu0 0.0
    %5061 = vmatprep.subr.mxu0 0.0
    %5062 = vmatpush1.msra.mxu0 0.0
    %5063 = vmatprep.subr.mxu0 0.0
    %5064 = vmatpush1.msra.mxu0 0.0
    %5065 = vmatprep.subr.mxu0 0.0
    %5066 = vmatpush1.msra.mxu0 0.0
    %5067 = vmatprep.subr.mxu0 0.0
    %5068 = vmatpush1.msra.mxu0 0.0
    %5069 = vmatprep.subr.mxu0 0.0
    %5070 = vmatpush1.msra.mxu0 0.0
    %5071 = vmatprep.subr.mxu0 0.0
    %5072 = vmatpush1.msra.mxu0 0.0
    %5073 = vmatprep.subr.mxu0 0.0
    %5074 = vmatpush1.msra.mxu0 0.0
    %5075 = vmatprep.subr.mxu0 0.0
    %5076 = vmatpush1.msra.mxu0 0.0
    %5077 = vmatprep.subr.mxu0 0.0
    %5078 = vmatpush1.msra.mxu0 0.0
    %5079 = vmatprep.subr.mxu0 0.0
    %5080 = vmatpush1.msra.mxu0 0.0
    %5081 = vmatprep.subr.mxu0 0.0
    %5082 = vmatpush1.msra.mxu0 0.0
    %5083 = vmatprep.subr.mxu0 0.0
    %5084 = vmatpush1.msra.mxu0 0.0
    %5085 = vmatprep.subr.mxu0 0.0
    %5086 = vmatpush1.msra.mxu0 0.0
    %5087 = vmatprep.mubr.f32.mxu0 0.0
    %5088 = vmatmul.mubr.f32.gmra.mrb[0].mxu0 %v5021
    %v5089 = vpop.f32.mrb[0].mxu0
    %v5090 = vadd.f32 0.0, %v5089
    %v5091 = vpop.f32.mrb[0].mxu0
    %5092 = vdwg.mxu0
    %v5094 = vrot.slane %v5090, 6
    %v5096 = vrot.slane %v5090, 4
    %v5098 = vrot.slane %v5090, 2
    %v5100 = vsel %vm647, %v5090, %v5094
    %v5101 = vsel %vm649, %v5100, %v5096
    %v5102 = vsel %vm651, %v5101, %v5098
    %v5103 = vadd.f32 %v5102, %v312
    %v5104 = vadd.f32 %v5102, %v317
    %v5105 = vtanh.pop %v5103
    %v5106 = vtanh.pop %v5104
    %v5107 = vmul.f32 %v5105, %v660
    %v5108 = vmul.f32 %v5106, %v660
    %v5109 = vsel %vm414, %v5107, 0.0
    %5110 = vadd.xlane.f32.xlu0 %v5109
    %v5111 = vpop.xlane.xlu0 %5110
    %v5112 = vsel %vm414, %v5108, 0.0
    %5113 = vadd.xlane.f32.xlu0 %v5112
    %v5114 = vpop.xlane.xlu0 %5113
    %v5117 = vlaneseq
    %v5118 = vshrl.u32 %v5117, 7
    %v5119 = vsub.s32 %v367, %v5118
    %v5120 = vrot.slane %v5111, %v5119
    %v5121 = vlaneseq
    %v5122 = vshrl.u32 %v5121, 7
    %v5123 = vsub.s32 %v367, %v5122
    %v5124 = vrot.slane %v5114, %v5123
    %v5125 = vsel %vm412, %v5124, %v5120
    %v5127 = vsel %vm681, %v5125, -inf
    %5128 = vmax.xlane.f32.xlu0 %v5127
    %v5129 = vpop.xlane.xlu0 %5128
    %v5131 = vlaneseq
    %v5132 = vshrl.u32 %v5131, 7
    %v5133 = vsub.s32 0, %v5132
    %v5134 = vrot.slane %v5129, %v5133
    %v5135 = vlaneseq
    %v5136 = vshrl.u32 %v5135, 7
    %v5137 = vsub.s32 1, %v5136
    %v5138 = vrot.slane %v5129, %v5137
    %v5141 = vsub.f32 %v5111, %v5134
    %v5142 = vsub.f32 %v5114, %v5138
    %v5143 = vmul.f32 %v5141, 1.442695
    %v5144 = vpow.pop %v5143
    %v5145 = vmul.f32 %v5142, 1.442695
    %v5146 = vpow.pop %v5145
    %5149 = vset.pattern.permute.xlu0 0
    %5150 = vperm.xlu0 %5149, %v5144
    %v5151 = vpop.permute.xlu0 %5150
    %5152 = vset.pattern.permute.xlu0 0
    %5153 = vperm.xlu0 %5152, %v5146
    %v5154 = vpop.permute.xlu0 %5153
    %v5155 = vlaneseq
    %v5156 = vshrl.u32 %v5155, 7
    %v5157 = vsub.s32 %v367, %v5156
    %v5158 = vrot.slane %v5151, %v5157
    %v5159 = vlaneseq
    %v5160 = vshrl.u32 %v5159, 7
    %v5161 = vsub.s32 %v367, %v5160
    %v5162 = vrot.slane %v5154, %v5161
    %v5163 = vsel %vm412, %v5162, %v5158
    %v5165 = vsel %vm681, %v5163, 0.0
    %5166 = vadd.xlane.f32.xlu0 %v5165
    %v5167 = vpop.xlane.xlu0 %5166
    %v5169 = vlaneseq
    %v5170 = vshrl.u32 %v5169, 7
    %v5171 = vsub.s32 0, %v5170
    %v5172 = vrot.slane %v5167, %v5171
    %v5173 = vlaneseq
    %v5174 = vshrl.u32 %v5173, 7
    %v5175 = vsub.s32 1, %v5174
    %v5176 = vrot.slane %v5167, %v5175
    %v5179 = vrcp.pop %v5172
    %v5180 = vmul.f32 %v5144, %v5179
    %v5181 = vrcp.pop %v5176
    %v5182 = vmul.f32 %v5146, %v5181
    %v5183 = vmul.f32 %v5180, %v752
    %v5184 = vmul.f32 %v5180, %v759
    %v5185 = vmul.f32 %v5180, %v766
    %v5186 = vmul.f32 %v5180, %v773
    %v5187 = vmul.f32 %v5180, %v780
    %v5188 = vmul.f32 %v5180, %v787
    %v5189 = vmul.f32 %v5180, %v794
    %v5190 = vmul.f32 %v5180, %v801
    %v5191 = vmul.f32 %v5180, %v808
    %v5192 = vmul.f32 %v5180, %v815
    %v5193 = vmul.f32 %v5180, %v822
    %v5194 = vmul.f32 %v5180, %v829
    %v5195 = vmul.f32 %v5180, %v836
    %v5196 = vmul.f32 %v5180, %v843
    %v5197 = vmul.f32 %v5180, %v850
    %v5198 = vmul.f32 %v5180, %v857
    %v5199 = vmul.f32 %v5180, %v864
    %v5200 = vmul.f32 %v5180, %v871
    %v5201 = vmul.f32 %v5180, %v878
    %v5202 = vmul.f32 %v5180, %v885
    %v5203 = vmul.f32 %v5180, %v892
    %v5204 = vmul.f32 %v5180, %v899
    %v5205 = vmul.f32 %v5180, %v906
    %v5206 = vmul.f32 %v5180, %v913
    %v5207 = vmul.f32 %v5180, %v920
    %v5208 = vmul.f32 %v5180, %v927
    %v5209 = vmul.f32 %v5180, %v934
    %v5210 = vmul.f32 %v5180, %v941
    %v5211 = vmul.f32 %v5180, %v948
    %v5212 = vmul.f32 %v5180, %v955
    %v5213 = vmul.f32 %v5180, %v962
    %v5214 = vmul.f32 %v5180, %v969
    %v5215 = vmul.f32 %v5182, %v976
    %v5216 = vmul.f32 %v5182, %v983
    %v5217 = vmul.f32 %v5182, %v990
    %v5218 = vmul.f32 %v5182, %v997
    %v5219 = vmul.f32 %v5182, %v1004
    %v5220 = vmul.f32 %v5182, %v1011
    %v5221 = vmul.f32 %v5182, %v1018
    %v5222 = vmul.f32 %v5182, %v1025
    %v5223 = vmul.f32 %v5182, %v1032
    %v5224 = vmul.f32 %v5182, %v1039
    %v5225 = vmul.f32 %v5182, %v1046
    %v5226 = vmul.f32 %v5182, %v1053
    %v5227 = vmul.f32 %v5182, %v1060
    %v5228 = vmul.f32 %v5182, %v1067
    %v5229 = vmul.f32 %v5182, %v1074
    %v5230 = vmul.f32 %v5182, %v1081
    %v5231 = vmul.f32 %v5182, %v1088
    %v5232 = vmul.f32 %v5182, %v1095
    %v5233 = vmul.f32 %v5182, %v1102
    %v5234 = vmul.f32 %v5182, %v1109
    %v5235 = vmul.f32 %v5182, %v1116
    %v5236 = vmul.f32 %v5182, %v1123
    %v5237 = vmul.f32 %v5182, %v1130
    %v5238 = vmul.f32 %v5182, %v1137
    %v5239 = vmul.f32 %v5182, %v1144
    %v5240 = vmul.f32 %v5182, %v1151
    %v5241 = vmul.f32 %v5182, %v1158
    %v5242 = vmul.f32 %v5182, %v1165
    %v5243 = vmul.f32 %v5182, %v1172
    %v5244 = vmul.f32 %v5182, %v1179
    %v5245 = vmul.f32 %v5182, %v1186
    %v5246 = vmul.f32 %v5182, %v1193
    %5311 = vset.pattern.permute.xlu0 0
    %5312 = vperm.xlu0 %5311, %v5183
    %v5313 = vpop.permute.xlu0 %5312
    %5314 = vset.pattern.permute.xlu0 0
    %5315 = vperm.xlu0 %5314, %v5184
    %v5316 = vpop.permute.xlu0 %5315
    %5317 = vset.pattern.permute.xlu0 0
    %5318 = vperm.xlu0 %5317, %v5185
    %v5319 = vpop.permute.xlu0 %5318
    %5320 = vset.pattern.permute.xlu0 0
    %5321 = vperm.xlu0 %5320, %v5186
    %v5322 = vpop.permute.xlu0 %5321
    %5323 = vset.pattern.permute.xlu0 0
    %5324 = vperm.xlu0 %5323, %v5187
    %v5325 = vpop.permute.xlu0 %5324
    %5326 = vset.pattern.permute.xlu0 0
    %5327 = vperm.xlu0 %5326, %v5188
    %v5328 = vpop.permute.xlu0 %5327
    %5329 = vset.pattern.permute.xlu0 0
    %5330 = vperm.xlu0 %5329, %v5189
    %v5331 = vpop.permute.xlu0 %5330
    %5332 = vset.pattern.permute.xlu0 0
    %5333 = vperm.xlu0 %5332, %v5190
    %v5334 = vpop.permute.xlu0 %5333
    %5335 = vset.pattern.permute.xlu0 0
    %5336 = vperm.xlu0 %5335, %v5191
    %v5337 = vpop.permute.xlu0 %5336
    %5338 = vset.pattern.permute.xlu0 0
    %5339 = vperm.xlu0 %5338, %v5192
    %v5340 = vpop.permute.xlu0 %5339
    %5341 = vset.pattern.permute.xlu0 0
    %5342 = vperm.xlu0 %5341, %v5193
    %v5343 = vpop.permute.xlu0 %5342
    %5344 = vset.pattern.permute.xlu0 0
    %5345 = vperm.xlu0 %5344, %v5194
    %v5346 = vpop.permute.xlu0 %5345
    %5347 = vset.pattern.permute.xlu0 0
    %5348 = vperm.xlu0 %5347, %v5195
    %v5349 = vpop.permute.xlu0 %5348
    %5350 = vset.pattern.permute.xlu0 0
    %5351 = vperm.xlu0 %5350, %v5196
    %v5352 = vpop.permute.xlu0 %5351
    %5353 = vset.pattern.permute.xlu0 0
    %5354 = vperm.xlu0 %5353, %v5197
    %v5355 = vpop.permute.xlu0 %5354
    %5356 = vset.pattern.permute.xlu0 0
    %5357 = vperm.xlu0 %5356, %v5198
    %v5358 = vpop.permute.xlu0 %5357
    %5359 = vset.pattern.permute.xlu0 0
    %5360 = vperm.xlu0 %5359, %v5199
    %v5361 = vpop.permute.xlu0 %5360
    %5362 = vset.pattern.permute.xlu0 0
    %5363 = vperm.xlu0 %5362, %v5200
    %v5364 = vpop.permute.xlu0 %5363
    %5365 = vset.pattern.permute.xlu0 0
    %5366 = vperm.xlu0 %5365, %v5201
    %v5367 = vpop.permute.xlu0 %5366
    %5368 = vset.pattern.permute.xlu0 0
    %5369 = vperm.xlu0 %5368, %v5202
    %v5370 = vpop.permute.xlu0 %5369
    %5371 = vset.pattern.permute.xlu0 0
    %5372 = vperm.xlu0 %5371, %v5203
    %v5373 = vpop.permute.xlu0 %5372
    %5374 = vset.pattern.permute.xlu0 0
    %5375 = vperm.xlu0 %5374, %v5204
    %v5376 = vpop.permute.xlu0 %5375
    %5377 = vset.pattern.permute.xlu0 0
    %5378 = vperm.xlu0 %5377, %v5205
    %v5379 = vpop.permute.xlu0 %5378
    %5380 = vset.pattern.permute.xlu0 0
    %5381 = vperm.xlu0 %5380, %v5206
    %v5382 = vpop.permute.xlu0 %5381
    %5383 = vset.pattern.permute.xlu0 0
    %5384 = vperm.xlu0 %5383, %v5207
    %v5385 = vpop.permute.xlu0 %5384
    %5386 = vset.pattern.permute.xlu0 0
    %5387 = vperm.xlu0 %5386, %v5208
    %v5388 = vpop.permute.xlu0 %5387
    %5389 = vset.pattern.permute.xlu0 0
    %5390 = vperm.xlu0 %5389, %v5209
    %v5391 = vpop.permute.xlu0 %5390
    %5392 = vset.pattern.permute.xlu0 0
    %5393 = vperm.xlu0 %5392, %v5210
    %v5394 = vpop.permute.xlu0 %5393
    %5395 = vset.pattern.permute.xlu0 0
    %5396 = vperm.xlu0 %5395, %v5211
    %v5397 = vpop.permute.xlu0 %5396
    %5398 = vset.pattern.permute.xlu0 0
    %5399 = vperm.xlu0 %5398, %v5212
    %v5400 = vpop.permute.xlu0 %5399
    %5401 = vset.pattern.permute.xlu0 0
    %5402 = vperm.xlu0 %5401, %v5213
    %v5403 = vpop.permute.xlu0 %5402
    %5404 = vset.pattern.permute.xlu0 0
    %5405 = vperm.xlu0 %5404, %v5214
    %v5406 = vpop.permute.xlu0 %5405
    %5407 = vset.pattern.permute.xlu0 0
    %5408 = vperm.xlu0 %5407, %v5215
    %v5409 = vpop.permute.xlu0 %5408
    %5410 = vset.pattern.permute.xlu0 0
    %5411 = vperm.xlu0 %5410, %v5216
    %v5412 = vpop.permute.xlu0 %5411
    %5413 = vset.pattern.permute.xlu0 0
    %5414 = vperm.xlu0 %5413, %v5217
    %v5415 = vpop.permute.xlu0 %5414
    %5416 = vset.pattern.permute.xlu0 0
    %5417 = vperm.xlu0 %5416, %v5218
    %v5418 = vpop.permute.xlu0 %5417
    %5419 = vset.pattern.permute.xlu0 0
    %5420 = vperm.xlu0 %5419, %v5219
    %v5421 = vpop.permute.xlu0 %5420
    %5422 = vset.pattern.permute.xlu0 0
    %5423 = vperm.xlu0 %5422, %v5220
    %v5424 = vpop.permute.xlu0 %5423
    %5425 = vset.pattern.permute.xlu0 0
    %5426 = vperm.xlu0 %5425, %v5221
    %v5427 = vpop.permute.xlu0 %5426
    %5428 = vset.pattern.permute.xlu0 0
    %5429 = vperm.xlu0 %5428, %v5222
    %v5430 = vpop.permute.xlu0 %5429
    %5431 = vset.pattern.permute.xlu0 0
    %5432 = vperm.xlu0 %5431, %v5223
    %v5433 = vpop.permute.xlu0 %5432
    %5434 = vset.pattern.permute.xlu0 0
    %5435 = vperm.xlu0 %5434, %v5224
    %v5436 = vpop.permute.xlu0 %5435
    %5437 = vset.pattern.permute.xlu0 0
    %5438 = vperm.xlu0 %5437, %v5225
    %v5439 = vpop.permute.xlu0 %5438
    %5440 = vset.pattern.permute.xlu0 0
    %5441 = vperm.xlu0 %5440, %v5226
    %v5442 = vpop.permute.xlu0 %5441
    %5443 = vset.pattern.permute.xlu0 0
    %5444 = vperm.xlu0 %5443, %v5227
    %v5445 = vpop.permute.xlu0 %5444
    %5446 = vset.pattern.permute.xlu0 0
    %5447 = vperm.xlu0 %5446, %v5228
    %v5448 = vpop.permute.xlu0 %5447
    %5449 = vset.pattern.permute.xlu0 0
    %5450 = vperm.xlu0 %5449, %v5229
    %v5451 = vpop.permute.xlu0 %5450
    %5452 = vset.pattern.permute.xlu0 0
    %5453 = vperm.xlu0 %5452, %v5230
    %v5454 = vpop.permute.xlu0 %5453
    %5455 = vset.pattern.permute.xlu0 0
    %5456 = vperm.xlu0 %5455, %v5231
    %v5457 = vpop.permute.xlu0 %5456
    %5458 = vset.pattern.permute.xlu0 0
    %5459 = vperm.xlu0 %5458, %v5232
    %v5460 = vpop.permute.xlu0 %5459
    %5461 = vset.pattern.permute.xlu0 0
    %5462 = vperm.xlu0 %5461, %v5233
    %v5463 = vpop.permute.xlu0 %5462
    %5464 = vset.pattern.permute.xlu0 0
    %5465 = vperm.xlu0 %5464, %v5234
    %v5466 = vpop.permute.xlu0 %5465
    %5467 = vset.pattern.permute.xlu0 0
    %5468 = vperm.xlu0 %5467, %v5235
    %v5469 = vpop.permute.xlu0 %5468
    %5470 = vset.pattern.permute.xlu0 0
    %5471 = vperm.xlu0 %5470, %v5236
    %v5472 = vpop.permute.xlu0 %5471
    %5473 = vset.pattern.permute.xlu0 0
    %5474 = vperm.xlu0 %5473, %v5237
    %v5475 = vpop.permute.xlu0 %5474
    %5476 = vset.pattern.permute.xlu0 0
    %5477 = vperm.xlu0 %5476, %v5238
    %v5478 = vpop.permute.xlu0 %5477
    %5479 = vset.pattern.permute.xlu0 0
    %5480 = vperm.xlu0 %5479, %v5239
    %v5481 = vpop.permute.xlu0 %5480
    %5482 = vset.pattern.permute.xlu0 0
    %5483 = vperm.xlu0 %5482, %v5240
    %v5484 = vpop.permute.xlu0 %5483
    %5485 = vset.pattern.permute.xlu0 0
    %5486 = vperm.xlu0 %5485, %v5241
    %v5487 = vpop.permute.xlu0 %5486
    %5488 = vset.pattern.permute.xlu0 0
    %5489 = vperm.xlu0 %5488, %v5242
    %v5490 = vpop.permute.xlu0 %5489
    %5491 = vset.pattern.permute.xlu0 0
    %5492 = vperm.xlu0 %5491, %v5243
    %v5493 = vpop.permute.xlu0 %5492
    %5494 = vset.pattern.permute.xlu0 0
    %5495 = vperm.xlu0 %5494, %v5244
    %v5496 = vpop.permute.xlu0 %5495
    %5497 = vset.pattern.permute.xlu0 0
    %5498 = vperm.xlu0 %5497, %v5245
    %v5499 = vpop.permute.xlu0 %5498
    %5500 = vset.pattern.permute.xlu0 0
    %5501 = vperm.xlu0 %5500, %v5246
    %v5502 = vpop.permute.xlu0 %5501
    %v5503 = vlaneseq
    %v5504 = vshrl.u32 %v5503, 7
    %v5505 = vsub.s32 %v367, %v5504
    %v5506 = vrot.slane %v5313, %v5505
    %v5507 = vlaneseq
    %v5508 = vshrl.u32 %v5507, 7
    %v5509 = vsub.s32 %v367, %v5508
    %v5510 = vrot.slane %v5316, %v5509
    %v5511 = vlaneseq
    %v5512 = vshrl.u32 %v5511, 7
    %v5513 = vsub.s32 %v367, %v5512
    %v5514 = vrot.slane %v5319, %v5513
    %v5515 = vlaneseq
    %v5516 = vshrl.u32 %v5515, 7
    %v5517 = vsub.s32 %v367, %v5516
    %v5518 = vrot.slane %v5322, %v5517
    %v5519 = vlaneseq
    %v5520 = vshrl.u32 %v5519, 7
    %v5521 = vsub.s32 %v367, %v5520
    %v5522 = vrot.slane %v5325, %v5521
    %v5523 = vlaneseq
    %v5524 = vshrl.u32 %v5523, 7
    %v5525 = vsub.s32 %v367, %v5524
    %v5526 = vrot.slane %v5328, %v5525
    %v5527 = vlaneseq
    %v5528 = vshrl.u32 %v5527, 7
    %v5529 = vsub.s32 %v367, %v5528
    %v5530 = vrot.slane %v5331, %v5529
    %v5531 = vlaneseq
    %v5532 = vshrl.u32 %v5531, 7
    %v5533 = vsub.s32 %v367, %v5532
    %v5534 = vrot.slane %v5334, %v5533
    %v5535 = vlaneseq
    %v5536 = vshrl.u32 %v5535, 7
    %v5537 = vsub.s32 %v367, %v5536
    %v5538 = vrot.slane %v5337, %v5537
    %v5539 = vlaneseq
    %v5540 = vshrl.u32 %v5539, 7
    %v5541 = vsub.s32 %v367, %v5540
    %v5542 = vrot.slane %v5340, %v5541
    %v5543 = vlaneseq
    %v5544 = vshrl.u32 %v5543, 7
    %v5545 = vsub.s32 %v367, %v5544
    %v5546 = vrot.slane %v5343, %v5545
    %v5547 = vlaneseq
    %v5548 = vshrl.u32 %v5547, 7
    %v5549 = vsub.s32 %v367, %v5548
    %v5550 = vrot.slane %v5346, %v5549
    %v5551 = vlaneseq
    %v5552 = vshrl.u32 %v5551, 7
    %v5553 = vsub.s32 %v367, %v5552
    %v5554 = vrot.slane %v5349, %v5553
    %v5555 = vlaneseq
    %v5556 = vshrl.u32 %v5555, 7
    %v5557 = vsub.s32 %v367, %v5556
    %v5558 = vrot.slane %v5352, %v5557
    %v5559 = vlaneseq
    %v5560 = vshrl.u32 %v5559, 7
    %v5561 = vsub.s32 %v367, %v5560
    %v5562 = vrot.slane %v5355, %v5561
    %v5563 = vlaneseq
    %v5564 = vshrl.u32 %v5563, 7
    %v5565 = vsub.s32 %v367, %v5564
    %v5566 = vrot.slane %v5358, %v5565
    %v5567 = vlaneseq
    %v5568 = vshrl.u32 %v5567, 7
    %v5569 = vsub.s32 %v367, %v5568
    %v5570 = vrot.slane %v5361, %v5569
    %v5571 = vlaneseq
    %v5572 = vshrl.u32 %v5571, 7
    %v5573 = vsub.s32 %v367, %v5572
    %v5574 = vrot.slane %v5364, %v5573
    %v5575 = vlaneseq
    %v5576 = vshrl.u32 %v5575, 7
    %v5577 = vsub.s32 %v367, %v5576
    %v5578 = vrot.slane %v5367, %v5577
    %v5579 = vlaneseq
    %v5580 = vshrl.u32 %v5579, 7
    %v5581 = vsub.s32 %v367, %v5580
    %v5582 = vrot.slane %v5370, %v5581
    %v5583 = vlaneseq
    %v5584 = vshrl.u32 %v5583, 7
    %v5585 = vsub.s32 %v367, %v5584
    %v5586 = vrot.slane %v5373, %v5585
    %v5587 = vlaneseq
    %v5588 = vshrl.u32 %v5587, 7
    %v5589 = vsub.s32 %v367, %v5588
    %v5590 = vrot.slane %v5376, %v5589
    %v5591 = vlaneseq
    %v5592 = vshrl.u32 %v5591, 7
    %v5593 = vsub.s32 %v367, %v5592
    %v5594 = vrot.slane %v5379, %v5593
    %v5595 = vlaneseq
    %v5596 = vshrl.u32 %v5595, 7
    %v5597 = vsub.s32 %v367, %v5596
    %v5598 = vrot.slane %v5382, %v5597
    %v5599 = vlaneseq
    %v5600 = vshrl.u32 %v5599, 7
    %v5601 = vsub.s32 %v367, %v5600
    %v5602 = vrot.slane %v5385, %v5601
    %v5603 = vlaneseq
    %v5604 = vshrl.u32 %v5603, 7
    %v5605 = vsub.s32 %v367, %v5604
    %v5606 = vrot.slane %v5388, %v5605
    %v5607 = vlaneseq
    %v5608 = vshrl.u32 %v5607, 7
    %v5609 = vsub.s32 %v367, %v5608
    %v5610 = vrot.slane %v5391, %v5609
    %v5611 = vlaneseq
    %v5612 = vshrl.u32 %v5611, 7
    %v5613 = vsub.s32 %v367, %v5612
    %v5614 = vrot.slane %v5394, %v5613
    %v5615 = vlaneseq
    %v5616 = vshrl.u32 %v5615, 7
    %v5617 = vsub.s32 %v367, %v5616
    %v5618 = vrot.slane %v5397, %v5617
    %v5619 = vlaneseq
    %v5620 = vshrl.u32 %v5619, 7
    %v5621 = vsub.s32 %v367, %v5620
    %v5622 = vrot.slane %v5400, %v5621
    %v5623 = vlaneseq
    %v5624 = vshrl.u32 %v5623, 7
    %v5625 = vsub.s32 %v367, %v5624
    %v5626 = vrot.slane %v5403, %v5625
    %v5627 = vlaneseq
    %v5628 = vshrl.u32 %v5627, 7
    %v5629 = vsub.s32 %v367, %v5628
    %v5630 = vrot.slane %v5406, %v5629
    %v5631 = vlaneseq
    %v5632 = vshrl.u32 %v5631, 7
    %v5633 = vsub.s32 %v367, %v5632
    %v5634 = vrot.slane %v5409, %v5633
    %v5635 = vlaneseq
    %v5636 = vshrl.u32 %v5635, 7
    %v5637 = vsub.s32 %v367, %v5636
    %v5638 = vrot.slane %v5412, %v5637
    %v5639 = vlaneseq
    %v5640 = vshrl.u32 %v5639, 7
    %v5641 = vsub.s32 %v367, %v5640
    %v5642 = vrot.slane %v5415, %v5641
    %v5643 = vlaneseq
    %v5644 = vshrl.u32 %v5643, 7
    %v5645 = vsub.s32 %v367, %v5644
    %v5646 = vrot.slane %v5418, %v5645
    %v5647 = vlaneseq
    %v5648 = vshrl.u32 %v5647, 7
    %v5649 = vsub.s32 %v367, %v5648
    %v5650 = vrot.slane %v5421, %v5649
    %v5651 = vlaneseq
    %v5652 = vshrl.u32 %v5651, 7
    %v5653 = vsub.s32 %v367, %v5652
    %v5654 = vrot.slane %v5424, %v5653
    %v5655 = vlaneseq
    %v5656 = vshrl.u32 %v5655, 7
    %v5657 = vsub.s32 %v367, %v5656
    %v5658 = vrot.slane %v5427, %v5657
    %v5659 = vlaneseq
    %v5660 = vshrl.u32 %v5659, 7
    %v5661 = vsub.s32 %v367, %v5660
    %v5662 = vrot.slane %v5430, %v5661
    %v5663 = vlaneseq
    %v5664 = vshrl.u32 %v5663, 7
    %v5665 = vsub.s32 %v367, %v5664
    %v5666 = vrot.slane %v5433, %v5665
    %v5667 = vlaneseq
    %v5668 = vshrl.u32 %v5667, 7
    %v5669 = vsub.s32 %v367, %v5668
    %v5670 = vrot.slane %v5436, %v5669
    %v5671 = vlaneseq
    %v5672 = vshrl.u32 %v5671, 7
    %v5673 = vsub.s32 %v367, %v5672
    %v5674 = vrot.slane %v5439, %v5673
    %v5675 = vlaneseq
    %v5676 = vshrl.u32 %v5675, 7
    %v5677 = vsub.s32 %v367, %v5676
    %v5678 = vrot.slane %v5442, %v5677
    %v5679 = vlaneseq
    %v5680 = vshrl.u32 %v5679, 7
    %v5681 = vsub.s32 %v367, %v5680
    %v5682 = vrot.slane %v5445, %v5681
    %v5683 = vlaneseq
    %v5684 = vshrl.u32 %v5683, 7
    %v5685 = vsub.s32 %v367, %v5684
    %v5686 = vrot.slane %v5448, %v5685
    %v5687 = vlaneseq
    %v5688 = vshrl.u32 %v5687, 7
    %v5689 = vsub.s32 %v367, %v5688
    %v5690 = vrot.slane %v5451, %v5689
    %v5691 = vlaneseq
    %v5692 = vshrl.u32 %v5691, 7
    %v5693 = vsub.s32 %v367, %v5692
    %v5694 = vrot.slane %v5454, %v5693
    %v5695 = vlaneseq
    %v5696 = vshrl.u32 %v5695, 7
    %v5697 = vsub.s32 %v367, %v5696
    %v5698 = vrot.slane %v5457, %v5697
    %v5699 = vlaneseq
    %v5700 = vshrl.u32 %v5699, 7
    %v5701 = vsub.s32 %v367, %v5700
    %v5702 = vrot.slane %v5460, %v5701
    %v5703 = vlaneseq
    %v5704 = vshrl.u32 %v5703, 7
    %v5705 = vsub.s32 %v367, %v5704
    %v5706 = vrot.slane %v5463, %v5705
    %v5707 = vlaneseq
    %v5708 = vshrl.u32 %v5707, 7
    %v5709 = vsub.s32 %v367, %v5708
    %v5710 = vrot.slane %v5466, %v5709
    %v5711 = vlaneseq
    %v5712 = vshrl.u32 %v5711, 7
    %v5713 = vsub.s32 %v367, %v5712
    %v5714 = vrot.slane %v5469, %v5713
    %v5715 = vlaneseq
    %v5716 = vshrl.u32 %v5715, 7
    %v5717 = vsub.s32 %v367, %v5716
    %v5718 = vrot.slane %v5472, %v5717
    %v5719 = vlaneseq
    %v5720 = vshrl.u32 %v5719, 7
    %v5721 = vsub.s32 %v367, %v5720
    %v5722 = vrot.slane %v5475, %v5721
    %v5723 = vlaneseq
    %v5724 = vshrl.u32 %v5723, 7
    %v5725 = vsub.s32 %v367, %v5724
    %v5726 = vrot.slane %v5478, %v5725
    %v5727 = vlaneseq
    %v5728 = vshrl.u32 %v5727, 7
    %v5729 = vsub.s32 %v367, %v5728
    %v5730 = vrot.slane %v5481, %v5729
    %v5731 = vlaneseq
    %v5732 = vshrl.u32 %v5731, 7
    %v5733 = vsub.s32 %v367, %v5732
    %v5734 = vrot.slane %v5484, %v5733
    %v5735 = vlaneseq
    %v5736 = vshrl.u32 %v5735, 7
    %v5737 = vsub.s32 %v367, %v5736
    %v5738 = vrot.slane %v5487, %v5737
    %v5739 = vlaneseq
    %v5740 = vshrl.u32 %v5739, 7
    %v5741 = vsub.s32 %v367, %v5740
    %v5742 = vrot.slane %v5490, %v5741
    %v5743 = vlaneseq
    %v5744 = vshrl.u32 %v5743, 7
    %v5745 = vsub.s32 %v367, %v5744
    %v5746 = vrot.slane %v5493, %v5745
    %v5747 = vlaneseq
    %v5748 = vshrl.u32 %v5747, 7
    %v5749 = vsub.s32 %v367, %v5748
    %v5750 = vrot.slane %v5496, %v5749
    %v5751 = vlaneseq
    %v5752 = vshrl.u32 %v5751, 7
    %v5753 = vsub.s32 %v367, %v5752
    %v5754 = vrot.slane %v5499, %v5753
    %v5755 = vlaneseq
    %v5756 = vshrl.u32 %v5755, 7
    %v5757 = vsub.s32 %v367, %v5756
    %v5758 = vrot.slane %v5502, %v5757
    %v5759 = vsel %vm412, %v5510, %v5506
    %v5760 = vsel %vm1835, %v5514, %v5759
    %v5761 = vsel %vm1837, %v5518, %v5760
    %v5762 = vsel %vm1839, %v5522, %v5761
    %v5763 = vsel %vm1841, %v5526, %v5762
    %v5764 = vsel %vm1843, %v5530, %v5763
    %v5765 = vsel %vm1845, %v5534, %v5764
    %v5766 = vsel %vm412, %v5542, %v5538
    %v5767 = vsel %vm1835, %v5546, %v5766
    %v5768 = vsel %vm1837, %v5550, %v5767
    %v5769 = vsel %vm1839, %v5554, %v5768
    %v5770 = vsel %vm1841, %v5558, %v5769
    %v5771 = vsel %vm1843, %v5562, %v5770
    %v5772 = vsel %vm1845, %v5566, %v5771
    %v5773 = vsel %vm412, %v5574, %v5570
    %v5774 = vsel %vm1835, %v5578, %v5773
    %v5775 = vsel %vm1837, %v5582, %v5774
    %v5776 = vsel %vm1839, %v5586, %v5775
    %v5777 = vsel %vm1841, %v5590, %v5776
    %v5778 = vsel %vm1843, %v5594, %v5777
    %v5779 = vsel %vm1845, %v5598, %v5778
    %v5780 = vsel %vm412, %v5606, %v5602
    %v5781 = vsel %vm1835, %v5610, %v5780
    %v5782 = vsel %vm1837, %v5614, %v5781
    %v5783 = vsel %vm1839, %v5618, %v5782
    %v5784 = vsel %vm1841, %v5622, %v5783
    %v5785 = vsel %vm1843, %v5626, %v5784
    %v5786 = vsel %vm1845, %v5630, %v5785
    %v5787 = vsel %vm412, %v5638, %v5634
    %v5788 = vsel %vm1835, %v5642, %v5787
    %v5789 = vsel %vm1837, %v5646, %v5788
    %v5790 = vsel %vm1839, %v5650, %v5789
    %v5791 = vsel %vm1841, %v5654, %v5790
    %v5792 = vsel %vm1843, %v5658, %v5791
    %v5793 = vsel %vm1845, %v5662, %v5792
    %v5794 = vsel %vm412, %v5670, %v5666
    %v5795 = vsel %vm1835, %v5674, %v5794
    %v5796 = vsel %vm1837, %v5678, %v5795
    %v5797 = vsel %vm1839, %v5682, %v5796
    %v5798 = vsel %vm1841, %v5686, %v5797
    %v5799 = vsel %vm1843, %v5690, %v5798
    %v5800 = vsel %vm1845, %v5694, %v5799
    %v5801 = vsel %vm412, %v5702, %v5698
    %v5802 = vsel %vm1835, %v5706, %v5801
    %v5803 = vsel %vm1837, %v5710, %v5802
    %v5804 = vsel %vm1839, %v5714, %v5803
    %v5805 = vsel %vm1841, %v5718, %v5804
    %v5806 = vsel %vm1843, %v5722, %v5805
    %v5807 = vsel %vm1845, %v5726, %v5806
    %v5808 = vsel %vm412, %v5734, %v5730
    %v5809 = vsel %vm1835, %v5738, %v5808
    %v5810 = vsel %vm1837, %v5742, %v5809
    %v5811 = vsel %vm1839, %v5746, %v5810
    %v5812 = vsel %vm1841, %v5750, %v5811
    %v5813 = vsel %vm1843, %v5754, %v5812
    %v5814 = vsel %vm1845, %v5758, %v5813
    %v5823 = vsel %vm320, %v5765, 0.0
    %5824 = vadd.xlane.f32.xlu0 %v5823
    %v5825 = vpop.xlane.xlu0 %5824
    %v5826 = vsel %vm320, %v5772, 0.0
    %5827 = vadd.xlane.f32.xlu0 %v5826
    %v5828 = vpop.xlane.xlu0 %5827
    %v5829 = vsel %vm320, %v5779, 0.0
    %5830 = vadd.xlane.f32.xlu0 %v5829
    %v5831 = vpop.xlane.xlu0 %5830
    %v5832 = vsel %vm320, %v5786, 0.0
    %5833 = vadd.xlane.f32.xlu0 %v5832
    %v5834 = vpop.xlane.xlu0 %5833
    %v5835 = vsel %vm320, %v5793, 0.0
    %5836 = vadd.xlane.f32.xlu0 %v5835
    %v5837 = vpop.xlane.xlu0 %5836
    %v5838 = vsel %vm320, %v5800, 0.0
    %5839 = vadd.xlane.f32.xlu0 %v5838
    %v5840 = vpop.xlane.xlu0 %5839
    %v5841 = vsel %vm320, %v5807, 0.0
    %5842 = vadd.xlane.f32.xlu0 %v5841
    %v5843 = vpop.xlane.xlu0 %5842
    %v5844 = vsel %vm320, %v5814, 0.0
    %5845 = vadd.xlane.f32.xlu0 %v5844
    %v5846 = vpop.xlane.xlu0 %5845
    %s5847 = scalar_lea.vmem %s1, 8
    %v5848 = vld [vmem:[%s5847] sm:$0x3]
    %v5857 = vlaneseq
    %v5858 = vshrl.u32 %v5857, 7
    %v5859 = vsub.s32 %v367, %v5858
    %v5860 = vrot.slane %v5825, %v5859
    %v5861 = vlaneseq
    %v5862 = vshrl.u32 %v5861, 7
    %v5863 = vsub.s32 %v372, %v5862
    %v5864 = vrot.slane %v5828, %v5863
    %v5865 = vsel %vm377, %v5864, %v5860
    %v5866 = vlaneseq
    %v5867 = vshrl.u32 %v5866, 7
    %v5868 = vsub.s32 %v379, %v5867
    %v5869 = vrot.slane %v5831, %v5868
    %v5870 = vsel %vm384, %v5869, %v5865
    %v5871 = vlaneseq
    %v5872 = vshrl.u32 %v5871, 7
    %v5873 = vsub.s32 %v386, %v5872
    %v5874 = vrot.slane %v5834, %v5873
    %v5875 = vsel %vm391, %v5874, %v5870
    %v5876 = vlaneseq
    %v5877 = vshrl.u32 %v5876, 7
    %v5878 = vsub.s32 %v367, %v5877
    %v5879 = vrot.slane %v5837, %v5878
    %v5880 = vlaneseq
    %v5881 = vshrl.u32 %v5880, 7
    %v5882 = vsub.s32 %v372, %v5881
    %v5883 = vrot.slane %v5840, %v5882
    %v5884 = vsel %vm377, %v5883, %v5879
    %v5885 = vlaneseq
    %v5886 = vshrl.u32 %v5885, 7
    %v5887 = vsub.s32 %v379, %v5886
    %v5888 = vrot.slane %v5843, %v5887
    %v5889 = vsel %vm384, %v5888, %v5884
    %v5890 = vlaneseq
    %v5891 = vshrl.u32 %v5890, 7
    %v5892 = vsub.s32 %v386, %v5891
    %v5893 = vrot.slane %v5846, %v5892
    %v5894 = vsel %vm391, %v5893, %v5889
    %v5895 = vsel %vm412, %v5894, %v5875
    %v5897 = vadd.f32 %v5848, %v5895
    %5898 = vrot.lane.b32.xlu0 %v5017, 64
    %v5899 = vpop.permute.xlu0 %5898
    %v5901 = vsel %vm414, %v5897, %v5899
    %v5903 = vsel %vm238, %v5901, 0
    %5905 = vmatprep.subr.mxu0 0.0
    %5906 = vmatpush1.msra.mxu0 %v68
    %5907 = vmatprep.subr.mxu0 0.0
    %5908 = vmatpush1.msra.mxu0 %v69
    %5909 = vmatprep.subr.mxu0 0.0
    %5910 = vmatpush1.msra.mxu0 %v70
    %5911 = vmatprep.subr.mxu0 0.0
    %5912 = vmatpush1.msra.mxu0 %v71
    %5913 = vmatprep.subr.mxu0 0.0
    %5914 = vmatpush1.msra.mxu0 %v72
    %5915 = vmatprep.subr.mxu0 0.0
    %5916 = vmatpush1.msra.mxu0 %v73
    %5917 = vmatprep.subr.mxu0 0.0
    %5918 = vmatpush1.msra.mxu0 %v74
    %5919 = vmatprep.subr.mxu0 0.0
    %5920 = vmatpush1.msra.mxu0 %v75
    %5921 = vmatprep.subr.mxu0 0.0
    %5922 = vmatpush1.msra.mxu0 0.0
    %5923 = vmatprep.subr.mxu0 0.0
    %5924 = vmatpush1.msra.mxu0 0.0
    %5925 = vmatprep.subr.mxu0 0.0
    %5926 = vmatpush1.msra.mxu0 0.0
    %5927 = vmatprep.subr.mxu0 0.0
    %5928 = vmatpush1.msra.mxu0 0.0
    %5929 = vmatprep.subr.mxu0 0.0
    %5930 = vmatpush1.msra.mxu0 0.0
    %5931 = vmatprep.subr.mxu0 0.0
    %5932 = vmatpush1.msra.mxu0 0.0
    %5933 = vmatprep.subr.mxu0 0.0
    %5934 = vmatpush1.msra.mxu0 0.0
    %5935 = vmatprep.subr.mxu0 0.0
    %5936 = vmatpush1.msra.mxu0 0.0
    %5937 = vmatprep.subr.mxu0 0.0
    %5938 = vmatpush1.msra.mxu0 0.0
    %5939 = vmatprep.subr.mxu0 0.0
    %5940 = vmatpush1.msra.mxu0 0.0
    %5941 = vmatprep.subr.mxu0 0.0
    %5942 = vmatpush1.msra.mxu0 0.0
    %5943 = vmatprep.subr.mxu0 0.0
    %5944 = vmatpush1.msra.mxu0 0.0
    %5945 = vmatprep.subr.mxu0 0.0
    %5946 = vmatpush1.msra.mxu0 0.0
    %5947 = vmatprep.subr.mxu0 0.0
    %5948 = vmatpush1.msra.mxu0 0.0
    %5949 = vmatprep.subr.mxu0 0.0
    %5950 = vmatpush1.msra.mxu0 0.0
    %5951 = vmatprep.subr.mxu0 0.0
    %5952 = vmatpush1.msra.mxu0 0.0
    %5953 = vmatprep.subr.mxu0 0.0
    %5954 = vmatpush1.msra.mxu0 0.0
    %5955 = vmatprep.subr.mxu0 0.0
    %5956 = vmatpush1.msra.mxu0 0.0
    %5957 = vmatprep.subr.mxu0 0.0
    %5958 = vmatpush1.msra.mxu0 0.0
    %5959 = vmatprep.subr.mxu0 0.0
    %5960 = vmatpush1.msra.mxu0 0.0
    %5961 = vmatprep.subr.mxu0 0.0
    %5962 = vmatpush1.msra.mxu0 0.0
    %5963 = vmatprep.subr.mxu0 0.0
    %5964 = vmatpush1.msra.mxu0 0.0
    %5965 = vmatprep.subr.mxu0 0.0
    %5966 = vmatpush1.msra.mxu0 0.0
    %5967 = vmatprep.subr.mxu0 0.0
    %5968 = vmatpush1.msra.mxu0 0.0
    %5969 = vmatprep.mubr.f32.mxu0 0.0
    %5970 = vmatmul.mubr.f32.gmra.mrb[0].mxu0 %v5903
    %v5971 = vpop.f32.mrb[0].mxu0
    %v5972 = vadd.f32 %v1985, %v5971
    %v5973 = vpop.f32.mrb[0].mxu0
    %5974 = vdwg.mxu0
    %v5975 = vmul.f32 %v5972, 0.5
    %v5976 = vtanh.pop %v5975
    %v5977 = vmul.f32 %v5976, 0.5
    %v5978 = vadd.f32 %v5977, 0.5
    %v5979 = vtanh.pop %v5972
    %v5980 = vmul.f32 %v5978, %v5011
    %5982 = vrot.lane.b32.xlu0 %v5979, 64
    %v5983 = vpop.permute.xlu0 %5982
    %v5985 = vmul.f32 %v5978, %v5983
    %5987 = vrot.lane.b32.xlu0 %v5985, 32
    %v5988 = vpop.permute.xlu0 %5987
    %v5990 = vadd.f32 %v5980, %v5988
    %v5991 = vtanh.pop %v5990
    %5993 = vrot.lane.b32.xlu0 %v5991, 64
    %v5994 = vpop.permute.xlu0 %5993
    %v5996 = vmul.f32 %v5978, %v5994
    %5998 = vrot.lane.b32.xlu0 %v5996, 32
    %v5999 = vpop.permute.xlu0 %5998
    %v6000 = vsel %vm414, %v5999, 0
    %6002 = vmatprep.subr.mxu0 0.0
    %6003 = vmatpush1.msra.mxu0 %v52
    %6004 = vmatprep.subr.mxu0 0.0
    %6005 = vmatpush1.msra.mxu0 %v53
    %6006 = vmatprep.subr.mxu0 0.0
    %6007 = vmatpush1.msra.mxu0 %v54
    %6008 = vmatprep.subr.mxu0 0.0
    %6009 = vmatpush1.msra.mxu0 %v55
    %6010 = vmatprep.subr.mxu0 0.0
    %6011 = vmatpush1.msra.mxu0 0.0
    %6012 = vmatprep.subr.mxu0 0.0
    %6013 = vmatpush1.msra.mxu0 0.0
    %6014 = vmatprep.subr.mxu0 0.0
    %6015 = vmatpush1.msra.mxu0 0.0
    %6016 = vmatprep.subr.mxu0 0.0
    %6017 = vmatpush1.msra.mxu0 0.0
    %6018 = vmatprep.subr.mxu0 0.0
    %6019 = vmatpush1.msra.mxu0 0.0
    %6020 = vmatprep.subr.mxu0 0.0
    %6021 = vmatpush1.msra.mxu0 0.0
    %6022 = vmatprep.subr.mxu0 0.0
    %6023 = vmatpush1.msra.mxu0 0.0
    %6024 = vmatprep.subr.mxu0 0.0
    %6025 = vmatpush1.msra.mxu0 0.0
    %6026 = vmatprep.subr.mxu0 0.0
    %6027 = vmatpush1.msra.mxu0 0.0
    %6028 = vmatprep.subr.mxu0 0.0
    %6029 = vmatpush1.msra.mxu0 0.0
    %6030 = vmatprep.subr.mxu0 0.0
    %6031 = vmatpush1.msra.mxu0 0.0
    %6032 = vmatprep.subr.mxu0 0.0
    %6033 = vmatpush1.msra.mxu0 0.0
    %6034 = vmatprep.subr.mxu0 0.0
    %6035 = vmatpush1.msra.mxu0 0.0
    %6036 = vmatprep.subr.mxu0 0.0
    %6037 = vmatpush1.msra.mxu0 0.0
    %6038 = vmatprep.subr.mxu0 0.0
    %6039 = vmatpush1.msra.mxu0 0.0
    %6040 = vmatprep.subr.mxu0 0.0
    %6041 = vmatpush1.msra.mxu0 0.0
    %6042 = vmatprep.subr.mxu0 0.0
    %6043 = vmatpush1.msra.mxu0 0.0
    %6044 = vmatprep.subr.mxu0 0.0
    %6045 = vmatpush1.msra.mxu0 0.0
    %6046 = vmatprep.subr.mxu0 0.0
    %6047 = vmatpush1.msra.mxu0 0.0
    %6048 = vmatprep.subr.mxu0 0.0
    %6049 = vmatpush1.msra.mxu0 0.0
    %6050 = vmatprep.subr.mxu0 0.0
    %6051 = vmatpush1.msra.mxu0 0.0
    %6052 = vmatprep.subr.mxu0 0.0
    %6053 = vmatpush1.msra.mxu0 0.0
    %6054 = vmatprep.subr.mxu0 0.0
    %6055 = vmatpush1.msra.mxu0 0.0
    %6056 = vmatprep.subr.mxu0 0.0
    %6057 = vmatpush1.msra.mxu0 0.0
    %6058 = vmatprep.subr.mxu0 0.0
    %6059 = vmatpush1.msra.mxu0 0.0
    %6060 = vmatprep.subr.mxu0 0.0
    %6061 = vmatpush1.msra.mxu0 0.0
    %6062 = vmatprep.subr.mxu0 0.0
    %6063 = vmatpush1.msra.mxu0 0.0
    %6064 = vmatprep.subr.mxu0 0.0
    %6065 = vmatpush1.msra.mxu0 0.0
    %6066 = vmatprep.mubr.f32.mxu0 0.0
    %6067 = vmatmul.mubr.f32.gmra.mrb[0].mxu0 %v6000
    %v6068 = vpop.f32.mrb[0].mxu0
    %v6069 = vadd.f32 0.0, %v6068
    %v6070 = vpop.f32.mrb[0].mxu0
    %6071 = vdwg.mxu0
    %v6073 = vrot.slane %v6069, 6
    %v6075 = vrot.slane %v6069, 4
    %v6077 = vrot.slane %v6069, 2
    %v6079 = vsel %vm647, %v6069, %v6073
    %v6080 = vsel %vm649, %v6079, %v6075
    %v6081 = vsel %vm651, %v6080, %v6077
    %v6082 = vadd.f32 %v6081, %v312
    %v6083 = vadd.f32 %v6081, %v317
    %v6084 = vtanh.pop %v6082
    %v6085 = vtanh.pop %v6083
    %v6086 = vmul.f32 %v6084, %v660
    %v6087 = vmul.f32 %v6085, %v660
    %v6088 = vsel %vm414, %v6086, 0.0
    %6089 = vadd.xlane.f32.xlu0 %v6088
    %v6090 = vpop.xlane.xlu0 %6089
    %v6091 = vsel %vm414, %v6087, 0.0
    %6092 = vadd.xlane.f32.xlu0 %v6091
    %v6093 = vpop.xlane.xlu0 %6092
    %v6096 = vlaneseq
    %v6097 = vshrl.u32 %v6096, 7
    %v6098 = vsub.s32 %v367, %v6097
    %v6099 = vrot.slane %v6090, %v6098
    %v6100 = vlaneseq
    %v6101 = vshrl.u32 %v6100, 7
    %v6102 = vsub.s32 %v367, %v6101
    %v6103 = vrot.slane %v6093, %v6102
    %v6104 = vsel %vm412, %v6103, %v6099
    %v6106 = vsel %vm681, %v6104, -inf
    %6107 = vmax.xlane.f32.xlu0 %v6106
    %v6108 = vpop.xlane.xlu0 %6107
    %v6110 = vlaneseq
    %v6111 = vshrl.u32 %v6110, 7
    %v6112 = vsub.s32 0, %v6111
    %v6113 = vrot.slane %v6108, %v6112
    %v6114 = vlaneseq
    %v6115 = vshrl.u32 %v6114, 7
    %v6116 = vsub.s32 1, %v6115
    %v6117 = vrot.slane %v6108, %v6116
    %v6120 = vsub.f32 %v6090, %v6113
    %v6121 = vsub.f32 %v6093, %v6117
    %v6122 = vmul.f32 %v6120, 1.442695
    %v6123 = vpow.pop %v6122
    %v6124 = vmul.f32 %v6121, 1.442695
    %v6125 = vpow.pop %v6124
    %6128 = vset.pattern.permute.xlu0 0
    %6129 = vperm.xlu0 %6128, %v6123
    %v6130 = vpop.permute.xlu0 %6129
    %6131 = vset.pattern.permute.xlu0 0
    %6132 = vperm.xlu0 %6131, %v6125
    %v6133 = vpop.permute.xlu0 %6132
    %v6134 = vlaneseq
    %v6135 = vshrl.u32 %v6134, 7
    %v6136 = vsub.s32 %v367, %v6135
    %v6137 = vrot.slane %v6130, %v6136
    %v6138 = vlaneseq
    %v6139 = vshrl.u32 %v6138, 7
    %v6140 = vsub.s32 %v367, %v6139
    %v6141 = vrot.slane %v6133, %v6140
    %v6142 = vsel %vm412, %v6141, %v6137
    %v6144 = vsel %vm681, %v6142, 0.0
    %6145 = vadd.xlane.f32.xlu0 %v6144
    %v6146 = vpop.xlane.xlu0 %6145
    %v6148 = vlaneseq
    %v6149 = vshrl.u32 %v6148, 7
    %v6150 = vsub.s32 0, %v6149
    %v6151 = vrot.slane %v6146, %v6150
    %v6152 = vlaneseq
    %v6153 = vshrl.u32 %v6152, 7
    %v6154 = vsub.s32 1, %v6153
    %v6155 = vrot.slane %v6146, %v6154
    %v6158 = vrcp.pop %v6151
    %v6159 = vmul.f32 %v6123, %v6158
    %v6160 = vrcp.pop %v6155
    %v6161 = vmul.f32 %v6125, %v6160
    %v6162 = vmul.f32 %v6159, %v752
    %v6163 = vmul.f32 %v6159, %v759
    %v6164 = vmul.f32 %v6159, %v766
    %v6165 = vmul.f32 %v6159, %v773
    %v6166 = vmul.f32 %v6159, %v780
    %v6167 = vmul.f32 %v6159, %v787
    %v6168 = vmul.f32 %v6159, %v794
    %v6169 = vmul.f32 %v6159, %v801
    %v6170 = vmul.f32 %v6159, %v808
    %v6171 = vmul.f32 %v6159, %v815
    %v6172 = vmul.f32 %v6159, %v822
    %v6173 = vmul.f32 %v6159, %v829
    %v6174 = vmul.f32 %v6159, %v836
    %v6175 = vmul.f32 %v6159, %v843
    %v6176 = vmul.f32 %v6159, %v850
    %v6177 = vmul.f32 %v6159, %v857
    %v6178 = vmul.f32 %v6159, %v864
    %v6179 = vmul.f32 %v6159, %v871
    %v6180 = vmul.f32 %v6159, %v878
    %v6181 = vmul.f32 %v6159, %v885
    %v6182 = vmul.f32 %v6159, %v892
    %v6183 = vmul.f32 %v6159, %v899
    %v6184 = vmul.f32 %v6159, %v906
    %v6185 = vmul.f32 %v6159, %v913
    %v6186 = vmul.f32 %v6159, %v920
    %v6187 = vmul.f32 %v6159, %v927
    %v6188 = vmul.f32 %v6159, %v934
    %v6189 = vmul.f32 %v6159, %v941
    %v6190 = vmul.f32 %v6159, %v948
    %v6191 = vmul.f32 %v6159, %v955
    %v6192 = vmul.f32 %v6159, %v962
    %v6193 = vmul.f32 %v6159, %v969
    %v6194 = vmul.f32 %v6161, %v976
    %v6195 = vmul.f32 %v6161, %v983
    %v6196 = vmul.f32 %v6161, %v990
    %v6197 = vmul.f32 %v6161, %v997
    %v6198 = vmul.f32 %v6161, %v1004
    %v6199 = vmul.f32 %v6161, %v1011
    %v6200 = vmul.f32 %v6161, %v1018
    %v6201 = vmul.f32 %v6161, %v1025
    %v6202 = vmul.f32 %v6161, %v1032
    %v6203 = vmul.f32 %v6161, %v1039
    %v6204 = vmul.f32 %v6161, %v1046
    %v6205 = vmul.f32 %v6161, %v1053
    %v6206 = vmul.f32 %v6161, %v1060
    %v6207 = vmul.f32 %v6161, %v1067
    %v6208 = vmul.f32 %v6161, %v1074
    %v6209 = vmul.f32 %v6161, %v1081
    %v6210 = vmul.f32 %v6161, %v1088
    %v6211 = vmul.f32 %v6161, %v1095
    %v6212 = vmul.f32 %v6161, %v1102
    %v6213 = vmul.f32 %v6161, %v1109
    %v6214 = vmul.f32 %v6161, %v1116
    %v6215 = vmul.f32 %v6161, %v1123
    %v6216 = vmul.f32 %v6161, %v1130
    %v6217 = vmul.f32 %v6161, %v1137
    %v6218 = vmul.f32 %v6161, %v1144
    %v6219 = vmul.f32 %v6161, %v1151
    %v6220 = vmul.f32 %v6161, %v1158
    %v6221 = vmul.f32 %v6161, %v1165
    %v6222 = vmul.f32 %v6161, %v1172
    %v6223 = vmul.f32 %v6161, %v1179
    %v6224 = vmul.f32 %v6161, %v1186
    %v6225 = vmul.f32 %v6161, %v1193
    %6290 = vset.pattern.permute.xlu0 0
    %6291 = vperm.xlu0 %6290, %v6162
    %v6292 = vpop.permute.xlu0 %6291
    %6293 = vset.pattern.permute.xlu0 0
    %6294 = vperm.xlu0 %6293, %v6163
    %v6295 = vpop.permute.xlu0 %6294
    %6296 = vset.pattern.permute.xlu0 0
    %6297 = vperm.xlu0 %6296, %v6164
    %v6298 = vpop.permute.xlu0 %6297
    %6299 = vset.pattern.permute.xlu0 0
    %6300 = vperm.xlu0 %6299, %v6165
    %v6301 = vpop.permute.xlu0 %6300
    %6302 = vset.pattern.permute.xlu0 0
    %6303 = vperm.xlu0 %6302, %v6166
    %v6304 = vpop.permute.xlu0 %6303
    %6305 = vset.pattern.permute.xlu0 0
    %6306 = vperm.xlu0 %6305, %v6167
    %v6307 = vpop.permute.xlu0 %6306
    %6308 = vset.pattern.permute.xlu0 0
    %6309 = vperm.xlu0 %6308, %v6168
    %v6310 = vpop.permute.xlu0 %6309
    %6311 = vset.pattern.permute.xlu0 0
    %6312 = vperm.xlu0 %6311, %v6169
    %v6313 = vpop.permute.xlu0 %6312
    %6314 = vset.pattern.permute.xlu0 0
    %6315 = vperm.xlu0 %6314, %v6170
    %v6316 = vpop.permute.xlu0 %6315
    %6317 = vset.pattern.permute.xlu0 0
    %6318 = vperm.xlu0 %6317, %v6171
    %v6319 = vpop.permute.xlu0 %6318
    %6320 = vset.pattern.permute.xlu0 0
    %6321 = vperm.xlu0 %6320, %v6172
    %v6322 = vpop.permute.xlu0 %6321
    %6323 = vset.pattern.permute.xlu0 0
    %6324 = vperm.xlu0 %6323, %v6173
    %v6325 = vpop.permute.xlu0 %6324
    %6326 = vset.pattern.permute.xlu0 0
    %6327 = vperm.xlu0 %6326, %v6174
    %v6328 = vpop.permute.xlu0 %6327
    %6329 = vset.pattern.permute.xlu0 0
    %6330 = vperm.xlu0 %6329, %v6175
    %v6331 = vpop.permute.xlu0 %6330
    %6332 = vset.pattern.permute.xlu0 0
    %6333 = vperm.xlu0 %6332, %v6176
    %v6334 = vpop.permute.xlu0 %6333
    %6335 = vset.pattern.permute.xlu0 0
    %6336 = vperm.xlu0 %6335, %v6177
    %v6337 = vpop.permute.xlu0 %6336
    %6338 = vset.pattern.permute.xlu0 0
    %6339 = vperm.xlu0 %6338, %v6178
    %v6340 = vpop.permute.xlu0 %6339
    %6341 = vset.pattern.permute.xlu0 0
    %6342 = vperm.xlu0 %6341, %v6179
    %v6343 = vpop.permute.xlu0 %6342
    %6344 = vset.pattern.permute.xlu0 0
    %6345 = vperm.xlu0 %6344, %v6180
    %v6346 = vpop.permute.xlu0 %6345
    %6347 = vset.pattern.permute.xlu0 0
    %6348 = vperm.xlu0 %6347, %v6181
    %v6349 = vpop.permute.xlu0 %6348
    %6350 = vset.pattern.permute.xlu0 0
    %6351 = vperm.xlu0 %6350, %v6182
    %v6352 = vpop.permute.xlu0 %6351
    %6353 = vset.pattern.permute.xlu0 0
    %6354 = vperm.xlu0 %6353, %v6183
    %v6355 = vpop.permute.xlu0 %6354
    %6356 = vset.pattern.permute.xlu0 0
    %6357 = vperm.xlu0 %6356, %v6184
    %v6358 = vpop.permute.xlu0 %6357
    %6359 = vset.pattern.permute.xlu0 0
    %6360 = vperm.xlu0 %6359, %v6185
    %v6361 = vpop.permute.xlu0 %6360
    %6362 = vset.pattern.permute.xlu0 0
    %6363 = vperm.xlu0 %6362, %v6186
    %v6364 = vpop.permute.xlu0 %6363
    %6365 = vset.pattern.permute.xlu0 0
    %6366 = vperm.xlu0 %6365, %v6187
    %v6367 = vpop.permute.xlu0 %6366
    %6368 = vset.pattern.permute.xlu0 0
    %6369 = vperm.xlu0 %6368, %v6188
    %v6370 = vpop.permute.xlu0 %6369
    %6371 = vset.pattern.permute.xlu0 0
    %6372 = vperm.xlu0 %6371, %v6189
    %v6373 = vpop.permute.xlu0 %6372
    %6374 = vset.pattern.permute.xlu0 0
    %6375 = vperm.xlu0 %6374, %v6190
    %v6376 = vpop.permute.xlu0 %6375
    %6377 = vset.pattern.permute.xlu0 0
    %6378 = vperm.xlu0 %6377, %v6191
    %v6379 = vpop.permute.xlu0 %6378
    %6380 = vset.pattern.permute.xlu0 0
    %6381 = vperm.xlu0 %6380, %v6192
    %v6382 = vpop.permute.xlu0 %6381
    %6383 = vset.pattern.permute.xlu0 0
    %6384 = vperm.xlu0 %6383, %v6193
    %v6385 = vpop.permute.xlu0 %6384
    %6386 = vset.pattern.permute.xlu0 0
    %6387 = vperm.xlu0 %6386, %v6194
    %v6388 = vpop.permute.xlu0 %6387
    %6389 = vset.pattern.permute.xlu0 0
    %6390 = vperm.xlu0 %6389, %v6195
    %v6391 = vpop.permute.xlu0 %6390
    %6392 = vset.pattern.permute.xlu0 0
    %6393 = vperm.xlu0 %6392, %v6196
    %v6394 = vpop.permute.xlu0 %6393
    %6395 = vset.pattern.permute.xlu0 0
    %6396 = vperm.xlu0 %6395, %v6197
    %v6397 = vpop.permute.xlu0 %6396
    %6398 = vset.pattern.permute.xlu0 0
    %6399 = vperm.xlu0 %6398, %v6198
    %v6400 = vpop.permute.xlu0 %6399
    %6401 = vset.pattern.permute.xlu0 0
    %6402 = vperm.xlu0 %6401, %v6199
    %v6403 = vpop.permute.xlu0 %6402
    %6404 = vset.pattern.permute.xlu0 0
    %6405 = vperm.xlu0 %6404, %v6200
    %v6406 = vpop.permute.xlu0 %6405
    %6407 = vset.pattern.permute.xlu0 0
    %6408 = vperm.xlu0 %6407, %v6201
    %v6409 = vpop.permute.xlu0 %6408
    %6410 = vset.pattern.permute.xlu0 0
    %6411 = vperm.xlu0 %6410, %v6202
    %v6412 = vpop.permute.xlu0 %6411
    %6413 = vset.pattern.permute.xlu0 0
    %6414 = vperm.xlu0 %6413, %v6203
    %v6415 = vpop.permute.xlu0 %6414
    %6416 = vset.pattern.permute.xlu0 0
    %6417 = vperm.xlu0 %6416, %v6204
    %v6418 = vpop.permute.xlu0 %6417
    %6419 = vset.pattern.permute.xlu0 0
    %6420 = vperm.xlu0 %6419, %v6205
    %v6421 = vpop.permute.xlu0 %6420
    %6422 = vset.pattern.permute.xlu0 0
    %6423 = vperm.xlu0 %6422, %v6206
    %v6424 = vpop.permute.xlu0 %6423
    %6425 = vset.pattern.permute.xlu0 0
    %6426 = vperm.xlu0 %6425, %v6207
    %v6427 = vpop.permute.xlu0 %6426
    %6428 = vset.pattern.permute.xlu0 0
    %6429 = vperm.xlu0 %6428, %v6208
    %v6430 = vpop.permute.xlu0 %6429
    %6431 = vset.pattern.permute.xlu0 0
    %6432 = vperm.xlu0 %6431, %v6209
    %v6433 = vpop.permute.xlu0 %6432
    %6434 = vset.pattern.permute.xlu0 0
    %6435 = vperm.xlu0 %6434, %v6210
    %v6436 = vpop.permute.xlu0 %6435
    %6437 = vset.pattern.permute.xlu0 0
    %6438 = vperm.xlu0 %6437, %v6211
    %v6439 = vpop.permute.xlu0 %6438
    %6440 = vset.pattern.permute.xlu0 0
    %6441 = vperm.xlu0 %6440, %v6212
    %v6442 = vpop.permute.xlu0 %6441
    %6443 = vset.pattern.permute.xlu0 0
    %6444 = vperm.xlu0 %6443, %v6213
    %v6445 = vpop.permute.xlu0 %6444
    %6446 = vset.pattern.permute.xlu0 0
    %6447 = vperm.xlu0 %6446, %v6214
    %v6448 = vpop.permute.xlu0 %6447
    %6449 = vset.pattern.permute.xlu0 0
    %6450 = vperm.xlu0 %6449, %v6215
    %v6451 = vpop.permute.xlu0 %6450
    %6452 = vset.pattern.permute.xlu0 0
    %6453 = vperm.xlu0 %6452, %v6216
    %v6454 = vpop.permute.xlu0 %6453
    %6455 = vset.pattern.permute.xlu0 0
    %6456 = vperm.xlu0 %6455, %v6217
    %v6457 = vpop.permute.xlu0 %6456
    %6458 = vset.pattern.permute.xlu0 0
    %6459 = vperm.xlu0 %6458, %v6218
    %v6460 = vpop.permute.xlu0 %6459
    %6461 = vset.pattern.permute.xlu0 0
    %6462 = vperm.xlu0 %6461, %v6219
    %v6463 = vpop.permute.xlu0 %6462
    %6464 = vset.pattern.permute.xlu0 0
    %6465 = vperm.xlu0 %6464, %v6220
    %v6466 = vpop.permute.xlu0 %6465
    %6467 = vset.pattern.permute.xlu0 0
    %6468 = vperm.xlu0 %6467, %v6221
    %v6469 = vpop.permute.xlu0 %6468
    %6470 = vset.pattern.permute.xlu0 0
    %6471 = vperm.xlu0 %6470, %v6222
    %v6472 = vpop.permute.xlu0 %6471
    %6473 = vset.pattern.permute.xlu0 0
    %6474 = vperm.xlu0 %6473, %v6223
    %v6475 = vpop.permute.xlu0 %6474
    %6476 = vset.pattern.permute.xlu0 0
    %6477 = vperm.xlu0 %6476, %v6224
    %v6478 = vpop.permute.xlu0 %6477
    %6479 = vset.pattern.permute.xlu0 0
    %6480 = vperm.xlu0 %6479, %v6225
    %v6481 = vpop.permute.xlu0 %6480
    %v6482 = vlaneseq
    %v6483 = vshrl.u32 %v6482, 7
    %v6484 = vsub.s32 %v367, %v6483
    %v6485 = vrot.slane %v6292, %v6484
    %v6486 = vlaneseq
    %v6487 = vshrl.u32 %v6486, 7
    %v6488 = vsub.s32 %v367, %v6487
    %v6489 = vrot.slane %v6295, %v6488
    %v6490 = vlaneseq
    %v6491 = vshrl.u32 %v6490, 7
    %v6492 = vsub.s32 %v367, %v6491
    %v6493 = vrot.slane %v6298, %v6492
    %v6494 = vlaneseq
    %v6495 = vshrl.u32 %v6494, 7
    %v6496 = vsub.s32 %v367, %v6495
    %v6497 = vrot.slane %v6301, %v6496
    %v6498 = vlaneseq
    %v6499 = vshrl.u32 %v6498, 7
    %v6500 = vsub.s32 %v367, %v6499
    %v6501 = vrot.slane %v6304, %v6500
    %v6502 = vlaneseq
    %v6503 = vshrl.u32 %v6502, 7
    %v6504 = vsub.s32 %v367, %v6503
    %v6505 = vrot.slane %v6307, %v6504
    %v6506 = vlaneseq
    %v6507 = vshrl.u32 %v6506, 7
    %v6508 = vsub.s32 %v367, %v6507
    %v6509 = vrot.slane %v6310, %v6508
    %v6510 = vlaneseq
    %v6511 = vshrl.u32 %v6510, 7
    %v6512 = vsub.s32 %v367, %v6511
    %v6513 = vrot.slane %v6313, %v6512
    %v6514 = vlaneseq
    %v6515 = vshrl.u32 %v6514, 7
    %v6516 = vsub.s32 %v367, %v6515
    %v6517 = vrot.slane %v6316, %v6516
    %v6518 = vlaneseq
    %v6519 = vshrl.u32 %v6518, 7
    %v6520 = vsub.s32 %v367, %v6519
    %v6521 = vrot.slane %v6319, %v6520
    %v6522 = vlaneseq
    %v6523 = vshrl.u32 %v6522, 7
    %v6524 = vsub.s32 %v367, %v6523
    %v6525 = vrot.slane %v6322, %v6524
    %v6526 = vlaneseq
    %v6527 = vshrl.u32 %v6526, 7
    %v6528 = vsub.s32 %v367, %v6527
    %v6529 = vrot.slane %v6325, %v6528
    %v6530 = vlaneseq
    %v6531 = vshrl.u32 %v6530, 7
    %v6532 = vsub.s32 %v367, %v6531
    %v6533 = vrot.slane %v6328, %v6532
    %v6534 = vlaneseq
    %v6535 = vshrl.u32 %v6534, 7
    %v6536 = vsub.s32 %v367, %v6535
    %v6537 = vrot.slane %v6331, %v6536
    %v6538 = vlaneseq
    %v6539 = vshrl.u32 %v6538, 7
    %v6540 = vsub.s32 %v367, %v6539
    %v6541 = vrot.slane %v6334, %v6540
    %v6542 = vlaneseq
    %v6543 = vshrl.u32 %v6542, 7
    %v6544 = vsub.s32 %v367, %v6543
    %v6545 = vrot.slane %v6337, %v6544
    %v6546 = vlaneseq
    %v6547 = vshrl.u32 %v6546, 7
    %v6548 = vsub.s32 %v367, %v6547
    %v6549 = vrot.slane %v6340, %v6548
    %v6550 = vlaneseq
    %v6551 = vshrl.u32 %v6550, 7
    %v6552 = vsub.s32 %v367, %v6551
    %v6553 = vrot.slane %v6343, %v6552
    %v6554 = vlaneseq
    %v6555 = vshrl.u32 %v6554, 7
    %v6556 = vsub.s32 %v367, %v6555
    %v6557 = vrot.slane %v6346, %v6556
    %v6558 = vlaneseq
    %v6559 = vshrl.u32 %v6558, 7
    %v6560 = vsub.s32 %v367, %v6559
    %v6561 = vrot.slane %v6349, %v6560
    %v6562 = vlaneseq
    %v6563 = vshrl.u32 %v6562, 7
    %v6564 = vsub.s32 %v367, %v6563
    %v6565 = vrot.slane %v6352, %v6564
    %v6566 = vlaneseq
    %v6567 = vshrl.u32 %v6566, 7
    %v6568 = vsub.s32 %v367, %v6567
    %v6569 = vrot.slane %v6355, %v6568
    %v6570 = vlaneseq
    %v6571 = vshrl.u32 %v6570, 7
    %v6572 = vsub.s32 %v367, %v6571
    %v6573 = vrot.slane %v6358, %v6572
    %v6574 = vlaneseq
    %v6575 = vshrl.u32 %v6574, 7
    %v6576 = vsub.s32 %v367, %v6575
    %v6577 = vrot.slane %v6361, %v6576
    %v6578 = vlaneseq
    %v6579 = vshrl.u32 %v6578, 7
    %v6580 = vsub.s32 %v367, %v6579
    %v6581 = vrot.slane %v6364, %v6580
    %v6582 = vlaneseq
    %v6583 = vshrl.u32 %v6582, 7
    %v6584 = vsub.s32 %v367, %v6583
    %v6585 = vrot.slane %v6367, %v6584
    %v6586 = vlaneseq
    %v6587 = vshrl.u32 %v6586, 7
    %v6588 = vsub.s32 %v367, %v6587
    %v6589 = vrot.slane %v6370, %v6588
    %v6590 = vlaneseq
    %v6591 = vshrl.u32 %v6590, 7
    %v6592 = vsub.s32 %v367, %v6591
    %v6593 = vrot.slane %v6373, %v6592
    %v6594 = vlaneseq
    %v6595 = vshrl.u32 %v6594, 7
    %v6596 = vsub.s32 %v367, %v6595
    %v6597 = vrot.slane %v6376, %v6596
    %v6598 = vlaneseq
    %v6599 = vshrl.u32 %v6598, 7
    %v6600 = vsub.s32 %v367, %v6599
    %v6601 = vrot.slane %v6379, %v6600
    %v6602 = vlaneseq
    %v6603 = vshrl.u32 %v6602, 7
    %v6604 = vsub.s32 %v367, %v6603
    %v6605 = vrot.slane %v6382, %v6604
    %v6606 = vlaneseq
    %v6607 = vshrl.u32 %v6606, 7
    %v6608 = vsub.s32 %v367, %v6607
    %v6609 = vrot.slane %v6385, %v6608
    %v6610 = vlaneseq
    %v6611 = vshrl.u32 %v6610, 7
    %v6612 = vsub.s32 %v367, %v6611
    %v6613 = vrot.slane %v6388, %v6612
    %v6614 = vlaneseq
    %v6615 = vshrl.u32 %v6614, 7
    %v6616 = vsub.s32 %v367, %v6615
    %v6617 = vrot.slane %v6391, %v6616
    %v6618 = vlaneseq
    %v6619 = vshrl.u32 %v6618, 7
    %v6620 = vsub.s32 %v367, %v6619
    %v6621 = vrot.slane %v6394, %v6620
    %v6622 = vlaneseq
    %v6623 = vshrl.u32 %v6622, 7
    %v6624 = vsub.s32 %v367, %v6623
    %v6625 = vrot.slane %v6397, %v6624
    %v6626 = vlaneseq
    %v6627 = vshrl.u32 %v6626, 7
    %v6628 = vsub.s32 %v367, %v6627
    %v6629 = vrot.slane %v6400, %v6628
    %v6630 = vlaneseq
    %v6631 = vshrl.u32 %v6630, 7
    %v6632 = vsub.s32 %v367, %v6631
    %v6633 = vrot.slane %v6403, %v6632
    %v6634 = vlaneseq
    %v6635 = vshrl.u32 %v6634, 7
    %v6636 = vsub.s32 %v367, %v6635
    %v6637 = vrot.slane %v6406, %v6636
    %v6638 = vlaneseq
    %v6639 = vshrl.u32 %v6638, 7
    %v6640 = vsub.s32 %v367, %v6639
    %v6641 = vrot.slane %v6409, %v6640
    %v6642 = vlaneseq
    %v6643 = vshrl.u32 %v6642, 7
    %v6644 = vsub.s32 %v367, %v6643
    %v6645 = vrot.slane %v6412, %v6644
    %v6646 = vlaneseq
    %v6647 = vshrl.u32 %v6646, 7
    %v6648 = vsub.s32 %v367, %v6647
    %v6649 = vrot.slane %v6415, %v6648
    %v6650 = vlaneseq
    %v6651 = vshrl.u32 %v6650, 7
    %v6652 = vsub.s32 %v367, %v6651
    %v6653 = vrot.slane %v6418, %v6652
    %v6654 = vlaneseq
    %v6655 = vshrl.u32 %v6654, 7
    %v6656 = vsub.s32 %v367, %v6655
    %v6657 = vrot.slane %v6421, %v6656
    %v6658 = vlaneseq
    %v6659 = vshrl.u32 %v6658, 7
    %v6660 = vsub.s32 %v367, %v6659
    %v6661 = vrot.slane %v6424, %v6660
    %v6662 = vlaneseq
    %v6663 = vshrl.u32 %v6662, 7
    %v6664 = vsub.s32 %v367, %v6663
    %v6665 = vrot.slane %v6427, %v6664
    %v6666 = vlaneseq
    %v6667 = vshrl.u32 %v6666, 7
    %v6668 = vsub.s32 %v367, %v6667
    %v6669 = vrot.slane %v6430, %v6668
    %v6670 = vlaneseq
    %v6671 = vshrl.u32 %v6670, 7
    %v6672 = vsub.s32 %v367, %v6671
    %v6673 = vrot.slane %v6433, %v6672
    %v6674 = vlaneseq
    %v6675 = vshrl.u32 %v6674, 7
    %v6676 = vsub.s32 %v367, %v6675
    %v6677 = vrot.slane %v6436, %v6676
    %v6678 = vlaneseq
    %v6679 = vshrl.u32 %v6678, 7
    %v6680 = vsub.s32 %v367, %v6679
    %v6681 = vrot.slane %v6439, %v6680
    %v6682 = vlaneseq
    %v6683 = vshrl.u32 %v6682, 7
    %v6684 = vsub.s32 %v367, %v6683
    %v6685 = vrot.slane %v6442, %v6684
    %v6686 = vlaneseq
    %v6687 = vshrl.u32 %v6686, 7
    %v6688 = vsub.s32 %v367, %v6687
    %v6689 = vrot.slane %v6445, %v6688
    %v6690 = vlaneseq
    %v6691 = vshrl.u32 %v6690, 7
    %v6692 = vsub.s32 %v367, %v6691
    %v6693 = vrot.slane %v6448, %v6692
    %v6694 = vlaneseq
    %v6695 = vshrl.u32 %v6694, 7
    %v6696 = vsub.s32 %v367, %v6695
    %v6697 = vrot.slane %v6451, %v6696
    %v6698 = vlaneseq
    %v6699 = vshrl.u32 %v6698, 7
    %v6700 = vsub.s32 %v367, %v6699
    %v6701 = vrot.slane %v6454, %v6700
    %v6702 = vlaneseq
    %v6703 = vshrl.u32 %v6702, 7
    %v6704 = vsub.s32 %v367, %v6703
    %v6705 = vrot.slane %v6457, %v6704
    %v6706 = vlaneseq
    %v6707 = vshrl.u32 %v6706, 7
    %v6708 = vsub.s32 %v367, %v6707
    %v6709 = vrot.slane %v6460, %v6708
    %v6710 = vlaneseq
    %v6711 = vshrl.u32 %v6710, 7
    %v6712 = vsub.s32 %v367, %v6711
    %v6713 = vrot.slane %v6463, %v6712
    %v6714 = vlaneseq
    %v6715 = vshrl.u32 %v6714, 7
    %v6716 = vsub.s32 %v367, %v6715
    %v6717 = vrot.slane %v6466, %v6716
    %v6718 = vlaneseq
    %v6719 = vshrl.u32 %v6718, 7
    %v6720 = vsub.s32 %v367, %v6719
    %v6721 = vrot.slane %v6469, %v6720
    %v6722 = vlaneseq
    %v6723 = vshrl.u32 %v6722, 7
    %v6724 = vsub.s32 %v367, %v6723
    %v6725 = vrot.slane %v6472, %v6724
    %v6726 = vlaneseq
    %v6727 = vshrl.u32 %v6726, 7
    %v6728 = vsub.s32 %v367, %v6727
    %v6729 = vrot.slane %v6475, %v6728
    %v6730 = vlaneseq
    %v6731 = vshrl.u32 %v6730, 7
    %v6732 = vsub.s32 %v367, %v6731
    %v6733 = vrot.slane %v6478, %v6732
    %v6734 = vlaneseq
    %v6735 = vshrl.u32 %v6734, 7
    %v6736 = vsub.s32 %v367, %v6735
    %v6737 = vrot.slane %v6481, %v6736
    %v6738 = vsel %vm412, %v6489, %v6485
    %v6739 = vsel %vm1835, %v6493, %v6738
    %v6740 = vsel %vm1837, %v6497, %v6739
    %v6741 = vsel %vm1839, %v6501, %v6740
    %v6742 = vsel %vm1841, %v6505, %v6741
    %v6743 = vsel %vm1843, %v6509, %v6742
    %v6744 = vsel %vm1845, %v6513, %v6743
    %v6745 = vsel %vm412, %v6521, %v6517
    %v6746 = vsel %vm1835, %v6525, %v6745
    %v6747 = vsel %vm1837, %v6529, %v6746
    %v6748 = vsel %vm1839, %v6533, %v6747
    %v6749 = vsel %vm1841, %v6537, %v6748
    %v6750 = vsel %vm1843, %v6541, %v6749
    %v6751 = vsel %vm1845, %v6545, %v6750
    %v6752 = vsel %vm412, %v6553, %v6549
    %v6753 = vsel %vm1835, %v6557, %v6752
    %v6754 = vsel %vm1837, %v6561, %v6753
    %v6755 = vsel %vm1839, %v6565, %v6754
    %v6756 = vsel %vm1841, %v6569, %v6755
    %v6757 = vsel %vm1843, %v6573, %v6756
    %v6758 = vsel %vm1845, %v6577, %v6757
    %v6759 = vsel %vm412, %v6585, %v6581
    %v6760 = vsel %vm1835, %v6589, %v6759
    %v6761 = vsel %vm1837, %v6593, %v6760
    %v6762 = vsel %vm1839, %v6597, %v6761
    %v6763 = vsel %vm1841, %v6601, %v6762
    %v6764 = vsel %vm1843, %v6605, %v6763
    %v6765 = vsel %vm1845, %v6609, %v6764
    %v6766 = vsel %vm412, %v6617, %v6613
    %v6767 = vsel %vm1835, %v6621, %v6766
    %v6768 = vsel %vm1837, %v6625, %v6767
    %v6769 = vsel %vm1839, %v6629, %v6768
    %v6770 = vsel %vm1841, %v6633, %v6769
    %v6771 = vsel %vm1843, %v6637, %v6770
    %v6772 = vsel %vm1845, %v6641, %v6771
    %v6773 = vsel %vm412, %v6649, %v6645
    %v6774 = vsel %vm1835, %v6653, %v6773
    %v6775 = vsel %vm1837, %v6657, %v6774
    %v6776 = vsel %vm1839, %v6661, %v6775
    %v6777 = vsel %vm1841, %v6665, %v6776
    %v6778 = vsel %vm1843, %v6669, %v6777
    %v6779 = vsel %vm1845, %v6673, %v6778
    %v6780 = vsel %vm412, %v6681, %v6677
    %v6781 = vsel %vm1835, %v6685, %v6780
    %v6782 = vsel %vm1837, %v6689, %v6781
    %v6783 = vsel %vm1839, %v6693, %v6782
    %v6784 = vsel %vm1841, %v6697, %v6783
    %v6785 = vsel %vm1843, %v6701, %v6784
    %v6786 = vsel %vm1845, %v6705, %v6785
    %v6787 = vsel %vm412, %v6713, %v6709
    %v6788 = vsel %vm1835, %v6717, %v6787
    %v6789 = vsel %vm1837, %v6721, %v6788
    %v6790 = vsel %vm1839, %v6725, %v6789
    %v6791 = vsel %vm1841, %v6729, %v6790
    %v6792 = vsel %vm1843, %v6733, %v6791
    %v6793 = vsel %vm1845, %v6737, %v6792
    %v6802 = vsel %vm320, %v6744, 0.0
    %6803 = vadd.xlane.f32.xlu0 %v6802
    %v6804 = vpop.xlane.xlu0 %6803
    %v6805 = vsel %vm320, %v6751, 0.0
    %6806 = vadd.xlane.f32.xlu0 %v6805
    %v6807 = vpop.xlane.xlu0 %6806
    %v6808 = vsel %vm320, %v6758, 0.0
    %6809 = vadd.xlane.f32.xlu0 %v6808
    %v6810 = vpop.xlane.xlu0 %6809
    %v6811 = vsel %vm320, %v6765, 0.0
    %6812 = vadd.xlane.f32.xlu0 %v6811
    %v6813 = vpop.xlane.xlu0 %6812
    %v6814 = vsel %vm320, %v6772, 0.0
    %6815 = vadd.xlane.f32.xlu0 %v6814
    %v6816 = vpop.xlane.xlu0 %6815
    %v6817 = vsel %vm320, %v6779, 0.0
    %6818 = vadd.xlane.f32.xlu0 %v6817
    %v6819 = vpop.xlane.xlu0 %6818
    %v6820 = vsel %vm320, %v6786, 0.0
    %6821 = vadd.xlane.f32.xlu0 %v6820
    %v6822 = vpop.xlane.xlu0 %6821
    %v6823 = vsel %vm320, %v6793, 0.0
    %6824 = vadd.xlane.f32.xlu0 %v6823
    %v6825 = vpop.xlane.xlu0 %6824
    %s6826 = scalar_lea.vmem %s1, 10
    %v6827 = vld [vmem:[%s6826] sm:$0x3]
    %v6836 = vlaneseq
    %v6837 = vshrl.u32 %v6836, 7
    %v6838 = vsub.s32 %v367, %v6837
    %v6839 = vrot.slane %v6804, %v6838
    %v6840 = vlaneseq
    %v6841 = vshrl.u32 %v6840, 7
    %v6842 = vsub.s32 %v372, %v6841
    %v6843 = vrot.slane %v6807, %v6842
    %v6844 = vsel %vm377, %v6843, %v6839
    %v6845 = vlaneseq
    %v6846 = vshrl.u32 %v6845, 7
    %v6847 = vsub.s32 %v379, %v6846
    %v6848 = vrot.slane %v6810, %v6847
    %v6849 = vsel %vm384, %v6848, %v6844
    %v6850 = vlaneseq
    %v6851 = vshrl.u32 %v6850, 7
    %v6852 = vsub.s32 %v386, %v6851
    %v6853 = vrot.slane %v6813, %v6852
    %v6854 = vsel %vm391, %v6853, %v6849
    %v6855 = vlaneseq
    %v6856 = vshrl.u32 %v6855, 7
    %v6857 = vsub.s32 %v367, %v6856
    %v6858 = vrot.slane %v6816, %v6857
    %v6859 = vlaneseq
    %v6860 = vshrl.u32 %v6859, 7
    %v6861 = vsub.s32 %v372, %v6860
    %v6862 = vrot.slane %v6819, %v6861
    %v6863 = vsel %vm377, %v6862, %v6858
    %v6864 = vlaneseq
    %v6865 = vshrl.u32 %v6864, 7
    %v6866 = vsub.s32 %v379, %v6865
    %v6867 = vrot.slane %v6822, %v6866
    %v6868 = vsel %vm384, %v6867, %v6863
    %v6869 = vlaneseq
    %v6870 = vshrl.u32 %v6869, 7
    %v6871 = vsub.s32 %v386, %v6870
    %v6872 = vrot.slane %v6825, %v6871
    %v6873 = vsel %vm391, %v6872, %v6868
    %v6874 = vsel %vm412, %v6873, %v6854
    %v6876 = vadd.f32 %v6827, %v6874
    %6877 = vrot.lane.b32.xlu0 %v5996, 64
    %v6878 = vpop.permute.xlu0 %6877
    %v6880 = vsel %vm414, %v6876, %v6878
    %v6882 = vsel %vm238, %v6880, 0
    %6884 = vmatprep.subr.mxu0 0.0
    %6885 = vmatpush1.msra.mxu0 %v68
    %6886 = vmatprep.subr.mxu0 0.0
    %6887 = vmatpush1.msra.mxu0 %v69
    %6888 = vmatprep.subr.mxu0 0.0
    %6889 = vmatpush1.msra.mxu0 %v70
    %6890 = vmatprep.subr.mxu0 0.0
    %6891 = vmatpush1.msra.mxu0 %v71
    %6892 = vmatprep.subr.mxu0 0.0
    %6893 = vmatpush1.msra.mxu0 %v72
    %6894 = vmatprep.subr.mxu0 0.0
    %6895 = vmatpush1.msra.mxu0 %v73
    %6896 = vmatprep.subr.mxu0 0.0
    %6897 = vmatpush1.msra.mxu0 %v74
    %6898 = vmatprep.subr.mxu0 0.0
    %6899 = vmatpush1.msra.mxu0 %v75
    %6900 = vmatprep.subr.mxu0 0.0
    %6901 = vmatpush1.msra.mxu0 0.0
    %6902 = vmatprep.subr.mxu0 0.0
    %6903 = vmatpush1.msra.mxu0 0.0
    %6904 = vmatprep.subr.mxu0 0.0
    %6905 = vmatpush1.msra.mxu0 0.0
    %6906 = vmatprep.subr.mxu0 0.0
    %6907 = vmatpush1.msra.mxu0 0.0
    %6908 = vmatprep.subr.mxu0 0.0
    %6909 = vmatpush1.msra.mxu0 0.0
    %6910 = vmatprep.subr.mxu0 0.0
    %6911 = vmatpush1.msra.mxu0 0.0
    %6912 = vmatprep.subr.mxu0 0.0
    %6913 = vmatpush1.msra.mxu0 0.0
    %6914 = vmatprep.subr.mxu0 0.0
    %6915 = vmatpush1.msra.mxu0 0.0
    %6916 = vmatprep.subr.mxu0 0.0
    %6917 = vmatpush1.msra.mxu0 0.0
    %6918 = vmatprep.subr.mxu0 0.0
    %6919 = vmatpush1.msra.mxu0 0.0
    %6920 = vmatprep.subr.mxu0 0.0
    %6921 = vmatpush1.msra.mxu0 0.0
    %6922 = vmatprep.subr.mxu0 0.0
    %6923 = vmatpush1.msra.mxu0 0.0
    %6924 = vmatprep.subr.mxu0 0.0
    %6925 = vmatpush1.msra.mxu0 0.0
    %6926 = vmatprep.subr.mxu0 0.0
    %6927 = vmatpush1.msra.mxu0 0.0
    %6928 = vmatprep.subr.mxu0 0.0
    %6929 = vmatpush1.msra.mxu0 0.0
    %6930 = vmatprep.subr.mxu0 0.0
    %6931 = vmatpush1.msra.mxu0 0.0
    %6932 = vmatprep.subr.mxu0 0.0
    %6933 = vmatpush1.msra.mxu0 0.0
    %6934 = vmatprep.subr.mxu0 0.0
    %6935 = vmatpush1.msra.mxu0 0.0
    %6936 = vmatprep.subr.mxu0 0.0
    %6937 = vmatpush1.msra.mxu0 0.0
    %6938 = vmatprep.subr.mxu0 0.0
    %6939 = vmatpush1.msra.mxu0 0.0
    %6940 = vmatprep.subr.mxu0 0.0
    %6941 = vmatpush1.msra.mxu0 0.0
    %6942 = vmatprep.subr.mxu0 0.0
    %6943 = vmatpush1.msra.mxu0 0.0
    %6944 = vmatprep.subr.mxu0 0.0
    %6945 = vmatpush1.msra.mxu0 0.0
    %6946 = vmatprep.subr.mxu0 0.0
    %6947 = vmatpush1.msra.mxu0 0.0
    %6948 = vmatprep.mubr.f32.mxu0 0.0
    %6949 = vmatmul.mubr.f32.gmra.mrb[0].mxu0 %v6882
    %v6950 = vpop.f32.mrb[0].mxu0
    %v6951 = vadd.f32 %v1985, %v6950
    %v6952 = vpop.f32.mrb[0].mxu0
    %6953 = vdwg.mxu0
    %v6954 = vmul.f32 %v6951, 0.5
    %v6955 = vtanh.pop %v6954
    %v6956 = vmul.f32 %v6955, 0.5
    %v6957 = vadd.f32 %v6956, 0.5
    %v6958 = vtanh.pop %v6951
    %v6959 = vmul.f32 %v6957, %v5990
    %6961 = vrot.lane.b32.xlu0 %v6958, 64
    %v6962 = vpop.permute.xlu0 %6961
    %v6964 = vmul.f32 %v6957, %v6962
    %6966 = vrot.lane.b32.xlu0 %v6964, 32
    %v6967 = vpop.permute.xlu0 %6966
    %v6969 = vadd.f32 %v6959, %v6967
    %v6970 = vtanh.pop %v6969
    %6972 = vrot.lane.b32.xlu0 %v6970, 64
    %v6973 = vpop.permute.xlu0 %6972
    %v6975 = vmul.f32 %v6957, %v6973
    %v6976 = vrot.slane %v3059, 6
    %v6978 = vrot.slane %v4038, 4
    %v6980 = vrot.slane %v5017, 2
    %v6983 = vrot.slane %v6975, 6
    %v6985 = vsel %vm647, %v2080, %v6976
    %v6986 = vsel %vm649, %v6985, %v6978
    %v6987 = vsel %vm651, %v6986, %v6980
    %v6988 = vsel %vm647, %v5996, %v6983
    %v6989 = vlaneseq
    %v6990 = vshrl.u32 %v6989, 7
    %v6991 = vsub.s32 0, %v6990
    %v6992 = vrot.slane %v86, %v6991
    %6995 = vrot.lane.b32.xlu0 %v6987, 32
    %v6996 = vpop.permute.xlu0 %6995
    %6997 = vrot.lane.b32.xlu0 %v6988, 32
    %v6998 = vpop.permute.xlu0 %6997
    %v6999 = vsel %vm414, %v6996, 0
    %v7001 = vsel %vm414, %v6998, 0
    %7003 = vmatprep.subr.mxu0 0.0
    %7004 = vmatpush1.msra.mxu0 %v76
    %7005 = vmatprep.subr.mxu0 0.0
    %7006 = vmatpush1.msra.mxu0 %v77
    %7007 = vmatprep.subr.mxu0 0.0
    %7008 = vmatpush1.msra.mxu0 %v78
    %7009 = vmatprep.subr.mxu0 0.0
    %7010 = vmatpush1.msra.mxu0 %v79
    %7011 = vmatprep.subr.mxu0 0.0
    %7012 = vmatpush1.msra.mxu0 0.0
    %7013 = vmatprep.subr.mxu0 0.0
    %7014 = vmatpush1.msra.mxu0 0.0
    %7015 = vmatprep.subr.mxu0 0.0
    %7016 = vmatpush1.msra.mxu0 0.0
    %7017 = vmatprep.subr.mxu0 0.0
    %7018 = vmatpush1.msra.mxu0 0.0
    %7019 = vmatprep.subr.mxu0 0.0
    %7020 = vmatpush1.msra.mxu0 0.0
    %7021 = vmatprep.subr.mxu0 0.0
    %7022 = vmatpush1.msra.mxu0 0.0
    %7023 = vmatprep.subr.mxu0 0.0
    %7024 = vmatpush1.msra.mxu0 0.0
    %7025 = vmatprep.subr.mxu0 0.0
    %7026 = vmatpush1.msra.mxu0 0.0
    %7027 = vmatprep.subr.mxu0 0.0
    %7028 = vmatpush1.msra.mxu0 0.0
    %7029 = vmatprep.subr.mxu0 0.0
    %7030 = vmatpush1.msra.mxu0 0.0
    %7031 = vmatprep.subr.mxu0 0.0
    %7032 = vmatpush1.msra.mxu0 0.0
    %7033 = vmatprep.subr.mxu0 0.0
    %7034 = vmatpush1.msra.mxu0 0.0
    %7035 = vmatprep.subr.mxu0 0.0
    %7036 = vmatpush1.msra.mxu0 0.0
    %7037 = vmatprep.subr.mxu0 0.0
    %7038 = vmatpush1.msra.mxu0 0.0
    %7039 = vmatprep.subr.mxu0 0.0
    %7040 = vmatpush1.msra.mxu0 0.0
    %7041 = vmatprep.subr.mxu0 0.0
    %7042 = vmatpush1.msra.mxu0 0.0
    %7043 = vmatprep.subr.mxu0 0.0
    %7044 = vmatpush1.msra.mxu0 0.0
    %7045 = vmatprep.subr.mxu0 0.0
    %7046 = vmatpush1.msra.mxu0 0.0
    %7047 = vmatprep.subr.mxu0 0.0
    %7048 = vmatpush1.msra.mxu0 0.0
    %7049 = vmatprep.subr.mxu0 0.0
    %7050 = vmatpush1.msra.mxu0 0.0
    %7051 = vmatprep.subr.mxu0 0.0
    %7052 = vmatpush1.msra.mxu0 0.0
    %7053 = vmatprep.subr.mxu0 0.0
    %7054 = vmatpush1.msra.mxu0 0.0
    %7055 = vmatprep.subr.mxu0 0.0
    %7056 = vmatpush1.msra.mxu0 0.0
    %7057 = vmatprep.subr.mxu0 0.0
    %7058 = vmatpush1.msra.mxu0 0.0
    %7059 = vmatprep.subr.mxu0 0.0
    %7060 = vmatpush1.msra.mxu0 0.0
    %7061 = vmatprep.subr.mxu0 0.0
    %7062 = vmatpush1.msra.mxu0 0.0
    %7063 = vmatprep.subr.mxu0 0.0
    %7064 = vmatpush1.msra.mxu0 0.0
    %7065 = vmatprep.subr.mxu0 0.0
    %7066 = vmatpush1.msra.mxu0 0.0
    %7067 = vmatprep.mubr.f32.mxu0 0.0
    %7068 = vmatmul.mubr.f32.gmra.mrb[0].mxu0 %v6999
    %v7069 = vpop.f32.mrb[0].mxu0
    %v7070 = vadd.f32 %v6992, %v7069
    %v7071 = vpop.f32.mrb[0].mxu0
    %7072 = vmatprep.mubr.f32.mxu0 0.0
    %7073 = vmatmul.mubr.f32.gmra.mrb[0].mxu0 %v7001
    %v7074 = vpop.f32.mrb[0].mxu0
    %v7075 = vadd.f32 %v6992, %v7074
    %v7076 = vpop.f32.mrb[0].mxu0
    %7077 = vdwg.mxu0
    %7078 = vst [vmem:[%s3] sm:$0xff] %v7070
    %7079 = vst [vmem:[%s3 + $0x8] sm:$0xf] %v7075
    // Predicated region
    $region18: #{decoder_forward.1} parent=1 // pred_check
      _
    $region19: #{decoder_forward.1} parent=1 // pred_check_branch
      %7081 = sbr.rel (0) target = $region21
    $region20: #{decoder_forward.1} parent=1 // pred_region
      _
    $region21: #{decoder_forward.1} parent=1 // pred_fallthru
      _
    // Predicated region
    $region22: #{decoder_forward.1} parent=1 // pred_check
      _
    $region23: #{decoder_forward.1} parent=1 // pred_check_branch
      %7083 = sbr.rel (0) target = $region25
    $region24: #{decoder_forward.1} parent=1 // pred_region
      _
    $region25: #{decoder_forward.1} parent=1 // pred_fallthru
      _
    %7084 = vsyncpa [#allocation3], 1

</llo_original>
